<compile_context>
chip_gen: v6e
topology: v6e:2x2x1
jax: 0.10.0
libtpu: 0.0.40
codegen_flags: <defaults>
</compile_context>

<pallas_src>
import functools

import jax
import jax.numpy as jnp
from jax import lax
from jax.experimental import pallas as pl
from jax.experimental.pallas import tpu as pltpu


def _round_up(x, m):
    return ((x + m - 1) // m) * m


def decoder_kernel(
    idx_ref,         # (B, 1)  int32 : initial decoder token ids
    aligns_ref,      # (T*B, H) f32  : encoder outputs, row t*B+b = enc[b, t]
    emb_proj_ref,    # (V, 3*HP) f32 : embedding table pre-multiplied by stacked W_e
    w_a_ref,         # (H, 3*HP) f32 : aligned-input gate weights (stacked, padded)
    w_h_ref,         # (HP, 3*HP) f32: hidden gate weights (stacked, padded)
    w_heads_ref,     # (HP, SP+IP) f32: [slot head | intent head] (padded)
    biases_ref,      # (1, 3*HP + HP + SP + IP) f32: [b_ax | b_hn | b_slot | b_int]
    slot_out_ref,    # (T, B, SP) f32 out: per-step slot log-softmax (lane-padded)
    intent_out_ref,  # (B, IP) f32 out   : intent scores (lane-padded)
    ax_ref,          # (T*B, 3*HP) f32 scratch: precomputed aligned-input gate pre-acts
):
    T, B, SP = slot_out_ref.shape
    HP, G = w_h_ref.shape          # G = 3 * HP, per-gate lane stride HP (mult of 128)
    V = emb_proj_ref.shape[0]
    IP = intent_out_ref.shape[1]

    # ---- tiny loop-invariant values only (few vregs; big weights stay in VMEM) ----
    iota_s = lax.broadcasted_iota(jnp.int32, (B, SP), 1)
    b_hn = biases_ref[0:1, G:G + HP]                      # (1, HP)
    b_slot = biases_ref[0:1, G + HP:G + HP + SP]          # (1, SP)

    # One-shot precompute of the aligned-input gate pre-activations for ALL steps
    # (input bias + r/z hidden biases already folded into biases[:, 0:G]).
    ax_ref[...] = (
        jnp.dot(aligns_ref[...], w_a_ref[...], preferred_element_type=jnp.float32)
        + biases_ref[0:1, 0:G])

    def pick_embedding(sel):
        # sel: int32, broadcastable to (B, G); returns emb_proj[sel_row] per batch row
        # via a VPU select-accumulate (tree-summed) — no MXU on the critical path.
        terms = [jnp.where(sel == v, emb_proj_ref[v:v + 1, :], 0.0) for v in range(V)]
        while len(terms) > 1:
            nxt = [terms[i] + terms[i + 1] for i in range(0, len(terms) - 1, 2)]
            if len(terms) % 2:
                nxt.append(terms[-1])
            terms = nxt
        return terms[0]                                   # (B, G)

    ein0 = pick_embedding(idx_ref[...])                   # (B, G)
    h0 = jnp.zeros((B, HP), jnp.float32)

    def step(t, h, ein):
        # [r | z | n] gate pre-activations at lane stride HP.
        gx = ein + ax_ref[pl.ds(t * B, B), :]                              # (B, G)
        gh = jnp.dot(h, w_h_ref[...], preferred_element_type=jnp.float32)  # (B, G)
        r = jax.nn.sigmoid(gx[:, 0:HP] + gh[:, 0:HP])
        z = jax.nn.sigmoid(gx[:, HP:2 * HP] + gh[:, HP:2 * HP])
        n = jnp.tanh(gx[:, 2 * HP:G] + r * (gh[:, 2 * HP:G] + b_hn))
        h_new = (1.0 - z) * n + z * h          # padded lanes remain exactly 0

        score = jnp.dot(h_new, w_heads_ref[:, 0:SP],
                        preferred_element_type=jnp.float32) + b_slot       # (B, SP)

        # Single-pass rolled (max, first-argmax) tournament over the lane axis.
        val, idx = score, iota_s
        shift = 1
        while shift < SP:
            v2 = pltpu.roll(val, shift=shift, axis=1)
            i2 = pltpu.roll(idx, shift=shift, axis=1)
            better = (v2 > val) | ((v2 == val) & (i2 < idx))
            val = jnp.where(better, v2, val)
            idx = jnp.where(better, i2, idx)
            shift *= 2
        # val: row max in every lane; idx: first-max index in every lane.

        # log-softmax output (off the recurrence critical path).
        shifted = score - val
        lse = jnp.log(jnp.sum(jnp.exp(shifted), axis=1, keepdims=True))
        slot_out_ref[t] = shifted - lse

        # Next-step embedded-input contribution: VPU select, not an MXU matmul.
        if HP == SP:
            sel = jnp.concatenate([idx, idx, idx], axis=1)     # (B, G), lanes equal
        else:
            sel = jnp.broadcast_to(idx[:, 0:1], (B, G))
        ein_new = pick_embedding(sel)
        return h_new, ein_new

    # Step 0 peeled: intent head uses the hidden state after the first GRU step.
    h1, ein1 = step(0, h0, ein0)
    intent_out_ref[...] = (
        jnp.dot(h1, w_heads_ref[:, SP:SP + IP], preferred_element_type=jnp.float32)
        + biases_ref[0:1, G + HP + SP:G + HP + SP + IP])

    lax.fori_loop(1, T, lambda t, c: step(t, *c), (h1, ein1), unroll=True)


def decoder_forward(kparams, input_ids, encoder_outputs):
    """input_ids: (B, 1) int32 ; encoder_outputs: (B, T, H) f32.
    Returns (slot_scores (B*T, slot_size), intent_score (B, intent_size))."""
    B, T, H = encoder_outputs.shape
    S = kparams["slot_size"]
    I = kparams["intent_size"]
    HP, SP, IP = kparams["HP"], kparams["SP"], kparams["IP"]
    G = 3 * HP

    # Layout plumbing only: time-major 2D slab, row t*B + b = encoder_outputs[b, t].
    aligns2d = jnp.transpose(encoder_outputs, (1, 0, 2)).reshape(T * B, H)

    in_specs = [pl.BlockSpec(memory_space=pltpu.MemorySpace.VMEM) for _ in range(7)]
    out_specs = [pl.BlockSpec(memory_space=pltpu.MemorySpace.VMEM) for _ in range(2)]

    slot_tbs, intent_p = pl.pallas_call(
        decoder_kernel,
        out_shape=[
            jax.ShapeDtypeStruct((T, B, SP), jnp.float32),
            jax.ShapeDtypeStruct((B, IP), jnp.float32),
        ],
        in_specs=in_specs,
        out_specs=out_specs,
        scratch_shapes=[pltpu.VMEM((T * B, G), jnp.float32)],
    )(input_ids.astype(jnp.int32), aligns2d,
      kparams["emb_proj"], kparams["w_a"], kparams["w_h"],
      kparams["w_heads"], kparams["biases"])

    slot_scores = jnp.transpose(slot_tbs, (1, 0, 2))[:, :, :S].reshape(B * T, S)
    intent_score = intent_p[:, :I]
    return slot_scores, intent_score


# ----------------------------------------------------------------------------
# Parameter construction (PyTorch-layout weights) and packing for the kernel.
# ----------------------------------------------------------------------------

def init_torch_params(key, slot_size, intent_size, E, H):
    """Deterministic synthetic weights with the same shapes as the torch module."""
    ks = jax.random.split(key, 7)
    emb = jax.random.uniform(ks[0], (slot_size, E), jnp.float32, -0.1, 0.1)
    w_ih = jax.random.normal(ks[1], (3 * H, E + H), jnp.float32) * 0.1   # GRU weight_ih_l0
    w_hh = jax.random.normal(ks[2], (3 * H, H), jnp.float32) * 0.1       # GRU weight_hh_l0
    b_ih = jax.random.normal(ks[3], (3 * H,), jnp.float32) * 0.1
    b_hh = jax.random.normal(ks[4], (3 * H,), jnp.float32) * 0.1
    w_slot = jax.random.normal(ks[5], (slot_size, H), jnp.float32) * 0.1
    b_slot = jnp.zeros((slot_size,), jnp.float32)
    w_int = jax.random.normal(ks[6], (intent_size, H), jnp.float32) * 0.1
    b_int = jnp.zeros((intent_size,), jnp.float32)
    return dict(emb=emb, w_ih=w_ih, w_hh=w_hh, b_ih=b_ih, b_hh=b_hh,
                w_slot=w_slot, b_slot=b_slot, w_int=w_int, b_int=b_int)


def pack_params(p, E, H):
    """Stack GRU gate weights (r, z, n), fold emb @ W_e and the foldable biases,
    lane-pad everything to 128, and consolidate small params into two arrays."""
    slot_size = p["w_slot"].shape[0]
    intent_size = p["w_int"].shape[0]
    HP = _round_up(H, 128)            # per-gate lane stride
    SP = _round_up(slot_size, 128)    # padded slot-head width
    IP = _round_up(intent_size, 128)  # padded intent-head width
    G = 3 * HP

    w_ih, w_hh, b_ih, b_hh = p["w_ih"], p["w_hh"], p["b_ih"], p["b_hh"]

    emb_proj = jnp.zeros((slot_size, G), jnp.float32)
    w_a = jnp.zeros((H, G), jnp.float32)
    w_h = jnp.zeros((HP, G), jnp.float32)
    biases = jnp.zeros((1, G + HP + SP + IP), jnp.float32)

    for g in range(3):                       # PyTorch gate order: r, z, n
        rows = slice(g * H, (g + 1) * H)
        lanes = slice(g * HP, g * HP + H)
        emb_proj = emb_proj.at[:, lanes].set(p["emb"] @ w_ih[rows, :E].T)
        w_a = w_a.at[:, lanes].set(w_ih[rows, E:].T)
        w_h = w_h.at[:H, lanes].set(w_hh[rows, :].T)
        # r/z: b_hh can be folded outside (r = sigmoid(i_r+b_ir+h_r+b_hr), same for z)
        # n : only b_in can be folded; b_hn stays inside the r*(...) term.
        b_gate = b_ih[rows] + (b_hh[rows] if g < 2 else 0.0)
        biases = biases.at[0, lanes].set(b_gate)

    biases = biases.at[0, G:G + H].set(b_hh[2 * H:3 * H])                   # b_hn
    biases = biases.at[0, G + HP:G + HP + SP].set(-1e30)                    # slot pad
    biases = biases.at[0, G + HP:G + HP + slot_size].set(p["b_slot"])       # b_slot
    biases = biases.at[0, G + HP + SP:G + HP + SP + intent_size].set(p["b_int"])

    w_heads = jnp.zeros((HP, SP + IP), jnp.float32)
    w_heads = w_heads.at[:H, :slot_size].set(p["w_slot"].T)
    w_heads = w_heads.at[:H, SP:SP + intent_size].set(p["w_int"].T)

    return dict(emb_proj=emb_proj, w_a=w_a, w_h=w_h, w_heads=w_heads, biases=biases,
                slot_size=slot_size, intent_size=intent_size, HP=HP, SP=SP, IP=IP)


def decoder_reference(p, input_ids, encoder_outputs):
    """Pure-JAX port of the PyTorch Decoder.forward (f32, HIGHEST dot precision)."""
    B, T, H = encoder_outputs.shape
    hp = functools.partial(jnp.dot, precision=lax.Precision.HIGHEST)
    w_ih, w_hh, b_ih, b_hh = p["w_ih"], p["w_hh"], p["b_ih"], p["b_hh"]

    def gru_cell(x, h):
        gi = hp(x, w_ih.T) + b_ih
        gh = hp(h, w_hh.T) + b_hh
        i_r, i_z, i_n = jnp.split(gi, 3, axis=1)
        h_r, h_z, h_n = jnp.split(gh, 3, axis=1)
        r = jax.nn.sigmoid(i_r + h_r)
        z = jax.nn.sigmoid(i_z + h_z)
        n = jnp.tanh(i_n + r * h_n)
        return (1.0 - z) * n + z * h

    embedded = p["emb"][input_ids[:, 0]]
    hidden = jnp.zeros((B, H), jnp.float32)
    aligns = jnp.transpose(encoder_outputs, (1, 0, 2))
    decode, intent = [], None
    for i in range(T):
        x = jnp.concatenate([embedded, aligns[i]], axis=1)
        hidden = gru_cell(x, hidden)
        if i == 0:
            intent = hp(hidden, p["w_int"].T) + p["b_int"]
        score = hp(hidden, p["w_slot"].T) + p["b_slot"]
        logsm = jax.nn.log_softmax(score, axis=1)
        decode.append(logsm)
        embedded = p["emb"][jnp.argmax(logsm, axis=1)]
    slot_scores = jnp.stack(decode, axis=1).reshape(B * T, -1)
    return slot_scores, intent


if __name__ == "__main__":
    slot_size, intent_size = 12, 6
    embedding_size, hidden_size = 16, 32
    B, T = 2, 8

    key = jax.random.PRNGKey(0)
    k_p, k_enc, k_in = jax.random.split(key, 3)
    tparams = init_torch_params(k_p, slot_size, intent_size, embedding_size, hidden_size)
    kparams = pack_params(tparams, embedding_size, hidden_size)
    encoder_outputs = jax.random.normal(k_enc, (B, T, hidden_size), jnp.float32)
    input_ids = jax.random.randint(k_in, (B, 1), 0, slot_size, dtype=jnp.int32)

    slot_scores, intent_score = decoder_forward(kparams, input_ids, encoder_outputs)
    jax.block_until_ready((slot_scores, intent_score))

    assert slot_scores.shape == (B * T, slot_size)
    assert intent_score.shape == (B, intent_size)
    assert bool(jnp.all(jnp.isfinite(slot_scores))) and bool(jnp.all(jnp.isfinite(intent_score)))

    ref_slot, ref_intent = decoder_reference(tparams, input_ids, encoder_outputs)
    assert jnp.allclose(slot_scores, ref_slot, atol=1e-3, rtol=1e-3), \
        float(jnp.max(jnp.abs(slot_scores - ref_slot)))
    assert jnp.allclose(intent_score, ref_intent, atol=1e-3, rtol=1e-3), \
        float(jnp.max(jnp.abs(intent_score - ref_intent)))
    print("KERNEL_OK")
</pallas_src>

<mosaic_0001>
module attributes {stable_mosaic.version = 11 : i64} {
  func.func @decoder_kernel(%arg0: memref<2x1xi32, #tpu.memory_space<vmem>>, %arg1: memref<16x32xf32, #tpu.memory_space<vmem>>, %arg2: memref<12x384xf32, #tpu.memory_space<vmem>>, %arg3: memref<32x384xf32, #tpu.memory_space<vmem>>, %arg4: memref<128x384xf32, #tpu.memory_space<vmem>>, %arg5: memref<128x256xf32, #tpu.memory_space<vmem>>, %arg6: memref<1x768xf32, #tpu.memory_space<vmem>>, %arg7: memref<8x2x128xf32, #tpu.memory_space<vmem>>, %arg8: memref<2x128xf32, #tpu.memory_space<vmem>>, %arg9: memref<16x384xf32, #tpu.memory_space<vmem>>) attributes {dimension_semantics = [], scalar_prefetch = 0 : i64, scratch_operands = 1 : i64, tpu.core_type = #tpu.core_type<tc>} {
    %0 = tpu.iota {dimensions = array<i32: 1>} : vector<2x128xi32>
    %c0 = arith.constant 0 : index
    %c384 = arith.constant 384 : index
    %1 = vector.load %arg6[%c0, %c384] : memref<1x768xf32, #tpu.memory_space<vmem>>, vector<1x128xf32>
    %c0_0 = arith.constant 0 : index
    %c512 = arith.constant 512 : index
    %2 = vector.load %arg6[%c0_0, %c512] : memref<1x768xf32, #tpu.memory_space<vmem>>, vector<1x128xf32>
    %c0_1 = arith.constant 0 : index
    %c0_2 = arith.constant 0 : index
    %3 = vector.load %arg1[%c0_1, %c0_2] : memref<16x32xf32, #tpu.memory_space<vmem>>, vector<16x32xf32>
    %c0_3 = arith.constant 0 : index
    %c0_4 = arith.constant 0 : index
    %4 = vector.load %arg3[%c0_3, %c0_4] : memref<32x384xf32, #tpu.memory_space<vmem>>, vector<32x384xf32>
    %cst = arith.constant dense<0.000000e+00> : vector<16x384xf32>
    %5 = tpu.matmul %3, %4, %cst {dimension_numbers = #tpu.dot_dimension_numbers<[1], [0], [0], [1], [0, 0, 1, 1], [], []>} : vector<16x32xf32>, vector<32x384xf32>, vector<16x384xf32> -> vector<16x384xf32>
    %c0_5 = arith.constant 0 : index
    %c0_6 = arith.constant 0 : index
    %6 = vector.load %arg6[%c0_5, %c0_6] : memref<1x768xf32, #tpu.memory_space<vmem>>, vector<1x384xf32>
    %7 = vector.broadcast %6 : vector<1x384xf32> to vector<16x384xf32>
    %8 = arith.addf %5, %7 : vector<16x384xf32>
    %c0_7 = arith.constant 0 : index
    %c0_8 = arith.constant 0 : index
    %9 = vector.load %arg9[%c0_7, %c0_8] : memref<16x384xf32, #tpu.memory_space<vmem>>, vector<16x384xf32>
    tpu.vector_store %arg9[%c0_7, %c0_8], %8 {strides = array<i32>} : memref<16x384xf32, #tpu.memory_space<vmem>>, vector<16x384xf32>,
    %c0_9 = arith.constant 0 : index
    %c0_10 = arith.constant 0 : index
    %10 = vector.load %arg0[%c0_9, %c0_10] : memref<2x1xi32, #tpu.memory_space<vmem>>, vector<2x1xi32>
    %c0_i32 = arith.constant 0 : i32
    %11 = vector.broadcast %c0_i32 : i32 to vector<2x1xi32>
    %12 = arith.cmpi eq, %10, %11 : vector<2x1xi32>
    %c0_11 = arith.constant 0 : index
    %c0_12 = arith.constant 0 : index
    %13 = vector.load %arg2[%c0_11, %c0_12] : memref<12x384xf32, #tpu.memory_space<vmem>>, vector<1x384xf32>
    %cst_13 = arith.constant 0.000000e+00 : f32
    %14 = vector.shape_cast %12 : vector<2x1xi1> to vector<2x1xi1>
    %15 = vector.broadcast %14 : vector<2x1xi1> to vector<2x384xi1>
    %16 = vector.shape_cast %13 : vector<1x384xf32> to vector<1x384xf32>
    %17 = vector.broadcast %16 : vector<1x384xf32> to vector<2x384xf32>
    %18 = vector.broadcast %cst_13 : f32 to vector<2x384xf32>
    %19 = arith.select %15, %17, %18 : vector<2x384xi1>, vector<2x384xf32>
    %c1_i32 = arith.constant 1 : i32
    %20 = vector.broadcast %c1_i32 : i32 to vector<2x1xi32>
    %21 = arith.cmpi eq, %10, %20 : vector<2x1xi32>
    %c1 = arith.constant 1 : index
    %c0_14 = arith.constant 0 : index
    %22 = vector.load %arg2[%c1, %c0_14] : memref<12x384xf32, #tpu.memory_space<vmem>>, vector<1x384xf32>
    %cst_15 = arith.constant 0.000000e+00 : f32
    %23 = vector.shape_cast %21 : vector<2x1xi1> to vector<2x1xi1>
    %24 = vector.broadcast %23 : vector<2x1xi1> to vector<2x384xi1>
    %25 = vector.shape_cast %22 : vector<1x384xf32> to vector<1x384xf32>
    %26 = vector.broadcast %25 : vector<1x384xf32> to vector<2x384xf32>
    %27 = vector.broadcast %cst_15 : f32 to vector<2x384xf32>
    %28 = arith.select %24, %26, %27 : vector<2x384xi1>, vector<2x384xf32>
    %c2_i32 = arith.constant 2 : i32
    %29 = vector.broadcast %c2_i32 : i32 to vector<2x1xi32>
    %30 = arith.cmpi eq, %10, %29 : vector<2x1xi32>
    %c2 = arith.constant 2 : index
    %c0_16 = arith.constant 0 : index
    %31 = vector.load %arg2[%c2, %c0_16] : memref<12x384xf32, #tpu.memory_space<vmem>>, vector<1x384xf32>
    %cst_17 = arith.constant 0.000000e+00 : f32
    %32 = vector.shape_cast %30 : vector<2x1xi1> to vector<2x1xi1>
    %33 = vector.broadcast %32 : vector<2x1xi1> to vector<2x384xi1>
    %34 = vector.shape_cast %31 : vector<1x384xf32> to vector<1x384xf32>
    %35 = vector.broadcast %34 : vector<1x384xf32> to vector<2x384xf32>
    %36 = vector.broadcast %cst_17 : f32 to vector<2x384xf32>
    %37 = arith.select %33, %35, %36 : vector<2x384xi1>, vector<2x384xf32>
    %c3_i32 = arith.constant 3 : i32
    %38 = vector.broadcast %c3_i32 : i32 to vector<2x1xi32>
    %39 = arith.cmpi eq, %10, %38 : vector<2x1xi32>
    %c3 = arith.constant 3 : index
    %c0_18 = arith.constant 0 : index
    %40 = vector.load %arg2[%c3, %c0_18] : memref<12x384xf32, #tpu.memory_space<vmem>>, vector<1x384xf32>
    %cst_19 = arith.constant 0.000000e+00 : f32
    %41 = vector.shape_cast %39 : vector<2x1xi1> to vector<2x1xi1>
    %42 = vector.broadcast %41 : vector<2x1xi1> to vector<2x384xi1>
    %43 = vector.shape_cast %40 : vector<1x384xf32> to vector<1x384xf32>
    %44 = vector.broadcast %43 : vector<1x384xf32> to vector<2x384xf32>
    %45 = vector.broadcast %cst_19 : f32 to vector<2x384xf32>
    %46 = arith.select %42, %44, %45 : vector<2x384xi1>, vector<2x384xf32>
    %c4_i32 = arith.constant 4 : i32
    %47 = vector.broadcast %c4_i32 : i32 to vector<2x1xi32>
    %48 = arith.cmpi eq, %10, %47 : vector<2x1xi32>
    %c4 = arith.constant 4 : index
    %c0_20 = arith.constant 0 : index
    %49 = vector.load %arg2[%c4, %c0_20] : memref<12x384xf32, #tpu.memory_space<vmem>>, vector<1x384xf32>
    %cst_21 = arith.constant 0.000000e+00 : f32
    %50 = vector.shape_cast %48 : vector<2x1xi1> to vector<2x1xi1>
    %51 = vector.broadcast %50 : vector<2x1xi1> to vector<2x384xi1>
    %52 = vector.shape_cast %49 : vector<1x384xf32> to vector<1x384xf32>
    %53 = vector.broadcast %52 : vector<1x384xf32> to vector<2x384xf32>
    %54 = vector.broadcast %cst_21 : f32 to vector<2x384xf32>
    %55 = arith.select %51, %53, %54 : vector<2x384xi1>, vector<2x384xf32>
    %c5_i32 = arith.constant 5 : i32
    %56 = vector.broadcast %c5_i32 : i32 to vector<2x1xi32>
    %57 = arith.cmpi eq, %10, %56 : vector<2x1xi32>
    %c5 = arith.constant 5 : index
    %c0_22 = arith.constant 0 : index
    %58 = vector.load %arg2[%c5, %c0_22] : memref<12x384xf32, #tpu.memory_space<vmem>>, vector<1x384xf32>
    %cst_23 = arith.constant 0.000000e+00 : f32
    %59 = vector.shape_cast %57 : vector<2x1xi1> to vector<2x1xi1>
    %60 = vector.broadcast %59 : vector<2x1xi1> to vector<2x384xi1>
    %61 = vector.shape_cast %58 : vector<1x384xf32> to vector<1x384xf32>
    %62 = vector.broadcast %61 : vector<1x384xf32> to vector<2x384xf32>
    %63 = vector.broadcast %cst_23 : f32 to vector<2x384xf32>
    %64 = arith.select %60, %62, %63 : vector<2x384xi1>, vector<2x384xf32>
    %c6_i32 = arith.constant 6 : i32
    %65 = vector.broadcast %c6_i32 : i32 to vector<2x1xi32>
    %66 = arith.cmpi eq, %10, %65 : vector<2x1xi32>
    %c6 = arith.constant 6 : index
    %c0_24 = arith.constant 0 : index
    %67 = vector.load %arg2[%c6, %c0_24] : memref<12x384xf32, #tpu.memory_space<vmem>>, vector<1x384xf32>
    %cst_25 = arith.constant 0.000000e+00 : f32
    %68 = vector.shape_cast %66 : vector<2x1xi1> to vector<2x1xi1>
    %69 = vector.broadcast %68 : vector<2x1xi1> to vector<2x384xi1>
    %70 = vector.shape_cast %67 : vector<1x384xf32> to vector<1x384xf32>
    %71 = vector.broadcast %70 : vector<1x384xf32> to vector<2x384xf32>
    %72 = vector.broadcast %cst_25 : f32 to vector<2x384xf32>
    %73 = arith.select %69, %71, %72 : vector<2x384xi1>, vector<2x384xf32>
    %c7_i32 = arith.constant 7 : i32
    %74 = vector.broadcast %c7_i32 : i32 to vector<2x1xi32>
    %75 = arith.cmpi eq, %10, %74 : vector<2x1xi32>
    %c7 = arith.constant 7 : index
    %c0_26 = arith.constant 0 : index
    %76 = vector.load %arg2[%c7, %c0_26] : memref<12x384xf32, #tpu.memory_space<vmem>>, vector<1x384xf32>
    %cst_27 = arith.constant 0.000000e+00 : f32
    %77 = vector.shape_cast %75 : vector<2x1xi1> to vector<2x1xi1>
    %78 = vector.broadcast %77 : vector<2x1xi1> to vector<2x384xi1>
    %79 = vector.shape_cast %76 : vector<1x384xf32> to vector<1x384xf32>
    %80 = vector.broadcast %79 : vector<1x384xf32> to vector<2x384xf32>
    %81 = vector.broadcast %cst_27 : f32 to vector<2x384xf32>
    %82 = arith.select %78, %80, %81 : vector<2x384xi1>, vector<2x384xf32>
    %c8_i32 = arith.constant 8 : i32
    %83 = vector.broadcast %c8_i32 : i32 to vector<2x1xi32>
    %84 = arith.cmpi eq, %10, %83 : vector<2x1xi32>
    %c8 = arith.constant 8 : index
    %c0_28 = arith.constant 0 : index
    %85 = vector.load %arg2[%c8, %c0_28] : memref<12x384xf32, #tpu.memory_space<vmem>>, vector<1x384xf32>
    %cst_29 = arith.constant 0.000000e+00 : f32
    %86 = vector.shape_cast %84 : vector<2x1xi1> to vector<2x1xi1>
    %87 = vector.broadcast %86 : vector<2x1xi1> to vector<2x384xi1>
    %88 = vector.shape_cast %85 : vector<1x384xf32> to vector<1x384xf32>
    %89 = vector.broadcast %88 : vector<1x384xf32> to vector<2x384xf32>
    %90 = vector.broadcast %cst_29 : f32 to vector<2x384xf32>
    %91 = arith.select %87, %89, %90 : vector<2x384xi1>, vector<2x384xf32>
    %c9_i32 = arith.constant 9 : i32
    %92 = vector.broadcast %c9_i32 : i32 to vector<2x1xi32>
    %93 = arith.cmpi eq, %10, %92 : vector<2x1xi32>
    %c9 = arith.constant 9 : index
    %c0_30 = arith.constant 0 : index
    %94 = vector.load %arg2[%c9, %c0_30] : memref<12x384xf32, #tpu.memory_space<vmem>>, vector<1x384xf32>
    %cst_31 = arith.constant 0.000000e+00 : f32
    %95 = vector.shape_cast %93 : vector<2x1xi1> to vector<2x1xi1>
    %96 = vector.broadcast %95 : vector<2x1xi1> to vector<2x384xi1>
    %97 = vector.shape_cast %94 : vector<1x384xf32> to vector<1x384xf32>
    %98 = vector.broadcast %97 : vector<1x384xf32> to vector<2x384xf32>
    %99 = vector.broadcast %cst_31 : f32 to vector<2x384xf32>
    %100 = arith.select %96, %98, %99 : vector<2x384xi1>, vector<2x384xf32>
    %c10_i32 = arith.constant 10 : i32
    %101 = vector.broadcast %c10_i32 : i32 to vector<2x1xi32>
    %102 = arith.cmpi eq, %10, %101 : vector<2x1xi32>
    %c10 = arith.constant 10 : index
    %c0_32 = arith.constant 0 : index
    %103 = vector.load %arg2[%c10, %c0_32] : memref<12x384xf32, #tpu.memory_space<vmem>>, vector<1x384xf32>
    %cst_33 = arith.constant 0.000000e+00 : f32
    %104 = vector.shape_cast %102 : vector<2x1xi1> to vector<2x1xi1>
    %105 = vector.broadcast %104 : vector<2x1xi1> to vector<2x384xi1>
    %106 = vector.shape_cast %103 : vector<1x384xf32> to vector<1x384xf32>
    %107 = vector.broadcast %106 : vector<1x384xf32> to vector<2x384xf32>
    %108 = vector.broadcast %cst_33 : f32 to vector<2x384xf32>
    %109 = arith.select %105, %107, %108 : vector<2x384xi1>, vector<2x384xf32>
    %c11_i32 = arith.constant 11 : i32
    %110 = vector.broadcast %c11_i32 : i32 to vector<2x1xi32>
    %111 = arith.cmpi eq, %10, %110 : vector<2x1xi32>
    %c11 = arith.constant 11 : index
    %c0_34 = arith.constant 0 : index
    %112 = vector.load %arg2[%c11, %c0_34] : memref<12x384xf32, #tpu.memory_space<vmem>>, vector<1x384xf32>
    %cst_35 = arith.constant 0.000000e+00 : f32
    %113 = vector.shape_cast %111 : vector<2x1xi1> to vector<2x1xi1>
    %114 = vector.broadcast %113 : vector<2x1xi1> to vector<2x384xi1>
    %115 = vector.shape_cast %112 : vector<1x384xf32> to vector<1x384xf32>
    %116 = vector.broadcast %115 : vector<1x384xf32> to vector<2x384xf32>
    %117 = vector.broadcast %cst_35 : f32 to vector<2x384xf32>
    %118 = arith.select %114, %116, %117 : vector<2x384xi1>, vector<2x384xf32>
    %119 = arith.addf %19, %28 : vector<2x384xf32>
    %120 = arith.addf %37, %46 : vector<2x384xf32>
    %121 = arith.addf %55, %64 : vector<2x384xf32>
    %122 = arith.addf %73, %82 : vector<2x384xf32>
    %123 = arith.addf %91, %100 : vector<2x384xf32>
    %124 = arith.addf %109, %118 : vector<2x384xf32>
    %125 = arith.addf %119, %120 : vector<2x384xf32>
    %126 = arith.addf %121, %122 : vector<2x384xf32>
    %127 = arith.addf %123, %124 : vector<2x384xf32>
    %128 = arith.addf %125, %126 : vector<2x384xf32>
    %129 = arith.addf %128, %127 : vector<2x384xf32>
    %cst_36 = arith.constant 0.000000e+00 : f32
    %130 = vector.broadcast %cst_36 : f32 to vector<2x128xf32>
    %c0_37 = arith.constant 0 : index
    %c0_38 = arith.constant 0 : index
    %131 = vector.load %arg9[%c0_37, %c0_38] : memref<16x384xf32, #tpu.memory_space<vmem>>, vector<2x384xf32>
    %132 = arith.addf %129, %131 : vector<2x384xf32>
    %c0_39 = arith.constant 0 : index
    %c0_40 = arith.constant 0 : index
    %133 = vector.load %arg4[%c0_39, %c0_40] : memref<128x384xf32, #tpu.memory_space<vmem>>, vector<128x384xf32>
    %cst_41 = arith.constant dense<0.000000e+00> : vector<2x384xf32>
    %134 = tpu.matmul %130, %133, %cst_41 {dimension_numbers = #tpu.dot_dimension_numbers<[1], [0], [0], [1], [0, 0, 1, 1], [], []>} : vector<2x128xf32>, vector<128x384xf32>, vector<2x384xf32> -> vector<2x384xf32>
    %135 = vector.extract_strided_slice %132 {offsets = [0, 0], sizes = [2, 128], strides = [1, 1]} : vector<2x384xf32> to vector<2x128xf32>
    %136 = vector.extract_strided_slice %134 {offsets = [0, 0], sizes = [2, 128], strides = [1, 1]} : vector<2x384xf32> to vector<2x128xf32>
    %137 = arith.addf %135, %136 : vector<2x128xf32>
    %138 = arith.negf %137 : vector<2x128xf32>
    %139 = math.exp %138 : vector<2x128xf32>
    %cst_42 = arith.constant 1.000000e+00 : f32
    %140 = vector.broadcast %cst_42 : f32 to vector<2x128xf32>
    %141 = arith.addf %140, %139 : vector<2x128xf32>
    %142 = arith.divf %140, %141 : vector<2x128xf32>
    %143 = vector.extract_strided_slice %132 {offsets = [0, 128], sizes = [2, 128], strides = [1, 1]} : vector<2x384xf32> to vector<2x128xf32>
    %144 = vector.extract_strided_slice %134 {offsets = [0, 128], sizes = [2, 128], strides = [1, 1]} : vector<2x384xf32> to vector<2x128xf32>
    %145 = arith.addf %143, %144 : vector<2x128xf32>
    %146 = arith.negf %145 : vector<2x128xf32>
    %147 = math.exp %146 : vector<2x128xf32>
    %cst_43 = arith.constant 1.000000e+00 : f32
    %148 = vector.broadcast %cst_43 : f32 to vector<2x128xf32>
    %149 = arith.addf %148, %147 : vector<2x128xf32>
    %150 = arith.divf %148, %149 : vector<2x128xf32>
    %151 = vector.extract_strided_slice %132 {offsets = [0, 256], sizes = [2, 128], strides = [1, 1]} : vector<2x384xf32> to vector<2x128xf32>
    %152 = vector.extract_strided_slice %134 {offsets = [0, 256], sizes = [2, 128], strides = [1, 1]} : vector<2x384xf32> to vector<2x128xf32>
    %153 = vector.broadcast %1 : vector<1x128xf32> to vector<2x128xf32>
    %154 = arith.addf %152, %153 : vector<2x128xf32>
    %155 = arith.mulf %142, %154 : vector<2x128xf32>
    %156 = arith.addf %151, %155 : vector<2x128xf32>
    %157 = math.tanh %156 : vector<2x128xf32>
    %cst_44 = arith.constant 1.000000e+00 : f32
    %158 = vector.broadcast %cst_44 : f32 to vector<2x128xf32>
    %159 = arith.subf %158, %150 : vector<2x128xf32>
    %160 = arith.mulf %159, %157 : vector<2x128xf32>
    %161 = arith.mulf %150, %130 : vector<2x128xf32>
    %162 = arith.addf %160, %161 : vector<2x128xf32>
    %c0_45 = arith.constant 0 : index
    %c0_46 = arith.constant 0 : index
    %163 = vector.load %arg5[%c0_45, %c0_46] : memref<128x256xf32, #tpu.memory_space<vmem>>, vector<128x128xf32>
    %cst_47 = arith.constant dense<0.000000e+00> : vector<2x128xf32>
    %164 = tpu.matmul %162, %163, %cst_47 {dimension_numbers = #tpu.dot_dimension_numbers<[1], [0], [0], [1], [0, 0, 1, 1], [], []>} : vector<2x128xf32>, vector<128x128xf32>, vector<2x128xf32> -> vector<2x128xf32>
    %165 = vector.broadcast %2 : vector<1x128xf32> to vector<2x128xf32>
    %166 = arith.addf %164, %165 : vector<2x128xf32>
    %c1_i32_48 = arith.constant 1 : i32
    %167 = tpu.dynamic_rotate %166 by %c1_i32_48 dim 1 : vector<2x128xf32>, i32 -> vector<2x128xf32>
    %c1_i32_49 = arith.constant 1 : i32
    %168 = tpu.dynamic_rotate %0 by %c1_i32_49 dim 1 : vector<2x128xi32>, i32 -> vector<2x128xi32>
    %169 = arith.cmpf ogt, %167, %166 : vector<2x128xf32>
    %170 = arith.cmpf oeq, %167, %166 : vector<2x128xf32>
    %171 = arith.cmpi slt, %168, %0 : vector<2x128xi32>
    %172 = arith.andi %170, %171 : vector<2x128xi1>
    %173 = arith.ori %169, %172 : vector<2x128xi1>
    %174 = arith.select %173, %167, %166 : vector<2x128xi1>, vector<2x128xf32>
    %175 = arith.select %173, %168, %0 : vector<2x128xi1>, vector<2x128xi32>
    %c2_i32_50 = arith.constant 2 : i32
    %176 = tpu.dynamic_rotate %174 by %c2_i32_50 dim 1 : vector<2x128xf32>, i32 -> vector<2x128xf32>
    %c2_i32_51 = arith.constant 2 : i32
    %177 = tpu.dynamic_rotate %175 by %c2_i32_51 dim 1 : vector<2x128xi32>, i32 -> vector<2x128xi32>
    %178 = arith.cmpf ogt, %176, %174 : vector<2x128xf32>
    %179 = arith.cmpf oeq, %176, %174 : vector<2x128xf32>
    %180 = arith.cmpi slt, %177, %175 : vector<2x128xi32>
    %181 = arith.andi %179, %180 : vector<2x128xi1>
    %182 = arith.ori %178, %181 : vector<2x128xi1>
    %183 = arith.select %182, %176, %174 : vector<2x128xi1>, vector<2x128xf32>
    %184 = arith.select %182, %177, %175 : vector<2x128xi1>, vector<2x128xi32>
    %c4_i32_52 = arith.constant 4 : i32
    %185 = tpu.dynamic_rotate %183 by %c4_i32_52 dim 1 : vector<2x128xf32>, i32 -> vector<2x128xf32>
    %c4_i32_53 = arith.constant 4 : i32
    %186 = tpu.dynamic_rotate %184 by %c4_i32_53 dim 1 : vector<2x128xi32>, i32 -> vector<2x128xi32>
    %187 = arith.cmpf ogt, %185, %183 : vector<2x128xf32>
    %188 = arith.cmpf oeq, %185, %183 : vector<2x128xf32>
    %189 = arith.cmpi slt, %186, %184 : vector<2x128xi32>
    %190 = arith.andi %188, %189 : vector<2x128xi1>
    %191 = arith.ori %187, %190 : vector<2x128xi1>
    %192 = arith.select %191, %185, %183 : vector<2x128xi1>, vector<2x128xf32>
    %193 = arith.select %191, %186, %184 : vector<2x128xi1>, vector<2x128xi32>
    %c8_i32_54 = arith.constant 8 : i32
    %194 = tpu.dynamic_rotate %192 by %c8_i32_54 dim 1 : vector<2x128xf32>, i32 -> vector<2x128xf32>
    %c8_i32_55 = arith.constant 8 : i32
    %195 = tpu.dynamic_rotate %193 by %c8_i32_55 dim 1 : vector<2x128xi32>, i32 -> vector<2x128xi32>
    %196 = arith.cmpf ogt, %194, %192 : vector<2x128xf32>
    %197 = arith.cmpf oeq, %194, %192 : vector<2x128xf32>
    %198 = arith.cmpi slt, %195, %193 : vector<2x128xi32>
    %199 = arith.andi %197, %198 : vector<2x128xi1>
    %200 = arith.ori %196, %199 : vector<2x128xi1>
    %201 = arith.select %200, %194, %192 : vector<2x128xi1>, vector<2x128xf32>
    %202 = arith.select %200, %195, %193 : vector<2x128xi1>, vector<2x128xi32>
    %c16_i32 = arith.constant 16 : i32
    %203 = tpu.dynamic_rotate %201 by %c16_i32 dim 1 : vector<2x128xf32>, i32 -> vector<2x128xf32>
    %c16_i32_56 = arith.constant 16 : i32
    %204 = tpu.dynamic_rotate %202 by %c16_i32_56 dim 1 : vector<2x128xi32>, i32 -> vector<2x128xi32>
    %205 = arith.cmpf ogt, %203, %201 : vector<2x128xf32>
    %206 = arith.cmpf oeq, %203, %201 : vector<2x128xf32>
    %207 = arith.cmpi slt, %204, %202 : vector<2x128xi32>
    %208 = arith.andi %206, %207 : vector<2x128xi1>
    %209 = arith.ori %205, %208 : vector<2x128xi1>
    %210 = arith.select %209, %203, %201 : vector<2x128xi1>, vector<2x128xf32>
    %211 = arith.select %209, %204, %202 : vector<2x128xi1>, vector<2x128xi32>
    %c32_i32 = arith.constant 32 : i32
    %212 = tpu.dynamic_rotate %210 by %c32_i32 dim 1 : vector<2x128xf32>, i32 -> vector<2x128xf32>
    %c32_i32_57 = arith.constant 32 : i32
    %213 = tpu.dynamic_rotate %211 by %c32_i32_57 dim 1 : vector<2x128xi32>, i32 -> vector<2x128xi32>
    %214 = arith.cmpf ogt, %212, %210 : vector<2x128xf32>
    %215 = arith.cmpf oeq, %212, %210 : vector<2x128xf32>
    %216 = arith.cmpi slt, %213, %211 : vector<2x128xi32>
    %217 = arith.andi %215, %216 : vector<2x128xi1>
    %218 = arith.ori %214, %217 : vector<2x128xi1>
    %219 = arith.select %218, %212, %210 : vector<2x128xi1>, vector<2x128xf32>
    %220 = arith.select %218, %213, %211 : vector<2x128xi1>, vector<2x128xi32>
    %c64_i32 = arith.constant 64 : i32
    %221 = tpu.dynamic_rotate %219 by %c64_i32 dim 1 : vector<2x128xf32>, i32 -> vector<2x128xf32>
    %c64_i32_58 = arith.constant 64 : i32
    %222 = tpu.dynamic_rotate %220 by %c64_i32_58 dim 1 : vector<2x128xi32>, i32 -> vector<2x128xi32>
    %223 = arith.cmpf ogt, %221, %219 : vector<2x128xf32>
    %224 = arith.cmpf oeq, %221, %219 : vector<2x128xf32>
    %225 = arith.cmpi slt, %222, %220 : vector<2x128xi32>
    %226 = arith.andi %224, %225 : vector<2x128xi1>
    %227 = arith.ori %223, %226 : vector<2x128xi1>
    %228 = arith.select %227, %221, %219 : vector<2x128xi1>, vector<2x128xf32>
    %229 = arith.select %227, %222, %220 : vector<2x128xi1>, vector<2x128xi32>
    %230 = arith.subf %166, %228 : vector<2x128xf32>
    %231 = math.exp %230 : vector<2x128xf32>
    %cst_59 = arith.constant dense<0.000000e+00> : vector<2xf32>
    %232 = vector.multi_reduction <add>, %231, %cst_59 [1] : vector<2x128xf32> to vector<2xf32>
    %233 = vector.shape_cast %232 : vector<2xf32> to vector<2x1xf32>
    %234 = math.log %233 : vector<2x1xf32>
    %235 = vector.broadcast %234 : vector<2x1xf32> to vector<2x128xf32>
    %236 = arith.subf %230, %235 : vector<2x128xf32>
    %c0_60 = arith.constant 0 : index
    %c0_61 = arith.constant 0 : index
    %c0_62 = arith.constant 0 : index
    %237 = vector.load %arg7[%c0_60, %c0_61, %c0_62] : memref<8x2x128xf32, #tpu.memory_space<vmem>>, vector<1x2x128xf32>
    %238 = vector.shape_cast %237 : vector<1x2x128xf32> to vector<2x128xf32>
    %239 = vector.shape_cast %236 : vector<2x128xf32> to vector<1x2x128xf32>
    tpu.vector_store %arg7[%c0_60, %c0_61, %c0_62], %239 {strides = array<i32>} : memref<8x2x128xf32, #tpu.memory_space<vmem>>, vector<1x2x128xf32>,
    %240 = tpu.concatenate %229, %229, %229 in 1 : vector<2x128xi32>, vector<2x128xi32>, vector<2x128xi32> -> vector<2x384xi32>
    %c0_i32_63 = arith.constant 0 : i32
    %241 = vector.broadcast %c0_i32_63 : i32 to vector<2x384xi32>
    %242 = arith.cmpi eq, %240, %241 : vector<2x384xi32>
    %c0_64 = arith.constant 0 : index
    %c0_65 = arith.constant 0 : index
    %243 = vector.load %arg2[%c0_64, %c0_65] : memref<12x384xf32, #tpu.memory_space<vmem>>, vector<1x384xf32>
    %cst_66 = arith.constant 0.000000e+00 : f32
    %244 = vector.shape_cast %243 : vector<1x384xf32> to vector<1x384xf32>
    %245 = vector.broadcast %244 : vector<1x384xf32> to vector<2x384xf32>
    %246 = vector.broadcast %cst_66 : f32 to vector<2x384xf32>
    %247 = arith.select %242, %245, %246 : vector<2x384xi1>, vector<2x384xf32>
    %c1_i32_67 = arith.constant 1 : i32
    %248 = vector.broadcast %c1_i32_67 : i32 to vector<2x384xi32>
    %249 = arith.cmpi eq, %240, %248 : vector<2x384xi32>
    %c1_68 = arith.constant 1 : index
    %c0_69 = arith.constant 0 : index
    %250 = vector.load %arg2[%c1_68, %c0_69] : memref<12x384xf32, #tpu.memory_space<vmem>>, vector<1x384xf32>
    %cst_70 = arith.constant 0.000000e+00 : f32
    %251 = vector.shape_cast %250 : vector<1x384xf32> to vector<1x384xf32>
    %252 = vector.broadcast %251 : vector<1x384xf32> to vector<2x384xf32>
    %253 = vector.broadcast %cst_70 : f32 to vector<2x384xf32>
    %254 = arith.select %249, %252, %253 : vector<2x384xi1>, vector<2x384xf32>
    %c2_i32_71 = arith.constant 2 : i32
    %255 = vector.broadcast %c2_i32_71 : i32 to vector<2x384xi32>
    %256 = arith.cmpi eq, %240, %255 : vector<2x384xi32>
    %c2_72 = arith.constant 2 : index
    %c0_73 = arith.constant 0 : index
    %257 = vector.load %arg2[%c2_72, %c0_73] : memref<12x384xf32, #tpu.memory_space<vmem>>, vector<1x384xf32>
    %cst_74 = arith.constant 0.000000e+00 : f32
    %258 = vector.shape_cast %257 : vector<1x384xf32> to vector<1x384xf32>
    %259 = vector.broadcast %258 : vector<1x384xf32> to vector<2x384xf32>
    %260 = vector.broadcast %cst_74 : f32 to vector<2x384xf32>
    %261 = arith.select %256, %259, %260 : vector<2x384xi1>, vector<2x384xf32>
    %c3_i32_75 = arith.constant 3 : i32
    %262 = vector.broadcast %c3_i32_75 : i32 to vector<2x384xi32>
    %263 = arith.cmpi eq, %240, %262 : vector<2x384xi32>
    %c3_76 = arith.constant 3 : index
    %c0_77 = arith.constant 0 : index
    %264 = vector.load %arg2[%c3_76, %c0_77] : memref<12x384xf32, #tpu.memory_space<vmem>>, vector<1x384xf32>
    %cst_78 = arith.constant 0.000000e+00 : f32
    %265 = vector.shape_cast %264 : vector<1x384xf32> to vector<1x384xf32>
    %266 = vector.broadcast %265 : vector<1x384xf32> to vector<2x384xf32>
    %267 = vector.broadcast %cst_78 : f32 to vector<2x384xf32>
    %268 = arith.select %263, %266, %267 : vector<2x384xi1>, vector<2x384xf32>
    %c4_i32_79 = arith.constant 4 : i32
    %269 = vector.broadcast %c4_i32_79 : i32 to vector<2x384xi32>
    %270 = arith.cmpi eq, %240, %269 : vector<2x384xi32>
    %c4_80 = arith.constant 4 : index
    %c0_81 = arith.constant 0 : index
    %271 = vector.load %arg2[%c4_80, %c0_81] : memref<12x384xf32, #tpu.memory_space<vmem>>, vector<1x384xf32>
    %cst_82 = arith.constant 0.000000e+00 : f32
    %272 = vector.shape_cast %271 : vector<1x384xf32> to vector<1x384xf32>
    %273 = vector.broadcast %272 : vector<1x384xf32> to vector<2x384xf32>
    %274 = vector.broadcast %cst_82 : f32 to vector<2x384xf32>
    %275 = arith.select %270, %273, %274 : vector<2x384xi1>, vector<2x384xf32>
    %c5_i32_83 = arith.constant 5 : i32
    %276 = vector.broadcast %c5_i32_83 : i32 to vector<2x384xi32>
    %277 = arith.cmpi eq, %240, %276 : vector<2x384xi32>
    %c5_84 = arith.constant 5 : index
    %c0_85 = arith.constant 0 : index
    %278 = vector.load %arg2[%c5_84, %c0_85] : memref<12x384xf32, #tpu.memory_space<vmem>>, vector<1x384xf32>
    %cst_86 = arith.constant 0.000000e+00 : f32
    %279 = vector.shape_cast %278 : vector<1x384xf32> to vector<1x384xf32>
    %280 = vector.broadcast %279 : vector<1x384xf32> to vector<2x384xf32>
    %281 = vector.broadcast %cst_86 : f32 to vector<2x384xf32>
    %282 = arith.select %277, %280, %281 : vector<2x384xi1>, vector<2x384xf32>
    %c6_i32_87 = arith.constant 6 : i32
    %283 = vector.broadcast %c6_i32_87 : i32 to vector<2x384xi32>
    %284 = arith.cmpi eq, %240, %283 : vector<2x384xi32>
    %c6_88 = arith.constant 6 : index
    %c0_89 = arith.constant 0 : index
    %285 = vector.load %arg2[%c6_88, %c0_89] : memref<12x384xf32, #tpu.memory_space<vmem>>, vector<1x384xf32>
    %cst_90 = arith.constant 0.000000e+00 : f32
    %286 = vector.shape_cast %285 : vector<1x384xf32> to vector<1x384xf32>
    %287 = vector.broadcast %286 : vector<1x384xf32> to vector<2x384xf32>
    %288 = vector.broadcast %cst_90 : f32 to vector<2x384xf32>
    %289 = arith.select %284, %287, %288 : vector<2x384xi1>, vector<2x384xf32>
    %c7_i32_91 = arith.constant 7 : i32
    %290 = vector.broadcast %c7_i32_91 : i32 to vector<2x384xi32>
    %291 = arith.cmpi eq, %240, %290 : vector<2x384xi32>
    %c7_92 = arith.constant 7 : index
    %c0_93 = arith.constant 0 : index
    %292 = vector.load %arg2[%c7_92, %c0_93] : memref<12x384xf32, #tpu.memory_space<vmem>>, vector<1x384xf32>
    %cst_94 = arith.constant 0.000000e+00 : f32
    %293 = vector.shape_cast %292 : vector<1x384xf32> to vector<1x384xf32>
    %294 = vector.broadcast %293 : vector<1x384xf32> to vector<2x384xf32>
    %295 = vector.broadcast %cst_94 : f32 to vector<2x384xf32>
    %296 = arith.select %291, %294, %295 : vector<2x384xi1>, vector<2x384xf32>
    %c8_i32_95 = arith.constant 8 : i32
    %297 = vector.broadcast %c8_i32_95 : i32 to vector<2x384xi32>
    %298 = arith.cmpi eq, %240, %297 : vector<2x384xi32>
    %c8_96 = arith.constant 8 : index
    %c0_97 = arith.constant 0 : index
    %299 = vector.load %arg2[%c8_96, %c0_97] : memref<12x384xf32, #tpu.memory_space<vmem>>, vector<1x384xf32>
    %cst_98 = arith.constant 0.000000e+00 : f32
    %300 = vector.shape_cast %299 : vector<1x384xf32> to vector<1x384xf32>
    %301 = vector.broadcast %300 : vector<1x384xf32> to vector<2x384xf32>
    %302 = vector.broadcast %cst_98 : f32 to vector<2x384xf32>
    %303 = arith.select %298, %301, %302 : vector<2x384xi1>, vector<2x384xf32>
    %c9_i32_99 = arith.constant 9 : i32
    %304 = vector.broadcast %c9_i32_99 : i32 to vector<2x384xi32>
    %305 = arith.cmpi eq, %240, %304 : vector<2x384xi32>
    %c9_100 = arith.constant 9 : index
    %c0_101 = arith.constant 0 : index
    %306 = vector.load %arg2[%c9_100, %c0_101] : memref<12x384xf32, #tpu.memory_space<vmem>>, vector<1x384xf32>
    %cst_102 = arith.constant 0.000000e+00 : f32
    %307 = vector.shape_cast %306 : vector<1x384xf32> to vector<1x384xf32>
    %308 = vector.broadcast %307 : vector<1x384xf32> to vector<2x384xf32>
    %309 = vector.broadcast %cst_102 : f32 to vector<2x384xf32>
    %310 = arith.select %305, %308, %309 : vector<2x384xi1>, vector<2x384xf32>
    %c10_i32_103 = arith.constant 10 : i32
    %311 = vector.broadcast %c10_i32_103 : i32 to vector<2x384xi32>
    %312 = arith.cmpi eq, %240, %311 : vector<2x384xi32>
    %c10_104 = arith.constant 10 : index
    %c0_105 = arith.constant 0 : index
    %313 = vector.load %arg2[%c10_104, %c0_105] : memref<12x384xf32, #tpu.memory_space<vmem>>, vector<1x384xf32>
    %cst_106 = arith.constant 0.000000e+00 : f32
    %314 = vector.shape_cast %313 : vector<1x384xf32> to vector<1x384xf32>
    %315 = vector.broadcast %314 : vector<1x384xf32> to vector<2x384xf32>
    %316 = vector.broadcast %cst_106 : f32 to vector<2x384xf32>
    %317 = arith.select %312, %315, %316 : vector<2x384xi1>, vector<2x384xf32>
    %c11_i32_107 = arith.constant 11 : i32
    %318 = vector.broadcast %c11_i32_107 : i32 to vector<2x384xi32>
    %319 = arith.cmpi eq, %240, %318 : vector<2x384xi32>
    %c11_108 = arith.constant 11 : index
    %c0_109 = arith.constant 0 : index
    %320 = vector.load %arg2[%c11_108, %c0_109] : memref<12x384xf32, #tpu.memory_space<vmem>>, vector<1x384xf32>
    %cst_110 = arith.constant 0.000000e+00 : f32
    %321 = vector.shape_cast %320 : vector<1x384xf32> to vector<1x384xf32>
    %322 = vector.broadcast %321 : vector<1x384xf32> to vector<2x384xf32>
    %323 = vector.broadcast %cst_110 : f32 to vector<2x384xf32>
    %324 = arith.select %319, %322, %323 : vector<2x384xi1>, vector<2x384xf32>
    %325 = arith.addf %247, %254 : vector<2x384xf32>
    %326 = arith.addf %261, %268 : vector<2x384xf32>
    %327 = arith.addf %275, %282 : vector<2x384xf32>
    %328 = arith.addf %289, %296 : vector<2x384xf32>
    %329 = arith.addf %303, %310 : vector<2x384xf32>
    %330 = arith.addf %317, %324 : vector<2x384xf32>
    %331 = arith.addf %325, %326 : vector<2x384xf32>
    %332 = arith.addf %327, %328 : vector<2x384xf32>
    %333 = arith.addf %329, %330 : vector<2x384xf32>
    %334 = arith.addf %331, %332 : vector<2x384xf32>
    %335 = arith.addf %334, %333 : vector<2x384xf32>
    %c0_111 = arith.constant 0 : index
    %c128 = arith.constant 128 : index
    %336 = vector.load %arg5[%c0_111, %c128] : memref<128x256xf32, #tpu.memory_space<vmem>>, vector<128x128xf32>
    %cst_112 = arith.constant dense<0.000000e+00> : vector<2x128xf32>
    %337 = tpu.matmul %162, %336, %cst_112 {dimension_numbers = #tpu.dot_dimension_numbers<[1], [0], [0], [1], [0, 0, 1, 1], [], []>} : vector<2x128xf32>, vector<128x128xf32>, vector<2x128xf32> -> vector<2x128xf32>
    %c0_113 = arith.constant 0 : index
    %c640 = arith.constant 640 : index
    %338 = vector.load %arg6[%c0_113, %c640] : memref<1x768xf32, #tpu.memory_space<vmem>>, vector<1x128xf32>
    %339 = vector.broadcast %338 : vector<1x128xf32> to vector<2x128xf32>
    %340 = arith.addf %337, %339 : vector<2x128xf32>
    %c0_114 = arith.constant 0 : index
    %c0_115 = arith.constant 0 : index
    %341 = vector.load %arg8[%c0_114, %c0_115] : memref<2x128xf32, #tpu.memory_space<vmem>>, vector<2x128xf32>
    tpu.vector_store %arg8[%c0_114, %c0_115], %340 {strides = array<i32>} : memref<2x128xf32, #tpu.memory_space<vmem>>, vector<2x128xf32>,
    %c1_i32_116 = arith.constant 1 : i32
    %c2_i32_117 = arith.constant 2 : i32
    %342 = arith.muli %c1_i32_116, %c2_i32_117 : i32
    %343 = arith.index_cast %342 : i32 to index
    %c0_118 = arith.constant 0 : index
    %344 = vector.load %arg9[%343, %c0_118] : memref<16x384xf32, #tpu.memory_space<vmem>>, vector<2x384xf32>
    %345 = arith.addf %335, %344 : vector<2x384xf32>
    %c0_119 = arith.constant 0 : index
    %c0_120 = arith.constant 0 : index
    %346 = vector.load %arg4[%c0_119, %c0_120] : memref<128x384xf32, #tpu.memory_space<vmem>>, vector<128x384xf32>
    %cst_121 = arith.constant dense<0.000000e+00> : vector<2x384xf32>
    %347 = tpu.matmul %162, %346, %cst_121 {dimension_numbers = #tpu.dot_dimension_numbers<[1], [0], [0], [1], [0, 0, 1, 1], [], []>} : vector<2x128xf32>, vector<128x384xf32>, vector<2x384xf32> -> vector<2x384xf32>
    %348 = vector.extract_strided_slice %345 {offsets = [0, 0], sizes = [2, 128], strides = [1, 1]} : vector<2x384xf32> to vector<2x128xf32>
    %349 = vector.extract_strided_slice %347 {offsets = [0, 0], sizes = [2, 128], strides = [1, 1]} : vector<2x384xf32> to vector<2x128xf32>
    %350 = arith.addf %348, %349 : vector<2x128xf32>
    %351 = arith.negf %350 : vector<2x128xf32>
    %352 = math.exp %351 : vector<2x128xf32>
    %cst_122 = arith.constant 1.000000e+00 : f32
    %353 = vector.broadcast %cst_122 : f32 to vector<2x128xf32>
    %354 = arith.addf %353, %352 : vector<2x128xf32>
    %355 = arith.divf %353, %354 : vector<2x128xf32>
    %356 = vector.extract_strided_slice %345 {offsets = [0, 128], sizes = [2, 128], strides = [1, 1]} : vector<2x384xf32> to vector<2x128xf32>
    %357 = vector.extract_strided_slice %347 {offsets = [0, 128], sizes = [2, 128], strides = [1, 1]} : vector<2x384xf32> to vector<2x128xf32>
    %358 = arith.addf %356, %357 : vector<2x128xf32>
    %359 = arith.negf %358 : vector<2x128xf32>
    %360 = math.exp %359 : vector<2x128xf32>
    %cst_123 = arith.constant 1.000000e+00 : f32
    %361 = vector.broadcast %cst_123 : f32 to vector<2x128xf32>
    %362 = arith.addf %361, %360 : vector<2x128xf32>
    %363 = arith.divf %361, %362 : vector<2x128xf32>
    %364 = vector.extract_strided_slice %345 {offsets = [0, 256], sizes = [2, 128], strides = [1, 1]} : vector<2x384xf32> to vector<2x128xf32>
    %365 = vector.extract_strided_slice %347 {offsets = [0, 256], sizes = [2, 128], strides = [1, 1]} : vector<2x384xf32> to vector<2x128xf32>
    %366 = vector.broadcast %1 : vector<1x128xf32> to vector<2x128xf32>
    %367 = arith.addf %365, %366 : vector<2x128xf32>
    %368 = arith.mulf %355, %367 : vector<2x128xf32>
    %369 = arith.addf %364, %368 : vector<2x128xf32>
    %370 = math.tanh %369 : vector<2x128xf32>
    %cst_124 = arith.constant 1.000000e+00 : f32
    %371 = vector.broadcast %cst_124 : f32 to vector<2x128xf32>
    %372 = arith.subf %371, %363 : vector<2x128xf32>
    %373 = arith.mulf %372, %370 : vector<2x128xf32>
    %374 = arith.mulf %363, %162 : vector<2x128xf32>
    %375 = arith.addf %373, %374 : vector<2x128xf32>
    %c0_125 = arith.constant 0 : index
    %c0_126 = arith.constant 0 : index
    %376 = vector.load %arg5[%c0_125, %c0_126] : memref<128x256xf32, #tpu.memory_space<vmem>>, vector<128x128xf32>
    %cst_127 = arith.constant dense<0.000000e+00> : vector<2x128xf32>
    %377 = tpu.matmul %375, %376, %cst_127 {dimension_numbers = #tpu.dot_dimension_numbers<[1], [0], [0], [1], [0, 0, 1, 1], [], []>} : vector<2x128xf32>, vector<128x128xf32>, vector<2x128xf32> -> vector<2x128xf32>
    %378 = vector.broadcast %2 : vector<1x128xf32> to vector<2x128xf32>
    %379 = arith.addf %377, %378 : vector<2x128xf32>
    %c1_i32_128 = arith.constant 1 : i32
    %380 = tpu.dynamic_rotate %379 by %c1_i32_128 dim 1 : vector<2x128xf32>, i32 -> vector<2x128xf32>
    %c1_i32_129 = arith.constant 1 : i32
    %381 = tpu.dynamic_rotate %0 by %c1_i32_129 dim 1 : vector<2x128xi32>, i32 -> vector<2x128xi32>
    %382 = arith.cmpf ogt, %380, %379 : vector<2x128xf32>
    %383 = arith.cmpf oeq, %380, %379 : vector<2x128xf32>
    %384 = arith.cmpi slt, %381, %0 : vector<2x128xi32>
    %385 = arith.andi %383, %384 : vector<2x128xi1>
    %386 = arith.ori %382, %385 : vector<2x128xi1>
    %387 = arith.select %386, %380, %379 : vector<2x128xi1>, vector<2x128xf32>
    %388 = arith.select %386, %381, %0 : vector<2x128xi1>, vector<2x128xi32>
    %c2_i32_130 = arith.constant 2 : i32
    %389 = tpu.dynamic_rotate %387 by %c2_i32_130 dim 1 : vector<2x128xf32>, i32 -> vector<2x128xf32>
    %c2_i32_131 = arith.constant 2 : i32
    %390 = tpu.dynamic_rotate %388 by %c2_i32_131 dim 1 : vector<2x128xi32>, i32 -> vector<2x128xi32>
    %391 = arith.cmpf ogt, %389, %387 : vector<2x128xf32>
    %392 = arith.cmpf oeq, %389, %387 : vector<2x128xf32>
    %393 = arith.cmpi slt, %390, %388 : vector<2x128xi32>
    %394 = arith.andi %392, %393 : vector<2x128xi1>
    %395 = arith.ori %391, %394 : vector<2x128xi1>
    %396 = arith.select %395, %389, %387 : vector<2x128xi1>, vector<2x128xf32>
    %397 = arith.select %395, %390, %388 : vector<2x128xi1>, vector<2x128xi32>
    %c4_i32_132 = arith.constant 4 : i32
    %398 = tpu.dynamic_rotate %396 by %c4_i32_132 dim 1 : vector<2x128xf32>, i32 -> vector<2x128xf32>
    %c4_i32_133 = arith.constant 4 : i32
    %399 = tpu.dynamic_rotate %397 by %c4_i32_133 dim 1 : vector<2x128xi32>, i32 -> vector<2x128xi32>
    %400 = arith.cmpf ogt, %398, %396 : vector<2x128xf32>
    %401 = arith.cmpf oeq, %398, %396 : vector<2x128xf32>
    %402 = arith.cmpi slt, %399, %397 : vector<2x128xi32>
    %403 = arith.andi %401, %402 : vector<2x128xi1>
    %404 = arith.ori %400, %403 : vector<2x128xi1>
    %405 = arith.select %404, %398, %396 : vector<2x128xi1>, vector<2x128xf32>
    %406 = arith.select %404, %399, %397 : vector<2x128xi1>, vector<2x128xi32>
    %c8_i32_134 = arith.constant 8 : i32
    %407 = tpu.dynamic_rotate %405 by %c8_i32_134 dim 1 : vector<2x128xf32>, i32 -> vector<2x128xf32>
    %c8_i32_135 = arith.constant 8 : i32
    %408 = tpu.dynamic_rotate %406 by %c8_i32_135 dim 1 : vector<2x128xi32>, i32 -> vector<2x128xi32>
    %409 = arith.cmpf ogt, %407, %405 : vector<2x128xf32>
    %410 = arith.cmpf oeq, %407, %405 : vector<2x128xf32>
    %411 = arith.cmpi slt, %408, %406 : vector<2x128xi32>
    %412 = arith.andi %410, %411 : vector<2x128xi1>
    %413 = arith.ori %409, %412 : vector<2x128xi1>
    %414 = arith.select %413, %407, %405 : vector<2x128xi1>, vector<2x128xf32>
    %415 = arith.select %413, %408, %406 : vector<2x128xi1>, vector<2x128xi32>
    %c16_i32_136 = arith.constant 16 : i32
    %416 = tpu.dynamic_rotate %414 by %c16_i32_136 dim 1 : vector<2x128xf32>, i32 -> vector<2x128xf32>
    %c16_i32_137 = arith.constant 16 : i32
    %417 = tpu.dynamic_rotate %415 by %c16_i32_137 dim 1 : vector<2x128xi32>, i32 -> vector<2x128xi32>
    %418 = arith.cmpf ogt, %416, %414 : vector<2x128xf32>
    %419 = arith.cmpf oeq, %416, %414 : vector<2x128xf32>
    %420 = arith.cmpi slt, %417, %415 : vector<2x128xi32>
    %421 = arith.andi %419, %420 : vector<2x128xi1>
    %422 = arith.ori %418, %421 : vector<2x128xi1>
    %423 = arith.select %422, %416, %414 : vector<2x128xi1>, vector<2x128xf32>
    %424 = arith.select %422, %417, %415 : vector<2x128xi1>, vector<2x128xi32>
    %c32_i32_138 = arith.constant 32 : i32
    %425 = tpu.dynamic_rotate %423 by %c32_i32_138 dim 1 : vector<2x128xf32>, i32 -> vector<2x128xf32>
    %c32_i32_139 = arith.constant 32 : i32
    %426 = tpu.dynamic_rotate %424 by %c32_i32_139 dim 1 : vector<2x128xi32>, i32 -> vector<2x128xi32>
    %427 = arith.cmpf ogt, %425, %423 : vector<2x128xf32>
    %428 = arith.cmpf oeq, %425, %423 : vector<2x128xf32>
    %429 = arith.cmpi slt, %426, %424 : vector<2x128xi32>
    %430 = arith.andi %428, %429 : vector<2x128xi1>
    %431 = arith.ori %427, %430 : vector<2x128xi1>
    %432 = arith.select %431, %425, %423 : vector<2x128xi1>, vector<2x128xf32>
    %433 = arith.select %431, %426, %424 : vector<2x128xi1>, vector<2x128xi32>
    %c64_i32_140 = arith.constant 64 : i32
    %434 = tpu.dynamic_rotate %432 by %c64_i32_140 dim 1 : vector<2x128xf32>, i32 -> vector<2x128xf32>
    %c64_i32_141 = arith.constant 64 : i32
    %435 = tpu.dynamic_rotate %433 by %c64_i32_141 dim 1 : vector<2x128xi32>, i32 -> vector<2x128xi32>
    %436 = arith.cmpf ogt, %434, %432 : vector<2x128xf32>
    %437 = arith.cmpf oeq, %434, %432 : vector<2x128xf32>
    %438 = arith.cmpi slt, %435, %433 : vector<2x128xi32>
    %439 = arith.andi %437, %438 : vector<2x128xi1>
    %440 = arith.ori %436, %439 : vector<2x128xi1>
    %441 = arith.select %440, %434, %432 : vector<2x128xi1>, vector<2x128xf32>
    %442 = arith.select %440, %435, %433 : vector<2x128xi1>, vector<2x128xi32>
    %443 = arith.subf %379, %441 : vector<2x128xf32>
    %444 = math.exp %443 : vector<2x128xf32>
    %cst_142 = arith.constant dense<0.000000e+00> : vector<2xf32>
    %445 = vector.multi_reduction <add>, %444, %cst_142 [1] : vector<2x128xf32> to vector<2xf32>
    %446 = vector.shape_cast %445 : vector<2xf32> to vector<2x1xf32>
    %447 = math.log %446 : vector<2x1xf32>
    %448 = vector.broadcast %447 : vector<2x1xf32> to vector<2x128xf32>
    %449 = arith.subf %443, %448 : vector<2x128xf32>
    %450 = arith.index_cast %c1_i32_116 : i32 to index
    %c0_143 = arith.constant 0 : index
    %c0_144 = arith.constant 0 : index
    %451 = vector.load %arg7[%450, %c0_143, %c0_144] : memref<8x2x128xf32, #tpu.memory_space<vmem>>, vector<1x2x128xf32>
    %452 = vector.shape_cast %451 : vector<1x2x128xf32> to vector<2x128xf32>
    %453 = vector.shape_cast %449 : vector<2x128xf32> to vector<1x2x128xf32>
    tpu.vector_store %arg7[%450, %c0_143, %c0_144], %453 {strides = array<i32>} : memref<8x2x128xf32, #tpu.memory_space<vmem>>, vector<1x2x128xf32>,
    %454 = tpu.concatenate %442, %442, %442 in 1 : vector<2x128xi32>, vector<2x128xi32>, vector<2x128xi32> -> vector<2x384xi32>
    %c0_i32_145 = arith.constant 0 : i32
    %455 = vector.broadcast %c0_i32_145 : i32 to vector<2x384xi32>
    %456 = arith.cmpi eq, %454, %455 : vector<2x384xi32>
    %c0_146 = arith.constant 0 : index
    %c0_147 = arith.constant 0 : index
    %457 = vector.load %arg2[%c0_146, %c0_147] : memref<12x384xf32, #tpu.memory_space<vmem>>, vector<1x384xf32>
    %cst_148 = arith.constant 0.000000e+00 : f32
    %458 = vector.shape_cast %457 : vector<1x384xf32> to vector<1x384xf32>
    %459 = vector.broadcast %458 : vector<1x384xf32> to vector<2x384xf32>
    %460 = vector.broadcast %cst_148 : f32 to vector<2x384xf32>
    %461 = arith.select %456, %459, %460 : vector<2x384xi1>, vector<2x384xf32>
    %c1_i32_149 = arith.constant 1 : i32
    %462 = vector.broadcast %c1_i32_149 : i32 to vector<2x384xi32>
    %463 = arith.cmpi eq, %454, %462 : vector<2x384xi32>
    %c1_150 = arith.constant 1 : index
    %c0_151 = arith.constant 0 : index
    %464 = vector.load %arg2[%c1_150, %c0_151] : memref<12x384xf32, #tpu.memory_space<vmem>>, vector<1x384xf32>
    %cst_152 = arith.constant 0.000000e+00 : f32
    %465 = vector.shape_cast %464 : vector<1x384xf32> to vector<1x384xf32>
    %466 = vector.broadcast %465 : vector<1x384xf32> to vector<2x384xf32>
    %467 = vector.broadcast %cst_152 : f32 to vector<2x384xf32>
    %468 = arith.select %463, %466, %467 : vector<2x384xi1>, vector<2x384xf32>
    %c2_i32_153 = arith.constant 2 : i32
    %469 = vector.broadcast %c2_i32_153 : i32 to vector<2x384xi32>
    %470 = arith.cmpi eq, %454, %469 : vector<2x384xi32>
    %c2_154 = arith.constant 2 : index
    %c0_155 = arith.constant 0 : index
    %471 = vector.load %arg2[%c2_154, %c0_155] : memref<12x384xf32, #tpu.memory_space<vmem>>, vector<1x384xf32>
    %cst_156 = arith.constant 0.000000e+00 : f32
    %472 = vector.shape_cast %471 : vector<1x384xf32> to vector<1x384xf32>
    %473 = vector.broadcast %472 : vector<1x384xf32> to vector<2x384xf32>
    %474 = vector.broadcast %cst_156 : f32 to vector<2x384xf32>
    %475 = arith.select %470, %473, %474 : vector<2x384xi1>, vector<2x384xf32>
    %c3_i32_157 = arith.constant 3 : i32
    %476 = vector.broadcast %c3_i32_157 : i32 to vector<2x384xi32>
    %477 = arith.cmpi eq, %454, %476 : vector<2x384xi32>
    %c3_158 = arith.constant 3 : index
    %c0_159 = arith.constant 0 : index
    %478 = vector.load %arg2[%c3_158, %c0_159] : memref<12x384xf32, #tpu.memory_space<vmem>>, vector<1x384xf32>
    %cst_160 = arith.constant 0.000000e+00 : f32
    %479 = vector.shape_cast %478 : vector<1x384xf32> to vector<1x384xf32>
    %480 = vector.broadcast %479 : vector<1x384xf32> to vector<2x384xf32>
    %481 = vector.broadcast %cst_160 : f32 to vector<2x384xf32>
    %482 = arith.select %477, %480, %481 : vector<2x384xi1>, vector<2x384xf32>
    %c4_i32_161 = arith.constant 4 : i32
    %483 = vector.broadcast %c4_i32_161 : i32 to vector<2x384xi32>
    %484 = arith.cmpi eq, %454, %483 : vector<2x384xi32>
    %c4_162 = arith.constant 4 : index
    %c0_163 = arith.constant 0 : index
    %485 = vector.load %arg2[%c4_162, %c0_163] : memref<12x384xf32, #tpu.memory_space<vmem>>, vector<1x384xf32>
    %cst_164 = arith.constant 0.000000e+00 : f32
    %486 = vector.shape_cast %485 : vector<1x384xf32> to vector<1x384xf32>
    %487 = vector.broadcast %486 : vector<1x384xf32> to vector<2x384xf32>
    %488 = vector.broadcast %cst_164 : f32 to vector<2x384xf32>
    %489 = arith.select %484, %487, %488 : vector<2x384xi1>, vector<2x384xf32>
    %c5_i32_165 = arith.constant 5 : i32
    %490 = vector.broadcast %c5_i32_165 : i32 to vector<2x384xi32>
    %491 = arith.cmpi eq, %454, %490 : vector<2x384xi32>
    %c5_166 = arith.constant 5 : index
    %c0_167 = arith.constant 0 : index
    %492 = vector.load %arg2[%c5_166, %c0_167] : memref<12x384xf32, #tpu.memory_space<vmem>>, vector<1x384xf32>
    %cst_168 = arith.constant 0.000000e+00 : f32
    %493 = vector.shape_cast %492 : vector<1x384xf32> to vector<1x384xf32>
    %494 = vector.broadcast %493 : vector<1x384xf32> to vector<2x384xf32>
    %495 = vector.broadcast %cst_168 : f32 to vector<2x384xf32>
    %496 = arith.select %491, %494, %495 : vector<2x384xi1>, vector<2x384xf32>
    %c6_i32_169 = arith.constant 6 : i32
    %497 = vector.broadcast %c6_i32_169 : i32 to vector<2x384xi32>
    %498 = arith.cmpi eq, %454, %497 : vector<2x384xi32>
    %c6_170 = arith.constant 6 : index
    %c0_171 = arith.constant 0 : index
    %499 = vector.load %arg2[%c6_170, %c0_171] : memref<12x384xf32, #tpu.memory_space<vmem>>, vector<1x384xf32>
    %cst_172 = arith.constant 0.000000e+00 : f32
    %500 = vector.shape_cast %499 : vector<1x384xf32> to vector<1x384xf32>
    %501 = vector.broadcast %500 : vector<1x384xf32> to vector<2x384xf32>
    %502 = vector.broadcast %cst_172 : f32 to vector<2x384xf32>
    %503 = arith.select %498, %501, %502 : vector<2x384xi1>, vector<2x384xf32>
    %c7_i32_173 = arith.constant 7 : i32
    %504 = vector.broadcast %c7_i32_173 : i32 to vector<2x384xi32>
    %505 = arith.cmpi eq, %454, %504 : vector<2x384xi32>
    %c7_174 = arith.constant 7 : index
    %c0_175 = arith.constant 0 : index
    %506 = vector.load %arg2[%c7_174, %c0_175] : memref<12x384xf32, #tpu.memory_space<vmem>>, vector<1x384xf32>
    %cst_176 = arith.constant 0.000000e+00 : f32
    %507 = vector.shape_cast %506 : vector<1x384xf32> to vector<1x384xf32>
    %508 = vector.broadcast %507 : vector<1x384xf32> to vector<2x384xf32>
    %509 = vector.broadcast %cst_176 : f32 to vector<2x384xf32>
    %510 = arith.select %505, %508, %509 : vector<2x384xi1>, vector<2x384xf32>
    %c8_i32_177 = arith.constant 8 : i32
    %511 = vector.broadcast %c8_i32_177 : i32 to vector<2x384xi32>
    %512 = arith.cmpi eq, %454, %511 : vector<2x384xi32>
    %c8_178 = arith.constant 8 : index
    %c0_179 = arith.constant 0 : index
    %513 = vector.load %arg2[%c8_178, %c0_179] : memref<12x384xf32, #tpu.memory_space<vmem>>, vector<1x384xf32>
    %cst_180 = arith.constant 0.000000e+00 : f32
    %514 = vector.shape_cast %513 : vector<1x384xf32> to vector<1x384xf32>
    %515 = vector.broadcast %514 : vector<1x384xf32> to vector<2x384xf32>
    %516 = vector.broadcast %cst_180 : f32 to vector<2x384xf32>
    %517 = arith.select %512, %515, %516 : vector<2x384xi1>, vector<2x384xf32>
    %c9_i32_181 = arith.constant 9 : i32
    %518 = vector.broadcast %c9_i32_181 : i32 to vector<2x384xi32>
    %519 = arith.cmpi eq, %454, %518 : vector<2x384xi32>
    %c9_182 = arith.constant 9 : index
    %c0_183 = arith.constant 0 : index
    %520 = vector.load %arg2[%c9_182, %c0_183] : memref<12x384xf32, #tpu.memory_space<vmem>>, vector<1x384xf32>
    %cst_184 = arith.constant 0.000000e+00 : f32
    %521 = vector.shape_cast %520 : vector<1x384xf32> to vector<1x384xf32>
    %522 = vector.broadcast %521 : vector<1x384xf32> to vector<2x384xf32>
    %523 = vector.broadcast %cst_184 : f32 to vector<2x384xf32>
    %524 = arith.select %519, %522, %523 : vector<2x384xi1>, vector<2x384xf32>
    %c10_i32_185 = arith.constant 10 : i32
    %525 = vector.broadcast %c10_i32_185 : i32 to vector<2x384xi32>
    %526 = arith.cmpi eq, %454, %525 : vector<2x384xi32>
    %c10_186 = arith.constant 10 : index
    %c0_187 = arith.constant 0 : index
    %527 = vector.load %arg2[%c10_186, %c0_187] : memref<12x384xf32, #tpu.memory_space<vmem>>, vector<1x384xf32>
    %cst_188 = arith.constant 0.000000e+00 : f32
    %528 = vector.shape_cast %527 : vector<1x384xf32> to vector<1x384xf32>
    %529 = vector.broadcast %528 : vector<1x384xf32> to vector<2x384xf32>
    %530 = vector.broadcast %cst_188 : f32 to vector<2x384xf32>
    %531 = arith.select %526, %529, %530 : vector<2x384xi1>, vector<2x384xf32>
    %c11_i32_189 = arith.constant 11 : i32
    %532 = vector.broadcast %c11_i32_189 : i32 to vector<2x384xi32>
    %533 = arith.cmpi eq, %454, %532 : vector<2x384xi32>
    %c11_190 = arith.constant 11 : index
    %c0_191 = arith.constant 0 : index
    %534 = vector.load %arg2[%c11_190, %c0_191] : memref<12x384xf32, #tpu.memory_space<vmem>>, vector<1x384xf32>
    %cst_192 = arith.constant 0.000000e+00 : f32
    %535 = vector.shape_cast %534 : vector<1x384xf32> to vector<1x384xf32>
    %536 = vector.broadcast %535 : vector<1x384xf32> to vector<2x384xf32>
    %537 = vector.broadcast %cst_192 : f32 to vector<2x384xf32>
    %538 = arith.select %533, %536, %537 : vector<2x384xi1>, vector<2x384xf32>
    %539 = arith.addf %461, %468 : vector<2x384xf32>
    %540 = arith.addf %475, %482 : vector<2x384xf32>
    %541 = arith.addf %489, %496 : vector<2x384xf32>
    %542 = arith.addf %503, %510 : vector<2x384xf32>
    %543 = arith.addf %517, %524 : vector<2x384xf32>
    %544 = arith.addf %531, %538 : vector<2x384xf32>
    %545 = arith.addf %539, %540 : vector<2x384xf32>
    %546 = arith.addf %541, %542 : vector<2x384xf32>
    %547 = arith.addf %543, %544 : vector<2x384xf32>
    %548 = arith.addf %545, %546 : vector<2x384xf32>
    %549 = arith.addf %548, %547 : vector<2x384xf32>
    %c2_i32_193 = arith.constant 2 : i32
    %c2_i32_194 = arith.constant 2 : i32
    %550 = arith.muli %c2_i32_193, %c2_i32_194 : i32
    %551 = arith.index_cast %550 : i32 to index
    %c0_195 = arith.constant 0 : index
    %552 = vector.load %arg9[%551, %c0_195] : memref<16x384xf32, #tpu.memory_space<vmem>>, vector<2x384xf32>
    %553 = arith.addf %549, %552 : vector<2x384xf32>
    %c0_196 = arith.constant 0 : index
    %c0_197 = arith.constant 0 : index
    %554 = vector.load %arg4[%c0_196, %c0_197] : memref<128x384xf32, #tpu.memory_space<vmem>>, vector<128x384xf32>
    %cst_198 = arith.constant dense<0.000000e+00> : vector<2x384xf32>
    %555 = tpu.matmul %375, %554, %cst_198 {dimension_numbers = #tpu.dot_dimension_numbers<[1], [0], [0], [1], [0, 0, 1, 1], [], []>} : vector<2x128xf32>, vector<128x384xf32>, vector<2x384xf32> -> vector<2x384xf32>
    %556 = vector.extract_strided_slice %553 {offsets = [0, 0], sizes = [2, 128], strides = [1, 1]} : vector<2x384xf32> to vector<2x128xf32>
    %557 = vector.extract_strided_slice %555 {offsets = [0, 0], sizes = [2, 128], strides = [1, 1]} : vector<2x384xf32> to vector<2x128xf32>
    %558 = arith.addf %556, %557 : vector<2x128xf32>
    %559 = arith.negf %558 : vector<2x128xf32>
    %560 = math.exp %559 : vector<2x128xf32>
    %cst_199 = arith.constant 1.000000e+00 : f32
    %561 = vector.broadcast %cst_199 : f32 to vector<2x128xf32>
    %562 = arith.addf %561, %560 : vector<2x128xf32>
    %563 = arith.divf %561, %562 : vector<2x128xf32>
    %564 = vector.extract_strided_slice %553 {offsets = [0, 128], sizes = [2, 128], strides = [1, 1]} : vector<2x384xf32> to vector<2x128xf32>
    %565 = vector.extract_strided_slice %555 {offsets = [0, 128], sizes = [2, 128], strides = [1, 1]} : vector<2x384xf32> to vector<2x128xf32>
    %566 = arith.addf %564, %565 : vector<2x128xf32>
    %567 = arith.negf %566 : vector<2x128xf32>
    %568 = math.exp %567 : vector<2x128xf32>
    %cst_200 = arith.constant 1.000000e+00 : f32
    %569 = vector.broadcast %cst_200 : f32 to vector<2x128xf32>
    %570 = arith.addf %569, %568 : vector<2x128xf32>
    %571 = arith.divf %569, %570 : vector<2x128xf32>
    %572 = vector.extract_strided_slice %553 {offsets = [0, 256], sizes = [2, 128], strides = [1, 1]} : vector<2x384xf32> to vector<2x128xf32>
    %573 = vector.extract_strided_slice %555 {offsets = [0, 256], sizes = [2, 128], strides = [1, 1]} : vector<2x384xf32> to vector<2x128xf32>
    %574 = vector.broadcast %1 : vector<1x128xf32> to vector<2x128xf32>
    %575 = arith.addf %573, %574 : vector<2x128xf32>
    %576 = arith.mulf %563, %575 : vector<2x128xf32>
    %577 = arith.addf %572, %576 : vector<2x128xf32>
    %578 = math.tanh %577 : vector<2x128xf32>
    %cst_201 = arith.constant 1.000000e+00 : f32
    %579 = vector.broadcast %cst_201 : f32 to vector<2x128xf32>
    %580 = arith.subf %579, %571 : vector<2x128xf32>
    %581 = arith.mulf %580, %578 : vector<2x128xf32>
    %582 = arith.mulf %571, %375 : vector<2x128xf32>
    %583 = arith.addf %581, %582 : vector<2x128xf32>
    %c0_202 = arith.constant 0 : index
    %c0_203 = arith.constant 0 : index
    %584 = vector.load %arg5[%c0_202, %c0_203] : memref<128x256xf32, #tpu.memory_space<vmem>>, vector<128x128xf32>
    %cst_204 = arith.constant dense<0.000000e+00> : vector<2x128xf32>
    %585 = tpu.matmul %583, %584, %cst_204 {dimension_numbers = #tpu.dot_dimension_numbers<[1], [0], [0], [1], [0, 0, 1, 1], [], []>} : vector<2x128xf32>, vector<128x128xf32>, vector<2x128xf32> -> vector<2x128xf32>
    %586 = vector.broadcast %2 : vector<1x128xf32> to vector<2x128xf32>
    %587 = arith.addf %585, %586 : vector<2x128xf32>
    %c1_i32_205 = arith.constant 1 : i32
    %588 = tpu.dynamic_rotate %587 by %c1_i32_205 dim 1 : vector<2x128xf32>, i32 -> vector<2x128xf32>
    %c1_i32_206 = arith.constant 1 : i32
    %589 = tpu.dynamic_rotate %0 by %c1_i32_206 dim 1 : vector<2x128xi32>, i32 -> vector<2x128xi32>
    %590 = arith.cmpf ogt, %588, %587 : vector<2x128xf32>
    %591 = arith.cmpf oeq, %588, %587 : vector<2x128xf32>
    %592 = arith.cmpi slt, %589, %0 : vector<2x128xi32>
    %593 = arith.andi %591, %592 : vector<2x128xi1>
    %594 = arith.ori %590, %593 : vector<2x128xi1>
    %595 = arith.select %594, %588, %587 : vector<2x128xi1>, vector<2x128xf32>
    %596 = arith.select %594, %589, %0 : vector<2x128xi1>, vector<2x128xi32>
    %c2_i32_207 = arith.constant 2 : i32
    %597 = tpu.dynamic_rotate %595 by %c2_i32_207 dim 1 : vector<2x128xf32>, i32 -> vector<2x128xf32>
    %c2_i32_208 = arith.constant 2 : i32
    %598 = tpu.dynamic_rotate %596 by %c2_i32_208 dim 1 : vector<2x128xi32>, i32 -> vector<2x128xi32>
    %599 = arith.cmpf ogt, %597, %595 : vector<2x128xf32>
    %600 = arith.cmpf oeq, %597, %595 : vector<2x128xf32>
    %601 = arith.cmpi slt, %598, %596 : vector<2x128xi32>
    %602 = arith.andi %600, %601 : vector<2x128xi1>
    %603 = arith.ori %599, %602 : vector<2x128xi1>
    %604 = arith.select %603, %597, %595 : vector<2x128xi1>, vector<2x128xf32>
    %605 = arith.select %603, %598, %596 : vector<2x128xi1>, vector<2x128xi32>
    %c4_i32_209 = arith.constant 4 : i32
    %606 = tpu.dynamic_rotate %604 by %c4_i32_209 dim 1 : vector<2x128xf32>, i32 -> vector<2x128xf32>
    %c4_i32_210 = arith.constant 4 : i32
    %607 = tpu.dynamic_rotate %605 by %c4_i32_210 dim 1 : vector<2x128xi32>, i32 -> vector<2x128xi32>
    %608 = arith.cmpf ogt, %606, %604 : vector<2x128xf32>
    %609 = arith.cmpf oeq, %606, %604 : vector<2x128xf32>
    %610 = arith.cmpi slt, %607, %605 : vector<2x128xi32>
    %611 = arith.andi %609, %610 : vector<2x128xi1>
    %612 = arith.ori %608, %611 : vector<2x128xi1>
    %613 = arith.select %612, %606, %604 : vector<2x128xi1>, vector<2x128xf32>
    %614 = arith.select %612, %607, %605 : vector<2x128xi1>, vector<2x128xi32>
    %c8_i32_211 = arith.constant 8 : i32
    %615 = tpu.dynamic_rotate %613 by %c8_i32_211 dim 1 : vector<2x128xf32>, i32 -> vector<2x128xf32>
    %c8_i32_212 = arith.constant 8 : i32
    %616 = tpu.dynamic_rotate %614 by %c8_i32_212 dim 1 : vector<2x128xi32>, i32 -> vector<2x128xi32>
    %617 = arith.cmpf ogt, %615, %613 : vector<2x128xf32>
    %618 = arith.cmpf oeq, %615, %613 : vector<2x128xf32>
    %619 = arith.cmpi slt, %616, %614 : vector<2x128xi32>
    %620 = arith.andi %618, %619 : vector<2x128xi1>
    %621 = arith.ori %617, %620 : vector<2x128xi1>
    %622 = arith.select %621, %615, %613 : vector<2x128xi1>, vector<2x128xf32>
    %623 = arith.select %621, %616, %614 : vector<2x128xi1>, vector<2x128xi32>
    %c16_i32_213 = arith.constant 16 : i32
    %624 = tpu.dynamic_rotate %622 by %c16_i32_213 dim 1 : vector<2x128xf32>, i32 -> vector<2x128xf32>
    %c16_i32_214 = arith.constant 16 : i32
    %625 = tpu.dynamic_rotate %623 by %c16_i32_214 dim 1 : vector<2x128xi32>, i32 -> vector<2x128xi32>
    %626 = arith.cmpf ogt, %624, %622 : vector<2x128xf32>
    %627 = arith.cmpf oeq, %624, %622 : vector<2x128xf32>
    %628 = arith.cmpi slt, %625, %623 : vector<2x128xi32>
    %629 = arith.andi %627, %628 : vector<2x128xi1>
    %630 = arith.ori %626, %629 : vector<2x128xi1>
    %631 = arith.select %630, %624, %622 : vector<2x128xi1>, vector<2x128xf32>
    %632 = arith.select %630, %625, %623 : vector<2x128xi1>, vector<2x128xi32>
    %c32_i32_215 = arith.constant 32 : i32
    %633 = tpu.dynamic_rotate %631 by %c32_i32_215 dim 1 : vector<2x128xf32>, i32 -> vector<2x128xf32>
    %c32_i32_216 = arith.constant 32 : i32
    %634 = tpu.dynamic_rotate %632 by %c32_i32_216 dim 1 : vector<2x128xi32>, i32 -> vector<2x128xi32>
    %635 = arith.cmpf ogt, %633, %631 : vector<2x128xf32>
    %636 = arith.cmpf oeq, %633, %631 : vector<2x128xf32>
    %637 = arith.cmpi slt, %634, %632 : vector<2x128xi32>
    %638 = arith.andi %636, %637 : vector<2x128xi1>
    %639 = arith.ori %635, %638 : vector<2x128xi1>
    %640 = arith.select %639, %633, %631 : vector<2x128xi1>, vector<2x128xf32>
    %641 = arith.select %639, %634, %632 : vector<2x128xi1>, vector<2x128xi32>
    %c64_i32_217 = arith.constant 64 : i32
    %642 = tpu.dynamic_rotate %640 by %c64_i32_217 dim 1 : vector<2x128xf32>, i32 -> vector<2x128xf32>
    %c64_i32_218 = arith.constant 64 : i32
    %643 = tpu.dynamic_rotate %641 by %c64_i32_218 dim 1 : vector<2x128xi32>, i32 -> vector<2x128xi32>
    %644 = arith.cmpf ogt, %642, %640 : vector<2x128xf32>
    %645 = arith.cmpf oeq, %642, %640 : vector<2x128xf32>
    %646 = arith.cmpi slt, %643, %641 : vector<2x128xi32>
    %647 = arith.andi %645, %646 : vector<2x128xi1>
    %648 = arith.ori %644, %647 : vector<2x128xi1>
    %649 = arith.select %648, %642, %640 : vector<2x128xi1>, vector<2x128xf32>
    %650 = arith.select %648, %643, %641 : vector<2x128xi1>, vector<2x128xi32>
    %651 = arith.subf %587, %649 : vector<2x128xf32>
    %652 = math.exp %651 : vector<2x128xf32>
    %cst_219 = arith.constant dense<0.000000e+00> : vector<2xf32>
    %653 = vector.multi_reduction <add>, %652, %cst_219 [1] : vector<2x128xf32> to vector<2xf32>
    %654 = vector.shape_cast %653 : vector<2xf32> to vector<2x1xf32>
    %655 = math.log %654 : vector<2x1xf32>
    %656 = vector.broadcast %655 : vector<2x1xf32> to vector<2x128xf32>
    %657 = arith.subf %651, %656 : vector<2x128xf32>
    %658 = arith.index_cast %c2_i32_193 : i32 to index
    %c0_220 = arith.constant 0 : index
    %c0_221 = arith.constant 0 : index
    %659 = vector.load %arg7[%658, %c0_220, %c0_221] : memref<8x2x128xf32, #tpu.memory_space<vmem>>, vector<1x2x128xf32>
    %660 = vector.shape_cast %659 : vector<1x2x128xf32> to vector<2x128xf32>
    %661 = vector.shape_cast %657 : vector<2x128xf32> to vector<1x2x128xf32>
    tpu.vector_store %arg7[%658, %c0_220, %c0_221], %661 {strides = array<i32>} : memref<8x2x128xf32, #tpu.memory_space<vmem>>, vector<1x2x128xf32>,
    %662 = tpu.concatenate %650, %650, %650 in 1 : vector<2x128xi32>, vector<2x128xi32>, vector<2x128xi32> -> vector<2x384xi32>
    %c0_i32_222 = arith.constant 0 : i32
    %663 = vector.broadcast %c0_i32_222 : i32 to vector<2x384xi32>
    %664 = arith.cmpi eq, %662, %663 : vector<2x384xi32>
    %c0_223 = arith.constant 0 : index
    %c0_224 = arith.constant 0 : index
    %665 = vector.load %arg2[%c0_223, %c0_224] : memref<12x384xf32, #tpu.memory_space<vmem>>, vector<1x384xf32>
    %cst_225 = arith.constant 0.000000e+00 : f32
    %666 = vector.shape_cast %665 : vector<1x384xf32> to vector<1x384xf32>
    %667 = vector.broadcast %666 : vector<1x384xf32> to vector<2x384xf32>
    %668 = vector.broadcast %cst_225 : f32 to vector<2x384xf32>
    %669 = arith.select %664, %667, %668 : vector<2x384xi1>, vector<2x384xf32>
    %c1_i32_226 = arith.constant 1 : i32
    %670 = vector.broadcast %c1_i32_226 : i32 to vector<2x384xi32>
    %671 = arith.cmpi eq, %662, %670 : vector<2x384xi32>
    %c1_227 = arith.constant 1 : index
    %c0_228 = arith.constant 0 : index
    %672 = vector.load %arg2[%c1_227, %c0_228] : memref<12x384xf32, #tpu.memory_space<vmem>>, vector<1x384xf32>
    %cst_229 = arith.constant 0.000000e+00 : f32
    %673 = vector.shape_cast %672 : vector<1x384xf32> to vector<1x384xf32>
    %674 = vector.broadcast %673 : vector<1x384xf32> to vector<2x384xf32>
    %675 = vector.broadcast %cst_229 : f32 to vector<2x384xf32>
    %676 = arith.select %671, %674, %675 : vector<2x384xi1>, vector<2x384xf32>
    %c2_i32_230 = arith.constant 2 : i32
    %677 = vector.broadcast %c2_i32_230 : i32 to vector<2x384xi32>
    %678 = arith.cmpi eq, %662, %677 : vector<2x384xi32>
    %c2_231 = arith.constant 2 : index
    %c0_232 = arith.constant 0 : index
    %679 = vector.load %arg2[%c2_231, %c0_232] : memref<12x384xf32, #tpu.memory_space<vmem>>, vector<1x384xf32>
    %cst_233 = arith.constant 0.000000e+00 : f32
    %680 = vector.shape_cast %679 : vector<1x384xf32> to vector<1x384xf32>
    %681 = vector.broadcast %680 : vector<1x384xf32> to vector<2x384xf32>
    %682 = vector.broadcast %cst_233 : f32 to vector<2x384xf32>
    %683 = arith.select %678, %681, %682 : vector<2x384xi1>, vector<2x384xf32>
    %c3_i32_234 = arith.constant 3 : i32
    %684 = vector.broadcast %c3_i32_234 : i32 to vector<2x384xi32>
    %685 = arith.cmpi eq, %662, %684 : vector<2x384xi32>
    %c3_235 = arith.constant 3 : index
    %c0_236 = arith.constant 0 : index
    %686 = vector.load %arg2[%c3_235, %c0_236] : memref<12x384xf32, #tpu.memory_space<vmem>>, vector<1x384xf32>
    %cst_237 = arith.constant 0.000000e+00 : f32
    %687 = vector.shape_cast %686 : vector<1x384xf32> to vector<1x384xf32>
    %688 = vector.broadcast %687 : vector<1x384xf32> to vector<2x384xf32>
    %689 = vector.broadcast %cst_237 : f32 to vector<2x384xf32>
    %690 = arith.select %685, %688, %689 : vector<2x384xi1>, vector<2x384xf32>
    %c4_i32_238 = arith.constant 4 : i32
    %691 = vector.broadcast %c4_i32_238 : i32 to vector<2x384xi32>
    %692 = arith.cmpi eq, %662, %691 : vector<2x384xi32>
    %c4_239 = arith.constant 4 : index
    %c0_240 = arith.constant 0 : index
    %693 = vector.load %arg2[%c4_239, %c0_240] : memref<12x384xf32, #tpu.memory_space<vmem>>, vector<1x384xf32>
    %cst_241 = arith.constant 0.000000e+00 : f32
    %694 = vector.shape_cast %693 : vector<1x384xf32> to vector<1x384xf32>
    %695 = vector.broadcast %694 : vector<1x384xf32> to vector<2x384xf32>
    %696 = vector.broadcast %cst_241 : f32 to vector<2x384xf32>
    %697 = arith.select %692, %695, %696 : vector<2x384xi1>, vector<2x384xf32>
    %c5_i32_242 = arith.constant 5 : i32
    %698 = vector.broadcast %c5_i32_242 : i32 to vector<2x384xi32>
    %699 = arith.cmpi eq, %662, %698 : vector<2x384xi32>
    %c5_243 = arith.constant 5 : index
    %c0_244 = arith.constant 0 : index
    %700 = vector.load %arg2[%c5_243, %c0_244] : memref<12x384xf32, #tpu.memory_space<vmem>>, vector<1x384xf32>
    %cst_245 = arith.constant 0.000000e+00 : f32
    %701 = vector.shape_cast %700 : vector<1x384xf32> to vector<1x384xf32>
    %702 = vector.broadcast %701 : vector<1x384xf32> to vector<2x384xf32>
    %703 = vector.broadcast %cst_245 : f32 to vector<2x384xf32>
    %704 = arith.select %699, %702, %703 : vector<2x384xi1>, vector<2x384xf32>
    %c6_i32_246 = arith.constant 6 : i32
    %705 = vector.broadcast %c6_i32_246 : i32 to vector<2x384xi32>
    %706 = arith.cmpi eq, %662, %705 : vector<2x384xi32>
    %c6_247 = arith.constant 6 : index
    %c0_248 = arith.constant 0 : index
    %707 = vector.load %arg2[%c6_247, %c0_248] : memref<12x384xf32, #tpu.memory_space<vmem>>, vector<1x384xf32>
    %cst_249 = arith.constant 0.000000e+00 : f32
    %708 = vector.shape_cast %707 : vector<1x384xf32> to vector<1x384xf32>
    %709 = vector.broadcast %708 : vector<1x384xf32> to vector<2x384xf32>
    %710 = vector.broadcast %cst_249 : f32 to vector<2x384xf32>
    %711 = arith.select %706, %709, %710 : vector<2x384xi1>, vector<2x384xf32>
    %c7_i32_250 = arith.constant 7 : i32
    %712 = vector.broadcast %c7_i32_250 : i32 to vector<2x384xi32>
    %713 = arith.cmpi eq, %662, %712 : vector<2x384xi32>
    %c7_251 = arith.constant 7 : index
    %c0_252 = arith.constant 0 : index
    %714 = vector.load %arg2[%c7_251, %c0_252] : memref<12x384xf32, #tpu.memory_space<vmem>>, vector<1x384xf32>
    %cst_253 = arith.constant 0.000000e+00 : f32
    %715 = vector.shape_cast %714 : vector<1x384xf32> to vector<1x384xf32>
    %716 = vector.broadcast %715 : vector<1x384xf32> to vector<2x384xf32>
    %717 = vector.broadcast %cst_253 : f32 to vector<2x384xf32>
    %718 = arith.select %713, %716, %717 : vector<2x384xi1>, vector<2x384xf32>
    %c8_i32_254 = arith.constant 8 : i32
    %719 = vector.broadcast %c8_i32_254 : i32 to vector<2x384xi32>
    %720 = arith.cmpi eq, %662, %719 : vector<2x384xi32>
    %c8_255 = arith.constant 8 : index
    %c0_256 = arith.constant 0 : index
    %721 = vector.load %arg2[%c8_255, %c0_256] : memref<12x384xf32, #tpu.memory_space<vmem>>, vector<1x384xf32>
    %cst_257 = arith.constant 0.000000e+00 : f32
    %722 = vector.shape_cast %721 : vector<1x384xf32> to vector<1x384xf32>
    %723 = vector.broadcast %722 : vector<1x384xf32> to vector<2x384xf32>
    %724 = vector.broadcast %cst_257 : f32 to vector<2x384xf32>
    %725 = arith.select %720, %723, %724 : vector<2x384xi1>, vector<2x384xf32>
    %c9_i32_258 = arith.constant 9 : i32
    %726 = vector.broadcast %c9_i32_258 : i32 to vector<2x384xi32>
    %727 = arith.cmpi eq, %662, %726 : vector<2x384xi32>
    %c9_259 = arith.constant 9 : index
    %c0_260 = arith.constant 0 : index
    %728 = vector.load %arg2[%c9_259, %c0_260] : memref<12x384xf32, #tpu.memory_space<vmem>>, vector<1x384xf32>
    %cst_261 = arith.constant 0.000000e+00 : f32
    %729 = vector.shape_cast %728 : vector<1x384xf32> to vector<1x384xf32>
    %730 = vector.broadcast %729 : vector<1x384xf32> to vector<2x384xf32>
    %731 = vector.broadcast %cst_261 : f32 to vector<2x384xf32>
    %732 = arith.select %727, %730, %731 : vector<2x384xi1>, vector<2x384xf32>
    %c10_i32_262 = arith.constant 10 : i32
    %733 = vector.broadcast %c10_i32_262 : i32 to vector<2x384xi32>
    %734 = arith.cmpi eq, %662, %733 : vector<2x384xi32>
    %c10_263 = arith.constant 10 : index
    %c0_264 = arith.constant 0 : index
    %735 = vector.load %arg2[%c10_263, %c0_264] : memref<12x384xf32, #tpu.memory_space<vmem>>, vector<1x384xf32>
    %cst_265 = arith.constant 0.000000e+00 : f32
    %736 = vector.shape_cast %735 : vector<1x384xf32> to vector<1x384xf32>
    %737 = vector.broadcast %736 : vector<1x384xf32> to vector<2x384xf32>
    %738 = vector.broadcast %cst_265 : f32 to vector<2x384xf32>
    %739 = arith.select %734, %737, %738 : vector<2x384xi1>, vector<2x384xf32>
    %c11_i32_266 = arith.constant 11 : i32
    %740 = vector.broadcast %c11_i32_266 : i32 to vector<2x384xi32>
    %741 = arith.cmpi eq, %662, %740 : vector<2x384xi32>
    %c11_267 = arith.constant 11 : index
    %c0_268 = arith.constant 0 : index
    %742 = vector.load %arg2[%c11_267, %c0_268] : memref<12x384xf32, #tpu.memory_space<vmem>>, vector<1x384xf32>
    %cst_269 = arith.constant 0.000000e+00 : f32
    %743 = vector.shape_cast %742 : vector<1x384xf32> to vector<1x384xf32>
    %744 = vector.broadcast %743 : vector<1x384xf32> to vector<2x384xf32>
    %745 = vector.broadcast %cst_269 : f32 to vector<2x384xf32>
    %746 = arith.select %741, %744, %745 : vector<2x384xi1>, vector<2x384xf32>
    %747 = arith.addf %669, %676 : vector<2x384xf32>
    %748 = arith.addf %683, %690 : vector<2x384xf32>
    %749 = arith.addf %697, %704 : vector<2x384xf32>
    %750 = arith.addf %711, %718 : vector<2x384xf32>
    %751 = arith.addf %725, %732 : vector<2x384xf32>
    %752 = arith.addf %739, %746 : vector<2x384xf32>
    %753 = arith.addf %747, %748 : vector<2x384xf32>
    %754 = arith.addf %749, %750 : vector<2x384xf32>
    %755 = arith.addf %751, %752 : vector<2x384xf32>
    %756 = arith.addf %753, %754 : vector<2x384xf32>
    %757 = arith.addf %756, %755 : vector<2x384xf32>
    %c3_i32_270 = arith.constant 3 : i32
    %c2_i32_271 = arith.constant 2 : i32
    %758 = arith.muli %c3_i32_270, %c2_i32_271 : i32
    %759 = arith.index_cast %758 : i32 to index
    %c0_272 = arith.constant 0 : index
    %760 = vector.load %arg9[%759, %c0_272] : memref<16x384xf32, #tpu.memory_space<vmem>>, vector<2x384xf32>
    %761 = arith.addf %757, %760 : vector<2x384xf32>
    %c0_273 = arith.constant 0 : index
    %c0_274 = arith.constant 0 : index
    %762 = vector.load %arg4[%c0_273, %c0_274] : memref<128x384xf32, #tpu.memory_space<vmem>>, vector<128x384xf32>
    %cst_275 = arith.constant dense<0.000000e+00> : vector<2x384xf32>
    %763 = tpu.matmul %583, %762, %cst_275 {dimension_numbers = #tpu.dot_dimension_numbers<[1], [0], [0], [1], [0, 0, 1, 1], [], []>} : vector<2x128xf32>, vector<128x384xf32>, vector<2x384xf32> -> vector<2x384xf32>
    %764 = vector.extract_strided_slice %761 {offsets = [0, 0], sizes = [2, 128], strides = [1, 1]} : vector<2x384xf32> to vector<2x128xf32>
    %765 = vector.extract_strided_slice %763 {offsets = [0, 0], sizes = [2, 128], strides = [1, 1]} : vector<2x384xf32> to vector<2x128xf32>
    %766 = arith.addf %764, %765 : vector<2x128xf32>
    %767 = arith.negf %766 : vector<2x128xf32>
    %768 = math.exp %767 : vector<2x128xf32>
    %cst_276 = arith.constant 1.000000e+00 : f32
    %769 = vector.broadcast %cst_276 : f32 to vector<2x128xf32>
    %770 = arith.addf %769, %768 : vector<2x128xf32>
    %771 = arith.divf %769, %770 : vector<2x128xf32>
    %772 = vector.extract_strided_slice %761 {offsets = [0, 128], sizes = [2, 128], strides = [1, 1]} : vector<2x384xf32> to vector<2x128xf32>
    %773 = vector.extract_strided_slice %763 {offsets = [0, 128], sizes = [2, 128], strides = [1, 1]} : vector<2x384xf32> to vector<2x128xf32>
    %774 = arith.addf %772, %773 : vector<2x128xf32>
    %775 = arith.negf %774 : vector<2x128xf32>
    %776 = math.exp %775 : vector<2x128xf32>
    %cst_277 = arith.constant 1.000000e+00 : f32
    %777 = vector.broadcast %cst_277 : f32 to vector<2x128xf32>
    %778 = arith.addf %777, %776 : vector<2x128xf32>
    %779 = arith.divf %777, %778 : vector<2x128xf32>
    %780 = vector.extract_strided_slice %761 {offsets = [0, 256], sizes = [2, 128], strides = [1, 1]} : vector<2x384xf32> to vector<2x128xf32>
    %781 = vector.extract_strided_slice %763 {offsets = [0, 256], sizes = [2, 128], strides = [1, 1]} : vector<2x384xf32> to vector<2x128xf32>
    %782 = vector.broadcast %1 : vector<1x128xf32> to vector<2x128xf32>
    %783 = arith.addf %781, %782 : vector<2x128xf32>
    %784 = arith.mulf %771, %783 : vector<2x128xf32>
    %785 = arith.addf %780, %784 : vector<2x128xf32>
    %786 = math.tanh %785 : vector<2x128xf32>
    %cst_278 = arith.constant 1.000000e+00 : f32
    %787 = vector.broadcast %cst_278 : f32 to vector<2x128xf32>
    %788 = arith.subf %787, %779 : vector<2x128xf32>
    %789 = arith.mulf %788, %786 : vector<2x128xf32>
    %790 = arith.mulf %779, %583 : vector<2x128xf32>
    %791 = arith.addf %789, %790 : vector<2x128xf32>
    %c0_279 = arith.constant 0 : index
    %c0_280 = arith.constant 0 : index
    %792 = vector.load %arg5[%c0_279, %c0_280] : memref<128x256xf32, #tpu.memory_space<vmem>>, vector<128x128xf32>
    %cst_281 = arith.constant dense<0.000000e+00> : vector<2x128xf32>
    %793 = tpu.matmul %791, %792, %cst_281 {dimension_numbers = #tpu.dot_dimension_numbers<[1], [0], [0], [1], [0, 0, 1, 1], [], []>} : vector<2x128xf32>, vector<128x128xf32>, vector<2x128xf32> -> vector<2x128xf32>
    %794 = vector.broadcast %2 : vector<1x128xf32> to vector<2x128xf32>
    %795 = arith.addf %793, %794 : vector<2x128xf32>
    %c1_i32_282 = arith.constant 1 : i32
    %796 = tpu.dynamic_rotate %795 by %c1_i32_282 dim 1 : vector<2x128xf32>, i32 -> vector<2x128xf32>
    %c1_i32_283 = arith.constant 1 : i32
    %797 = tpu.dynamic_rotate %0 by %c1_i32_283 dim 1 : vector<2x128xi32>, i32 -> vector<2x128xi32>
    %798 = arith.cmpf ogt, %796, %795 : vector<2x128xf32>
    %799 = arith.cmpf oeq, %796, %795 : vector<2x128xf32>
    %800 = arith.cmpi slt, %797, %0 : vector<2x128xi32>
    %801 = arith.andi %799, %800 : vector<2x128xi1>
    %802 = arith.ori %798, %801 : vector<2x128xi1>
    %803 = arith.select %802, %796, %795 : vector<2x128xi1>, vector<2x128xf32>
    %804 = arith.select %802, %797, %0 : vector<2x128xi1>, vector<2x128xi32>
    %c2_i32_284 = arith.constant 2 : i32
    %805 = tpu.dynamic_rotate %803 by %c2_i32_284 dim 1 : vector<2x128xf32>, i32 -> vector<2x128xf32>
    %c2_i32_285 = arith.constant 2 : i32
    %806 = tpu.dynamic_rotate %804 by %c2_i32_285 dim 1 : vector<2x128xi32>, i32 -> vector<2x128xi32>
    %807 = arith.cmpf ogt, %805, %803 : vector<2x128xf32>
    %808 = arith.cmpf oeq, %805, %803 : vector<2x128xf32>
    %809 = arith.cmpi slt, %806, %804 : vector<2x128xi32>
    %810 = arith.andi %808, %809 : vector<2x128xi1>
    %811 = arith.ori %807, %810 : vector<2x128xi1>
    %812 = arith.select %811, %805, %803 : vector<2x128xi1>, vector<2x128xf32>
    %813 = arith.select %811, %806, %804 : vector<2x128xi1>, vector<2x128xi32>
    %c4_i32_286 = arith.constant 4 : i32
    %814 = tpu.dynamic_rotate %812 by %c4_i32_286 dim 1 : vector<2x128xf32>, i32 -> vector<2x128xf32>
    %c4_i32_287 = arith.constant 4 : i32
    %815 = tpu.dynamic_rotate %813 by %c4_i32_287 dim 1 : vector<2x128xi32>, i32 -> vector<2x128xi32>
    %816 = arith.cmpf ogt, %814, %812 : vector<2x128xf32>
    %817 = arith.cmpf oeq, %814, %812 : vector<2x128xf32>
    %818 = arith.cmpi slt, %815, %813 : vector<2x128xi32>
    %819 = arith.andi %817, %818 : vector<2x128xi1>
    %820 = arith.ori %816, %819 : vector<2x128xi1>
    %821 = arith.select %820, %814, %812 : vector<2x128xi1>, vector<2x128xf32>
    %822 = arith.select %820, %815, %813 : vector<2x128xi1>, vector<2x128xi32>
    %c8_i32_288 = arith.constant 8 : i32
    %823 = tpu.dynamic_rotate %821 by %c8_i32_288 dim 1 : vector<2x128xf32>, i32 -> vector<2x128xf32>
    %c8_i32_289 = arith.constant 8 : i32
    %824 = tpu.dynamic_rotate %822 by %c8_i32_289 dim 1 : vector<2x128xi32>, i32 -> vector<2x128xi32>
    %825 = arith.cmpf ogt, %823, %821 : vector<2x128xf32>
    %826 = arith.cmpf oeq, %823, %821 : vector<2x128xf32>
    %827 = arith.cmpi slt, %824, %822 : vector<2x128xi32>
    %828 = arith.andi %826, %827 : vector<2x128xi1>
    %829 = arith.ori %825, %828 : vector<2x128xi1>
    %830 = arith.select %829, %823, %821 : vector<2x128xi1>, vector<2x128xf32>
    %831 = arith.select %829, %824, %822 : vector<2x128xi1>, vector<2x128xi32>
    %c16_i32_290 = arith.constant 16 : i32
    %832 = tpu.dynamic_rotate %830 by %c16_i32_290 dim 1 : vector<2x128xf32>, i32 -> vector<2x128xf32>
    %c16_i32_291 = arith.constant 16 : i32
    %833 = tpu.dynamic_rotate %831 by %c16_i32_291 dim 1 : vector<2x128xi32>, i32 -> vector<2x128xi32>
    %834 = arith.cmpf ogt, %832, %830 : vector<2x128xf32>
    %835 = arith.cmpf oeq, %832, %830 : vector<2x128xf32>
    %836 = arith.cmpi slt, %833, %831 : vector<2x128xi32>
    %837 = arith.andi %835, %836 : vector<2x128xi1>
    %838 = arith.ori %834, %837 : vector<2x128xi1>
    %839 = arith.select %838, %832, %830 : vector<2x128xi1>, vector<2x128xf32>
    %840 = arith.select %838, %833, %831 : vector<2x128xi1>, vector<2x128xi32>
    %c32_i32_292 = arith.constant 32 : i32
    %841 = tpu.dynamic_rotate %839 by %c32_i32_292 dim 1 : vector<2x128xf32>, i32 -> vector<2x128xf32>
    %c32_i32_293 = arith.constant 32 : i32
    %842 = tpu.dynamic_rotate %840 by %c32_i32_293 dim 1 : vector<2x128xi32>, i32 -> vector<2x128xi32>
    %843 = arith.cmpf ogt, %841, %839 : vector<2x128xf32>
    %844 = arith.cmpf oeq, %841, %839 : vector<2x128xf32>
    %845 = arith.cmpi slt, %842, %840 : vector<2x128xi32>
    %846 = arith.andi %844, %845 : vector<2x128xi1>
    %847 = arith.ori %843, %846 : vector<2x128xi1>
    %848 = arith.select %847, %841, %839 : vector<2x128xi1>, vector<2x128xf32>
    %849 = arith.select %847, %842, %840 : vector<2x128xi1>, vector<2x128xi32>
    %c64_i32_294 = arith.constant 64 : i32
    %850 = tpu.dynamic_rotate %848 by %c64_i32_294 dim 1 : vector<2x128xf32>, i32 -> vector<2x128xf32>
    %c64_i32_295 = arith.constant 64 : i32
    %851 = tpu.dynamic_rotate %849 by %c64_i32_295 dim 1 : vector<2x128xi32>, i32 -> vector<2x128xi32>
    %852 = arith.cmpf ogt, %850, %848 : vector<2x128xf32>
    %853 = arith.cmpf oeq, %850, %848 : vector<2x128xf32>
    %854 = arith.cmpi slt, %851, %849 : vector<2x128xi32>
    %855 = arith.andi %853, %854 : vector<2x128xi1>
    %856 = arith.ori %852, %855 : vector<2x128xi1>
    %857 = arith.select %856, %850, %848 : vector<2x128xi1>, vector<2x128xf32>
    %858 = arith.select %856, %851, %849 : vector<2x128xi1>, vector<2x128xi32>
    %859 = arith.subf %795, %857 : vector<2x128xf32>
    %860 = math.exp %859 : vector<2x128xf32>
    %cst_296 = arith.constant dense<0.000000e+00> : vector<2xf32>
    %861 = vector.multi_reduction <add>, %860, %cst_296 [1] : vector<2x128xf32> to vector<2xf32>
    %862 = vector.shape_cast %861 : vector<2xf32> to vector<2x1xf32>
    %863 = math.log %862 : vector<2x1xf32>
    %864 = vector.broadcast %863 : vector<2x1xf32> to vector<2x128xf32>
    %865 = arith.subf %859, %864 : vector<2x128xf32>
    %866 = arith.index_cast %c3_i32_270 : i32 to index
    %c0_297 = arith.constant 0 : index
    %c0_298 = arith.constant 0 : index
    %867 = vector.load %arg7[%866, %c0_297, %c0_298] : memref<8x2x128xf32, #tpu.memory_space<vmem>>, vector<1x2x128xf32>
    %868 = vector.shape_cast %867 : vector<1x2x128xf32> to vector<2x128xf32>
    %869 = vector.shape_cast %865 : vector<2x128xf32> to vector<1x2x128xf32>
    tpu.vector_store %arg7[%866, %c0_297, %c0_298], %869 {strides = array<i32>} : memref<8x2x128xf32, #tpu.memory_space<vmem>>, vector<1x2x128xf32>,
    %870 = tpu.concatenate %858, %858, %858 in 1 : vector<2x128xi32>, vector<2x128xi32>, vector<2x128xi32> -> vector<2x384xi32>
    %c0_i32_299 = arith.constant 0 : i32
    %871 = vector.broadcast %c0_i32_299 : i32 to vector<2x384xi32>
    %872 = arith.cmpi eq, %870, %871 : vector<2x384xi32>
    %c0_300 = arith.constant 0 : index
    %c0_301 = arith.constant 0 : index
    %873 = vector.load %arg2[%c0_300, %c0_301] : memref<12x384xf32, #tpu.memory_space<vmem>>, vector<1x384xf32>
    %cst_302 = arith.constant 0.000000e+00 : f32
    %874 = vector.shape_cast %873 : vector<1x384xf32> to vector<1x384xf32>
    %875 = vector.broadcast %874 : vector<1x384xf32> to vector<2x384xf32>
    %876 = vector.broadcast %cst_302 : f32 to vector<2x384xf32>
    %877 = arith.select %872, %875, %876 : vector<2x384xi1>, vector<2x384xf32>
    %c1_i32_303 = arith.constant 1 : i32
    %878 = vector.broadcast %c1_i32_303 : i32 to vector<2x384xi32>
    %879 = arith.cmpi eq, %870, %878 : vector<2x384xi32>
    %c1_304 = arith.constant 1 : index
    %c0_305 = arith.constant 0 : index
    %880 = vector.load %arg2[%c1_304, %c0_305] : memref<12x384xf32, #tpu.memory_space<vmem>>, vector<1x384xf32>
    %cst_306 = arith.constant 0.000000e+00 : f32
    %881 = vector.shape_cast %880 : vector<1x384xf32> to vector<1x384xf32>
    %882 = vector.broadcast %881 : vector<1x384xf32> to vector<2x384xf32>
    %883 = vector.broadcast %cst_306 : f32 to vector<2x384xf32>
    %884 = arith.select %879, %882, %883 : vector<2x384xi1>, vector<2x384xf32>
    %c2_i32_307 = arith.constant 2 : i32
    %885 = vector.broadcast %c2_i32_307 : i32 to vector<2x384xi32>
    %886 = arith.cmpi eq, %870, %885 : vector<2x384xi32>
    %c2_308 = arith.constant 2 : index
    %c0_309 = arith.constant 0 : index
    %887 = vector.load %arg2[%c2_308, %c0_309] : memref<12x384xf32, #tpu.memory_space<vmem>>, vector<1x384xf32>
    %cst_310 = arith.constant 0.000000e+00 : f32
    %888 = vector.shape_cast %887 : vector<1x384xf32> to vector<1x384xf32>
    %889 = vector.broadcast %888 : vector<1x384xf32> to vector<2x384xf32>
    %890 = vector.broadcast %cst_310 : f32 to vector<2x384xf32>
    %891 = arith.select %886, %889, %890 : vector<2x384xi1>, vector<2x384xf32>
    %c3_i32_311 = arith.constant 3 : i32
    %892 = vector.broadcast %c3_i32_311 : i32 to vector<2x384xi32>
    %893 = arith.cmpi eq, %870, %892 : vector<2x384xi32>
    %c3_312 = arith.constant 3 : index
    %c0_313 = arith.constant 0 : index
    %894 = vector.load %arg2[%c3_312, %c0_313] : memref<12x384xf32, #tpu.memory_space<vmem>>, vector<1x384xf32>
    %cst_314 = arith.constant 0.000000e+00 : f32
    %895 = vector.shape_cast %894 : vector<1x384xf32> to vector<1x384xf32>
    %896 = vector.broadcast %895 : vector<1x384xf32> to vector<2x384xf32>
    %897 = vector.broadcast %cst_314 : f32 to vector<2x384xf32>
    %898 = arith.select %893, %896, %897 : vector<2x384xi1>, vector<2x384xf32>
    %c4_i32_315 = arith.constant 4 : i32
    %899 = vector.broadcast %c4_i32_315 : i32 to vector<2x384xi32>
    %900 = arith.cmpi eq, %870, %899 : vector<2x384xi32>
    %c4_316 = arith.constant 4 : index
    %c0_317 = arith.constant 0 : index
    %901 = vector.load %arg2[%c4_316, %c0_317] : memref<12x384xf32, #tpu.memory_space<vmem>>, vector<1x384xf32>
    %cst_318 = arith.constant 0.000000e+00 : f32
    %902 = vector.shape_cast %901 : vector<1x384xf32> to vector<1x384xf32>
    %903 = vector.broadcast %902 : vector<1x384xf32> to vector<2x384xf32>
    %904 = vector.broadcast %cst_318 : f32 to vector<2x384xf32>
    %905 = arith.select %900, %903, %904 : vector<2x384xi1>, vector<2x384xf32>
    %c5_i32_319 = arith.constant 5 : i32
    %906 = vector.broadcast %c5_i32_319 : i32 to vector<2x384xi32>
    %907 = arith.cmpi eq, %870, %906 : vector<2x384xi32>
    %c5_320 = arith.constant 5 : index
    %c0_321 = arith.constant 0 : index
    %908 = vector.load %arg2[%c5_320, %c0_321] : memref<12x384xf32, #tpu.memory_space<vmem>>, vector<1x384xf32>
    %cst_322 = arith.constant 0.000000e+00 : f32
    %909 = vector.shape_cast %908 : vector<1x384xf32> to vector<1x384xf32>
    %910 = vector.broadcast %909 : vector<1x384xf32> to vector<2x384xf32>
    %911 = vector.broadcast %cst_322 : f32 to vector<2x384xf32>
    %912 = arith.select %907, %910, %911 : vector<2x384xi1>, vector<2x384xf32>
    %c6_i32_323 = arith.constant 6 : i32
    %913 = vector.broadcast %c6_i32_323 : i32 to vector<2x384xi32>
    %914 = arith.cmpi eq, %870, %913 : vector<2x384xi32>
    %c6_324 = arith.constant 6 : index
    %c0_325 = arith.constant 0 : index
    %915 = vector.load %arg2[%c6_324, %c0_325] : memref<12x384xf32, #tpu.memory_space<vmem>>, vector<1x384xf32>
    %cst_326 = arith.constant 0.000000e+00 : f32
    %916 = vector.shape_cast %915 : vector<1x384xf32> to vector<1x384xf32>
    %917 = vector.broadcast %916 : vector<1x384xf32> to vector<2x384xf32>
    %918 = vector.broadcast %cst_326 : f32 to vector<2x384xf32>
    %919 = arith.select %914, %917, %918 : vector<2x384xi1>, vector<2x384xf32>
    %c7_i32_327 = arith.constant 7 : i32
    %920 = vector.broadcast %c7_i32_327 : i32 to vector<2x384xi32>
    %921 = arith.cmpi eq, %870, %920 : vector<2x384xi32>
    %c7_328 = arith.constant 7 : index
    %c0_329 = arith.constant 0 : index
    %922 = vector.load %arg2[%c7_328, %c0_329] : memref<12x384xf32, #tpu.memory_space<vmem>>, vector<1x384xf32>
    %cst_330 = arith.constant 0.000000e+00 : f32
    %923 = vector.shape_cast %922 : vector<1x384xf32> to vector<1x384xf32>
    %924 = vector.broadcast %923 : vector<1x384xf32> to vector<2x384xf32>
    %925 = vector.broadcast %cst_330 : f32 to vector<2x384xf32>
    %926 = arith.select %921, %924, %925 : vector<2x384xi1>, vector<2x384xf32>
    %c8_i32_331 = arith.constant 8 : i32
    %927 = vector.broadcast %c8_i32_331 : i32 to vector<2x384xi32>
    %928 = arith.cmpi eq, %870, %927 : vector<2x384xi32>
    %c8_332 = arith.constant 8 : index
    %c0_333 = arith.constant 0 : index
    %929 = vector.load %arg2[%c8_332, %c0_333] : memref<12x384xf32, #tpu.memory_space<vmem>>, vector<1x384xf32>
    %cst_334 = arith.constant 0.000000e+00 : f32
    %930 = vector.shape_cast %929 : vector<1x384xf32> to vector<1x384xf32>
    %931 = vector.broadcast %930 : vector<1x384xf32> to vector<2x384xf32>
    %932 = vector.broadcast %cst_334 : f32 to vector<2x384xf32>
    %933 = arith.select %928, %931, %932 : vector<2x384xi1>, vector<2x384xf32>
    %c9_i32_335 = arith.constant 9 : i32
    %934 = vector.broadcast %c9_i32_335 : i32 to vector<2x384xi32>
    %935 = arith.cmpi eq, %870, %934 : vector<2x384xi32>
    %c9_336 = arith.constant 9 : index
    %c0_337 = arith.constant 0 : index
    %936 = vector.load %arg2[%c9_336, %c0_337] : memref<12x384xf32, #tpu.memory_space<vmem>>, vector<1x384xf32>
    %cst_338 = arith.constant 0.000000e+00 : f32
    %937 = vector.shape_cast %936 : vector<1x384xf32> to vector<1x384xf32>
    %938 = vector.broadcast %937 : vector<1x384xf32> to vector<2x384xf32>
    %939 = vector.broadcast %cst_338 : f32 to vector<2x384xf32>
    %940 = arith.select %935, %938, %939 : vector<2x384xi1>, vector<2x384xf32>
    %c10_i32_339 = arith.constant 10 : i32
    %941 = vector.broadcast %c10_i32_339 : i32 to vector<2x384xi32>
    %942 = arith.cmpi eq, %870, %941 : vector<2x384xi32>
    %c10_340 = arith.constant 10 : index
    %c0_341 = arith.constant 0 : index
    %943 = vector.load %arg2[%c10_340, %c0_341] : memref<12x384xf32, #tpu.memory_space<vmem>>, vector<1x384xf32>
    %cst_342 = arith.constant 0.000000e+00 : f32
    %944 = vector.shape_cast %943 : vector<1x384xf32> to vector<1x384xf32>
    %945 = vector.broadcast %944 : vector<1x384xf32> to vector<2x384xf32>
    %946 = vector.broadcast %cst_342 : f32 to vector<2x384xf32>
    %947 = arith.select %942, %945, %946 : vector<2x384xi1>, vector<2x384xf32>
    %c11_i32_343 = arith.constant 11 : i32
    %948 = vector.broadcast %c11_i32_343 : i32 to vector<2x384xi32>
    %949 = arith.cmpi eq, %870, %948 : vector<2x384xi32>
    %c11_344 = arith.constant 11 : index
    %c0_345 = arith.constant 0 : index
    %950 = vector.load %arg2[%c11_344, %c0_345] : memref<12x384xf32, #tpu.memory_space<vmem>>, vector<1x384xf32>
    %cst_346 = arith.constant 0.000000e+00 : f32
    %951 = vector.shape_cast %950 : vector<1x384xf32> to vector<1x384xf32>
    %952 = vector.broadcast %951 : vector<1x384xf32> to vector<2x384xf32>
    %953 = vector.broadcast %cst_346 : f32 to vector<2x384xf32>
    %954 = arith.select %949, %952, %953 : vector<2x384xi1>, vector<2x384xf32>
    %955 = arith.addf %877, %884 : vector<2x384xf32>
    %956 = arith.addf %891, %898 : vector<2x384xf32>
    %957 = arith.addf %905, %912 : vector<2x384xf32>
    %958 = arith.addf %919, %926 : vector<2x384xf32>
    %959 = arith.addf %933, %940 : vector<2x384xf32>
    %960 = arith.addf %947, %954 : vector<2x384xf32>
    %961 = arith.addf %955, %956 : vector<2x384xf32>
    %962 = arith.addf %957, %958 : vector<2x384xf32>
    %963 = arith.addf %959, %960 : vector<2x384xf32>
    %964 = arith.addf %961, %962 : vector<2x384xf32>
    %965 = arith.addf %964, %963 : vector<2x384xf32>
    %c4_i32_347 = arith.constant 4 : i32
    %c2_i32_348 = arith.constant 2 : i32
    %966 = arith.muli %c4_i32_347, %c2_i32_348 : i32
    %967 = arith.index_cast %966 : i32 to index
    %c0_349 = arith.constant 0 : index
    %968 = vector.load %arg9[%967, %c0_349] : memref<16x384xf32, #tpu.memory_space<vmem>>, vector<2x384xf32>
    %969 = arith.addf %965, %968 : vector<2x384xf32>
    %c0_350 = arith.constant 0 : index
    %c0_351 = arith.constant 0 : index
    %970 = vector.load %arg4[%c0_350, %c0_351] : memref<128x384xf32, #tpu.memory_space<vmem>>, vector<128x384xf32>
    %cst_352 = arith.constant dense<0.000000e+00> : vector<2x384xf32>
    %971 = tpu.matmul %791, %970, %cst_352 {dimension_numbers = #tpu.dot_dimension_numbers<[1], [0], [0], [1], [0, 0, 1, 1], [], []>} : vector<2x128xf32>, vector<128x384xf32>, vector<2x384xf32> -> vector<2x384xf32>
    %972 = vector.extract_strided_slice %969 {offsets = [0, 0], sizes = [2, 128], strides = [1, 1]} : vector<2x384xf32> to vector<2x128xf32>
    %973 = vector.extract_strided_slice %971 {offsets = [0, 0], sizes = [2, 128], strides = [1, 1]} : vector<2x384xf32> to vector<2x128xf32>
    %974 = arith.addf %972, %973 : vector<2x128xf32>
    %975 = arith.negf %974 : vector<2x128xf32>
    %976 = math.exp %975 : vector<2x128xf32>
    %cst_353 = arith.constant 1.000000e+00 : f32
    %977 = vector.broadcast %cst_353 : f32 to vector<2x128xf32>
    %978 = arith.addf %977, %976 : vector<2x128xf32>
    %979 = arith.divf %977, %978 : vector<2x128xf32>
    %980 = vector.extract_strided_slice %969 {offsets = [0, 128], sizes = [2, 128], strides = [1, 1]} : vector<2x384xf32> to vector<2x128xf32>
    %981 = vector.extract_strided_slice %971 {offsets = [0, 128], sizes = [2, 128], strides = [1, 1]} : vector<2x384xf32> to vector<2x128xf32>
    %982 = arith.addf %980, %981 : vector<2x128xf32>
    %983 = arith.negf %982 : vector<2x128xf32>
    %984 = math.exp %983 : vector<2x128xf32>
    %cst_354 = arith.constant 1.000000e+00 : f32
    %985 = vector.broadcast %cst_354 : f32 to vector<2x128xf32>
    %986 = arith.addf %985, %984 : vector<2x128xf32>
    %987 = arith.divf %985, %986 : vector<2x128xf32>
    %988 = vector.extract_strided_slice %969 {offsets = [0, 256], sizes = [2, 128], strides = [1, 1]} : vector<2x384xf32> to vector<2x128xf32>
    %989 = vector.extract_strided_slice %971 {offsets = [0, 256], sizes = [2, 128], strides = [1, 1]} : vector<2x384xf32> to vector<2x128xf32>
    %990 = vector.broadcast %1 : vector<1x128xf32> to vector<2x128xf32>
    %991 = arith.addf %989, %990 : vector<2x128xf32>
    %992 = arith.mulf %979, %991 : vector<2x128xf32>
    %993 = arith.addf %988, %992 : vector<2x128xf32>
    %994 = math.tanh %993 : vector<2x128xf32>
    %cst_355 = arith.constant 1.000000e+00 : f32
    %995 = vector.broadcast %cst_355 : f32 to vector<2x128xf32>
    %996 = arith.subf %995, %987 : vector<2x128xf32>
    %997 = arith.mulf %996, %994 : vector<2x128xf32>
    %998 = arith.mulf %987, %791 : vector<2x128xf32>
    %999 = arith.addf %997, %998 : vector<2x128xf32>
    %c0_356 = arith.constant 0 : index
    %c0_357 = arith.constant 0 : index
    %1000 = vector.load %arg5[%c0_356, %c0_357] : memref<128x256xf32, #tpu.memory_space<vmem>>, vector<128x128xf32>
    %cst_358 = arith.constant dense<0.000000e+00> : vector<2x128xf32>
    %1001 = tpu.matmul %999, %1000, %cst_358 {dimension_numbers = #tpu.dot_dimension_numbers<[1], [0], [0], [1], [0, 0, 1, 1], [], []>} : vector<2x128xf32>, vector<128x128xf32>, vector<2x128xf32> -> vector<2x128xf32>
    %1002 = vector.broadcast %2 : vector<1x128xf32> to vector<2x128xf32>
    %1003 = arith.addf %1001, %1002 : vector<2x128xf32>
    %c1_i32_359 = arith.constant 1 : i32
    %1004 = tpu.dynamic_rotate %1003 by %c1_i32_359 dim 1 : vector<2x128xf32>, i32 -> vector<2x128xf32>
    %c1_i32_360 = arith.constant 1 : i32
    %1005 = tpu.dynamic_rotate %0 by %c1_i32_360 dim 1 : vector<2x128xi32>, i32 -> vector<2x128xi32>
    %1006 = arith.cmpf ogt, %1004, %1003 : vector<2x128xf32>
    %1007 = arith.cmpf oeq, %1004, %1003 : vector<2x128xf32>
    %1008 = arith.cmpi slt, %1005, %0 : vector<2x128xi32>
    %1009 = arith.andi %1007, %1008 : vector<2x128xi1>
    %1010 = arith.ori %1006, %1009 : vector<2x128xi1>
    %1011 = arith.select %1010, %1004, %1003 : vector<2x128xi1>, vector<2x128xf32>
    %1012 = arith.select %1010, %1005, %0 : vector<2x128xi1>, vector<2x128xi32>
    %c2_i32_361 = arith.constant 2 : i32
    %1013 = tpu.dynamic_rotate %1011 by %c2_i32_361 dim 1 : vector<2x128xf32>, i32 -> vector<2x128xf32>
    %c2_i32_362 = arith.constant 2 : i32
    %1014 = tpu.dynamic_rotate %1012 by %c2_i32_362 dim 1 : vector<2x128xi32>, i32 -> vector<2x128xi32>
    %1015 = arith.cmpf ogt, %1013, %1011 : vector<2x128xf32>
    %1016 = arith.cmpf oeq, %1013, %1011 : vector<2x128xf32>
    %1017 = arith.cmpi slt, %1014, %1012 : vector<2x128xi32>
    %1018 = arith.andi %1016, %1017 : vector<2x128xi1>
    %1019 = arith.ori %1015, %1018 : vector<2x128xi1>
    %1020 = arith.select %1019, %1013, %1011 : vector<2x128xi1>, vector<2x128xf32>
    %1021 = arith.select %1019, %1014, %1012 : vector<2x128xi1>, vector<2x128xi32>
    %c4_i32_363 = arith.constant 4 : i32
    %1022 = tpu.dynamic_rotate %1020 by %c4_i32_363 dim 1 : vector<2x128xf32>, i32 -> vector<2x128xf32>
    %c4_i32_364 = arith.constant 4 : i32
    %1023 = tpu.dynamic_rotate %1021 by %c4_i32_364 dim 1 : vector<2x128xi32>, i32 -> vector<2x128xi32>
    %1024 = arith.cmpf ogt, %1022, %1020 : vector<2x128xf32>
    %1025 = arith.cmpf oeq, %1022, %1020 : vector<2x128xf32>
    %1026 = arith.cmpi slt, %1023, %1021 : vector<2x128xi32>
    %1027 = arith.andi %1025, %1026 : vector<2x128xi1>
    %1028 = arith.ori %1024, %1027 : vector<2x128xi1>
    %1029 = arith.select %1028, %1022, %1020 : vector<2x128xi1>, vector<2x128xf32>
    %1030 = arith.select %1028, %1023, %1021 : vector<2x128xi1>, vector<2x128xi32>
    %c8_i32_365 = arith.constant 8 : i32
    %1031 = tpu.dynamic_rotate %1029 by %c8_i32_365 dim 1 : vector<2x128xf32>, i32 -> vector<2x128xf32>
    %c8_i32_366 = arith.constant 8 : i32
    %1032 = tpu.dynamic_rotate %1030 by %c8_i32_366 dim 1 : vector<2x128xi32>, i32 -> vector<2x128xi32>
    %1033 = arith.cmpf ogt, %1031, %1029 : vector<2x128xf32>
    %1034 = arith.cmpf oeq, %1031, %1029 : vector<2x128xf32>
    %1035 = arith.cmpi slt, %1032, %1030 : vector<2x128xi32>
    %1036 = arith.andi %1034, %1035 : vector<2x128xi1>
    %1037 = arith.ori %1033, %1036 : vector<2x128xi1>
    %1038 = arith.select %1037, %1031, %1029 : vector<2x128xi1>, vector<2x128xf32>
    %1039 = arith.select %1037, %1032, %1030 : vector<2x128xi1>, vector<2x128xi32>
    %c16_i32_367 = arith.constant 16 : i32
    %1040 = tpu.dynamic_rotate %1038 by %c16_i32_367 dim 1 : vector<2x128xf32>, i32 -> vector<2x128xf32>
    %c16_i32_368 = arith.constant 16 : i32
    %1041 = tpu.dynamic_rotate %1039 by %c16_i32_368 dim 1 : vector<2x128xi32>, i32 -> vector<2x128xi32>
    %1042 = arith.cmpf ogt, %1040, %1038 : vector<2x128xf32>
    %1043 = arith.cmpf oeq, %1040, %1038 : vector<2x128xf32>
    %1044 = arith.cmpi slt, %1041, %1039 : vector<2x128xi32>
    %1045 = arith.andi %1043, %1044 : vector<2x128xi1>
    %1046 = arith.ori %1042, %1045 : vector<2x128xi1>
    %1047 = arith.select %1046, %1040, %1038 : vector<2x128xi1>, vector<2x128xf32>
    %1048 = arith.select %1046, %1041, %1039 : vector<2x128xi1>, vector<2x128xi32>
    %c32_i32_369 = arith.constant 32 : i32
    %1049 = tpu.dynamic_rotate %1047 by %c32_i32_369 dim 1 : vector<2x128xf32>, i32 -> vector<2x128xf32>
    %c32_i32_370 = arith.constant 32 : i32
    %1050 = tpu.dynamic_rotate %1048 by %c32_i32_370 dim 1 : vector<2x128xi32>, i32 -> vector<2x128xi32>
    %1051 = arith.cmpf ogt, %1049, %1047 : vector<2x128xf32>
    %1052 = arith.cmpf oeq, %1049, %1047 : vector<2x128xf32>
    %1053 = arith.cmpi slt, %1050, %1048 : vector<2x128xi32>
    %1054 = arith.andi %1052, %1053 : vector<2x128xi1>
    %1055 = arith.ori %1051, %1054 : vector<2x128xi1>
    %1056 = arith.select %1055, %1049, %1047 : vector<2x128xi1>, vector<2x128xf32>
    %1057 = arith.select %1055, %1050, %1048 : vector<2x128xi1>, vector<2x128xi32>
    %c64_i32_371 = arith.constant 64 : i32
    %1058 = tpu.dynamic_rotate %1056 by %c64_i32_371 dim 1 : vector<2x128xf32>, i32 -> vector<2x128xf32>
    %c64_i32_372 = arith.constant 64 : i32
    %1059 = tpu.dynamic_rotate %1057 by %c64_i32_372 dim 1 : vector<2x128xi32>, i32 -> vector<2x128xi32>
    %1060 = arith.cmpf ogt, %1058, %1056 : vector<2x128xf32>
    %1061 = arith.cmpf oeq, %1058, %1056 : vector<2x128xf32>
    %1062 = arith.cmpi slt, %1059, %1057 : vector<2x128xi32>
    %1063 = arith.andi %1061, %1062 : vector<2x128xi1>
    %1064 = arith.ori %1060, %1063 : vector<2x128xi1>
    %1065 = arith.select %1064, %1058, %1056 : vector<2x128xi1>, vector<2x128xf32>
    %1066 = arith.select %1064, %1059, %1057 : vector<2x128xi1>, vector<2x128xi32>
    %1067 = arith.subf %1003, %1065 : vector<2x128xf32>
    %1068 = math.exp %1067 : vector<2x128xf32>
    %cst_373 = arith.constant dense<0.000000e+00> : vector<2xf32>
    %1069 = vector.multi_reduction <add>, %1068, %cst_373 [1] : vector<2x128xf32> to vector<2xf32>
    %1070 = vector.shape_cast %1069 : vector<2xf32> to vector<2x1xf32>
    %1071 = math.log %1070 : vector<2x1xf32>
    %1072 = vector.broadcast %1071 : vector<2x1xf32> to vector<2x128xf32>
    %1073 = arith.subf %1067, %1072 : vector<2x128xf32>
    %1074 = arith.index_cast %c4_i32_347 : i32 to index
    %c0_374 = arith.constant 0 : index
    %c0_375 = arith.constant 0 : index
    %1075 = vector.load %arg7[%1074, %c0_374, %c0_375] : memref<8x2x128xf32, #tpu.memory_space<vmem>>, vector<1x2x128xf32>
    %1076 = vector.shape_cast %1075 : vector<1x2x128xf32> to vector<2x128xf32>
    %1077 = vector.shape_cast %1073 : vector<2x128xf32> to vector<1x2x128xf32>
    tpu.vector_store %arg7[%1074, %c0_374, %c0_375], %1077 {strides = array<i32>} : memref<8x2x128xf32, #tpu.memory_space<vmem>>, vector<1x2x128xf32>,
    %1078 = tpu.concatenate %1066, %1066, %1066 in 1 : vector<2x128xi32>, vector<2x128xi32>, vector<2x128xi32> -> vector<2x384xi32>
    %c0_i32_376 = arith.constant 0 : i32
    %1079 = vector.broadcast %c0_i32_376 : i32 to vector<2x384xi32>
    %1080 = arith.cmpi eq, %1078, %1079 : vector<2x384xi32>
    %c0_377 = arith.constant 0 : index
    %c0_378 = arith.constant 0 : index
    %1081 = vector.load %arg2[%c0_377, %c0_378] : memref<12x384xf32, #tpu.memory_space<vmem>>, vector<1x384xf32>
    %cst_379 = arith.constant 0.000000e+00 : f32
    %1082 = vector.shape_cast %1081 : vector<1x384xf32> to vector<1x384xf32>
    %1083 = vector.broadcast %1082 : vector<1x384xf32> to vector<2x384xf32>
    %1084 = vector.broadcast %cst_379 : f32 to vector<2x384xf32>
    %1085 = arith.select %1080, %1083, %1084 : vector<2x384xi1>, vector<2x384xf32>
    %c1_i32_380 = arith.constant 1 : i32
    %1086 = vector.broadcast %c1_i32_380 : i32 to vector<2x384xi32>
    %1087 = arith.cmpi eq, %1078, %1086 : vector<2x384xi32>
    %c1_381 = arith.constant 1 : index
    %c0_382 = arith.constant 0 : index
    %1088 = vector.load %arg2[%c1_381, %c0_382] : memref<12x384xf32, #tpu.memory_space<vmem>>, vector<1x384xf32>
    %cst_383 = arith.constant 0.000000e+00 : f32
    %1089 = vector.shape_cast %1088 : vector<1x384xf32> to vector<1x384xf32>
    %1090 = vector.broadcast %1089 : vector<1x384xf32> to vector<2x384xf32>
    %1091 = vector.broadcast %cst_383 : f32 to vector<2x384xf32>
    %1092 = arith.select %1087, %1090, %1091 : vector<2x384xi1>, vector<2x384xf32>
    %c2_i32_384 = arith.constant 2 : i32
    %1093 = vector.broadcast %c2_i32_384 : i32 to vector<2x384xi32>
    %1094 = arith.cmpi eq, %1078, %1093 : vector<2x384xi32>
    %c2_385 = arith.constant 2 : index
    %c0_386 = arith.constant 0 : index
    %1095 = vector.load %arg2[%c2_385, %c0_386] : memref<12x384xf32, #tpu.memory_space<vmem>>, vector<1x384xf32>
    %cst_387 = arith.constant 0.000000e+00 : f32
    %1096 = vector.shape_cast %1095 : vector<1x384xf32> to vector<1x384xf32>
    %1097 = vector.broadcast %1096 : vector<1x384xf32> to vector<2x384xf32>
    %1098 = vector.broadcast %cst_387 : f32 to vector<2x384xf32>
    %1099 = arith.select %1094, %1097, %1098 : vector<2x384xi1>, vector<2x384xf32>
    %c3_i32_388 = arith.constant 3 : i32
    %1100 = vector.broadcast %c3_i32_388 : i32 to vector<2x384xi32>
    %1101 = arith.cmpi eq, %1078, %1100 : vector<2x384xi32>
    %c3_389 = arith.constant 3 : index
    %c0_390 = arith.constant 0 : index
    %1102 = vector.load %arg2[%c3_389, %c0_390] : memref<12x384xf32, #tpu.memory_space<vmem>>, vector<1x384xf32>
    %cst_391 = arith.constant 0.000000e+00 : f32
    %1103 = vector.shape_cast %1102 : vector<1x384xf32> to vector<1x384xf32>
    %1104 = vector.broadcast %1103 : vector<1x384xf32> to vector<2x384xf32>
    %1105 = vector.broadcast %cst_391 : f32 to vector<2x384xf32>
    %1106 = arith.select %1101, %1104, %1105 : vector<2x384xi1>, vector<2x384xf32>
    %c4_i32_392 = arith.constant 4 : i32
    %1107 = vector.broadcast %c4_i32_392 : i32 to vector<2x384xi32>
    %1108 = arith.cmpi eq, %1078, %1107 : vector<2x384xi32>
    %c4_393 = arith.constant 4 : index
    %c0_394 = arith.constant 0 : index
    %1109 = vector.load %arg2[%c4_393, %c0_394] : memref<12x384xf32, #tpu.memory_space<vmem>>, vector<1x384xf32>
    %cst_395 = arith.constant 0.000000e+00 : f32
    %1110 = vector.shape_cast %1109 : vector<1x384xf32> to vector<1x384xf32>
    %1111 = vector.broadcast %1110 : vector<1x384xf32> to vector<2x384xf32>
    %1112 = vector.broadcast %cst_395 : f32 to vector<2x384xf32>
    %1113 = arith.select %1108, %1111, %1112 : vector<2x384xi1>, vector<2x384xf32>
    %c5_i32_396 = arith.constant 5 : i32
    %1114 = vector.broadcast %c5_i32_396 : i32 to vector<2x384xi32>
    %1115 = arith.cmpi eq, %1078, %1114 : vector<2x384xi32>
    %c5_397 = arith.constant 5 : index
    %c0_398 = arith.constant 0 : index
    %1116 = vector.load %arg2[%c5_397, %c0_398] : memref<12x384xf32, #tpu.memory_space<vmem>>, vector<1x384xf32>
    %cst_399 = arith.constant 0.000000e+00 : f32
    %1117 = vector.shape_cast %1116 : vector<1x384xf32> to vector<1x384xf32>
    %1118 = vector.broadcast %1117 : vector<1x384xf32> to vector<2x384xf32>
    %1119 = vector.broadcast %cst_399 : f32 to vector<2x384xf32>
    %1120 = arith.select %1115, %1118, %1119 : vector<2x384xi1>, vector<2x384xf32>
    %c6_i32_400 = arith.constant 6 : i32
    %1121 = vector.broadcast %c6_i32_400 : i32 to vector<2x384xi32>
    %1122 = arith.cmpi eq, %1078, %1121 : vector<2x384xi32>
    %c6_401 = arith.constant 6 : index
    %c0_402 = arith.constant 0 : index
    %1123 = vector.load %arg2[%c6_401, %c0_402] : memref<12x384xf32, #tpu.memory_space<vmem>>, vector<1x384xf32>
    %cst_403 = arith.constant 0.000000e+00 : f32
    %1124 = vector.shape_cast %1123 : vector<1x384xf32> to vector<1x384xf32>
    %1125 = vector.broadcast %1124 : vector<1x384xf32> to vector<2x384xf32>
    %1126 = vector.broadcast %cst_403 : f32 to vector<2x384xf32>
    %1127 = arith.select %1122, %1125, %1126 : vector<2x384xi1>, vector<2x384xf32>
    %c7_i32_404 = arith.constant 7 : i32
    %1128 = vector.broadcast %c7_i32_404 : i32 to vector<2x384xi32>
    %1129 = arith.cmpi eq, %1078, %1128 : vector<2x384xi32>
    %c7_405 = arith.constant 7 : index
    %c0_406 = arith.constant 0 : index
    %1130 = vector.load %arg2[%c7_405, %c0_406] : memref<12x384xf32, #tpu.memory_space<vmem>>, vector<1x384xf32>
    %cst_407 = arith.constant 0.000000e+00 : f32
    %1131 = vector.shape_cast %1130 : vector<1x384xf32> to vector<1x384xf32>
    %1132 = vector.broadcast %1131 : vector<1x384xf32> to vector<2x384xf32>
    %1133 = vector.broadcast %cst_407 : f32 to vector<2x384xf32>
    %1134 = arith.select %1129, %1132, %1133 : vector<2x384xi1>, vector<2x384xf32>
    %c8_i32_408 = arith.constant 8 : i32
    %1135 = vector.broadcast %c8_i32_408 : i32 to vector<2x384xi32>
    %1136 = arith.cmpi eq, %1078, %1135 : vector<2x384xi32>
    %c8_409 = arith.constant 8 : index
    %c0_410 = arith.constant 0 : index
    %1137 = vector.load %arg2[%c8_409, %c0_410] : memref<12x384xf32, #tpu.memory_space<vmem>>, vector<1x384xf32>
    %cst_411 = arith.constant 0.000000e+00 : f32
    %1138 = vector.shape_cast %1137 : vector<1x384xf32> to vector<1x384xf32>
    %1139 = vector.broadcast %1138 : vector<1x384xf32> to vector<2x384xf32>
    %1140 = vector.broadcast %cst_411 : f32 to vector<2x384xf32>
    %1141 = arith.select %1136, %1139, %1140 : vector<2x384xi1>, vector<2x384xf32>
    %c9_i32_412 = arith.constant 9 : i32
    %1142 = vector.broadcast %c9_i32_412 : i32 to vector<2x384xi32>
    %1143 = arith.cmpi eq, %1078, %1142 : vector<2x384xi32>
    %c9_413 = arith.constant 9 : index
    %c0_414 = arith.constant 0 : index
    %1144 = vector.load %arg2[%c9_413, %c0_414] : memref<12x384xf32, #tpu.memory_space<vmem>>, vector<1x384xf32>
    %cst_415 = arith.constant 0.000000e+00 : f32
    %1145 = vector.shape_cast %1144 : vector<1x384xf32> to vector<1x384xf32>
    %1146 = vector.broadcast %1145 : vector<1x384xf32> to vector<2x384xf32>
    %1147 = vector.broadcast %cst_415 : f32 to vector<2x384xf32>
    %1148 = arith.select %1143, %1146, %1147 : vector<2x384xi1>, vector<2x384xf32>
    %c10_i32_416 = arith.constant 10 : i32
    %1149 = vector.broadcast %c10_i32_416 : i32 to vector<2x384xi32>
    %1150 = arith.cmpi eq, %1078, %1149 : vector<2x384xi32>
    %c10_417 = arith.constant 10 : index
    %c0_418 = arith.constant 0 : index
    %1151 = vector.load %arg2[%c10_417, %c0_418] : memref<12x384xf32, #tpu.memory_space<vmem>>, vector<1x384xf32>
    %cst_419 = arith.constant 0.000000e+00 : f32
    %1152 = vector.shape_cast %1151 : vector<1x384xf32> to vector<1x384xf32>
    %1153 = vector.broadcast %1152 : vector<1x384xf32> to vector<2x384xf32>
    %1154 = vector.broadcast %cst_419 : f32 to vector<2x384xf32>
    %1155 = arith.select %1150, %1153, %1154 : vector<2x384xi1>, vector<2x384xf32>
    %c11_i32_420 = arith.constant 11 : i32
    %1156 = vector.broadcast %c11_i32_420 : i32 to vector<2x384xi32>
    %1157 = arith.cmpi eq, %1078, %1156 : vector<2x384xi32>
    %c11_421 = arith.constant 11 : index
    %c0_422 = arith.constant 0 : index
    %1158 = vector.load %arg2[%c11_421, %c0_422] : memref<12x384xf32, #tpu.memory_space<vmem>>, vector<1x384xf32>
    %cst_423 = arith.constant 0.000000e+00 : f32
    %1159 = vector.shape_cast %1158 : vector<1x384xf32> to vector<1x384xf32>
    %1160 = vector.broadcast %1159 : vector<1x384xf32> to vector<2x384xf32>
    %1161 = vector.broadcast %cst_423 : f32 to vector<2x384xf32>
    %1162 = arith.select %1157, %1160, %1161 : vector<2x384xi1>, vector<2x384xf32>
    %1163 = arith.addf %1085, %1092 : vector<2x384xf32>
    %1164 = arith.addf %1099, %1106 : vector<2x384xf32>
    %1165 = arith.addf %1113, %1120 : vector<2x384xf32>
    %1166 = arith.addf %1127, %1134 : vector<2x384xf32>
    %1167 = arith.addf %1141, %1148 : vector<2x384xf32>
    %1168 = arith.addf %1155, %1162 : vector<2x384xf32>
    %1169 = arith.addf %1163, %1164 : vector<2x384xf32>
    %1170 = arith.addf %1165, %1166 : vector<2x384xf32>
    %1171 = arith.addf %1167, %1168 : vector<2x384xf32>
    %1172 = arith.addf %1169, %1170 : vector<2x384xf32>
    %1173 = arith.addf %1172, %1171 : vector<2x384xf32>
    %c5_i32_424 = arith.constant 5 : i32
    %c2_i32_425 = arith.constant 2 : i32
    %1174 = arith.muli %c5_i32_424, %c2_i32_425 : i32
    %1175 = arith.index_cast %1174 : i32 to index
    %c0_426 = arith.constant 0 : index
    %1176 = vector.load %arg9[%1175, %c0_426] : memref<16x384xf32, #tpu.memory_space<vmem>>, vector<2x384xf32>
    %1177 = arith.addf %1173, %1176 : vector<2x384xf32>
    %c0_427 = arith.constant 0 : index
    %c0_428 = arith.constant 0 : index
    %1178 = vector.load %arg4[%c0_427, %c0_428] : memref<128x384xf32, #tpu.memory_space<vmem>>, vector<128x384xf32>
    %cst_429 = arith.constant dense<0.000000e+00> : vector<2x384xf32>
    %1179 = tpu.matmul %999, %1178, %cst_429 {dimension_numbers = #tpu.dot_dimension_numbers<[1], [0], [0], [1], [0, 0, 1, 1], [], []>} : vector<2x128xf32>, vector<128x384xf32>, vector<2x384xf32> -> vector<2x384xf32>
    %1180 = vector.extract_strided_slice %1177 {offsets = [0, 0], sizes = [2, 128], strides = [1, 1]} : vector<2x384xf32> to vector<2x128xf32>
    %1181 = vector.extract_strided_slice %1179 {offsets = [0, 0], sizes = [2, 128], strides = [1, 1]} : vector<2x384xf32> to vector<2x128xf32>
    %1182 = arith.addf %1180, %1181 : vector<2x128xf32>
    %1183 = arith.negf %1182 : vector<2x128xf32>
    %1184 = math.exp %1183 : vector<2x128xf32>
    %cst_430 = arith.constant 1.000000e+00 : f32
    %1185 = vector.broadcast %cst_430 : f32 to vector<2x128xf32>
    %1186 = arith.addf %1185, %1184 : vector<2x128xf32>
    %1187 = arith.divf %1185, %1186 : vector<2x128xf32>
    %1188 = vector.extract_strided_slice %1177 {offsets = [0, 128], sizes = [2, 128], strides = [1, 1]} : vector<2x384xf32> to vector<2x128xf32>
    %1189 = vector.extract_strided_slice %1179 {offsets = [0, 128], sizes = [2, 128], strides = [1, 1]} : vector<2x384xf32> to vector<2x128xf32>
    %1190 = arith.addf %1188, %1189 : vector<2x128xf32>
    %1191 = arith.negf %1190 : vector<2x128xf32>
    %1192 = math.exp %1191 : vector<2x128xf32>
    %cst_431 = arith.constant 1.000000e+00 : f32
    %1193 = vector.broadcast %cst_431 : f32 to vector<2x128xf32>
    %1194 = arith.addf %1193, %1192 : vector<2x128xf32>
    %1195 = arith.divf %1193, %1194 : vector<2x128xf32>
    %1196 = vector.extract_strided_slice %1177 {offsets = [0, 256], sizes = [2, 128], strides = [1, 1]} : vector<2x384xf32> to vector<2x128xf32>
    %1197 = vector.extract_strided_slice %1179 {offsets = [0, 256], sizes = [2, 128], strides = [1, 1]} : vector<2x384xf32> to vector<2x128xf32>
    %1198 = vector.broadcast %1 : vector<1x128xf32> to vector<2x128xf32>
    %1199 = arith.addf %1197, %1198 : vector<2x128xf32>
    %1200 = arith.mulf %1187, %1199 : vector<2x128xf32>
    %1201 = arith.addf %1196, %1200 : vector<2x128xf32>
    %1202 = math.tanh %1201 : vector<2x128xf32>
    %cst_432 = arith.constant 1.000000e+00 : f32
    %1203 = vector.broadcast %cst_432 : f32 to vector<2x128xf32>
    %1204 = arith.subf %1203, %1195 : vector<2x128xf32>
    %1205 = arith.mulf %1204, %1202 : vector<2x128xf32>
    %1206 = arith.mulf %1195, %999 : vector<2x128xf32>
    %1207 = arith.addf %1205, %1206 : vector<2x128xf32>
    %c0_433 = arith.constant 0 : index
    %c0_434 = arith.constant 0 : index
    %1208 = vector.load %arg5[%c0_433, %c0_434] : memref<128x256xf32, #tpu.memory_space<vmem>>, vector<128x128xf32>
    %cst_435 = arith.constant dense<0.000000e+00> : vector<2x128xf32>
    %1209 = tpu.matmul %1207, %1208, %cst_435 {dimension_numbers = #tpu.dot_dimension_numbers<[1], [0], [0], [1], [0, 0, 1, 1], [], []>} : vector<2x128xf32>, vector<128x128xf32>, vector<2x128xf32> -> vector<2x128xf32>
    %1210 = vector.broadcast %2 : vector<1x128xf32> to vector<2x128xf32>
    %1211 = arith.addf %1209, %1210 : vector<2x128xf32>
    %c1_i32_436 = arith.constant 1 : i32
    %1212 = tpu.dynamic_rotate %1211 by %c1_i32_436 dim 1 : vector<2x128xf32>, i32 -> vector<2x128xf32>
    %c1_i32_437 = arith.constant 1 : i32
    %1213 = tpu.dynamic_rotate %0 by %c1_i32_437 dim 1 : vector<2x128xi32>, i32 -> vector<2x128xi32>
    %1214 = arith.cmpf ogt, %1212, %1211 : vector<2x128xf32>
    %1215 = arith.cmpf oeq, %1212, %1211 : vector<2x128xf32>
    %1216 = arith.cmpi slt, %1213, %0 : vector<2x128xi32>
    %1217 = arith.andi %1215, %1216 : vector<2x128xi1>
    %1218 = arith.ori %1214, %1217 : vector<2x128xi1>
    %1219 = arith.select %1218, %1212, %1211 : vector<2x128xi1>, vector<2x128xf32>
    %1220 = arith.select %1218, %1213, %0 : vector<2x128xi1>, vector<2x128xi32>
    %c2_i32_438 = arith.constant 2 : i32
    %1221 = tpu.dynamic_rotate %1219 by %c2_i32_438 dim 1 : vector<2x128xf32>, i32 -> vector<2x128xf32>
    %c2_i32_439 = arith.constant 2 : i32
    %1222 = tpu.dynamic_rotate %1220 by %c2_i32_439 dim 1 : vector<2x128xi32>, i32 -> vector<2x128xi32>
    %1223 = arith.cmpf ogt, %1221, %1219 : vector<2x128xf32>
    %1224 = arith.cmpf oeq, %1221, %1219 : vector<2x128xf32>
    %1225 = arith.cmpi slt, %1222, %1220 : vector<2x128xi32>
    %1226 = arith.andi %1224, %1225 : vector<2x128xi1>
    %1227 = arith.ori %1223, %1226 : vector<2x128xi1>
    %1228 = arith.select %1227, %1221, %1219 : vector<2x128xi1>, vector<2x128xf32>
    %1229 = arith.select %1227, %1222, %1220 : vector<2x128xi1>, vector<2x128xi32>
    %c4_i32_440 = arith.constant 4 : i32
    %1230 = tpu.dynamic_rotate %1228 by %c4_i32_440 dim 1 : vector<2x128xf32>, i32 -> vector<2x128xf32>
    %c4_i32_441 = arith.constant 4 : i32
    %1231 = tpu.dynamic_rotate %1229 by %c4_i32_441 dim 1 : vector<2x128xi32>, i32 -> vector<2x128xi32>
    %1232 = arith.cmpf ogt, %1230, %1228 : vector<2x128xf32>
    %1233 = arith.cmpf oeq, %1230, %1228 : vector<2x128xf32>
    %1234 = arith.cmpi slt, %1231, %1229 : vector<2x128xi32>
    %1235 = arith.andi %1233, %1234 : vector<2x128xi1>
    %1236 = arith.ori %1232, %1235 : vector<2x128xi1>
    %1237 = arith.select %1236, %1230, %1228 : vector<2x128xi1>, vector<2x128xf32>
    %1238 = arith.select %1236, %1231, %1229 : vector<2x128xi1>, vector<2x128xi32>
    %c8_i32_442 = arith.constant 8 : i32
    %1239 = tpu.dynamic_rotate %1237 by %c8_i32_442 dim 1 : vector<2x128xf32>, i32 -> vector<2x128xf32>
    %c8_i32_443 = arith.constant 8 : i32
    %1240 = tpu.dynamic_rotate %1238 by %c8_i32_443 dim 1 : vector<2x128xi32>, i32 -> vector<2x128xi32>
    %1241 = arith.cmpf ogt, %1239, %1237 : vector<2x128xf32>
    %1242 = arith.cmpf oeq, %1239, %1237 : vector<2x128xf32>
    %1243 = arith.cmpi slt, %1240, %1238 : vector<2x128xi32>
    %1244 = arith.andi %1242, %1243 : vector<2x128xi1>
    %1245 = arith.ori %1241, %1244 : vector<2x128xi1>
    %1246 = arith.select %1245, %1239, %1237 : vector<2x128xi1>, vector<2x128xf32>
    %1247 = arith.select %1245, %1240, %1238 : vector<2x128xi1>, vector<2x128xi32>
    %c16_i32_444 = arith.constant 16 : i32
    %1248 = tpu.dynamic_rotate %1246 by %c16_i32_444 dim 1 : vector<2x128xf32>, i32 -> vector<2x128xf32>
    %c16_i32_445 = arith.constant 16 : i32
    %1249 = tpu.dynamic_rotate %1247 by %c16_i32_445 dim 1 : vector<2x128xi32>, i32 -> vector<2x128xi32>
    %1250 = arith.cmpf ogt, %1248, %1246 : vector<2x128xf32>
    %1251 = arith.cmpf oeq, %1248, %1246 : vector<2x128xf32>
    %1252 = arith.cmpi slt, %1249, %1247 : vector<2x128xi32>
    %1253 = arith.andi %1251, %1252 : vector<2x128xi1>
    %1254 = arith.ori %1250, %1253 : vector<2x128xi1>
    %1255 = arith.select %1254, %1248, %1246 : vector<2x128xi1>, vector<2x128xf32>
    %1256 = arith.select %1254, %1249, %1247 : vector<2x128xi1>, vector<2x128xi32>
    %c32_i32_446 = arith.constant 32 : i32
    %1257 = tpu.dynamic_rotate %1255 by %c32_i32_446 dim 1 : vector<2x128xf32>, i32 -> vector<2x128xf32>
    %c32_i32_447 = arith.constant 32 : i32
    %1258 = tpu.dynamic_rotate %1256 by %c32_i32_447 dim 1 : vector<2x128xi32>, i32 -> vector<2x128xi32>
    %1259 = arith.cmpf ogt, %1257, %1255 : vector<2x128xf32>
    %1260 = arith.cmpf oeq, %1257, %1255 : vector<2x128xf32>
    %1261 = arith.cmpi slt, %1258, %1256 : vector<2x128xi32>
    %1262 = arith.andi %1260, %1261 : vector<2x128xi1>
    %1263 = arith.ori %1259, %1262 : vector<2x128xi1>
    %1264 = arith.select %1263, %1257, %1255 : vector<2x128xi1>, vector<2x128xf32>
    %1265 = arith.select %1263, %1258, %1256 : vector<2x128xi1>, vector<2x128xi32>
    %c64_i32_448 = arith.constant 64 : i32
    %1266 = tpu.dynamic_rotate %1264 by %c64_i32_448 dim 1 : vector<2x128xf32>, i32 -> vector<2x128xf32>
    %c64_i32_449 = arith.constant 64 : i32
    %1267 = tpu.dynamic_rotate %1265 by %c64_i32_449 dim 1 : vector<2x128xi32>, i32 -> vector<2x128xi32>
    %1268 = arith.cmpf ogt, %1266, %1264 : vector<2x128xf32>
    %1269 = arith.cmpf oeq, %1266, %1264 : vector<2x128xf32>
    %1270 = arith.cmpi slt, %1267, %1265 : vector<2x128xi32>
    %1271 = arith.andi %1269, %1270 : vector<2x128xi1>
    %1272 = arith.ori %1268, %1271 : vector<2x128xi1>
    %1273 = arith.select %1272, %1266, %1264 : vector<2x128xi1>, vector<2x128xf32>
    %1274 = arith.select %1272, %1267, %1265 : vector<2x128xi1>, vector<2x128xi32>
    %1275 = arith.subf %1211, %1273 : vector<2x128xf32>
    %1276 = math.exp %1275 : vector<2x128xf32>
    %cst_450 = arith.constant dense<0.000000e+00> : vector<2xf32>
    %1277 = vector.multi_reduction <add>, %1276, %cst_450 [1] : vector<2x128xf32> to vector<2xf32>
    %1278 = vector.shape_cast %1277 : vector<2xf32> to vector<2x1xf32>
    %1279 = math.log %1278 : vector<2x1xf32>
    %1280 = vector.broadcast %1279 : vector<2x1xf32> to vector<2x128xf32>
    %1281 = arith.subf %1275, %1280 : vector<2x128xf32>
    %1282 = arith.index_cast %c5_i32_424 : i32 to index
    %c0_451 = arith.constant 0 : index
    %c0_452 = arith.constant 0 : index
    %1283 = vector.load %arg7[%1282, %c0_451, %c0_452] : memref<8x2x128xf32, #tpu.memory_space<vmem>>, vector<1x2x128xf32>
    %1284 = vector.shape_cast %1283 : vector<1x2x128xf32> to vector<2x128xf32>
    %1285 = vector.shape_cast %1281 : vector<2x128xf32> to vector<1x2x128xf32>
    tpu.vector_store %arg7[%1282, %c0_451, %c0_452], %1285 {strides = array<i32>} : memref<8x2x128xf32, #tpu.memory_space<vmem>>, vector<1x2x128xf32>,
    %1286 = tpu.concatenate %1274, %1274, %1274 in 1 : vector<2x128xi32>, vector<2x128xi32>, vector<2x128xi32> -> vector<2x384xi32>
    %c0_i32_453 = arith.constant 0 : i32
    %1287 = vector.broadcast %c0_i32_453 : i32 to vector<2x384xi32>
    %1288 = arith.cmpi eq, %1286, %1287 : vector<2x384xi32>
    %c0_454 = arith.constant 0 : index
    %c0_455 = arith.constant 0 : index
    %1289 = vector.load %arg2[%c0_454, %c0_455] : memref<12x384xf32, #tpu.memory_space<vmem>>, vector<1x384xf32>
    %cst_456 = arith.constant 0.000000e+00 : f32
    %1290 = vector.shape_cast %1289 : vector<1x384xf32> to vector<1x384xf32>
    %1291 = vector.broadcast %1290 : vector<1x384xf32> to vector<2x384xf32>
    %1292 = vector.broadcast %cst_456 : f32 to vector<2x384xf32>
    %1293 = arith.select %1288, %1291, %1292 : vector<2x384xi1>, vector<2x384xf32>
    %c1_i32_457 = arith.constant 1 : i32
    %1294 = vector.broadcast %c1_i32_457 : i32 to vector<2x384xi32>
    %1295 = arith.cmpi eq, %1286, %1294 : vector<2x384xi32>
    %c1_458 = arith.constant 1 : index
    %c0_459 = arith.constant 0 : index
    %1296 = vector.load %arg2[%c1_458, %c0_459] : memref<12x384xf32, #tpu.memory_space<vmem>>, vector<1x384xf32>
    %cst_460 = arith.constant 0.000000e+00 : f32
    %1297 = vector.shape_cast %1296 : vector<1x384xf32> to vector<1x384xf32>
    %1298 = vector.broadcast %1297 : vector<1x384xf32> to vector<2x384xf32>
    %1299 = vector.broadcast %cst_460 : f32 to vector<2x384xf32>
    %1300 = arith.select %1295, %1298, %1299 : vector<2x384xi1>, vector<2x384xf32>
    %c2_i32_461 = arith.constant 2 : i32
    %1301 = vector.broadcast %c2_i32_461 : i32 to vector<2x384xi32>
    %1302 = arith.cmpi eq, %1286, %1301 : vector<2x384xi32>
    %c2_462 = arith.constant 2 : index
    %c0_463 = arith.constant 0 : index
    %1303 = vector.load %arg2[%c2_462, %c0_463] : memref<12x384xf32, #tpu.memory_space<vmem>>, vector<1x384xf32>
    %cst_464 = arith.constant 0.000000e+00 : f32
    %1304 = vector.shape_cast %1303 : vector<1x384xf32> to vector<1x384xf32>
    %1305 = vector.broadcast %1304 : vector<1x384xf32> to vector<2x384xf32>
    %1306 = vector.broadcast %cst_464 : f32 to vector<2x384xf32>
    %1307 = arith.select %1302, %1305, %1306 : vector<2x384xi1>, vector<2x384xf32>
    %c3_i32_465 = arith.constant 3 : i32
    %1308 = vector.broadcast %c3_i32_465 : i32 to vector<2x384xi32>
    %1309 = arith.cmpi eq, %1286, %1308 : vector<2x384xi32>
    %c3_466 = arith.constant 3 : index
    %c0_467 = arith.constant 0 : index
    %1310 = vector.load %arg2[%c3_466, %c0_467] : memref<12x384xf32, #tpu.memory_space<vmem>>, vector<1x384xf32>
    %cst_468 = arith.constant 0.000000e+00 : f32
    %1311 = vector.shape_cast %1310 : vector<1x384xf32> to vector<1x384xf32>
    %1312 = vector.broadcast %1311 : vector<1x384xf32> to vector<2x384xf32>
    %1313 = vector.broadcast %cst_468 : f32 to vector<2x384xf32>
    %1314 = arith.select %1309, %1312, %1313 : vector<2x384xi1>, vector<2x384xf32>
    %c4_i32_469 = arith.constant 4 : i32
    %1315 = vector.broadcast %c4_i32_469 : i32 to vector<2x384xi32>
    %1316 = arith.cmpi eq, %1286, %1315 : vector<2x384xi32>
    %c4_470 = arith.constant 4 : index
    %c0_471 = arith.constant 0 : index
    %1317 = vector.load %arg2[%c4_470, %c0_471] : memref<12x384xf32, #tpu.memory_space<vmem>>, vector<1x384xf32>
    %cst_472 = arith.constant 0.000000e+00 : f32
    %1318 = vector.shape_cast %1317 : vector<1x384xf32> to vector<1x384xf32>
    %1319 = vector.broadcast %1318 : vector<1x384xf32> to vector<2x384xf32>
    %1320 = vector.broadcast %cst_472 : f32 to vector<2x384xf32>
    %1321 = arith.select %1316, %1319, %1320 : vector<2x384xi1>, vector<2x384xf32>
    %c5_i32_473 = arith.constant 5 : i32
    %1322 = vector.broadcast %c5_i32_473 : i32 to vector<2x384xi32>
    %1323 = arith.cmpi eq, %1286, %1322 : vector<2x384xi32>
    %c5_474 = arith.constant 5 : index
    %c0_475 = arith.constant 0 : index
    %1324 = vector.load %arg2[%c5_474, %c0_475] : memref<12x384xf32, #tpu.memory_space<vmem>>, vector<1x384xf32>
    %cst_476 = arith.constant 0.000000e+00 : f32
    %1325 = vector.shape_cast %1324 : vector<1x384xf32> to vector<1x384xf32>
    %1326 = vector.broadcast %1325 : vector<1x384xf32> to vector<2x384xf32>
    %1327 = vector.broadcast %cst_476 : f32 to vector<2x384xf32>
    %1328 = arith.select %1323, %1326, %1327 : vector<2x384xi1>, vector<2x384xf32>
    %c6_i32_477 = arith.constant 6 : i32
    %1329 = vector.broadcast %c6_i32_477 : i32 to vector<2x384xi32>
    %1330 = arith.cmpi eq, %1286, %1329 : vector<2x384xi32>
    %c6_478 = arith.constant 6 : index
    %c0_479 = arith.constant 0 : index
    %1331 = vector.load %arg2[%c6_478, %c0_479] : memref<12x384xf32, #tpu.memory_space<vmem>>, vector<1x384xf32>
    %cst_480 = arith.constant 0.000000e+00 : f32
    %1332 = vector.shape_cast %1331 : vector<1x384xf32> to vector<1x384xf32>
    %1333 = vector.broadcast %1332 : vector<1x384xf32> to vector<2x384xf32>
    %1334 = vector.broadcast %cst_480 : f32 to vector<2x384xf32>
    %1335 = arith.select %1330, %1333, %1334 : vector<2x384xi1>, vector<2x384xf32>
    %c7_i32_481 = arith.constant 7 : i32
    %1336 = vector.broadcast %c7_i32_481 : i32 to vector<2x384xi32>
    %1337 = arith.cmpi eq, %1286, %1336 : vector<2x384xi32>
    %c7_482 = arith.constant 7 : index
    %c0_483 = arith.constant 0 : index
    %1338 = vector.load %arg2[%c7_482, %c0_483] : memref<12x384xf32, #tpu.memory_space<vmem>>, vector<1x384xf32>
    %cst_484 = arith.constant 0.000000e+00 : f32
    %1339 = vector.shape_cast %1338 : vector<1x384xf32> to vector<1x384xf32>
    %1340 = vector.broadcast %1339 : vector<1x384xf32> to vector<2x384xf32>
    %1341 = vector.broadcast %cst_484 : f32 to vector<2x384xf32>
    %1342 = arith.select %1337, %1340, %1341 : vector<2x384xi1>, vector<2x384xf32>
    %c8_i32_485 = arith.constant 8 : i32
    %1343 = vector.broadcast %c8_i32_485 : i32 to vector<2x384xi32>
    %1344 = arith.cmpi eq, %1286, %1343 : vector<2x384xi32>
    %c8_486 = arith.constant 8 : index
    %c0_487 = arith.constant 0 : index
    %1345 = vector.load %arg2[%c8_486, %c0_487] : memref<12x384xf32, #tpu.memory_space<vmem>>, vector<1x384xf32>
    %cst_488 = arith.constant 0.000000e+00 : f32
    %1346 = vector.shape_cast %1345 : vector<1x384xf32> to vector<1x384xf32>
    %1347 = vector.broadcast %1346 : vector<1x384xf32> to vector<2x384xf32>
    %1348 = vector.broadcast %cst_488 : f32 to vector<2x384xf32>
    %1349 = arith.select %1344, %1347, %1348 : vector<2x384xi1>, vector<2x384xf32>
    %c9_i32_489 = arith.constant 9 : i32
    %1350 = vector.broadcast %c9_i32_489 : i32 to vector<2x384xi32>
    %1351 = arith.cmpi eq, %1286, %1350 : vector<2x384xi32>
    %c9_490 = arith.constant 9 : index
    %c0_491 = arith.constant 0 : index
    %1352 = vector.load %arg2[%c9_490, %c0_491] : memref<12x384xf32, #tpu.memory_space<vmem>>, vector<1x384xf32>
    %cst_492 = arith.constant 0.000000e+00 : f32
    %1353 = vector.shape_cast %1352 : vector<1x384xf32> to vector<1x384xf32>
    %1354 = vector.broadcast %1353 : vector<1x384xf32> to vector<2x384xf32>
    %1355 = vector.broadcast %cst_492 : f32 to vector<2x384xf32>
    %1356 = arith.select %1351, %1354, %1355 : vector<2x384xi1>, vector<2x384xf32>
    %c10_i32_493 = arith.constant 10 : i32
    %1357 = vector.broadcast %c10_i32_493 : i32 to vector<2x384xi32>
    %1358 = arith.cmpi eq, %1286, %1357 : vector<2x384xi32>
    %c10_494 = arith.constant 10 : index
    %c0_495 = arith.constant 0 : index
    %1359 = vector.load %arg2[%c10_494, %c0_495] : memref<12x384xf32, #tpu.memory_space<vmem>>, vector<1x384xf32>
    %cst_496 = arith.constant 0.000000e+00 : f32
    %1360 = vector.shape_cast %1359 : vector<1x384xf32> to vector<1x384xf32>
    %1361 = vector.broadcast %1360 : vector<1x384xf32> to vector<2x384xf32>
    %1362 = vector.broadcast %cst_496 : f32 to vector<2x384xf32>
    %1363 = arith.select %1358, %1361, %1362 : vector<2x384xi1>, vector<2x384xf32>
    %c11_i32_497 = arith.constant 11 : i32
    %1364 = vector.broadcast %c11_i32_497 : i32 to vector<2x384xi32>
    %1365 = arith.cmpi eq, %1286, %1364 : vector<2x384xi32>
    %c11_498 = arith.constant 11 : index
    %c0_499 = arith.constant 0 : index
    %1366 = vector.load %arg2[%c11_498, %c0_499] : memref<12x384xf32, #tpu.memory_space<vmem>>, vector<1x384xf32>
    %cst_500 = arith.constant 0.000000e+00 : f32
    %1367 = vector.shape_cast %1366 : vector<1x384xf32> to vector<1x384xf32>
    %1368 = vector.broadcast %1367 : vector<1x384xf32> to vector<2x384xf32>
    %1369 = vector.broadcast %cst_500 : f32 to vector<2x384xf32>
    %1370 = arith.select %1365, %1368, %1369 : vector<2x384xi1>, vector<2x384xf32>
    %1371 = arith.addf %1293, %1300 : vector<2x384xf32>
    %1372 = arith.addf %1307, %1314 : vector<2x384xf32>
    %1373 = arith.addf %1321, %1328 : vector<2x384xf32>
    %1374 = arith.addf %1335, %1342 : vector<2x384xf32>
    %1375 = arith.addf %1349, %1356 : vector<2x384xf32>
    %1376 = arith.addf %1363, %1370 : vector<2x384xf32>
    %1377 = arith.addf %1371, %1372 : vector<2x384xf32>
    %1378 = arith.addf %1373, %1374 : vector<2x384xf32>
    %1379 = arith.addf %1375, %1376 : vector<2x384xf32>
    %1380 = arith.addf %1377, %1378 : vector<2x384xf32>
    %1381 = arith.addf %1380, %1379 : vector<2x384xf32>
    %c6_i32_501 = arith.constant 6 : i32
    %c2_i32_502 = arith.constant 2 : i32
    %1382 = arith.muli %c6_i32_501, %c2_i32_502 : i32
    %1383 = arith.index_cast %1382 : i32 to index
    %c0_503 = arith.constant 0 : index
    %1384 = vector.load %arg9[%1383, %c0_503] : memref<16x384xf32, #tpu.memory_space<vmem>>, vector<2x384xf32>
    %1385 = arith.addf %1381, %1384 : vector<2x384xf32>
    %c0_504 = arith.constant 0 : index
    %c0_505 = arith.constant 0 : index
    %1386 = vector.load %arg4[%c0_504, %c0_505] : memref<128x384xf32, #tpu.memory_space<vmem>>, vector<128x384xf32>
    %cst_506 = arith.constant dense<0.000000e+00> : vector<2x384xf32>
    %1387 = tpu.matmul %1207, %1386, %cst_506 {dimension_numbers = #tpu.dot_dimension_numbers<[1], [0], [0], [1], [0, 0, 1, 1], [], []>} : vector<2x128xf32>, vector<128x384xf32>, vector<2x384xf32> -> vector<2x384xf32>
    %1388 = vector.extract_strided_slice %1385 {offsets = [0, 0], sizes = [2, 128], strides = [1, 1]} : vector<2x384xf32> to vector<2x128xf32>
    %1389 = vector.extract_strided_slice %1387 {offsets = [0, 0], sizes = [2, 128], strides = [1, 1]} : vector<2x384xf32> to vector<2x128xf32>
    %1390 = arith.addf %1388, %1389 : vector<2x128xf32>
    %1391 = arith.negf %1390 : vector<2x128xf32>
    %1392 = math.exp %1391 : vector<2x128xf32>
    %cst_507 = arith.constant 1.000000e+00 : f32
    %1393 = vector.broadcast %cst_507 : f32 to vector<2x128xf32>
    %1394 = arith.addf %1393, %1392 : vector<2x128xf32>
    %1395 = arith.divf %1393, %1394 : vector<2x128xf32>
    %1396 = vector.extract_strided_slice %1385 {offsets = [0, 128], sizes = [2, 128], strides = [1, 1]} : vector<2x384xf32> to vector<2x128xf32>
    %1397 = vector.extract_strided_slice %1387 {offsets = [0, 128], sizes = [2, 128], strides = [1, 1]} : vector<2x384xf32> to vector<2x128xf32>
    %1398 = arith.addf %1396, %1397 : vector<2x128xf32>
    %1399 = arith.negf %1398 : vector<2x128xf32>
    %1400 = math.exp %1399 : vector<2x128xf32>
    %cst_508 = arith.constant 1.000000e+00 : f32
    %1401 = vector.broadcast %cst_508 : f32 to vector<2x128xf32>
    %1402 = arith.addf %1401, %1400 : vector<2x128xf32>
    %1403 = arith.divf %1401, %1402 : vector<2x128xf32>
    %1404 = vector.extract_strided_slice %1385 {offsets = [0, 256], sizes = [2, 128], strides = [1, 1]} : vector<2x384xf32> to vector<2x128xf32>
    %1405 = vector.extract_strided_slice %1387 {offsets = [0, 256], sizes = [2, 128], strides = [1, 1]} : vector<2x384xf32> to vector<2x128xf32>
    %1406 = vector.broadcast %1 : vector<1x128xf32> to vector<2x128xf32>
    %1407 = arith.addf %1405, %1406 : vector<2x128xf32>
    %1408 = arith.mulf %1395, %1407 : vector<2x128xf32>
    %1409 = arith.addf %1404, %1408 : vector<2x128xf32>
    %1410 = math.tanh %1409 : vector<2x128xf32>
    %cst_509 = arith.constant 1.000000e+00 : f32
    %1411 = vector.broadcast %cst_509 : f32 to vector<2x128xf32>
    %1412 = arith.subf %1411, %1403 : vector<2x128xf32>
    %1413 = arith.mulf %1412, %1410 : vector<2x128xf32>
    %1414 = arith.mulf %1403, %1207 : vector<2x128xf32>
    %1415 = arith.addf %1413, %1414 : vector<2x128xf32>
    %c0_510 = arith.constant 0 : index
    %c0_511 = arith.constant 0 : index
    %1416 = vector.load %arg5[%c0_510, %c0_511] : memref<128x256xf32, #tpu.memory_space<vmem>>, vector<128x128xf32>
    %cst_512 = arith.constant dense<0.000000e+00> : vector<2x128xf32>
    %1417 = tpu.matmul %1415, %1416, %cst_512 {dimension_numbers = #tpu.dot_dimension_numbers<[1], [0], [0], [1], [0, 0, 1, 1], [], []>} : vector<2x128xf32>, vector<128x128xf32>, vector<2x128xf32> -> vector<2x128xf32>
    %1418 = vector.broadcast %2 : vector<1x128xf32> to vector<2x128xf32>
    %1419 = arith.addf %1417, %1418 : vector<2x128xf32>
    %c1_i32_513 = arith.constant 1 : i32
    %1420 = tpu.dynamic_rotate %1419 by %c1_i32_513 dim 1 : vector<2x128xf32>, i32 -> vector<2x128xf32>
    %c1_i32_514 = arith.constant 1 : i32
    %1421 = tpu.dynamic_rotate %0 by %c1_i32_514 dim 1 : vector<2x128xi32>, i32 -> vector<2x128xi32>
    %1422 = arith.cmpf ogt, %1420, %1419 : vector<2x128xf32>
    %1423 = arith.cmpf oeq, %1420, %1419 : vector<2x128xf32>
    %1424 = arith.cmpi slt, %1421, %0 : vector<2x128xi32>
    %1425 = arith.andi %1423, %1424 : vector<2x128xi1>
    %1426 = arith.ori %1422, %1425 : vector<2x128xi1>
    %1427 = arith.select %1426, %1420, %1419 : vector<2x128xi1>, vector<2x128xf32>
    %1428 = arith.select %1426, %1421, %0 : vector<2x128xi1>, vector<2x128xi32>
    %c2_i32_515 = arith.constant 2 : i32
    %1429 = tpu.dynamic_rotate %1427 by %c2_i32_515 dim 1 : vector<2x128xf32>, i32 -> vector<2x128xf32>
    %c2_i32_516 = arith.constant 2 : i32
    %1430 = tpu.dynamic_rotate %1428 by %c2_i32_516 dim 1 : vector<2x128xi32>, i32 -> vector<2x128xi32>
    %1431 = arith.cmpf ogt, %1429, %1427 : vector<2x128xf32>
    %1432 = arith.cmpf oeq, %1429, %1427 : vector<2x128xf32>
    %1433 = arith.cmpi slt, %1430, %1428 : vector<2x128xi32>
    %1434 = arith.andi %1432, %1433 : vector<2x128xi1>
    %1435 = arith.ori %1431, %1434 : vector<2x128xi1>
    %1436 = arith.select %1435, %1429, %1427 : vector<2x128xi1>, vector<2x128xf32>
    %1437 = arith.select %1435, %1430, %1428 : vector<2x128xi1>, vector<2x128xi32>
    %c4_i32_517 = arith.constant 4 : i32
    %1438 = tpu.dynamic_rotate %1436 by %c4_i32_517 dim 1 : vector<2x128xf32>, i32 -> vector<2x128xf32>
    %c4_i32_518 = arith.constant 4 : i32
    %1439 = tpu.dynamic_rotate %1437 by %c4_i32_518 dim 1 : vector<2x128xi32>, i32 -> vector<2x128xi32>
    %1440 = arith.cmpf ogt, %1438, %1436 : vector<2x128xf32>
    %1441 = arith.cmpf oeq, %1438, %1436 : vector<2x128xf32>
    %1442 = arith.cmpi slt, %1439, %1437 : vector<2x128xi32>
    %1443 = arith.andi %1441, %1442 : vector<2x128xi1>
    %1444 = arith.ori %1440, %1443 : vector<2x128xi1>
    %1445 = arith.select %1444, %1438, %1436 : vector<2x128xi1>, vector<2x128xf32>
    %1446 = arith.select %1444, %1439, %1437 : vector<2x128xi1>, vector<2x128xi32>
    %c8_i32_519 = arith.constant 8 : i32
    %1447 = tpu.dynamic_rotate %1445 by %c8_i32_519 dim 1 : vector<2x128xf32>, i32 -> vector<2x128xf32>
    %c8_i32_520 = arith.constant 8 : i32
    %1448 = tpu.dynamic_rotate %1446 by %c8_i32_520 dim 1 : vector<2x128xi32>, i32 -> vector<2x128xi32>
    %1449 = arith.cmpf ogt, %1447, %1445 : vector<2x128xf32>
    %1450 = arith.cmpf oeq, %1447, %1445 : vector<2x128xf32>
    %1451 = arith.cmpi slt, %1448, %1446 : vector<2x128xi32>
    %1452 = arith.andi %1450, %1451 : vector<2x128xi1>
    %1453 = arith.ori %1449, %1452 : vector<2x128xi1>
    %1454 = arith.select %1453, %1447, %1445 : vector<2x128xi1>, vector<2x128xf32>
    %1455 = arith.select %1453, %1448, %1446 : vector<2x128xi1>, vector<2x128xi32>
    %c16_i32_521 = arith.constant 16 : i32
    %1456 = tpu.dynamic_rotate %1454 by %c16_i32_521 dim 1 : vector<2x128xf32>, i32 -> vector<2x128xf32>
    %c16_i32_522 = arith.constant 16 : i32
    %1457 = tpu.dynamic_rotate %1455 by %c16_i32_522 dim 1 : vector<2x128xi32>, i32 -> vector<2x128xi32>
    %1458 = arith.cmpf ogt, %1456, %1454 : vector<2x128xf32>
    %1459 = arith.cmpf oeq, %1456, %1454 : vector<2x128xf32>
    %1460 = arith.cmpi slt, %1457, %1455 : vector<2x128xi32>
    %1461 = arith.andi %1459, %1460 : vector<2x128xi1>
    %1462 = arith.ori %1458, %1461 : vector<2x128xi1>
    %1463 = arith.select %1462, %1456, %1454 : vector<2x128xi1>, vector<2x128xf32>
    %1464 = arith.select %1462, %1457, %1455 : vector<2x128xi1>, vector<2x128xi32>
    %c32_i32_523 = arith.constant 32 : i32
    %1465 = tpu.dynamic_rotate %1463 by %c32_i32_523 dim 1 : vector<2x128xf32>, i32 -> vector<2x128xf32>
    %c32_i32_524 = arith.constant 32 : i32
    %1466 = tpu.dynamic_rotate %1464 by %c32_i32_524 dim 1 : vector<2x128xi32>, i32 -> vector<2x128xi32>
    %1467 = arith.cmpf ogt, %1465, %1463 : vector<2x128xf32>
    %1468 = arith.cmpf oeq, %1465, %1463 : vector<2x128xf32>
    %1469 = arith.cmpi slt, %1466, %1464 : vector<2x128xi32>
    %1470 = arith.andi %1468, %1469 : vector<2x128xi1>
    %1471 = arith.ori %1467, %1470 : vector<2x128xi1>
    %1472 = arith.select %1471, %1465, %1463 : vector<2x128xi1>, vector<2x128xf32>
    %1473 = arith.select %1471, %1466, %1464 : vector<2x128xi1>, vector<2x128xi32>
    %c64_i32_525 = arith.constant 64 : i32
    %1474 = tpu.dynamic_rotate %1472 by %c64_i32_525 dim 1 : vector<2x128xf32>, i32 -> vector<2x128xf32>
    %c64_i32_526 = arith.constant 64 : i32
    %1475 = tpu.dynamic_rotate %1473 by %c64_i32_526 dim 1 : vector<2x128xi32>, i32 -> vector<2x128xi32>
    %1476 = arith.cmpf ogt, %1474, %1472 : vector<2x128xf32>
    %1477 = arith.cmpf oeq, %1474, %1472 : vector<2x128xf32>
    %1478 = arith.cmpi slt, %1475, %1473 : vector<2x128xi32>
    %1479 = arith.andi %1477, %1478 : vector<2x128xi1>
    %1480 = arith.ori %1476, %1479 : vector<2x128xi1>
    %1481 = arith.select %1480, %1474, %1472 : vector<2x128xi1>, vector<2x128xf32>
    %1482 = arith.select %1480, %1475, %1473 : vector<2x128xi1>, vector<2x128xi32>
    %1483 = arith.subf %1419, %1481 : vector<2x128xf32>
    %1484 = math.exp %1483 : vector<2x128xf32>
    %cst_527 = arith.constant dense<0.000000e+00> : vector<2xf32>
    %1485 = vector.multi_reduction <add>, %1484, %cst_527 [1] : vector<2x128xf32> to vector<2xf32>
    %1486 = vector.shape_cast %1485 : vector<2xf32> to vector<2x1xf32>
    %1487 = math.log %1486 : vector<2x1xf32>
    %1488 = vector.broadcast %1487 : vector<2x1xf32> to vector<2x128xf32>
    %1489 = arith.subf %1483, %1488 : vector<2x128xf32>
    %1490 = arith.index_cast %c6_i32_501 : i32 to index
    %c0_528 = arith.constant 0 : index
    %c0_529 = arith.constant 0 : index
    %1491 = vector.load %arg7[%1490, %c0_528, %c0_529] : memref<8x2x128xf32, #tpu.memory_space<vmem>>, vector<1x2x128xf32>
    %1492 = vector.shape_cast %1491 : vector<1x2x128xf32> to vector<2x128xf32>
    %1493 = vector.shape_cast %1489 : vector<2x128xf32> to vector<1x2x128xf32>
    tpu.vector_store %arg7[%1490, %c0_528, %c0_529], %1493 {strides = array<i32>} : memref<8x2x128xf32, #tpu.memory_space<vmem>>, vector<1x2x128xf32>,
    %1494 = tpu.concatenate %1482, %1482, %1482 in 1 : vector<2x128xi32>, vector<2x128xi32>, vector<2x128xi32> -> vector<2x384xi32>
    %c0_i32_530 = arith.constant 0 : i32
    %1495 = vector.broadcast %c0_i32_530 : i32 to vector<2x384xi32>
    %1496 = arith.cmpi eq, %1494, %1495 : vector<2x384xi32>
    %c0_531 = arith.constant 0 : index
    %c0_532 = arith.constant 0 : index
    %1497 = vector.load %arg2[%c0_531, %c0_532] : memref<12x384xf32, #tpu.memory_space<vmem>>, vector<1x384xf32>
    %cst_533 = arith.constant 0.000000e+00 : f32
    %1498 = vector.shape_cast %1497 : vector<1x384xf32> to vector<1x384xf32>
    %1499 = vector.broadcast %1498 : vector<1x384xf32> to vector<2x384xf32>
    %1500 = vector.broadcast %cst_533 : f32 to vector<2x384xf32>
    %1501 = arith.select %1496, %1499, %1500 : vector<2x384xi1>, vector<2x384xf32>
    %c1_i32_534 = arith.constant 1 : i32
    %1502 = vector.broadcast %c1_i32_534 : i32 to vector<2x384xi32>
    %1503 = arith.cmpi eq, %1494, %1502 : vector<2x384xi32>
    %c1_535 = arith.constant 1 : index
    %c0_536 = arith.constant 0 : index
    %1504 = vector.load %arg2[%c1_535, %c0_536] : memref<12x384xf32, #tpu.memory_space<vmem>>, vector<1x384xf32>
    %cst_537 = arith.constant 0.000000e+00 : f32
    %1505 = vector.shape_cast %1504 : vector<1x384xf32> to vector<1x384xf32>
    %1506 = vector.broadcast %1505 : vector<1x384xf32> to vector<2x384xf32>
    %1507 = vector.broadcast %cst_537 : f32 to vector<2x384xf32>
    %1508 = arith.select %1503, %1506, %1507 : vector<2x384xi1>, vector<2x384xf32>
    %c2_i32_538 = arith.constant 2 : i32
    %1509 = vector.broadcast %c2_i32_538 : i32 to vector<2x384xi32>
    %1510 = arith.cmpi eq, %1494, %1509 : vector<2x384xi32>
    %c2_539 = arith.constant 2 : index
    %c0_540 = arith.constant 0 : index
    %1511 = vector.load %arg2[%c2_539, %c0_540] : memref<12x384xf32, #tpu.memory_space<vmem>>, vector<1x384xf32>
    %cst_541 = arith.constant 0.000000e+00 : f32
    %1512 = vector.shape_cast %1511 : vector<1x384xf32> to vector<1x384xf32>
    %1513 = vector.broadcast %1512 : vector<1x384xf32> to vector<2x384xf32>
    %1514 = vector.broadcast %cst_541 : f32 to vector<2x384xf32>
    %1515 = arith.select %1510, %1513, %1514 : vector<2x384xi1>, vector<2x384xf32>
    %c3_i32_542 = arith.constant 3 : i32
    %1516 = vector.broadcast %c3_i32_542 : i32 to vector<2x384xi32>
    %1517 = arith.cmpi eq, %1494, %1516 : vector<2x384xi32>
    %c3_543 = arith.constant 3 : index
    %c0_544 = arith.constant 0 : index
    %1518 = vector.load %arg2[%c3_543, %c0_544] : memref<12x384xf32, #tpu.memory_space<vmem>>, vector<1x384xf32>
    %cst_545 = arith.constant 0.000000e+00 : f32
    %1519 = vector.shape_cast %1518 : vector<1x384xf32> to vector<1x384xf32>
    %1520 = vector.broadcast %1519 : vector<1x384xf32> to vector<2x384xf32>
    %1521 = vector.broadcast %cst_545 : f32 to vector<2x384xf32>
    %1522 = arith.select %1517, %1520, %1521 : vector<2x384xi1>, vector<2x384xf32>
    %c4_i32_546 = arith.constant 4 : i32
    %1523 = vector.broadcast %c4_i32_546 : i32 to vector<2x384xi32>
    %1524 = arith.cmpi eq, %1494, %1523 : vector<2x384xi32>
    %c4_547 = arith.constant 4 : index
    %c0_548 = arith.constant 0 : index
    %1525 = vector.load %arg2[%c4_547, %c0_548] : memref<12x384xf32, #tpu.memory_space<vmem>>, vector<1x384xf32>
    %cst_549 = arith.constant 0.000000e+00 : f32
    %1526 = vector.shape_cast %1525 : vector<1x384xf32> to vector<1x384xf32>
    %1527 = vector.broadcast %1526 : vector<1x384xf32> to vector<2x384xf32>
    %1528 = vector.broadcast %cst_549 : f32 to vector<2x384xf32>
    %1529 = arith.select %1524, %1527, %1528 : vector<2x384xi1>, vector<2x384xf32>
    %c5_i32_550 = arith.constant 5 : i32
    %1530 = vector.broadcast %c5_i32_550 : i32 to vector<2x384xi32>
    %1531 = arith.cmpi eq, %1494, %1530 : vector<2x384xi32>
    %c5_551 = arith.constant 5 : index
    %c0_552 = arith.constant 0 : index
    %1532 = vector.load %arg2[%c5_551, %c0_552] : memref<12x384xf32, #tpu.memory_space<vmem>>, vector<1x384xf32>
    %cst_553 = arith.constant 0.000000e+00 : f32
    %1533 = vector.shape_cast %1532 : vector<1x384xf32> to vector<1x384xf32>
    %1534 = vector.broadcast %1533 : vector<1x384xf32> to vector<2x384xf32>
    %1535 = vector.broadcast %cst_553 : f32 to vector<2x384xf32>
    %1536 = arith.select %1531, %1534, %1535 : vector<2x384xi1>, vector<2x384xf32>
    %c6_i32_554 = arith.constant 6 : i32
    %1537 = vector.broadcast %c6_i32_554 : i32 to vector<2x384xi32>
    %1538 = arith.cmpi eq, %1494, %1537 : vector<2x384xi32>
    %c6_555 = arith.constant 6 : index
    %c0_556 = arith.constant 0 : index
    %1539 = vector.load %arg2[%c6_555, %c0_556] : memref<12x384xf32, #tpu.memory_space<vmem>>, vector<1x384xf32>
    %cst_557 = arith.constant 0.000000e+00 : f32
    %1540 = vector.shape_cast %1539 : vector<1x384xf32> to vector<1x384xf32>
    %1541 = vector.broadcast %1540 : vector<1x384xf32> to vector<2x384xf32>
    %1542 = vector.broadcast %cst_557 : f32 to vector<2x384xf32>
    %1543 = arith.select %1538, %1541, %1542 : vector<2x384xi1>, vector<2x384xf32>
    %c7_i32_558 = arith.constant 7 : i32
    %1544 = vector.broadcast %c7_i32_558 : i32 to vector<2x384xi32>
    %1545 = arith.cmpi eq, %1494, %1544 : vector<2x384xi32>
    %c7_559 = arith.constant 7 : index
    %c0_560 = arith.constant 0 : index
    %1546 = vector.load %arg2[%c7_559, %c0_560] : memref<12x384xf32, #tpu.memory_space<vmem>>, vector<1x384xf32>
    %cst_561 = arith.constant 0.000000e+00 : f32
    %1547 = vector.shape_cast %1546 : vector<1x384xf32> to vector<1x384xf32>
    %1548 = vector.broadcast %1547 : vector<1x384xf32> to vector<2x384xf32>
    %1549 = vector.broadcast %cst_561 : f32 to vector<2x384xf32>
    %1550 = arith.select %1545, %1548, %1549 : vector<2x384xi1>, vector<2x384xf32>
    %c8_i32_562 = arith.constant 8 : i32
    %1551 = vector.broadcast %c8_i32_562 : i32 to vector<2x384xi32>
    %1552 = arith.cmpi eq, %1494, %1551 : vector<2x384xi32>
    %c8_563 = arith.constant 8 : index
    %c0_564 = arith.constant 0 : index
    %1553 = vector.load %arg2[%c8_563, %c0_564] : memref<12x384xf32, #tpu.memory_space<vmem>>, vector<1x384xf32>
    %cst_565 = arith.constant 0.000000e+00 : f32
    %1554 = vector.shape_cast %1553 : vector<1x384xf32> to vector<1x384xf32>
    %1555 = vector.broadcast %1554 : vector<1x384xf32> to vector<2x384xf32>
    %1556 = vector.broadcast %cst_565 : f32 to vector<2x384xf32>
    %1557 = arith.select %1552, %1555, %1556 : vector<2x384xi1>, vector<2x384xf32>
    %c9_i32_566 = arith.constant 9 : i32
    %1558 = vector.broadcast %c9_i32_566 : i32 to vector<2x384xi32>
    %1559 = arith.cmpi eq, %1494, %1558 : vector<2x384xi32>
    %c9_567 = arith.constant 9 : index
    %c0_568 = arith.constant 0 : index
    %1560 = vector.load %arg2[%c9_567, %c0_568] : memref<12x384xf32, #tpu.memory_space<vmem>>, vector<1x384xf32>
    %cst_569 = arith.constant 0.000000e+00 : f32
    %1561 = vector.shape_cast %1560 : vector<1x384xf32> to vector<1x384xf32>
    %1562 = vector.broadcast %1561 : vector<1x384xf32> to vector<2x384xf32>
    %1563 = vector.broadcast %cst_569 : f32 to vector<2x384xf32>
    %1564 = arith.select %1559, %1562, %1563 : vector<2x384xi1>, vector<2x384xf32>
    %c10_i32_570 = arith.constant 10 : i32
    %1565 = vector.broadcast %c10_i32_570 : i32 to vector<2x384xi32>
    %1566 = arith.cmpi eq, %1494, %1565 : vector<2x384xi32>
    %c10_571 = arith.constant 10 : index
    %c0_572 = arith.constant 0 : index
    %1567 = vector.load %arg2[%c10_571, %c0_572] : memref<12x384xf32, #tpu.memory_space<vmem>>, vector<1x384xf32>
    %cst_573 = arith.constant 0.000000e+00 : f32
    %1568 = vector.shape_cast %1567 : vector<1x384xf32> to vector<1x384xf32>
    %1569 = vector.broadcast %1568 : vector<1x384xf32> to vector<2x384xf32>
    %1570 = vector.broadcast %cst_573 : f32 to vector<2x384xf32>
    %1571 = arith.select %1566, %1569, %1570 : vector<2x384xi1>, vector<2x384xf32>
    %c11_i32_574 = arith.constant 11 : i32
    %1572 = vector.broadcast %c11_i32_574 : i32 to vector<2x384xi32>
    %1573 = arith.cmpi eq, %1494, %1572 : vector<2x384xi32>
    %c11_575 = arith.constant 11 : index
    %c0_576 = arith.constant 0 : index
    %1574 = vector.load %arg2[%c11_575, %c0_576] : memref<12x384xf32, #tpu.memory_space<vmem>>, vector<1x384xf32>
    %cst_577 = arith.constant 0.000000e+00 : f32
    %1575 = vector.shape_cast %1574 : vector<1x384xf32> to vector<1x384xf32>
    %1576 = vector.broadcast %1575 : vector<1x384xf32> to vector<2x384xf32>
    %1577 = vector.broadcast %cst_577 : f32 to vector<2x384xf32>
    %1578 = arith.select %1573, %1576, %1577 : vector<2x384xi1>, vector<2x384xf32>
    %1579 = arith.addf %1501, %1508 : vector<2x384xf32>
    %1580 = arith.addf %1515, %1522 : vector<2x384xf32>
    %1581 = arith.addf %1529, %1536 : vector<2x384xf32>
    %1582 = arith.addf %1543, %1550 : vector<2x384xf32>
    %1583 = arith.addf %1557, %1564 : vector<2x384xf32>
    %1584 = arith.addf %1571, %1578 : vector<2x384xf32>
    %1585 = arith.addf %1579, %1580 : vector<2x384xf32>
    %1586 = arith.addf %1581, %1582 : vector<2x384xf32>
    %1587 = arith.addf %1583, %1584 : vector<2x384xf32>
    %1588 = arith.addf %1585, %1586 : vector<2x384xf32>
    %1589 = arith.addf %1588, %1587 : vector<2x384xf32>
    %c7_i32_578 = arith.constant 7 : i32
    %c2_i32_579 = arith.constant 2 : i32
    %1590 = arith.muli %c7_i32_578, %c2_i32_579 : i32
    %1591 = arith.index_cast %1590 : i32 to index
    %c0_580 = arith.constant 0 : index
    %1592 = vector.load %arg9[%1591, %c0_580] : memref<16x384xf32, #tpu.memory_space<vmem>>, vector<2x384xf32>
    %1593 = arith.addf %1589, %1592 : vector<2x384xf32>
    %c0_581 = arith.constant 0 : index
    %c0_582 = arith.constant 0 : index
    %1594 = vector.load %arg4[%c0_581, %c0_582] : memref<128x384xf32, #tpu.memory_space<vmem>>, vector<128x384xf32>
    %cst_583 = arith.constant dense<0.000000e+00> : vector<2x384xf32>
    %1595 = tpu.matmul %1415, %1594, %cst_583 {dimension_numbers = #tpu.dot_dimension_numbers<[1], [0], [0], [1], [0, 0, 1, 1], [], []>} : vector<2x128xf32>, vector<128x384xf32>, vector<2x384xf32> -> vector<2x384xf32>
    %1596 = vector.extract_strided_slice %1593 {offsets = [0, 0], sizes = [2, 128], strides = [1, 1]} : vector<2x384xf32> to vector<2x128xf32>
    %1597 = vector.extract_strided_slice %1595 {offsets = [0, 0], sizes = [2, 128], strides = [1, 1]} : vector<2x384xf32> to vector<2x128xf32>
    %1598 = arith.addf %1596, %1597 : vector<2x128xf32>
    %1599 = arith.negf %1598 : vector<2x128xf32>
    %1600 = math.exp %1599 : vector<2x128xf32>
    %cst_584 = arith.constant 1.000000e+00 : f32
    %1601 = vector.broadcast %cst_584 : f32 to vector<2x128xf32>
    %1602 = arith.addf %1601, %1600 : vector<2x128xf32>
    %1603 = arith.divf %1601, %1602 : vector<2x128xf32>
    %1604 = vector.extract_strided_slice %1593 {offsets = [0, 128], sizes = [2, 128], strides = [1, 1]} : vector<2x384xf32> to vector<2x128xf32>
    %1605 = vector.extract_strided_slice %1595 {offsets = [0, 128], sizes = [2, 128], strides = [1, 1]} : vector<2x384xf32> to vector<2x128xf32>
    %1606 = arith.addf %1604, %1605 : vector<2x128xf32>
    %1607 = arith.negf %1606 : vector<2x128xf32>
    %1608 = math.exp %1607 : vector<2x128xf32>
    %cst_585 = arith.constant 1.000000e+00 : f32
    %1609 = vector.broadcast %cst_585 : f32 to vector<2x128xf32>
    %1610 = arith.addf %1609, %1608 : vector<2x128xf32>
    %1611 = arith.divf %1609, %1610 : vector<2x128xf32>
    %1612 = vector.extract_strided_slice %1593 {offsets = [0, 256], sizes = [2, 128], strides = [1, 1]} : vector<2x384xf32> to vector<2x128xf32>
    %1613 = vector.extract_strided_slice %1595 {offsets = [0, 256], sizes = [2, 128], strides = [1, 1]} : vector<2x384xf32> to vector<2x128xf32>
    %1614 = vector.broadcast %1 : vector<1x128xf32> to vector<2x128xf32>
    %1615 = arith.addf %1613, %1614 : vector<2x128xf32>
    %1616 = arith.mulf %1603, %1615 : vector<2x128xf32>
    %1617 = arith.addf %1612, %1616 : vector<2x128xf32>
    %1618 = math.tanh %1617 : vector<2x128xf32>
    %cst_586 = arith.constant 1.000000e+00 : f32
    %1619 = vector.broadcast %cst_586 : f32 to vector<2x128xf32>
    %1620 = arith.subf %1619, %1611 : vector<2x128xf32>
    %1621 = arith.mulf %1620, %1618 : vector<2x128xf32>
    %1622 = arith.mulf %1611, %1415 : vector<2x128xf32>
    %1623 = arith.addf %1621, %1622 : vector<2x128xf32>
    %c0_587 = arith.constant 0 : index
    %c0_588 = arith.constant 0 : index
    %1624 = vector.load %arg5[%c0_587, %c0_588] : memref<128x256xf32, #tpu.memory_space<vmem>>, vector<128x128xf32>
    %cst_589 = arith.constant dense<0.000000e+00> : vector<2x128xf32>
    %1625 = tpu.matmul %1623, %1624, %cst_589 {dimension_numbers = #tpu.dot_dimension_numbers<[1], [0], [0], [1], [0, 0, 1, 1], [], []>} : vector<2x128xf32>, vector<128x128xf32>, vector<2x128xf32> -> vector<2x128xf32>
    %1626 = vector.broadcast %2 : vector<1x128xf32> to vector<2x128xf32>
    %1627 = arith.addf %1625, %1626 : vector<2x128xf32>
    %c1_i32_590 = arith.constant 1 : i32
    %1628 = tpu.dynamic_rotate %1627 by %c1_i32_590 dim 1 : vector<2x128xf32>, i32 -> vector<2x128xf32>
    %c1_i32_591 = arith.constant 1 : i32
    %1629 = tpu.dynamic_rotate %0 by %c1_i32_591 dim 1 : vector<2x128xi32>, i32 -> vector<2x128xi32>
    %1630 = arith.cmpf ogt, %1628, %1627 : vector<2x128xf32>
    %1631 = arith.cmpf oeq, %1628, %1627 : vector<2x128xf32>
    %1632 = arith.cmpi slt, %1629, %0 : vector<2x128xi32>
    %1633 = arith.andi %1631, %1632 : vector<2x128xi1>
    %1634 = arith.ori %1630, %1633 : vector<2x128xi1>
    %1635 = arith.select %1634, %1628, %1627 : vector<2x128xi1>, vector<2x128xf32>
    %1636 = arith.select %1634, %1629, %0 : vector<2x128xi1>, vector<2x128xi32>
    %c2_i32_592 = arith.constant 2 : i32
    %1637 = tpu.dynamic_rotate %1635 by %c2_i32_592 dim 1 : vector<2x128xf32>, i32 -> vector<2x128xf32>
    %c2_i32_593 = arith.constant 2 : i32
    %1638 = tpu.dynamic_rotate %1636 by %c2_i32_593 dim 1 : vector<2x128xi32>, i32 -> vector<2x128xi32>
    %1639 = arith.cmpf ogt, %1637, %1635 : vector<2x128xf32>
    %1640 = arith.cmpf oeq, %1637, %1635 : vector<2x128xf32>
    %1641 = arith.cmpi slt, %1638, %1636 : vector<2x128xi32>
    %1642 = arith.andi %1640, %1641 : vector<2x128xi1>
    %1643 = arith.ori %1639, %1642 : vector<2x128xi1>
    %1644 = arith.select %1643, %1637, %1635 : vector<2x128xi1>, vector<2x128xf32>
    %1645 = arith.select %1643, %1638, %1636 : vector<2x128xi1>, vector<2x128xi32>
    %c4_i32_594 = arith.constant 4 : i32
    %1646 = tpu.dynamic_rotate %1644 by %c4_i32_594 dim 1 : vector<2x128xf32>, i32 -> vector<2x128xf32>
    %c4_i32_595 = arith.constant 4 : i32
    %1647 = tpu.dynamic_rotate %1645 by %c4_i32_595 dim 1 : vector<2x128xi32>, i32 -> vector<2x128xi32>
    %1648 = arith.cmpf ogt, %1646, %1644 : vector<2x128xf32>
    %1649 = arith.cmpf oeq, %1646, %1644 : vector<2x128xf32>
    %1650 = arith.cmpi slt, %1647, %1645 : vector<2x128xi32>
    %1651 = arith.andi %1649, %1650 : vector<2x128xi1>
    %1652 = arith.ori %1648, %1651 : vector<2x128xi1>
    %1653 = arith.select %1652, %1646, %1644 : vector<2x128xi1>, vector<2x128xf32>
    %1654 = arith.select %1652, %1647, %1645 : vector<2x128xi1>, vector<2x128xi32>
    %c8_i32_596 = arith.constant 8 : i32
    %1655 = tpu.dynamic_rotate %1653 by %c8_i32_596 dim 1 : vector<2x128xf32>, i32 -> vector<2x128xf32>
    %c8_i32_597 = arith.constant 8 : i32
    %1656 = tpu.dynamic_rotate %1654 by %c8_i32_597 dim 1 : vector<2x128xi32>, i32 -> vector<2x128xi32>
    %1657 = arith.cmpf ogt, %1655, %1653 : vector<2x128xf32>
    %1658 = arith.cmpf oeq, %1655, %1653 : vector<2x128xf32>
    %1659 = arith.cmpi slt, %1656, %1654 : vector<2x128xi32>
    %1660 = arith.andi %1658, %1659 : vector<2x128xi1>
    %1661 = arith.ori %1657, %1660 : vector<2x128xi1>
    %1662 = arith.select %1661, %1655, %1653 : vector<2x128xi1>, vector<2x128xf32>
    %1663 = arith.select %1661, %1656, %1654 : vector<2x128xi1>, vector<2x128xi32>
    %c16_i32_598 = arith.constant 16 : i32
    %1664 = tpu.dynamic_rotate %1662 by %c16_i32_598 dim 1 : vector<2x128xf32>, i32 -> vector<2x128xf32>
    %c16_i32_599 = arith.constant 16 : i32
    %1665 = tpu.dynamic_rotate %1663 by %c16_i32_599 dim 1 : vector<2x128xi32>, i32 -> vector<2x128xi32>
    %1666 = arith.cmpf ogt, %1664, %1662 : vector<2x128xf32>
    %1667 = arith.cmpf oeq, %1664, %1662 : vector<2x128xf32>
    %1668 = arith.cmpi slt, %1665, %1663 : vector<2x128xi32>
    %1669 = arith.andi %1667, %1668 : vector<2x128xi1>
    %1670 = arith.ori %1666, %1669 : vector<2x128xi1>
    %1671 = arith.select %1670, %1664, %1662 : vector<2x128xi1>, vector<2x128xf32>
    %1672 = arith.select %1670, %1665, %1663 : vector<2x128xi1>, vector<2x128xi32>
    %c32_i32_600 = arith.constant 32 : i32
    %1673 = tpu.dynamic_rotate %1671 by %c32_i32_600 dim 1 : vector<2x128xf32>, i32 -> vector<2x128xf32>
    %c32_i32_601 = arith.constant 32 : i32
    %1674 = tpu.dynamic_rotate %1672 by %c32_i32_601 dim 1 : vector<2x128xi32>, i32 -> vector<2x128xi32>
    %1675 = arith.cmpf ogt, %1673, %1671 : vector<2x128xf32>
    %1676 = arith.cmpf oeq, %1673, %1671 : vector<2x128xf32>
    %1677 = arith.cmpi slt, %1674, %1672 : vector<2x128xi32>
    %1678 = arith.andi %1676, %1677 : vector<2x128xi1>
    %1679 = arith.ori %1675, %1678 : vector<2x128xi1>
    %1680 = arith.select %1679, %1673, %1671 : vector<2x128xi1>, vector<2x128xf32>
    %1681 = arith.select %1679, %1674, %1672 : vector<2x128xi1>, vector<2x128xi32>
    %c64_i32_602 = arith.constant 64 : i32
    %1682 = tpu.dynamic_rotate %1680 by %c64_i32_602 dim 1 : vector<2x128xf32>, i32 -> vector<2x128xf32>
    %c64_i32_603 = arith.constant 64 : i32
    %1683 = tpu.dynamic_rotate %1681 by %c64_i32_603 dim 1 : vector<2x128xi32>, i32 -> vector<2x128xi32>
    %1684 = arith.cmpf ogt, %1682, %1680 : vector<2x128xf32>
    %1685 = arith.cmpf oeq, %1682, %1680 : vector<2x128xf32>
    %1686 = arith.cmpi slt, %1683, %1681 : vector<2x128xi32>
    %1687 = arith.andi %1685, %1686 : vector<2x128xi1>
    %1688 = arith.ori %1684, %1687 : vector<2x128xi1>
    %1689 = arith.select %1688, %1682, %1680 : vector<2x128xi1>, vector<2x128xf32>
    %1690 = arith.select %1688, %1683, %1681 : vector<2x128xi1>, vector<2x128xi32>
    %1691 = arith.subf %1627, %1689 : vector<2x128xf32>
    %1692 = math.exp %1691 : vector<2x128xf32>
    %cst_604 = arith.constant dense<0.000000e+00> : vector<2xf32>
    %1693 = vector.multi_reduction <add>, %1692, %cst_604 [1] : vector<2x128xf32> to vector<2xf32>
    %1694 = vector.shape_cast %1693 : vector<2xf32> to vector<2x1xf32>
    %1695 = math.log %1694 : vector<2x1xf32>
    %1696 = vector.broadcast %1695 : vector<2x1xf32> to vector<2x128xf32>
    %1697 = arith.subf %1691, %1696 : vector<2x128xf32>
    %1698 = arith.index_cast %c7_i32_578 : i32 to index
    %c0_605 = arith.constant 0 : index
    %c0_606 = arith.constant 0 : index
    %1699 = vector.load %arg7[%1698, %c0_605, %c0_606] : memref<8x2x128xf32, #tpu.memory_space<vmem>>, vector<1x2x128xf32>
    %1700 = vector.shape_cast %1699 : vector<1x2x128xf32> to vector<2x128xf32>
    %1701 = vector.shape_cast %1697 : vector<2x128xf32> to vector<1x2x128xf32>
    tpu.vector_store %arg7[%1698, %c0_605, %c0_606], %1701 {strides = array<i32>} : memref<8x2x128xf32, #tpu.memory_space<vmem>>, vector<1x2x128xf32>,
    %1702 = tpu.concatenate %1690, %1690, %1690 in 1 : vector<2x128xi32>, vector<2x128xi32>, vector<2x128xi32> -> vector<2x384xi32>
    %c0_i32_607 = arith.constant 0 : i32
    %1703 = vector.broadcast %c0_i32_607 : i32 to vector<2x384xi32>
    %1704 = arith.cmpi eq, %1702, %1703 : vector<2x384xi32>
    %c0_608 = arith.constant 0 : index
    %c0_609 = arith.constant 0 : index
    %1705 = vector.load %arg2[%c0_608, %c0_609] : memref<12x384xf32, #tpu.memory_space<vmem>>, vector<1x384xf32>
    %cst_610 = arith.constant 0.000000e+00 : f32
    %1706 = vector.shape_cast %1705 : vector<1x384xf32> to vector<1x384xf32>
    %1707 = vector.broadcast %1706 : vector<1x384xf32> to vector<2x384xf32>
    %1708 = vector.broadcast %cst_610 : f32 to vector<2x384xf32>
    %1709 = arith.select %1704, %1707, %1708 : vector<2x384xi1>, vector<2x384xf32>
    %c1_i32_611 = arith.constant 1 : i32
    %1710 = vector.broadcast %c1_i32_611 : i32 to vector<2x384xi32>
    %1711 = arith.cmpi eq, %1702, %1710 : vector<2x384xi32>
    %c1_612 = arith.constant 1 : index
    %c0_613 = arith.constant 0 : index
    %1712 = vector.load %arg2[%c1_612, %c0_613] : memref<12x384xf32, #tpu.memory_space<vmem>>, vector<1x384xf32>
    %cst_614 = arith.constant 0.000000e+00 : f32
    %1713 = vector.shape_cast %1712 : vector<1x384xf32> to vector<1x384xf32>
    %1714 = vector.broadcast %1713 : vector<1x384xf32> to vector<2x384xf32>
    %1715 = vector.broadcast %cst_614 : f32 to vector<2x384xf32>
    %1716 = arith.select %1711, %1714, %1715 : vector<2x384xi1>, vector<2x384xf32>
    %c2_i32_615 = arith.constant 2 : i32
    %1717 = vector.broadcast %c2_i32_615 : i32 to vector<2x384xi32>
    %1718 = arith.cmpi eq, %1702, %1717 : vector<2x384xi32>
    %c2_616 = arith.constant 2 : index
    %c0_617 = arith.constant 0 : index
    %1719 = vector.load %arg2[%c2_616, %c0_617] : memref<12x384xf32, #tpu.memory_space<vmem>>, vector<1x384xf32>
    %cst_618 = arith.constant 0.000000e+00 : f32
    %1720 = vector.shape_cast %1719 : vector<1x384xf32> to vector<1x384xf32>
    %1721 = vector.broadcast %1720 : vector<1x384xf32> to vector<2x384xf32>
    %1722 = vector.broadcast %cst_618 : f32 to vector<2x384xf32>
    %1723 = arith.select %1718, %1721, %1722 : vector<2x384xi1>, vector<2x384xf32>
    %c3_i32_619 = arith.constant 3 : i32
    %1724 = vector.broadcast %c3_i32_619 : i32 to vector<2x384xi32>
    %1725 = arith.cmpi eq, %1702, %1724 : vector<2x384xi32>
    %c3_620 = arith.constant 3 : index
    %c0_621 = arith.constant 0 : index
    %1726 = vector.load %arg2[%c3_620, %c0_621] : memref<12x384xf32, #tpu.memory_space<vmem>>, vector<1x384xf32>
    %cst_622 = arith.constant 0.000000e+00 : f32
    %1727 = vector.shape_cast %1726 : vector<1x384xf32> to vector<1x384xf32>
    %1728 = vector.broadcast %1727 : vector<1x384xf32> to vector<2x384xf32>
    %1729 = vector.broadcast %cst_622 : f32 to vector<2x384xf32>
    %1730 = arith.select %1725, %1728, %1729 : vector<2x384xi1>, vector<2x384xf32>
    %c4_i32_623 = arith.constant 4 : i32
    %1731 = vector.broadcast %c4_i32_623 : i32 to vector<2x384xi32>
    %1732 = arith.cmpi eq, %1702, %1731 : vector<2x384xi32>
    %c4_624 = arith.constant 4 : index
    %c0_625 = arith.constant 0 : index
    %1733 = vector.load %arg2[%c4_624, %c0_625] : memref<12x384xf32, #tpu.memory_space<vmem>>, vector<1x384xf32>
    %cst_626 = arith.constant 0.000000e+00 : f32
    %1734 = vector.shape_cast %1733 : vector<1x384xf32> to vector<1x384xf32>
    %1735 = vector.broadcast %1734 : vector<1x384xf32> to vector<2x384xf32>
    %1736 = vector.broadcast %cst_626 : f32 to vector<2x384xf32>
    %1737 = arith.select %1732, %1735, %1736 : vector<2x384xi1>, vector<2x384xf32>
    %c5_i32_627 = arith.constant 5 : i32
    %1738 = vector.broadcast %c5_i32_627 : i32 to vector<2x384xi32>
    %1739 = arith.cmpi eq, %1702, %1738 : vector<2x384xi32>
    %c5_628 = arith.constant 5 : index
    %c0_629 = arith.constant 0 : index
    %1740 = vector.load %arg2[%c5_628, %c0_629] : memref<12x384xf32, #tpu.memory_space<vmem>>, vector<1x384xf32>
    %cst_630 = arith.constant 0.000000e+00 : f32
    %1741 = vector.shape_cast %1740 : vector<1x384xf32> to vector<1x384xf32>
    %1742 = vector.broadcast %1741 : vector<1x384xf32> to vector<2x384xf32>
    %1743 = vector.broadcast %cst_630 : f32 to vector<2x384xf32>
    %1744 = arith.select %1739, %1742, %1743 : vector<2x384xi1>, vector<2x384xf32>
    %c6_i32_631 = arith.constant 6 : i32
    %1745 = vector.broadcast %c6_i32_631 : i32 to vector<2x384xi32>
    %1746 = arith.cmpi eq, %1702, %1745 : vector<2x384xi32>
    %c6_632 = arith.constant 6 : index
    %c0_633 = arith.constant 0 : index
    %1747 = vector.load %arg2[%c6_632, %c0_633] : memref<12x384xf32, #tpu.memory_space<vmem>>, vector<1x384xf32>
    %cst_634 = arith.constant 0.000000e+00 : f32
    %1748 = vector.shape_cast %1747 : vector<1x384xf32> to vector<1x384xf32>
    %1749 = vector.broadcast %1748 : vector<1x384xf32> to vector<2x384xf32>
    %1750 = vector.broadcast %cst_634 : f32 to vector<2x384xf32>
    %1751 = arith.select %1746, %1749, %1750 : vector<2x384xi1>, vector<2x384xf32>
    %c7_i32_635 = arith.constant 7 : i32
    %1752 = vector.broadcast %c7_i32_635 : i32 to vector<2x384xi32>
    %1753 = arith.cmpi eq, %1702, %1752 : vector<2x384xi32>
    %c7_636 = arith.constant 7 : index
    %c0_637 = arith.constant 0 : index
    %1754 = vector.load %arg2[%c7_636, %c0_637] : memref<12x384xf32, #tpu.memory_space<vmem>>, vector<1x384xf32>
    %cst_638 = arith.constant 0.000000e+00 : f32
    %1755 = vector.shape_cast %1754 : vector<1x384xf32> to vector<1x384xf32>
    %1756 = vector.broadcast %1755 : vector<1x384xf32> to vector<2x384xf32>
    %1757 = vector.broadcast %cst_638 : f32 to vector<2x384xf32>
    %1758 = arith.select %1753, %1756, %1757 : vector<2x384xi1>, vector<2x384xf32>
    %c8_i32_639 = arith.constant 8 : i32
    %1759 = vector.broadcast %c8_i32_639 : i32 to vector<2x384xi32>
    %1760 = arith.cmpi eq, %1702, %1759 : vector<2x384xi32>
    %c8_640 = arith.constant 8 : index
    %c0_641 = arith.constant 0 : index
    %1761 = vector.load %arg2[%c8_640, %c0_641] : memref<12x384xf32, #tpu.memory_space<vmem>>, vector<1x384xf32>
    %cst_642 = arith.constant 0.000000e+00 : f32
    %1762 = vector.shape_cast %1761 : vector<1x384xf32> to vector<1x384xf32>
    %1763 = vector.broadcast %1762 : vector<1x384xf32> to vector<2x384xf32>
    %1764 = vector.broadcast %cst_642 : f32 to vector<2x384xf32>
    %1765 = arith.select %1760, %1763, %1764 : vector<2x384xi1>, vector<2x384xf32>
    %c9_i32_643 = arith.constant 9 : i32
    %1766 = vector.broadcast %c9_i32_643 : i32 to vector<2x384xi32>
    %1767 = arith.cmpi eq, %1702, %1766 : vector<2x384xi32>
    %c9_644 = arith.constant 9 : index
    %c0_645 = arith.constant 0 : index
    %1768 = vector.load %arg2[%c9_644, %c0_645] : memref<12x384xf32, #tpu.memory_space<vmem>>, vector<1x384xf32>
    %cst_646 = arith.constant 0.000000e+00 : f32
    %1769 = vector.shape_cast %1768 : vector<1x384xf32> to vector<1x384xf32>
    %1770 = vector.broadcast %1769 : vector<1x384xf32> to vector<2x384xf32>
    %1771 = vector.broadcast %cst_646 : f32 to vector<2x384xf32>
    %1772 = arith.select %1767, %1770, %1771 : vector<2x384xi1>, vector<2x384xf32>
    %c10_i32_647 = arith.constant 10 : i32
    %1773 = vector.broadcast %c10_i32_647 : i32 to vector<2x384xi32>
    %1774 = arith.cmpi eq, %1702, %1773 : vector<2x384xi32>
    %c10_648 = arith.constant 10 : index
    %c0_649 = arith.constant 0 : index
    %1775 = vector.load %arg2[%c10_648, %c0_649] : memref<12x384xf32, #tpu.memory_space<vmem>>, vector<1x384xf32>
    %cst_650 = arith.constant 0.000000e+00 : f32
    %1776 = vector.shape_cast %1775 : vector<1x384xf32> to vector<1x384xf32>
    %1777 = vector.broadcast %1776 : vector<1x384xf32> to vector<2x384xf32>
    %1778 = vector.broadcast %cst_650 : f32 to vector<2x384xf32>
    %1779 = arith.select %1774, %1777, %1778 : vector<2x384xi1>, vector<2x384xf32>
    %c11_i32_651 = arith.constant 11 : i32
    %1780 = vector.broadcast %c11_i32_651 : i32 to vector<2x384xi32>
    %1781 = arith.cmpi eq, %1702, %1780 : vector<2x384xi32>
    %c11_652 = arith.constant 11 : index
    %c0_653 = arith.constant 0 : index
    %1782 = vector.load %arg2[%c11_652, %c0_653] : memref<12x384xf32, #tpu.memory_space<vmem>>, vector<1x384xf32>
    %cst_654 = arith.constant 0.000000e+00 : f32
    %1783 = vector.shape_cast %1782 : vector<1x384xf32> to vector<1x384xf32>
    %1784 = vector.broadcast %1783 : vector<1x384xf32> to vector<2x384xf32>
    %1785 = vector.broadcast %cst_654 : f32 to vector<2x384xf32>
    %1786 = arith.select %1781, %1784, %1785 : vector<2x384xi1>, vector<2x384xf32>
    %1787 = arith.addf %1709, %1716 : vector<2x384xf32>
    %1788 = arith.addf %1723, %1730 : vector<2x384xf32>
    %1789 = arith.addf %1737, %1744 : vector<2x384xf32>
    %1790 = arith.addf %1751, %1758 : vector<2x384xf32>
    %1791 = arith.addf %1765, %1772 : vector<2x384xf32>
    %1792 = arith.addf %1779, %1786 : vector<2x384xf32>
    %1793 = arith.addf %1787, %1788 : vector<2x384xf32>
    %1794 = arith.addf %1789, %1790 : vector<2x384xf32>
    %1795 = arith.addf %1791, %1792 : vector<2x384xf32>
    %1796 = arith.addf %1793, %1794 : vector<2x384xf32>
    %1797 = arith.addf %1796, %1795 : vector<2x384xf32>
    %c7_i32_655 = arith.constant 7 : i32
    return
  }
}

</mosaic_0001>

<llo_original>
// kernel: tpu_custom_call.1
$region0: #{tpu_custom_call.1}
  #allocation0 [shape = 'u32[]', space=smem, size = 0x4, offset = 0x4, fixed_abs, tag = 'smem constant byte address 0x4 - core index']
  #allocation1 [shape = 'u32[144,128]{1,0:T(1,128)}', space=vmem, size = 0x12000, scoped, tag = 'internal scratch']
  #allocation2 [shape = 'f32[16,384]{1,0:T(8,128)}', space=vmem, size = 0x6000, scoped, tag = 'scratch operand']
  %s0 = inlined_call_operand.vmem [shape: s32[2,1], index: 0, kind: input, shape index: {}]
  %s1 = inlined_call_operand.hbm [shape: f32[16,32], index: 1, kind: input, shape index: {}]
  %s2 = inlined_call_operand.hbm [shape: f32[12,384], index: 2, kind: input, shape index: {}]
  %s3 = inlined_call_operand.hbm [shape: f32[32,384], index: 3, kind: input, shape index: {}]
  %s4 = inlined_call_operand.hbm [shape: f32[128,384], index: 4, kind: input, shape index: {}]
  %s5 = inlined_call_operand.hbm [shape: f32[128,256], index: 5, kind: input, shape index: {}]
  %s6 = inlined_call_operand.vmem [shape: f32[1,768], index: 6, kind: input, shape index: {}]
  %s7 = inlined_call_operand.hbm [shape: f32[8,2,128], index: 7, kind: output, shape index: {0}]
  %s8 = inlined_call_operand.hbm [shape: f32[2,128], index: 8, kind: output, shape index: {1}]
  %9 = xla_tuple %s7, %s8
  %s10 = sld [smem:[#allocation0]]
  $region66: #{tpu_custom_call.1} parent=0
    _
  %s12 = ssub.s32 1, %s10
  %s13 = scalar_select 0, %s12, %s10
  $region1: #{tpu_custom_call.1} parent=0
    #allocation3 [shape = 'u8[8192]{0}', space=vmem, size = 0x2000, scoped, tag = 'input window, operand 1, single buffered']
    #allocation4 [shape = 's32[1]{0}', space=sflag, size = 0x4, scoped, tag = 'scoped memory for tpu_custom_call.1']
    #allocation5 [shape = 's32[1]{0}', space=sflag, size = 0x4, scoped, tag = 'scoped memory for tpu_custom_call.1']
    #allocation6 [shape = 'u8[24576]{0}', space=vmem, size = 0x6000, scoped, tag = 'input window, operand 2, single buffered']
    #allocation7 [shape = 's32[1]{0}', space=sflag, size = 0x4, scoped, tag = 'scoped memory for tpu_custom_call.1']
    #allocation8 [shape = 'u8[49152]{0}', space=vmem, size = 0xc000, scoped, tag = 'input window, operand 3, single buffered']
    #allocation9 [shape = 'u8[196608]{0}', space=vmem, size = 0x30000, scoped, tag = 'input window, operand 4, single buffered']
    #allocation10 [shape = 's32[1]{0}', space=sflag, size = 0x4, scoped, tag = 'scoped memory for tpu_custom_call.1']
    #allocation11 [shape = 'u8[131072]{0}', space=vmem, size = 0x20000, scoped, tag = 'input window, operand 5, single buffered']
    #allocation12 [shape = 'u8[8192]{0}', space=vmem, size = 0x2000, scoped, tag = 'output window, operand 0, single buffered']
    #allocation13 [shape = 'u8[1024]{0}', space=vmem, size = 0x400, scoped, tag = 'output window, operand 1, single buffered']
    #allocation14 [shape = 's32[1]{0}', space=sflag, size = 0x4, scoped, tag = 'scoped memory for tpu_custom_call.1']
    %14 = vsyncpa [#allocation4], 0
    %15 = vsyncpa [#allocation7], 0
    %16 = vsyncpa [#allocation10], 0
    %17 = vsyncpa [#allocation5], 0
    %18 = vsyncpa [#allocation14], 0
    // Predicated region
    $region2: #{tpu_custom_call.1} parent=1 // pred_check
      _
    $region3: #{tpu_custom_call.1} parent=1 // pred_check_branch
      %20 = sbr.rel (0) target = $region5
    $region4: #{tpu_custom_call.1} parent=1 // pred_region
      _
    $region5: #{tpu_custom_call.1} parent=1 // pred_fallthru
      _
    // Predicated region
    $region6: #{tpu_custom_call.1} parent=1 // pred_check
      _
    $region7: #{tpu_custom_call.1} parent=1 // pred_check_branch
      %22 = sbr.rel (0) target = $region9
    $region8: #{tpu_custom_call.1} parent=1 // pred_region
      %s24 = ssub.s32 256, 256
      %25 = vsyncadd [#allocation4], %s24
      %s26 = sshll.u32 [#allocation3], 4
      %s27 = int_to_ptr.vmem [resolvable:$true] %s26
      %32 = dma.hbm_to_vmem [thread:$0]  %s1, 256, %s27, [#allocation4], 128, 128, 8
    $region9: #{tpu_custom_call.1} parent=1 // pred_fallthru
      _
    // Predicated region
    $region10: #{tpu_custom_call.1} parent=1 // pred_check
      _
    $region11: #{tpu_custom_call.1} parent=1 // pred_check_branch
      %34 = sbr.rel (0) target = $region13
    $region12: #{tpu_custom_call.1} parent=1 // pred_region
      %s36 = ssub.s32 768, 768
      %37 = vsyncadd [#allocation7], %s36
      %s38 = sshll.u32 [#allocation6], 4
      %s39 = int_to_ptr.vmem [resolvable:$true] %s38
      %44 = dma.hbm_to_vmem [thread:$0]  %s2, 768, %s39, [#allocation7], 384, 384, 24
    $region13: #{tpu_custom_call.1} parent=1 // pred_fallthru
      _
    // Predicated region
    $region14: #{tpu_custom_call.1} parent=1 // pred_check
      _
    $region15: #{tpu_custom_call.1} parent=1 // pred_check_branch
      %46 = sbr.rel (0) target = $region17
    $region16: #{tpu_custom_call.1} parent=1 // pred_region
      %s48 = ssub.s32 1536, 1536
      %49 = vsyncadd [#allocation7], %s48
      %s50 = sshll.u32 [#allocation8], 4
      %s51 = int_to_ptr.vmem [resolvable:$true] %s50
      %56 = dma.hbm_to_vmem [thread:$0]  %s3, 1536, %s51, [#allocation7], 384, 384, 24
    $region17: #{tpu_custom_call.1} parent=1 // pred_fallthru
      _
    // Predicated region
    $region18: #{tpu_custom_call.1} parent=1 // pred_check
      _
    $region19: #{tpu_custom_call.1} parent=1 // pred_check_branch
      %58 = sbr.rel (0) target = $region21
    $region20: #{tpu_custom_call.1} parent=1 // pred_region
      %s60 = ssub.s32 6144, 6144
      %61 = vsyncadd [#allocation10], %s60
      %s62 = sshll.u32 [#allocation9], 4
      %s63 = int_to_ptr.vmem [resolvable:$true] %s62
      %68 = dma.hbm_to_vmem [thread:$0]  %s4, 6144, %s63, [#allocation10], 384, 384, 24
    $region21: #{tpu_custom_call.1} parent=1 // pred_fallthru
      _
    // Predicated region
    $region22: #{tpu_custom_call.1} parent=1 // pred_check
      _
    $region23: #{tpu_custom_call.1} parent=1 // pred_check_branch
      %70 = sbr.rel (0) target = $region25
    $region24: #{tpu_custom_call.1} parent=1 // pred_region
      %s72 = ssub.s32 4096, 4096
      %73 = vsyncadd [#allocation10], %s72
      %s74 = sshll.u32 [#allocation11], 4
      %s75 = int_to_ptr.vmem [resolvable:$true] %s74
      %80 = dma.hbm_to_vmem [thread:$0]  %s5, 4096, %s75, [#allocation10], 256, 256, 16
    $region25: #{tpu_custom_call.1} parent=1 // pred_fallthru
      _
    // Predicated region
    $region26: #{tpu_custom_call.1} parent=1 // pred_check
      _
    $region27: #{tpu_custom_call.1} parent=1 // pred_check_branch
      %82 = sbr.rel (0) target = $region29
    $region28: #{tpu_custom_call.1} parent=1 // pred_region
      _
    $region29: #{tpu_custom_call.1} parent=1 // pred_fallthru
      _
    // Predicated region
    $region30: #{tpu_custom_call.1} parent=1 // pred_check
      _
    $region31: #{tpu_custom_call.1} parent=1 // pred_check_branch
      %84 = sbr.rel (0) target = $region33
    $region32: #{tpu_custom_call.1} parent=1 // pred_region
      %85 = dma.done [#allocation4], 256
    $region33: #{tpu_custom_call.1} parent=1 // pred_fallthru
      _
    // Predicated region
    $region34: #{tpu_custom_call.1} parent=1 // pred_check
      _
    $region35: #{tpu_custom_call.1} parent=1 // pred_check_branch
      %87 = sbr.rel (0) target = $region37
    $region36: #{tpu_custom_call.1} parent=1 // pred_region
      %88 = dma.done [#allocation7], 768
    $region37: #{tpu_custom_call.1} parent=1 // pred_fallthru
      _
    // Predicated region
    $region38: #{tpu_custom_call.1} parent=1 // pred_check
      _
    $region39: #{tpu_custom_call.1} parent=1 // pred_check_branch
      %90 = sbr.rel (0) target = $region41
    $region40: #{tpu_custom_call.1} parent=1 // pred_region
      %91 = dma.done [#allocation7], 1536
    $region41: #{tpu_custom_call.1} parent=1 // pred_fallthru
      _
    // Predicated region
    $region42: #{tpu_custom_call.1} parent=1 // pred_check
      _
    $region43: #{tpu_custom_call.1} parent=1 // pred_check_branch
      %93 = sbr.rel (0) target = $region45
    $region44: #{tpu_custom_call.1} parent=1 // pred_region
      %94 = dma.done [#allocation10], 6144
    $region45: #{tpu_custom_call.1} parent=1 // pred_fallthru
      _
    // Predicated region
    $region46: #{tpu_custom_call.1} parent=1 // pred_check
      _
    $region47: #{tpu_custom_call.1} parent=1 // pred_check_branch
      %96 = sbr.rel (0) target = $region49
    $region48: #{tpu_custom_call.1} parent=1 // pred_region
      %97 = dma.done [#allocation10], 4096
    $region49: #{tpu_custom_call.1} parent=1 // pred_fallthru
      _
    %v98 = vlaneseq
    %v99 = vand.u32 %v98, 127
    %v100 = vld [vmem:[%s6 + $0x3] sm:$0x1]
    %v101 = vld [vmem:[%s6 + $0x4] sm:$0x1]
    %v102 = vld [vmem:[#allocation3] sm:$0xff]
    %v103 = vld [vmem:[#allocation3 + $0x8] sm:$0xff]
    %v104 = vld [vmem:[#allocation8] sm:$0xff]
    %v105 = vld [vmem:[#allocation8 + $0x8] sm:$0xff]
    %v106 = vld [vmem:[#allocation8 + $0x10] sm:$0xff]
    %v107 = vld [vmem:[#allocation8 + $0x18] sm:$0xff]
    %v108 = vld [vmem:[#allocation8 + $0x20] sm:$0xff]
    %v109 = vld [vmem:[#allocation8 + $0x28] sm:$0xff]
    %v110 = vld [vmem:[#allocation8 + $0x30] sm:$0xff]
    %v111 = vld [vmem:[#allocation8 + $0x38] sm:$0xff]
    %v112 = vld [vmem:[#allocation8 + $0x40] sm:$0xff]
    %v113 = vld [vmem:[#allocation8 + $0x48] sm:$0xff]
    %v114 = vld [vmem:[#allocation8 + $0x50] sm:$0xff]
    %v115 = vld [vmem:[#allocation8 + $0x58] sm:$0xff]
    %v116 = vld [vmem:[%s6] sm:$0x7]
    %v118 = vlaneseq
    %v119 = vshrl.u32 %v118, 7
    %v120 = vsub.s32 0, %v119
    %v121 = vrot.slane %v116, %v120
    %v122 = vlaneseq
    %v123 = vshrl.u32 %v122, 7
    %v124 = vsub.s32 1, %v123
    %v125 = vrot.slane %v116, %v124
    %v126 = vlaneseq
    %v127 = vshrl.u32 %v126, 7
    %v128 = vsub.s32 2, %v127
    %v129 = vrot.slane %v116, %v128
    %vm133 = vcmask 261120
    %v135 = vsel %vm133, %v102, 0
    %v138 = vsel %vm133, %v103, 0
    %140 = vmatprep.subr.mxu0 0.0
    %141 = vmatpush1.msra.mxu0 0.0
    %142 = vmatprep.subr.mxu0 0.0
    %143 = vmatpush1.msra.mxu0 0.0
    %144 = vmatprep.subr.mxu0 0.0
    %145 = vmatpush1.msra.mxu0 0.0
    %146 = vmatprep.subr.mxu0 0.0
    %147 = vmatpush1.msra.mxu0 0.0
    %148 = vmatprep.subr.mxu0 0.0
    %149 = vmatpush1.msra.mxu0 0.0
    %150 = vmatprep.subr.mxu0 0.0
    %151 = vmatpush1.msra.mxu0 0.0
    %152 = vmatprep.subr.mxu0 0.0
    %153 = vmatpush1.msra.mxu0 0.0
    %154 = vmatprep.subr.mxu0 0.0
    %155 = vmatpush1.msra.mxu0 0.0
    %156 = vmatprep.subr.mxu0 0.0
    %157 = vmatpush1.msra.mxu0 0.0
    %158 = vmatprep.subr.mxu0 0.0
    %159 = vmatpush1.msra.mxu0 0.0
    %160 = vmatprep.subr.mxu0 0.0
    %161 = vmatpush1.msra.mxu0 0.0
    %162 = vmatprep.subr.mxu0 0.0
    %163 = vmatpush1.msra.mxu0 0.0
    %164 = vmatprep.subr.mxu0 %v114
    %165 = vmatpush1.msra.mxu0 %v113
    %166 = vmatprep.subr.mxu0 %v111
    %167 = vmatpush1.msra.mxu0 %v110
    %168 = vmatprep.subr.mxu0 %v108
    %169 = vmatpush1.msra.mxu0 %v107
    %170 = vmatprep.subr.mxu0 %v105
    %171 = vmatpush1.msra.mxu0 %v104
    %172 = vmatprep.subr.mxu0 0.0
    %173 = vmatpush2.msra.mxu0 0.0
    %174 = vmatprep.subr.mxu0 0.0
    %175 = vmatpush2.msra.mxu0 0.0
    %176 = vmatprep.subr.mxu0 0.0
    %177 = vmatpush2.msra.mxu0 0.0
    %178 = vmatprep.subr.mxu0 0.0
    %179 = vmatpush2.msra.mxu0 0.0
    %180 = vmatprep.subr.mxu0 0.0
    %181 = vmatpush2.msra.mxu0 0.0
    %182 = vmatprep.subr.mxu0 0.0
    %183 = vmatpush2.msra.mxu0 0.0
    %184 = vmatprep.subr.mxu0 0.0
    %185 = vmatpush2.msra.mxu0 0.0
    %186 = vmatprep.subr.mxu0 0.0
    %187 = vmatpush2.msra.mxu0 0.0
    %188 = vmatprep.subr.mxu0 0.0
    %189 = vmatpush2.msra.mxu0 0.0
    %190 = vmatprep.subr.mxu0 0.0
    %191 = vmatpush2.msra.mxu0 0.0
    %192 = vmatprep.subr.mxu0 0.0
    %193 = vmatpush2.msra.mxu0 0.0
    %194 = vmatprep.subr.mxu0 0.0
    %195 = vmatpush2.msra.mxu0 0.0
    %196 = vmatprep.subr.mxu0 0.0
    %197 = vmatpush2.msra.mxu0 0.0
    %198 = vmatprep.subr.mxu0 0.0
    %199 = vmatpush2.msra.mxu0 0.0
    %200 = vmatprep.subr.mxu0 0.0
    %201 = vmatpush2.msra.mxu0 0.0
    %202 = vmatprep.subr.mxu0 0.0
    %203 = vmatpush2.msra.mxu0 0.0
    %204 = vmatprep.mubr.f32.mxu0 0.0
    %205 = vmatmul.mubr.f32.gmra.mxu0 %v135
    %v206 = vpop.f32.mrf.mxu0
    %v207 = vadd.f32 %v121, %v206
    %v208 = vpop.f32.mrf.mxu0
    %v209 = vadd.f32 %v125, %v208
    %210 = vmatprep.mubr.f32.mxu0 0.0
    %211 = vmatmul.mubr.f32.gmra.mxu0 %v138
    %v212 = vpop.f32.mrf.mxu0
    %v213 = vadd.f32 %v121, %v212
    %v214 = vpop.f32.mrf.mxu0
    %v215 = vadd.f32 %v125, %v214
    %216 = vdwg.mxu0
    %217 = vmatprep.subr.mxu0 0.0
    %218 = vmatpush1.msra.mxu0 0.0
    %219 = vmatprep.subr.mxu0 0.0
    %220 = vmatpush1.msra.mxu0 0.0
    %221 = vmatprep.subr.mxu0 0.0
    %222 = vmatpush1.msra.mxu0 0.0
    %223 = vmatprep.subr.mxu0 0.0
    %224 = vmatpush1.msra.mxu0 0.0
    %225 = vmatprep.subr.mxu0 0.0
    %226 = vmatpush1.msra.mxu0 0.0
    %227 = vmatprep.subr.mxu0 0.0
    %228 = vmatpush1.msra.mxu0 0.0
    %229 = vmatprep.subr.mxu0 0.0
    %230 = vmatpush1.msra.mxu0 0.0
    %231 = vmatprep.subr.mxu0 0.0
    %232 = vmatpush1.msra.mxu0 0.0
    %233 = vmatprep.subr.mxu0 0.0
    %234 = vmatpush1.msra.mxu0 0.0
    %235 = vmatprep.subr.mxu0 0.0
    %236 = vmatpush1.msra.mxu0 0.0
    %237 = vmatprep.subr.mxu0 0.0
    %238 = vmatpush1.msra.mxu0 0.0
    %239 = vmatprep.subr.mxu0 0.0
    %240 = vmatpush1.msra.mxu0 0.0
    %241 = vmatprep.subr.mxu0 0.0
    %242 = vmatpush1.msra.mxu0 %v115
    %243 = vmatprep.subr.mxu0 0.0
    %244 = vmatpush1.msra.mxu0 %v112
    %245 = vmatprep.subr.mxu0 0.0
    %246 = vmatpush1.msra.mxu0 %v109
    %247 = vmatprep.subr.mxu0 0.0
    %248 = vmatpush1.msra.mxu0 %v106
    %249 = vmatprep.subr.mxu0 0.0
    %250 = vmatpush2.msra.mxu0 0.0
    %251 = vmatprep.subr.mxu0 0.0
    %252 = vmatpush2.msra.mxu0 0.0
    %253 = vmatprep.subr.mxu0 0.0
    %254 = vmatpush2.msra.mxu0 0.0
    %255 = vmatprep.subr.mxu0 0.0
    %256 = vmatpush2.msra.mxu0 0.0
    %257 = vmatprep.subr.mxu0 0.0
    %258 = vmatpush2.msra.mxu0 0.0
    %259 = vmatprep.subr.mxu0 0.0
    %260 = vmatpush2.msra.mxu0 0.0
    %261 = vmatprep.subr.mxu0 0.0
    %262 = vmatpush2.msra.mxu0 0.0
    %263 = vmatprep.subr.mxu0 0.0
    %264 = vmatpush2.msra.mxu0 0.0
    %265 = vmatprep.subr.mxu0 0.0
    %266 = vmatpush2.msra.mxu0 0.0
    %267 = vmatprep.subr.mxu0 0.0
    %268 = vmatpush2.msra.mxu0 0.0
    %269 = vmatprep.subr.mxu0 0.0
    %270 = vmatpush2.msra.mxu0 0.0
    %271 = vmatprep.subr.mxu0 0.0
    %272 = vmatpush2.msra.mxu0 0.0
    %273 = vmatprep.subr.mxu0 0.0
    %274 = vmatpush2.msra.mxu0 0.0
    %275 = vmatprep.subr.mxu0 0.0
    %276 = vmatpush2.msra.mxu0 0.0
    %277 = vmatprep.subr.mxu0 0.0
    %278 = vmatpush2.msra.mxu0 0.0
    %279 = vmatprep.subr.mxu0 0.0
    %280 = vmatpush2.msra.mxu0 0.0
    %281 = vmatprep.mubr.f32.mxu0 0.0
    %282 = vmatmul.mubr.f32.gmra.mxu0 %v135
    %v283 = vpop.f32.mrf.mxu0
    %v284 = vadd.f32 %v129, %v283
    %v285 = vpop.f32.mrf.mxu0
    %286 = vmatprep.mubr.f32.mxu0 0.0
    %287 = vmatmul.mubr.f32.gmra.mxu0 %v138
    %v288 = vpop.f32.mrf.mxu0
    %v289 = vadd.f32 %v129, %v288
    %v290 = vpop.f32.mrf.mxu0
    %291 = vdwg.mxu0
    %292 = vst [vmem:[#allocation2] sm:$0xff] %v207
    %293 = vst [vmem:[#allocation2 + $0x8] sm:$0xff] %v209
    %294 = vst [vmem:[#allocation2 + $0x10] sm:$0xff] %v284
    %295 = vst [vmem:[#allocation2 + $0x18] sm:$0xff] %v213
    %296 = vst [vmem:[#allocation2 + $0x20] sm:$0xff] %v215
    %297 = vst [vmem:[#allocation2 + $0x28] sm:$0xff] %v289
    %v298 = vld [vmem:[%s0] sm:$0x3]
    %vm299 = vcmp.eq.s32.totalorder %v298, 0
    %v300 = vld [vmem:[#allocation6] ss:$8 sm:$0x7]
    %v301 = vsel %vm299, 1, 0
    %302 = vset.pattern.permute.xlu0 0
    %303 = vperm.xlu0 %302, %v301
    %v304 = vpop.permute.xlu0 %303
    %vm305 = vcmp.eq.s32.totalorder %v304, 1
    %v307 = vlaneseq
    %v308 = vshrl.u32 %v307, 7
    %v309 = vsub.s32 0, %v308
    %v310 = vrot.slane %v300, %v309
    %v311 = vlaneseq
    %v312 = vshrl.u32 %v311, 7
    %v313 = vsub.s32 1, %v312
    %v314 = vrot.slane %v300, %v313
    %v315 = vlaneseq
    %v316 = vshrl.u32 %v315, 7
    %v317 = vsub.s32 2, %v316
    %v318 = vrot.slane %v300, %v317
    %v322 = vsel %vm305, %v310, 0.0
    %v323 = vsel %vm305, %v314, 0.0
    %v324 = vsel %vm305, %v318, 0.0
    %vm325 = vcmp.eq.s32.totalorder %v298, 1
    %s326 = scalar_lea.vmem [#allocation6], 1
    %v327 = vld [vmem:[%s326] ss:$8 sm:$0x7]
    %v328 = vsel %vm325, 1, 0
    %329 = vset.pattern.permute.xlu0 0
    %330 = vperm.xlu0 %329, %v328
    %v331 = vpop.permute.xlu0 %330
    %vm332 = vcmp.eq.s32.totalorder %v331, 1
    %v334 = vlaneseq
    %v335 = vshrl.u32 %v334, 7
    %v336 = vsub.s32 0, %v335
    %v337 = vrot.slane %v327, %v336
    %v338 = vlaneseq
    %v339 = vshrl.u32 %v338, 7
    %v340 = vsub.s32 1, %v339
    %v341 = vrot.slane %v327, %v340
    %v342 = vlaneseq
    %v343 = vshrl.u32 %v342, 7
    %v344 = vsub.s32 2, %v343
    %v345 = vrot.slane %v327, %v344
    %v349 = vsel %vm332, %v337, 0.0
    %v350 = vsel %vm332, %v341, 0.0
    %v351 = vsel %vm332, %v345, 0.0
    %vm352 = vcmp.eq.s32.totalorder %v298, 2
    %s353 = scalar_lea.vmem [#allocation6], 2
    %v354 = vld [vmem:[%s353] ss:$8 sm:$0x7]
    %v355 = vsel %vm352, 1, 0
    %356 = vset.pattern.permute.xlu0 0
    %357 = vperm.xlu0 %356, %v355
    %v358 = vpop.permute.xlu0 %357
    %vm359 = vcmp.eq.s32.totalorder %v358, 1
    %v361 = vlaneseq
    %v362 = vshrl.u32 %v361, 7
    %v363 = vsub.s32 0, %v362
    %v364 = vrot.slane %v354, %v363
    %v365 = vlaneseq
    %v366 = vshrl.u32 %v365, 7
    %v367 = vsub.s32 1, %v366
    %v368 = vrot.slane %v354, %v367
    %v369 = vlaneseq
    %v370 = vshrl.u32 %v369, 7
    %v371 = vsub.s32 2, %v370
    %v372 = vrot.slane %v354, %v371
    %v376 = vsel %vm359, %v364, 0.0
    %v377 = vsel %vm359, %v368, 0.0
    %v378 = vsel %vm359, %v372, 0.0
    %vm379 = vcmp.eq.s32.totalorder %v298, 3
    %s380 = scalar_lea.vmem [#allocation6], 3
    %v381 = vld [vmem:[%s380] ss:$8 sm:$0x7]
    %v382 = vsel %vm379, 1, 0
    %383 = vset.pattern.permute.xlu0 0
    %384 = vperm.xlu0 %383, %v382
    %v385 = vpop.permute.xlu0 %384
    %vm386 = vcmp.eq.s32.totalorder %v385, 1
    %v388 = vlaneseq
    %v389 = vshrl.u32 %v388, 7
    %v390 = vsub.s32 0, %v389
    %v391 = vrot.slane %v381, %v390
    %v392 = vlaneseq
    %v393 = vshrl.u32 %v392, 7
    %v394 = vsub.s32 1, %v393
    %v395 = vrot.slane %v381, %v394
    %v396 = vlaneseq
    %v397 = vshrl.u32 %v396, 7
    %v398 = vsub.s32 2, %v397
    %v399 = vrot.slane %v381, %v398
    %v403 = vsel %vm386, %v391, 0.0
    %v404 = vsel %vm386, %v395, 0.0
    %v405 = vsel %vm386, %v399, 0.0
    %vm406 = vcmp.eq.s32.totalorder %v298, 4
    %s407 = scalar_lea.vmem [#allocation6], 4
    %v408 = vld [vmem:[%s407] ss:$8 sm:$0x7]
    %v409 = vsel %vm406, 1, 0
    %410 = vset.pattern.permute.xlu0 0
    %411 = vperm.xlu0 %410, %v409
    %v412 = vpop.permute.xlu0 %411
    %vm413 = vcmp.eq.s32.totalorder %v412, 1
    %v415 = vlaneseq
    %v416 = vshrl.u32 %v415, 7
    %v417 = vsub.s32 0, %v416
    %v418 = vrot.slane %v408, %v417
    %v419 = vlaneseq
    %v420 = vshrl.u32 %v419, 7
    %v421 = vsub.s32 1, %v420
    %v422 = vrot.slane %v408, %v421
    %v423 = vlaneseq
    %v424 = vshrl.u32 %v423, 7
    %v425 = vsub.s32 2, %v424
    %v426 = vrot.slane %v408, %v425
    %v430 = vsel %vm413, %v418, 0.0
    %v431 = vsel %vm413, %v422, 0.0
    %v432 = vsel %vm413, %v426, 0.0
    %vm433 = vcmp.eq.s32.totalorder %v298, 5
    %s434 = scalar_lea.vmem [#allocation6], 5
    %v435 = vld [vmem:[%s434] ss:$8 sm:$0x7]
    %v436 = vsel %vm433, 1, 0
    %437 = vset.pattern.permute.xlu0 0
    %438 = vperm.xlu0 %437, %v436
    %v439 = vpop.permute.xlu0 %438
    %vm440 = vcmp.eq.s32.totalorder %v439, 1
    %v442 = vlaneseq
    %v443 = vshrl.u32 %v442, 7
    %v444 = vsub.s32 0, %v443
    %v445 = vrot.slane %v435, %v444
    %v446 = vlaneseq
    %v447 = vshrl.u32 %v446, 7
    %v448 = vsub.s32 1, %v447
    %v449 = vrot.slane %v435, %v448
    %v450 = vlaneseq
    %v451 = vshrl.u32 %v450, 7
    %v452 = vsub.s32 2, %v451
    %v453 = vrot.slane %v435, %v452
    %v457 = vsel %vm440, %v445, 0.0
    %v458 = vsel %vm440, %v449, 0.0
    %v459 = vsel %vm440, %v453, 0.0
    %vm460 = vcmp.eq.s32.totalorder %v298, 6
    %s461 = scalar_lea.vmem [#allocation6], 6
    %v462 = vld [vmem:[%s461] ss:$8 sm:$0x7]
    %v463 = vsel %vm460, 1, 0
    %464 = vset.pattern.permute.xlu0 0
    %465 = vperm.xlu0 %464, %v463
    %v466 = vpop.permute.xlu0 %465
    %vm467 = vcmp.eq.s32.totalorder %v466, 1
    %v469 = vlaneseq
    %v470 = vshrl.u32 %v469, 7
    %v471 = vsub.s32 0, %v470
    %v472 = vrot.slane %v462, %v471
    %v473 = vlaneseq
    %v474 = vshrl.u32 %v473, 7
    %v475 = vsub.s32 1, %v474
    %v476 = vrot.slane %v462, %v475
    %v477 = vlaneseq
    %v478 = vshrl.u32 %v477, 7
    %v479 = vsub.s32 2, %v478
    %v480 = vrot.slane %v462, %v479
    %v484 = vsel %vm467, %v472, 0.0
    %v485 = vsel %vm467, %v476, 0.0
    %v486 = vsel %vm467, %v480, 0.0
    %vm487 = vcmp.eq.s32.totalorder %v298, 7
    %s488 = scalar_lea.vmem [#allocation6], 7
    %v489 = vld [vmem:[%s488] ss:$8 sm:$0x7]
    %v490 = vsel %vm487, 1, 0
    %491 = vset.pattern.permute.xlu0 0
    %492 = vperm.xlu0 %491, %v490
    %v493 = vpop.permute.xlu0 %492
    %vm494 = vcmp.eq.s32.totalorder %v493, 1
    %v496 = vlaneseq
    %v497 = vshrl.u32 %v496, 7
    %v498 = vsub.s32 0, %v497
    %v499 = vrot.slane %v489, %v498
    %v500 = vlaneseq
    %v501 = vshrl.u32 %v500, 7
    %v502 = vsub.s32 1, %v501
    %v503 = vrot.slane %v489, %v502
    %v504 = vlaneseq
    %v505 = vshrl.u32 %v504, 7
    %v506 = vsub.s32 2, %v505
    %v507 = vrot.slane %v489, %v506
    %v511 = vsel %vm494, %v499, 0.0
    %v512 = vsel %vm494, %v503, 0.0
    %v513 = vsel %vm494, %v507, 0.0
    %vm514 = vcmp.eq.s32.totalorder %v298, 8
    %s515 = scalar_lea.vmem [#allocation6], 24
    %v516 = vld [vmem:[%s515] ss:$8 sm:$0x7]
    %v517 = vsel %vm514, 1, 0
    %518 = vset.pattern.permute.xlu0 0
    %519 = vperm.xlu0 %518, %v517
    %v520 = vpop.permute.xlu0 %519
    %vm521 = vcmp.eq.s32.totalorder %v520, 1
    %v523 = vlaneseq
    %v524 = vshrl.u32 %v523, 7
    %v525 = vsub.s32 0, %v524
    %v526 = vrot.slane %v516, %v525
    %v527 = vlaneseq
    %v528 = vshrl.u32 %v527, 7
    %v529 = vsub.s32 1, %v528
    %v530 = vrot.slane %v516, %v529
    %v531 = vlaneseq
    %v532 = vshrl.u32 %v531, 7
    %v533 = vsub.s32 2, %v532
    %v534 = vrot.slane %v516, %v533
    %v538 = vsel %vm521, %v526, 0.0
    %v539 = vsel %vm521, %v530, 0.0
    %v540 = vsel %vm521, %v534, 0.0
    %vm541 = vcmp.eq.s32.totalorder %v298, 9
    %s542 = scalar_lea.vmem [#allocation6], 25
    %v543 = vld [vmem:[%s542] ss:$8 sm:$0x7]
    %v544 = vsel %vm541, 1, 0
    %545 = vset.pattern.permute.xlu0 0
    %546 = vperm.xlu0 %545, %v544
    %v547 = vpop.permute.xlu0 %546
    %vm548 = vcmp.eq.s32.totalorder %v547, 1
    %v550 = vlaneseq
    %v551 = vshrl.u32 %v550, 7
    %v552 = vsub.s32 0, %v551
    %v553 = vrot.slane %v543, %v552
    %v554 = vlaneseq
    %v555 = vshrl.u32 %v554, 7
    %v556 = vsub.s32 1, %v555
    %v557 = vrot.slane %v543, %v556
    %v558 = vlaneseq
    %v559 = vshrl.u32 %v558, 7
    %v560 = vsub.s32 2, %v559
    %v561 = vrot.slane %v543, %v560
    %v565 = vsel %vm548, %v553, 0.0
    %v566 = vsel %vm548, %v557, 0.0
    %v567 = vsel %vm548, %v561, 0.0
    %vm568 = vcmp.eq.s32.totalorder %v298, 10
    %s569 = scalar_lea.vmem [#allocation6], 26
    %v570 = vld [vmem:[%s569] ss:$8 sm:$0x7]
    %v571 = vsel %vm568, 1, 0
    %572 = vset.pattern.permute.xlu0 0
    %573 = vperm.xlu0 %572, %v571
    %v574 = vpop.permute.xlu0 %573
    %vm575 = vcmp.eq.s32.totalorder %v574, 1
    %v577 = vlaneseq
    %v578 = vshrl.u32 %v577, 7
    %v579 = vsub.s32 0, %v578
    %v580 = vrot.slane %v570, %v579
    %v581 = vlaneseq
    %v582 = vshrl.u32 %v581, 7
    %v583 = vsub.s32 1, %v582
    %v584 = vrot.slane %v570, %v583
    %v585 = vlaneseq
    %v586 = vshrl.u32 %v585, 7
    %v587 = vsub.s32 2, %v586
    %v588 = vrot.slane %v570, %v587
    %v592 = vsel %vm575, %v580, 0.0
    %v593 = vsel %vm575, %v584, 0.0
    %v594 = vsel %vm575, %v588, 0.0
    %vm595 = vcmp.eq.s32.totalorder %v298, 11
    %s596 = scalar_lea.vmem [#allocation6], 27
    %v597 = vld [vmem:[%s596] ss:$8 sm:$0x7]
    %v598 = vsel %vm595, 1, 0
    %599 = vset.pattern.permute.xlu0 0
    %600 = vperm.xlu0 %599, %v598
    %v601 = vpop.permute.xlu0 %600
    %vm602 = vcmp.eq.s32.totalorder %v601, 1
    %v604 = vlaneseq
    %v605 = vshrl.u32 %v604, 7
    %v606 = vsub.s32 0, %v605
    %v607 = vrot.slane %v597, %v606
    %v608 = vlaneseq
    %v609 = vshrl.u32 %v608, 7
    %v610 = vsub.s32 1, %v609
    %v611 = vrot.slane %v597, %v610
    %v612 = vlaneseq
    %v613 = vshrl.u32 %v612, 7
    %v614 = vsub.s32 2, %v613
    %v615 = vrot.slane %v597, %v614
    %v619 = vsel %vm602, %v607, 0.0
    %v620 = vsel %vm602, %v611, 0.0
    %v621 = vsel %vm602, %v615, 0.0
    %v622 = vadd.f32 %v322, %v349
    %v623 = vadd.f32 %v323, %v350
    %v624 = vadd.f32 %v324, %v351
    %v625 = vadd.f32 %v376, %v403
    %v626 = vadd.f32 %v377, %v404
    %v627 = vadd.f32 %v378, %v405
    %v628 = vadd.f32 %v430, %v457
    %v629 = vadd.f32 %v431, %v458
    %v630 = vadd.f32 %v432, %v459
    %v631 = vadd.f32 %v484, %v511
    %v632 = vadd.f32 %v485, %v512
    %v633 = vadd.f32 %v486, %v513
    %v634 = vadd.f32 %v538, %v565
    %v635 = vadd.f32 %v539, %v566
    %v636 = vadd.f32 %v540, %v567
    %v637 = vadd.f32 %v592, %v619
    %v638 = vadd.f32 %v593, %v620
    %v639 = vadd.f32 %v594, %v621
    %v640 = vadd.f32 %v622, %v625
    %v641 = vadd.f32 %v623, %v626
    %v642 = vadd.f32 %v624, %v627
    %v643 = vadd.f32 %v628, %v631
    %v644 = vadd.f32 %v629, %v632
    %v645 = vadd.f32 %v630, %v633
    %v646 = vadd.f32 %v634, %v637
    %v647 = vadd.f32 %v635, %v638
    %v648 = vadd.f32 %v636, %v639
    %v649 = vadd.f32 %v640, %v643
    %v650 = vadd.f32 %v641, %v644
    %v651 = vadd.f32 %v642, %v645
    %v652 = vadd.f32 %v649, %v646
    %v653 = vadd.f32 %v650, %v647
    %v654 = vadd.f32 %v651, %v648
    %v655 = vld [vmem:[#allocation2] sm:$0x3]
    %v656 = vld [vmem:[#allocation2 + $0x8] sm:$0x3]
    %v657 = vld [vmem:[#allocation2 + $0x10] sm:$0x3]
    %v658 = vadd.f32 %v652, %v655
    %v659 = vadd.f32 %v653, %v656
    %v660 = vadd.f32 %v654, %v657
    %v661 = vld [vmem:[#allocation9] sm:$0xff]
    %v662 = vld [vmem:[#allocation9 + $0x8] sm:$0xff]
    %v663 = vld [vmem:[#allocation9 + $0x10] sm:$0xff]
    %v664 = vld [vmem:[#allocation9 + $0x18] sm:$0xff]
    %v665 = vld [vmem:[#allocation9 + $0x20] sm:$0xff]
    %v666 = vld [vmem:[#allocation9 + $0x28] sm:$0xff]
    %v667 = vld [vmem:[#allocation9 + $0x30] sm:$0xff]
    %v668 = vld [vmem:[#allocation9 + $0x38] sm:$0xff]
    %v669 = vld [vmem:[#allocation9 + $0x40] sm:$0xff]
    %v670 = vld [vmem:[#allocation9 + $0x48] sm:$0xff]
    %v671 = vld [vmem:[#allocation9 + $0x50] sm:$0xff]
    %v672 = vld [vmem:[#allocation9 + $0x58] sm:$0xff]
    %v673 = vld [vmem:[#allocation9 + $0x60] sm:$0xff]
    %v674 = vld [vmem:[#allocation9 + $0x68] sm:$0xff]
    %v675 = vld [vmem:[#allocation9 + $0x70] sm:$0xff]
    %v676 = vld [vmem:[#allocation9 + $0x78] sm:$0xff]
    %v677 = vld [vmem:[#allocation9 + $0x80] sm:$0xff]
    %v678 = vld [vmem:[#allocation9 + $0x88] sm:$0xff]
    %v679 = vld [vmem:[#allocation9 + $0x90] sm:$0xff]
    %v680 = vld [vmem:[#allocation9 + $0x98] sm:$0xff]
    %v681 = vld [vmem:[#allocation9 + $0xa0] sm:$0xff]
    %v682 = vld [vmem:[#allocation9 + $0xa8] sm:$0xff]
    %v683 = vld [vmem:[#allocation9 + $0xb0] sm:$0xff]
    %v684 = vld [vmem:[#allocation9 + $0xb8] sm:$0xff]
    %v685 = vld [vmem:[#allocation9 + $0xc0] sm:$0xff]
    %v686 = vld [vmem:[#allocation9 + $0xc8] sm:$0xff]
    %v687 = vld [vmem:[#allocation9 + $0xd0] sm:$0xff]
    %v688 = vld [vmem:[#allocation9 + $0xd8] sm:$0xff]
    %v689 = vld [vmem:[#allocation9 + $0xe0] sm:$0xff]
    %v690 = vld [vmem:[#allocation9 + $0xe8] sm:$0xff]
    %v691 = vld [vmem:[#allocation9 + $0xf0] sm:$0xff]
    %v692 = vld [vmem:[#allocation9 + $0xf8] sm:$0xff]
    %v693 = vld [vmem:[#allocation9 + $0x100] sm:$0xff]
    %v694 = vld [vmem:[#allocation9 + $0x108] sm:$0xff]
    %v695 = vld [vmem:[#allocation9 + $0x110] sm:$0xff]
    %v696 = vld [vmem:[#allocation9 + $0x118] sm:$0xff]
    %v697 = vld [vmem:[#allocation9 + $0x120] sm:$0xff]
    %v698 = vld [vmem:[#allocation9 + $0x128] sm:$0xff]
    %v699 = vld [vmem:[#allocation9 + $0x130] sm:$0xff]
    %v700 = vld [vmem:[#allocation9 + $0x138] sm:$0xff]
    %v701 = vld [vmem:[#allocation9 + $0x140] sm:$0xff]
    %v702 = vld [vmem:[#allocation9 + $0x148] sm:$0xff]
    %v703 = vld [vmem:[#allocation9 + $0x150] sm:$0xff]
    %v704 = vld [vmem:[#allocation9 + $0x158] sm:$0xff]
    %v705 = vld [vmem:[#allocation9 + $0x160] sm:$0xff]
    %v706 = vld [vmem:[#allocation9 + $0x168] sm:$0xff]
    %v707 = vld [vmem:[#allocation9 + $0x170] sm:$0xff]
    %v708 = vld [vmem:[#allocation9 + $0x178] sm:$0xff]
    %709 = vmatprep.subr.mxu0 %v707
    %710 = vmatpush1.msra.mxu0 %v706
    %711 = vmatprep.subr.mxu0 %v704
    %712 = vmatpush1.msra.mxu0 %v703
    %713 = vmatprep.subr.mxu0 %v701
    %714 = vmatpush1.msra.mxu0 %v700
    %715 = vmatprep.subr.mxu0 %v698
    %716 = vmatpush1.msra.mxu0 %v697
    %717 = vmatprep.subr.mxu0 %v695
    %718 = vmatpush1.msra.mxu0 %v694
    %719 = vmatprep.subr.mxu0 %v692
    %720 = vmatpush1.msra.mxu0 %v691
    %721 = vmatprep.subr.mxu0 %v689
    %722 = vmatpush1.msra.mxu0 %v688
    %723 = vmatprep.subr.mxu0 %v686
    %724 = vmatpush1.msra.mxu0 %v685
    %725 = vmatprep.subr.mxu0 %v683
    %726 = vmatpush1.msra.mxu0 %v682
    %727 = vmatprep.subr.mxu0 %v680
    %728 = vmatpush1.msra.mxu0 %v679
    %729 = vmatprep.subr.mxu0 %v677
    %730 = vmatpush1.msra.mxu0 %v676
    %731 = vmatprep.subr.mxu0 %v674
    %732 = vmatpush1.msra.mxu0 %v673
    %733 = vmatprep.subr.mxu0 %v671
    %734 = vmatpush1.msra.mxu0 %v670
    %735 = vmatprep.subr.mxu0 %v668
    %736 = vmatpush1.msra.mxu0 %v667
    %737 = vmatprep.subr.mxu0 %v665
    %738 = vmatpush1.msra.mxu0 %v664
    %739 = vmatprep.subr.mxu0 %v662
    %740 = vmatpush1.msra.mxu0 %v661
    %741 = vmatprep.subr.mxu0 0.0
    %742 = vmatpush2.msra.mxu0 0.0
    %743 = vmatprep.subr.mxu0 0.0
    %744 = vmatpush2.msra.mxu0 0.0
    %745 = vmatprep.subr.mxu0 0.0
    %746 = vmatpush2.msra.mxu0 0.0
    %747 = vmatprep.subr.mxu0 0.0
    %748 = vmatpush2.msra.mxu0 0.0
    %749 = vmatprep.subr.mxu0 0.0
    %750 = vmatpush2.msra.mxu0 0.0
    %751 = vmatprep.subr.mxu0 0.0
    %752 = vmatpush2.msra.mxu0 0.0
    %753 = vmatprep.subr.mxu0 0.0
    %754 = vmatpush2.msra.mxu0 0.0
    %755 = vmatprep.subr.mxu0 0.0
    %756 = vmatpush2.msra.mxu0 0.0
    %757 = vmatprep.subr.mxu0 0.0
    %758 = vmatpush2.msra.mxu0 0.0
    %759 = vmatprep.subr.mxu0 0.0
    %760 = vmatpush2.msra.mxu0 0.0
    %761 = vmatprep.subr.mxu0 0.0
    %762 = vmatpush2.msra.mxu0 0.0
    %763 = vmatprep.subr.mxu0 0.0
    %764 = vmatpush2.msra.mxu0 0.0
    %765 = vmatprep.subr.mxu0 0.0
    %766 = vmatpush2.msra.mxu0 0.0
    %767 = vmatprep.subr.mxu0 0.0
    %768 = vmatpush2.msra.mxu0 0.0
    %769 = vmatprep.subr.mxu0 0.0
    %770 = vmatpush2.msra.mxu0 0.0
    %771 = vmatprep.subr.mxu0 0.0
    %772 = vmatpush2.msra.mxu0 0.0
    %773 = vmatprep.mubr.f32.mxu0 0.0
    %774 = vmatmul.mubr.f32.gmra.mxu0 0.0
    %v775 = vpop.f32.mrf.mxu0
    %v776 = vadd.f32 0.0, %v775
    %v777 = vpop.f32.mrf.mxu0
    %v778 = vadd.f32 0.0, %v777
    %779 = vdwg.mxu0
    %780 = vmatprep.subr.mxu0 0.0
    %781 = vmatpush1.msra.mxu0 %v708
    %782 = vmatprep.subr.mxu0 0.0
    %783 = vmatpush1.msra.mxu0 %v705
    %784 = vmatprep.subr.mxu0 0.0
    %785 = vmatpush1.msra.mxu0 %v702
    %786 = vmatprep.subr.mxu0 0.0
    %787 = vmatpush1.msra.mxu0 %v699
    %788 = vmatprep.subr.mxu0 0.0
    %789 = vmatpush1.msra.mxu0 %v696
    %790 = vmatprep.subr.mxu0 0.0
    %791 = vmatpush1.msra.mxu0 %v693
    %792 = vmatprep.subr.mxu0 0.0
    %793 = vmatpush1.msra.mxu0 %v690
    %794 = vmatprep.subr.mxu0 0.0
    %795 = vmatpush1.msra.mxu0 %v687
    %796 = vmatprep.subr.mxu0 0.0
    %797 = vmatpush1.msra.mxu0 %v684
    %798 = vmatprep.subr.mxu0 0.0
    %799 = vmatpush1.msra.mxu0 %v681
    %800 = vmatprep.subr.mxu0 0.0
    %801 = vmatpush1.msra.mxu0 %v678
    %802 = vmatprep.subr.mxu0 0.0
    %803 = vmatpush1.msra.mxu0 %v675
    %804 = vmatprep.subr.mxu0 0.0
    %805 = vmatpush1.msra.mxu0 %v672
    %806 = vmatprep.subr.mxu0 0.0
    %807 = vmatpush1.msra.mxu0 %v669
    %808 = vmatprep.subr.mxu0 0.0
    %809 = vmatpush1.msra.mxu0 %v666
    %810 = vmatprep.subr.mxu0 0.0
    %811 = vmatpush1.msra.mxu0 %v663
    %812 = vmatprep.subr.mxu0 0.0
    %813 = vmatpush2.msra.mxu0 0.0
    %814 = vmatprep.subr.mxu0 0.0
    %815 = vmatpush2.msra.mxu0 0.0
    %816 = vmatprep.subr.mxu0 0.0
    %817 = vmatpush2.msra.mxu0 0.0
    %818 = vmatprep.subr.mxu0 0.0
    %819 = vmatpush2.msra.mxu0 0.0
    %820 = vmatprep.subr.mxu0 0.0
    %821 = vmatpush2.msra.mxu0 0.0
    %822 = vmatprep.subr.mxu0 0.0
    %823 = vmatpush2.msra.mxu0 0.0
    %824 = vmatprep.subr.mxu0 0.0
    %825 = vmatpush2.msra.mxu0 0.0
    %826 = vmatprep.subr.mxu0 0.0
    %827 = vmatpush2.msra.mxu0 0.0
    %828 = vmatprep.subr.mxu0 0.0
    %829 = vmatpush2.msra.mxu0 0.0
    %830 = vmatprep.subr.mxu0 0.0
    %831 = vmatpush2.msra.mxu0 0.0
    %832 = vmatprep.subr.mxu0 0.0
    %833 = vmatpush2.msra.mxu0 0.0
    %834 = vmatprep.subr.mxu0 0.0
    %835 = vmatpush2.msra.mxu0 0.0
    %836 = vmatprep.subr.mxu0 0.0
    %837 = vmatpush2.msra.mxu0 0.0
    %838 = vmatprep.subr.mxu0 0.0
    %839 = vmatpush2.msra.mxu0 0.0
    %840 = vmatprep.subr.mxu0 0.0
    %841 = vmatpush2.msra.mxu0 0.0
    %842 = vmatprep.subr.mxu0 0.0
    %843 = vmatpush2.msra.mxu0 0.0
    %844 = vmatprep.mubr.f32.mxu0 0.0
    %845 = vmatmul.mubr.f32.gmra.mxu0 0.0
    %v846 = vpop.f32.mrf.mxu0
    %v847 = vadd.f32 0.0, %v846
    %v848 = vpop.f32.mrf.mxu0
    %849 = vdwg.mxu0
    %v850 = vadd.f32 %v658, %v776
    %v851 = vxor.u32 %v850, 2147483648
    %v852 = vmul.f32 %v851, 1.442695
    %v853 = vpow.pop %v852
    %v854 = vadd.f32 %v853, 1.0
    %v855 = vrcp.pop %v854
    %v856 = vmul.f32 1.0, %v855
    %v857 = vadd.f32 %v659, %v778
    %v858 = vxor.u32 %v857, 2147483648
    %v859 = vmul.f32 %v858, 1.442695
    %v860 = vpow.pop %v859
    %v861 = vadd.f32 %v860, 1.0
    %v862 = vrcp.pop %v861
    %v863 = vmul.f32 1.0, %v862
    %v865 = vlaneseq
    %v866 = vshrl.u32 %v865, 7
    %v867 = vsub.s32 0, %v866
    %v868 = vrot.slane %v100, %v867
    %v870 = vadd.f32 %v847, %v868
    %v871 = vmul.f32 %v856, %v870
    %v872 = vadd.f32 %v660, %v871
    %v873 = vtanh.pop %v872
    %v874 = vsub.f32 1.0, %v863
    %v875 = vmul.f32 %v874, %v873
    %v876 = vmul.f32 %v863, 0.0
    %v877 = vadd.f32 %v875, %v876
    %v878 = vld [vmem:[#allocation11] sm:$0xff]
    %v879 = vld [vmem:[#allocation11 + $0x10] sm:$0xff]
    %v880 = vld [vmem:[#allocation11 + $0x20] sm:$0xff]
    %v881 = vld [vmem:[#allocation11 + $0x30] sm:$0xff]
    %v882 = vld [vmem:[#allocation11 + $0x40] sm:$0xff]
    %v883 = vld [vmem:[#allocation11 + $0x50] sm:$0xff]
    %v884 = vld [vmem:[#allocation11 + $0x60] sm:$0xff]
    %v885 = vld [vmem:[#allocation11 + $0x70] sm:$0xff]
    %v886 = vld [vmem:[#allocation11 + $0x80] sm:$0xff]
    %v887 = vld [vmem:[#allocation11 + $0x90] sm:$0xff]
    %v888 = vld [vmem:[#allocation11 + $0xa0] sm:$0xff]
    %v889 = vld [vmem:[#allocation11 + $0xb0] sm:$0xff]
    %v890 = vld [vmem:[#allocation11 + $0xc0] sm:$0xff]
    %v891 = vld [vmem:[#allocation11 + $0xd0] sm:$0xff]
    %v892 = vld [vmem:[#allocation11 + $0xe0] sm:$0xff]
    %v893 = vld [vmem:[#allocation11 + $0xf0] sm:$0xff]
    %v895 = vlaneseq
    %v896 = vshrl.u32 %v895, 7
    %v897 = vsub.s32 0, %v896
    %v898 = vrot.slane %v101, %v897
    %900 = vmatprep.subr.mxu0 0.0
    %901 = vmatpush1.msra.mxu0 %v893
    %902 = vmatprep.subr.mxu0 0.0
    %903 = vmatpush1.msra.mxu0 %v892
    %904 = vmatprep.subr.mxu0 0.0
    %905 = vmatpush1.msra.mxu0 %v891
    %906 = vmatprep.subr.mxu0 0.0
    %907 = vmatpush1.msra.mxu0 %v890
    %908 = vmatprep.subr.mxu0 0.0
    %909 = vmatpush1.msra.mxu0 %v889
    %910 = vmatprep.subr.mxu0 0.0
    %911 = vmatpush1.msra.mxu0 %v888
    %912 = vmatprep.subr.mxu0 0.0
    %913 = vmatpush1.msra.mxu0 %v887
    %914 = vmatprep.subr.mxu0 0.0
    %915 = vmatpush1.msra.mxu0 %v886
    %916 = vmatprep.subr.mxu0 0.0
    %917 = vmatpush1.msra.mxu0 %v885
    %918 = vmatprep.subr.mxu0 0.0
    %919 = vmatpush1.msra.mxu0 %v884
    %920 = vmatprep.subr.mxu0 0.0
    %921 = vmatpush1.msra.mxu0 %v883
    %922 = vmatprep.subr.mxu0 0.0
    %923 = vmatpush1.msra.mxu0 %v882
    %924 = vmatprep.subr.mxu0 0.0
    %925 = vmatpush1.msra.mxu0 %v881
    %926 = vmatprep.subr.mxu0 0.0
    %927 = vmatpush1.msra.mxu0 %v880
    %928 = vmatprep.subr.mxu0 0.0
    %929 = vmatpush1.msra.mxu0 %v879
    %930 = vmatprep.subr.mxu0 0.0
    %931 = vmatpush1.msra.mxu0 %v878
    %932 = vmatprep.subr.mxu0 0.0
    %933 = vmatpush2.msra.mxu0 0.0
    %934 = vmatprep.subr.mxu0 0.0
    %935 = vmatpush2.msra.mxu0 0.0
    %936 = vmatprep.subr.mxu0 0.0
    %937 = vmatpush2.msra.mxu0 0.0
    %938 = vmatprep.subr.mxu0 0.0
    %939 = vmatpush2.msra.mxu0 0.0
    %940 = vmatprep.subr.mxu0 0.0
    %941 = vmatpush2.msra.mxu0 0.0
    %942 = vmatprep.subr.mxu0 0.0
    %943 = vmatpush2.msra.mxu0 0.0
    %944 = vmatprep.subr.mxu0 0.0
    %945 = vmatpush2.msra.mxu0 0.0
    %946 = vmatprep.subr.mxu0 0.0
    %947 = vmatpush2.msra.mxu0 0.0
    %948 = vmatprep.subr.mxu0 0.0
    %949 = vmatpush2.msra.mxu0 0.0
    %950 = vmatprep.subr.mxu0 0.0
    %951 = vmatpush2.msra.mxu0 0.0
    %952 = vmatprep.subr.mxu0 0.0
    %953 = vmatpush2.msra.mxu0 0.0
    %954 = vmatprep.subr.mxu0 0.0
    %955 = vmatpush2.msra.mxu0 0.0
    %956 = vmatprep.subr.mxu0 0.0
    %957 = vmatpush2.msra.mxu0 0.0
    %958 = vmatprep.subr.mxu0 0.0
    %959 = vmatpush2.msra.mxu0 0.0
    %960 = vmatprep.subr.mxu0 0.0
    %961 = vmatpush2.msra.mxu0 0.0
    %962 = vmatprep.subr.mxu0 0.0
    %963 = vmatpush2.msra.mxu0 0.0
    %964 = vmatprep.mubr.f32.mxu0 0.0
    %965 = vmatmul.mubr.f32.gmra.mxu0 %v877
    %v966 = vpop.f32.mrf.mxu0
    %v967 = vadd.f32 %v898, %v966
    %v968 = vpop.f32.mrf.mxu0
    %969 = vdwg.mxu0
    %970 = vrot.lane.b32.xlu0 %v967, 1
    %v971 = vpop.permute.xlu0 %970
    %972 = vrot.lane.b32.xlu0 %v99, 1
    %v973 = vpop.permute.xlu0 %972
    %vm974 = vcmp.gt.f32.partialorder %v971, %v967
    %vm975 = vcmp.eq.f32.partialorder %v971, %v967
    %vm976 = vcmp.lt.s32.totalorder %v973, %v99
    %vm977 = vmand %vm975, %vm976
    %vm978 = vmor %vm974, %vm977
    %v979 = vsel %vm978, %v971, %v967
    %v980 = vsel %vm978, %v973, %v99
    %981 = vrot.lane.b32.xlu0 %v979, 2
    %v982 = vpop.permute.xlu0 %981
    %983 = vrot.lane.b32.xlu0 %v980, 2
    %v984 = vpop.permute.xlu0 %983
    %vm985 = vcmp.gt.f32.partialorder %v982, %v979
    %vm986 = vcmp.eq.f32.partialorder %v982, %v979
    %vm987 = vcmp.lt.s32.totalorder %v984, %v980
    %vm988 = vmand %vm986, %vm987
    %vm989 = vmor %vm985, %vm988
    %v990 = vsel %vm989, %v982, %v979
    %v991 = vsel %vm989, %v984, %v980
    %992 = vrot.lane.b32.xlu0 %v990, 4
    %v993 = vpop.permute.xlu0 %992
    %994 = vrot.lane.b32.xlu0 %v991, 4
    %v995 = vpop.permute.xlu0 %994
    %vm996 = vcmp.gt.f32.partialorder %v993, %v990
    %vm997 = vcmp.eq.f32.partialorder %v993, %v990
    %vm998 = vcmp.lt.s32.totalorder %v995, %v991
    %vm999 = vmand %vm997, %vm998
    %vm1000 = vmor %vm996, %vm999
    %v1001 = vsel %vm1000, %v993, %v990
    %v1002 = vsel %vm1000, %v995, %v991
    %1003 = vrot.lane.b32.xlu0 %v1001, 8
    %v1004 = vpop.permute.xlu0 %1003
    %1005 = vrot.lane.b32.xlu0 %v1002, 8
    %v1006 = vpop.permute.xlu0 %1005
    %vm1007 = vcmp.gt.f32.partialorder %v1004, %v1001
    %vm1008 = vcmp.eq.f32.partialorder %v1004, %v1001
    %vm1009 = vcmp.lt.s32.totalorder %v1006, %v1002
    %vm1010 = vmand %vm1008, %vm1009
    %vm1011 = vmor %vm1007, %vm1010
    %v1012 = vsel %vm1011, %v1004, %v1001
    %v1013 = vsel %vm1011, %v1006, %v1002
    %1014 = vrot.lane.b32.xlu0 %v1012, 16
    %v1015 = vpop.permute.xlu0 %1014
    %1016 = vrot.lane.b32.xlu0 %v1013, 16
    %v1017 = vpop.permute.xlu0 %1016
    %vm1018 = vcmp.gt.f32.partialorder %v1015, %v1012
    %vm1019 = vcmp.eq.f32.partialorder %v1015, %v1012
    %vm1020 = vcmp.lt.s32.totalorder %v1017, %v1013
    %vm1021 = vmand %vm1019, %vm1020
    %vm1022 = vmor %vm1018, %vm1021
    %v1023 = vsel %vm1022, %v1015, %v1012
    %v1024 = vsel %vm1022, %v1017, %v1013
    %1025 = vrot.lane.b32.xlu0 %v1023, 32
    %v1026 = vpop.permute.xlu0 %1025
    %1027 = vrot.lane.b32.xlu0 %v1024, 32
    %v1028 = vpop.permute.xlu0 %1027
    %vm1029 = vcmp.gt.f32.partialorder %v1026, %v1023
    %vm1030 = vcmp.eq.f32.partialorder %v1026, %v1023
    %vm1031 = vcmp.lt.s32.totalorder %v1028, %v1024
    %vm1032 = vmand %vm1030, %vm1031
    %vm1033 = vmor %vm1029, %vm1032
    %v1034 = vsel %vm1033, %v1026, %v1023
    %v1035 = vsel %vm1033, %v1028, %v1024
    %1036 = vrot.lane.b32.xlu0 %v1034, 64
    %v1037 = vpop.permute.xlu0 %1036
    %1038 = vrot.lane.b32.xlu0 %v1035, 64
    %v1039 = vpop.permute.xlu0 %1038
    %vm1040 = vcmp.gt.f32.partialorder %v1037, %v1034
    %vm1041 = vcmp.eq.f32.partialorder %v1037, %v1034
    %vm1042 = vcmp.lt.s32.totalorder %v1039, %v1035
    %vm1043 = vmand %vm1041, %vm1042
    %vm1044 = vmor %vm1040, %vm1043
    %v1045 = vsel %vm1044, %v1037, %v1034
    %v1046 = vsel %vm1044, %v1039, %v1035
    %v1047 = vsub.f32 %v967, %v1045
    %v1048 = vmul.f32 %v1047, 1.442695
    %v1049 = vpow.pop %v1048
    %vm1050 = vcmask 1041408
    %v1051 = vsel %vm1050, %v1049, 0.0
    %1052 = vadd.xlane.f32.xlu0 %v1051
    %v1053 = vpop.xlane.xlu0 %1052
    %v1054 = vlog2.pop %v1053
    %v1055 = vmul.f32 %v1054, 0.6931472
    %v1056 = vsub.f32 %v1047, %v1055
    %1057 = vst [vmem:[#allocation12] sm:$0x3] %v1056
    %vm1058 = vcmp.eq.s32.totalorder %v1046, 0
    %v1059 = vld [vmem:[#allocation6] ss:$8 sm:$0x7]
    %v1061 = vlaneseq
    %v1062 = vshrl.u32 %v1061, 7
    %v1063 = vsub.s32 0, %v1062
    %v1064 = vrot.slane %v1059, %v1063
    %v1065 = vlaneseq
    %v1066 = vshrl.u32 %v1065, 7
    %v1067 = vsub.s32 1, %v1066
    %v1068 = vrot.slane %v1059, %v1067
    %v1069 = vlaneseq
    %v1070 = vshrl.u32 %v1069, 7
    %v1071 = vsub.s32 2, %v1070
    %v1072 = vrot.slane %v1059, %v1071
    %v1076 = vsel %vm1058, %v1064, 0.0
    %v1077 = vsel %vm1058, %v1068, 0.0
    %v1078 = vsel %vm1058, %v1072, 0.0
    %vm1079 = vcmp.eq.s32.totalorder %v1046, 1
    %v1080 = vld [vmem:[%s326] ss:$8 sm:$0x7]
    %v1082 = vlaneseq
    %v1083 = vshrl.u32 %v1082, 7
    %v1084 = vsub.s32 0, %v1083
    %v1085 = vrot.slane %v1080, %v1084
    %v1086 = vlaneseq
    %v1087 = vshrl.u32 %v1086, 7
    %v1088 = vsub.s32 1, %v1087
    %v1089 = vrot.slane %v1080, %v1088
    %v1090 = vlaneseq
    %v1091 = vshrl.u32 %v1090, 7
    %v1092 = vsub.s32 2, %v1091
    %v1093 = vrot.slane %v1080, %v1092
    %v1097 = vsel %vm1079, %v1085, 0.0
    %v1098 = vsel %vm1079, %v1089, 0.0
    %v1099 = vsel %vm1079, %v1093, 0.0
    %vm1100 = vcmp.eq.s32.totalorder %v1046, 2
    %v1101 = vld [vmem:[%s353] ss:$8 sm:$0x7]
    %v1103 = vlaneseq
    %v1104 = vshrl.u32 %v1103, 7
    %v1105 = vsub.s32 0, %v1104
    %v1106 = vrot.slane %v1101, %v1105
    %v1107 = vlaneseq
    %v1108 = vshrl.u32 %v1107, 7
    %v1109 = vsub.s32 1, %v1108
    %v1110 = vrot.slane %v1101, %v1109
    %v1111 = vlaneseq
    %v1112 = vshrl.u32 %v1111, 7
    %v1113 = vsub.s32 2, %v1112
    %v1114 = vrot.slane %v1101, %v1113
    %v1118 = vsel %vm1100, %v1106, 0.0
    %v1119 = vsel %vm1100, %v1110, 0.0
    %v1120 = vsel %vm1100, %v1114, 0.0
    %vm1121 = vcmp.eq.s32.totalorder %v1046, 3
    %v1122 = vld [vmem:[%s380] ss:$8 sm:$0x7]
    %v1124 = vlaneseq
    %v1125 = vshrl.u32 %v1124, 7
    %v1126 = vsub.s32 0, %v1125
    %v1127 = vrot.slane %v1122, %v1126
    %v1128 = vlaneseq
    %v1129 = vshrl.u32 %v1128, 7
    %v1130 = vsub.s32 1, %v1129
    %v1131 = vrot.slane %v1122, %v1130
    %v1132 = vlaneseq
    %v1133 = vshrl.u32 %v1132, 7
    %v1134 = vsub.s32 2, %v1133
    %v1135 = vrot.slane %v1122, %v1134
    %v1139 = vsel %vm1121, %v1127, 0.0
    %v1140 = vsel %vm1121, %v1131, 0.0
    %v1141 = vsel %vm1121, %v1135, 0.0
    %vm1142 = vcmp.eq.s32.totalorder %v1046, 4
    %v1143 = vld [vmem:[%s407] ss:$8 sm:$0x7]
    %v1145 = vlaneseq
    %v1146 = vshrl.u32 %v1145, 7
    %v1147 = vsub.s32 0, %v1146
    %v1148 = vrot.slane %v1143, %v1147
    %v1149 = vlaneseq
    %v1150 = vshrl.u32 %v1149, 7
    %v1151 = vsub.s32 1, %v1150
    %v1152 = vrot.slane %v1143, %v1151
    %v1153 = vlaneseq
    %v1154 = vshrl.u32 %v1153, 7
    %v1155 = vsub.s32 2, %v1154
    %v1156 = vrot.slane %v1143, %v1155
    %v1160 = vsel %vm1142, %v1148, 0.0
    %v1161 = vsel %vm1142, %v1152, 0.0
    %v1162 = vsel %vm1142, %v1156, 0.0
    %vm1163 = vcmp.eq.s32.totalorder %v1046, 5
    %v1164 = vld [vmem:[%s434] ss:$8 sm:$0x7]
    %v1166 = vlaneseq
    %v1167 = vshrl.u32 %v1166, 7
    %v1168 = vsub.s32 0, %v1167
    %v1169 = vrot.slane %v1164, %v1168
    %v1170 = vlaneseq
    %v1171 = vshrl.u32 %v1170, 7
    %v1172 = vsub.s32 1, %v1171
    %v1173 = vrot.slane %v1164, %v1172
    %v1174 = vlaneseq
    %v1175 = vshrl.u32 %v1174, 7
    %v1176 = vsub.s32 2, %v1175
    %v1177 = vrot.slane %v1164, %v1176
    %v1181 = vsel %vm1163, %v1169, 0.0
    %v1182 = vsel %vm1163, %v1173, 0.0
    %v1183 = vsel %vm1163, %v1177, 0.0
    %vm1184 = vcmp.eq.s32.totalorder %v1046, 6
    %v1185 = vld [vmem:[%s461] ss:$8 sm:$0x7]
    %v1187 = vlaneseq
    %v1188 = vshrl.u32 %v1187, 7
    %v1189 = vsub.s32 0, %v1188
    %v1190 = vrot.slane %v1185, %v1189
    %v1191 = vlaneseq
    %v1192 = vshrl.u32 %v1191, 7
    %v1193 = vsub.s32 1, %v1192
    %v1194 = vrot.slane %v1185, %v1193
    %v1195 = vlaneseq
    %v1196 = vshrl.u32 %v1195, 7
    %v1197 = vsub.s32 2, %v1196
    %v1198 = vrot.slane %v1185, %v1197
    %v1202 = vsel %vm1184, %v1190, 0.0
    %v1203 = vsel %vm1184, %v1194, 0.0
    %v1204 = vsel %vm1184, %v1198, 0.0
    %vm1205 = vcmp.eq.s32.totalorder %v1046, 7
    %v1206 = vld [vmem:[%s488] ss:$8 sm:$0x7]
    %v1208 = vlaneseq
    %v1209 = vshrl.u32 %v1208, 7
    %v1210 = vsub.s32 0, %v1209
    %v1211 = vrot.slane %v1206, %v1210
    %v1212 = vlaneseq
    %v1213 = vshrl.u32 %v1212, 7
    %v1214 = vsub.s32 1, %v1213
    %v1215 = vrot.slane %v1206, %v1214
    %v1216 = vlaneseq
    %v1217 = vshrl.u32 %v1216, 7
    %v1218 = vsub.s32 2, %v1217
    %v1219 = vrot.slane %v1206, %v1218
    %v1223 = vsel %vm1205, %v1211, 0.0
    %v1224 = vsel %vm1205, %v1215, 0.0
    %v1225 = vsel %vm1205, %v1219, 0.0
    %vm1226 = vcmp.eq.s32.totalorder %v1046, 8
    %v1227 = vld [vmem:[%s515] ss:$8 sm:$0x7]
    %v1229 = vlaneseq
    %v1230 = vshrl.u32 %v1229, 7
    %v1231 = vsub.s32 0, %v1230
    %v1232 = vrot.slane %v1227, %v1231
    %v1233 = vlaneseq
    %v1234 = vshrl.u32 %v1233, 7
    %v1235 = vsub.s32 1, %v1234
    %v1236 = vrot.slane %v1227, %v1235
    %v1237 = vlaneseq
    %v1238 = vshrl.u32 %v1237, 7
    %v1239 = vsub.s32 2, %v1238
    %v1240 = vrot.slane %v1227, %v1239
    %v1244 = vsel %vm1226, %v1232, 0.0
    %v1245 = vsel %vm1226, %v1236, 0.0
    %v1246 = vsel %vm1226, %v1240, 0.0
    %vm1247 = vcmp.eq.s32.totalorder %v1046, 9
    %v1248 = vld [vmem:[%s542] ss:$8 sm:$0x7]
    %v1250 = vlaneseq
    %v1251 = vshrl.u32 %v1250, 7
    %v1252 = vsub.s32 0, %v1251
    %v1253 = vrot.slane %v1248, %v1252
    %v1254 = vlaneseq
    %v1255 = vshrl.u32 %v1254, 7
    %v1256 = vsub.s32 1, %v1255
    %v1257 = vrot.slane %v1248, %v1256
    %v1258 = vlaneseq
    %v1259 = vshrl.u32 %v1258, 7
    %v1260 = vsub.s32 2, %v1259
    %v1261 = vrot.slane %v1248, %v1260
    %v1265 = vsel %vm1247, %v1253, 0.0
    %v1266 = vsel %vm1247, %v1257, 0.0
    %v1267 = vsel %vm1247, %v1261, 0.0
    %vm1268 = vcmp.eq.s32.totalorder %v1046, 10
    %v1269 = vld [vmem:[%s569] ss:$8 sm:$0x7]
    %v1271 = vlaneseq
    %v1272 = vshrl.u32 %v1271, 7
    %v1273 = vsub.s32 0, %v1272
    %v1274 = vrot.slane %v1269, %v1273
    %v1275 = vlaneseq
    %v1276 = vshrl.u32 %v1275, 7
    %v1277 = vsub.s32 1, %v1276
    %v1278 = vrot.slane %v1269, %v1277
    %v1279 = vlaneseq
    %v1280 = vshrl.u32 %v1279, 7
    %v1281 = vsub.s32 2, %v1280
    %v1282 = vrot.slane %v1269, %v1281
    %v1286 = vsel %vm1268, %v1274, 0.0
    %v1287 = vsel %vm1268, %v1278, 0.0
    %v1288 = vsel %vm1268, %v1282, 0.0
    %vm1289 = vcmp.eq.s32.totalorder %v1046, 11
    %v1290 = vld [vmem:[%s596] ss:$8 sm:$0x7]
    %v1292 = vlaneseq
    %v1293 = vshrl.u32 %v1292, 7
    %v1294 = vsub.s32 0, %v1293
    %v1295 = vrot.slane %v1290, %v1294
    %v1296 = vlaneseq
    %v1297 = vshrl.u32 %v1296, 7
    %v1298 = vsub.s32 1, %v1297
    %v1299 = vrot.slane %v1290, %v1298
    %v1300 = vlaneseq
    %v1301 = vshrl.u32 %v1300, 7
    %v1302 = vsub.s32 2, %v1301
    %v1303 = vrot.slane %v1290, %v1302
    %v1307 = vsel %vm1289, %v1295, 0.0
    %v1308 = vsel %vm1289, %v1299, 0.0
    %v1309 = vsel %vm1289, %v1303, 0.0
    %v1310 = vadd.f32 %v1076, %v1097
    %v1311 = vadd.f32 %v1077, %v1098
    %v1312 = vadd.f32 %v1078, %v1099
    %v1313 = vadd.f32 %v1118, %v1139
    %v1314 = vadd.f32 %v1119, %v1140
    %v1315 = vadd.f32 %v1120, %v1141
    %v1316 = vadd.f32 %v1160, %v1181
    %v1317 = vadd.f32 %v1161, %v1182
    %v1318 = vadd.f32 %v1162, %v1183
    %v1319 = vadd.f32 %v1202, %v1223
    %v1320 = vadd.f32 %v1203, %v1224
    %v1321 = vadd.f32 %v1204, %v1225
    %v1322 = vadd.f32 %v1244, %v1265
    %v1323 = vadd.f32 %v1245, %v1266
    %v1324 = vadd.f32 %v1246, %v1267
    %v1325 = vadd.f32 %v1286, %v1307
    %v1326 = vadd.f32 %v1287, %v1308
    %v1327 = vadd.f32 %v1288, %v1309
    %v1328 = vadd.f32 %v1310, %v1313
    %v1329 = vadd.f32 %v1311, %v1314
    %v1330 = vadd.f32 %v1312, %v1315
    %v1331 = vadd.f32 %v1316, %v1319
    %v1332 = vadd.f32 %v1317, %v1320
    %v1333 = vadd.f32 %v1318, %v1321
    %v1334 = vadd.f32 %v1322, %v1325
    %v1335 = vadd.f32 %v1323, %v1326
    %v1336 = vadd.f32 %v1324, %v1327
    %v1337 = vadd.f32 %v1328, %v1331
    %v1338 = vadd.f32 %v1329, %v1332
    %v1339 = vadd.f32 %v1330, %v1333
    %v1340 = vadd.f32 %v1337, %v1334
    %v1341 = vadd.f32 %v1338, %v1335
    %v1342 = vadd.f32 %v1339, %v1336
    %v1343 = vld [vmem:[#allocation11 + $0x8] sm:$0xff]
    %v1344 = vld [vmem:[#allocation11 + $0x18] sm:$0xff]
    %v1345 = vld [vmem:[#allocation11 + $0x28] sm:$0xff]
    %v1346 = vld [vmem:[#allocation11 + $0x38] sm:$0xff]
    %v1347 = vld [vmem:[#allocation11 + $0x48] sm:$0xff]
    %v1348 = vld [vmem:[#allocation11 + $0x58] sm:$0xff]
    %v1349 = vld [vmem:[#allocation11 + $0x68] sm:$0xff]
    %v1350 = vld [vmem:[#allocation11 + $0x78] sm:$0xff]
    %v1351 = vld [vmem:[#allocation11 + $0x88] sm:$0xff]
    %v1352 = vld [vmem:[#allocation11 + $0x98] sm:$0xff]
    %v1353 = vld [vmem:[#allocation11 + $0xa8] sm:$0xff]
    %v1354 = vld [vmem:[#allocation11 + $0xb8] sm:$0xff]
    %v1355 = vld [vmem:[#allocation11 + $0xc8] sm:$0xff]
    %v1356 = vld [vmem:[#allocation11 + $0xd8] sm:$0xff]
    %v1357 = vld [vmem:[#allocation11 + $0xe8] sm:$0xff]
    %v1358 = vld [vmem:[#allocation11 + $0xf8] sm:$0xff]
    %v1359 = vld [vmem:[%s6 + $0x5] sm:$0x1]
    %v1361 = vlaneseq
    %v1362 = vshrl.u32 %v1361, 7
    %v1363 = vsub.s32 0, %v1362
    %v1364 = vrot.slane %v1359, %v1363
    %1366 = vmatprep.subr.mxu0 0.0
    %1367 = vmatpush1.msra.mxu0 %v1358
    %1368 = vmatprep.subr.mxu0 0.0
    %1369 = vmatpush1.msra.mxu0 %v1357
    %1370 = vmatprep.subr.mxu0 0.0
    %1371 = vmatpush1.msra.mxu0 %v1356
    %1372 = vmatprep.subr.mxu0 0.0
    %1373 = vmatpush1.msra.mxu0 %v1355
    %1374 = vmatprep.subr.mxu0 0.0
    %1375 = vmatpush1.msra.mxu0 %v1354
    %1376 = vmatprep.subr.mxu0 0.0
    %1377 = vmatpush1.msra.mxu0 %v1353
    %1378 = vmatprep.subr.mxu0 0.0
    %1379 = vmatpush1.msra.mxu0 %v1352
    %1380 = vmatprep.subr.mxu0 0.0
    %1381 = vmatpush1.msra.mxu0 %v1351
    %1382 = vmatprep.subr.mxu0 0.0
    %1383 = vmatpush1.msra.mxu0 %v1350
    %1384 = vmatprep.subr.mxu0 0.0
    %1385 = vmatpush1.msra.mxu0 %v1349
    %1386 = vmatprep.subr.mxu0 0.0
    %1387 = vmatpush1.msra.mxu0 %v1348
    %1388 = vmatprep.subr.mxu0 0.0
    %1389 = vmatpush1.msra.mxu0 %v1347
    %1390 = vmatprep.subr.mxu0 0.0
    %1391 = vmatpush1.msra.mxu0 %v1346
    %1392 = vmatprep.subr.mxu0 0.0
    %1393 = vmatpush1.msra.mxu0 %v1345
    %1394 = vmatprep.subr.mxu0 0.0
    %1395 = vmatpush1.msra.mxu0 %v1344
    %1396 = vmatprep.subr.mxu0 0.0
    %1397 = vmatpush1.msra.mxu0 %v1343
    %1398 = vmatprep.subr.mxu0 0.0
    %1399 = vmatpush2.msra.mxu0 0.0
    %1400 = vmatprep.subr.mxu0 0.0
    %1401 = vmatpush2.msra.mxu0 0.0
    %1402 = vmatprep.subr.mxu0 0.0
    %1403 = vmatpush2.msra.mxu0 0.0
    %1404 = vmatprep.subr.mxu0 0.0
    %1405 = vmatpush2.msra.mxu0 0.0
    %1406 = vmatprep.subr.mxu0 0.0
    %1407 = vmatpush2.msra.mxu0 0.0
    %1408 = vmatprep.subr.mxu0 0.0
    %1409 = vmatpush2.msra.mxu0 0.0
    %1410 = vmatprep.subr.mxu0 0.0
    %1411 = vmatpush2.msra.mxu0 0.0
    %1412 = vmatprep.subr.mxu0 0.0
    %1413 = vmatpush2.msra.mxu0 0.0
    %1414 = vmatprep.subr.mxu0 0.0
    %1415 = vmatpush2.msra.mxu0 0.0
    %1416 = vmatprep.subr.mxu0 0.0
    %1417 = vmatpush2.msra.mxu0 0.0
    %1418 = vmatprep.subr.mxu0 0.0
    %1419 = vmatpush2.msra.mxu0 0.0
    %1420 = vmatprep.subr.mxu0 0.0
    %1421 = vmatpush2.msra.mxu0 0.0
    %1422 = vmatprep.subr.mxu0 0.0
    %1423 = vmatpush2.msra.mxu0 0.0
    %1424 = vmatprep.subr.mxu0 0.0
    %1425 = vmatpush2.msra.mxu0 0.0
    %1426 = vmatprep.subr.mxu0 0.0
    %1427 = vmatpush2.msra.mxu0 0.0
    %1428 = vmatprep.subr.mxu0 0.0
    %1429 = vmatpush2.msra.mxu0 0.0
    %1430 = vmatprep.mubr.f32.mxu0 0.0
    %1431 = vmatmul.mubr.f32.gmra.mxu0 %v877
    %v1432 = vpop.f32.mrf.mxu0
    %v1433 = vadd.f32 %v1364, %v1432
    %v1434 = vpop.f32.mrf.mxu0
    %1435 = vdwg.mxu0
    %1436 = vst [vmem:[#allocation13] sm:$0x3] %v1433
    %v1437 = vld [vmem:[#allocation2] sm:$0xc]
    %v1438 = vld [vmem:[#allocation2 + $0x8] sm:$0xc]
    %v1439 = vld [vmem:[#allocation2 + $0x10] sm:$0xc]
    %v1443 = vrot.slane %v1437, 2
    %v1444 = vrot.slane %v1438, 2
    %v1445 = vrot.slane %v1439, 2
    %v1449 = vadd.f32 %v1340, %v1443
    %v1450 = vadd.f32 %v1341, %v1444
    %v1451 = vadd.f32 %v1342, %v1445
    %v1452 = vld [vmem:[#allocation9] sm:$0xff]
    %v1453 = vld [vmem:[#allocation9 + $0x8] sm:$0xff]
    %v1454 = vld [vmem:[#allocation9 + $0x10] sm:$0xff]
    %v1455 = vld [vmem:[#allocation9 + $0x18] sm:$0xff]
    %v1456 = vld [vmem:[#allocation9 + $0x20] sm:$0xff]
    %v1457 = vld [vmem:[#allocation9 + $0x28] sm:$0xff]
    %v1458 = vld [vmem:[#allocation9 + $0x30] sm:$0xff]
    %v1459 = vld [vmem:[#allocation9 + $0x38] sm:$0xff]
    %v1460 = vld [vmem:[#allocation9 + $0x40] sm:$0xff]
    %v1461 = vld [vmem:[#allocation9 + $0x48] sm:$0xff]
    %v1462 = vld [vmem:[#allocation9 + $0x50] sm:$0xff]
    %v1463 = vld [vmem:[#allocation9 + $0x58] sm:$0xff]
    %v1464 = vld [vmem:[#allocation9 + $0x60] sm:$0xff]
    %v1465 = vld [vmem:[#allocation9 + $0x68] sm:$0xff]
    %v1466 = vld [vmem:[#allocation9 + $0x70] sm:$0xff]
    %v1467 = vld [vmem:[#allocation9 + $0x78] sm:$0xff]
    %v1468 = vld [vmem:[#allocation9 + $0x80] sm:$0xff]
    %v1469 = vld [vmem:[#allocation9 + $0x88] sm:$0xff]
    %v1470 = vld [vmem:[#allocation9 + $0x90] sm:$0xff]
    %v1471 = vld [vmem:[#allocation9 + $0x98] sm:$0xff]
    %v1472 = vld [vmem:[#allocation9 + $0xa0] sm:$0xff]
    %v1473 = vld [vmem:[#allocation9 + $0xa8] sm:$0xff]
    %v1474 = vld [vmem:[#allocation9 + $0xb0] sm:$0xff]
    %v1475 = vld [vmem:[#allocation9 + $0xb8] sm:$0xff]
    %v1476 = vld [vmem:[#allocation9 + $0xc0] sm:$0xff]
    %v1477 = vld [vmem:[#allocation9 + $0xc8] sm:$0xff]
    %v1478 = vld [vmem:[#allocation9 + $0xd0] sm:$0xff]
    %v1479 = vld [vmem:[#allocation9 + $0xd8] sm:$0xff]
    %v1480 = vld [vmem:[#allocation9 + $0xe0] sm:$0xff]
    %v1481 = vld [vmem:[#allocation9 + $0xe8] sm:$0xff]
    %v1482 = vld [vmem:[#allocation9 + $0xf0] sm:$0xff]
    %v1483 = vld [vmem:[#allocation9 + $0xf8] sm:$0xff]
    %v1484 = vld [vmem:[#allocation9 + $0x100] sm:$0xff]
    %v1485 = vld [vmem:[#allocation9 + $0x108] sm:$0xff]
    %v1486 = vld [vmem:[#allocation9 + $0x110] sm:$0xff]
    %v1487 = vld [vmem:[#allocation9 + $0x118] sm:$0xff]
    %v1488 = vld [vmem:[#allocation9 + $0x120] sm:$0xff]
    %v1489 = vld [vmem:[#allocation9 + $0x128] sm:$0xff]
    %v1490 = vld [vmem:[#allocation9 + $0x130] sm:$0xff]
    %v1491 = vld [vmem:[#allocation9 + $0x138] sm:$0xff]
    %v1492 = vld [vmem:[#allocation9 + $0x140] sm:$0xff]
    %v1493 = vld [vmem:[#allocation9 + $0x148] sm:$0xff]
    %v1494 = vld [vmem:[#allocation9 + $0x150] sm:$0xff]
    %v1495 = vld [vmem:[#allocation9 + $0x158] sm:$0xff]
    %v1496 = vld [vmem:[#allocation9 + $0x160] sm:$0xff]
    %v1497 = vld [vmem:[#allocation9 + $0x168] sm:$0xff]
    %v1498 = vld [vmem:[#allocation9 + $0x170] sm:$0xff]
    %v1499 = vld [vmem:[#allocation9 + $0x178] sm:$0xff]
    %1500 = vmatprep.subr.mxu0 %v1498
    %1501 = vmatpush1.msra.mxu0 %v1497
    %1502 = vmatprep.subr.mxu0 %v1495
    %1503 = vmatpush1.msra.mxu0 %v1494
    %1504 = vmatprep.subr.mxu0 %v1492
    %1505 = vmatpush1.msra.mxu0 %v1491
    %1506 = vmatprep.subr.mxu0 %v1489
    %1507 = vmatpush1.msra.mxu0 %v1488
    %1508 = vmatprep.subr.mxu0 %v1486
    %1509 = vmatpush1.msra.mxu0 %v1485
    %1510 = vmatprep.subr.mxu0 %v1483
    %1511 = vmatpush1.msra.mxu0 %v1482
    %1512 = vmatprep.subr.mxu0 %v1480
    %1513 = vmatpush1.msra.mxu0 %v1479
    %1514 = vmatprep.subr.mxu0 %v1477
    %1515 = vmatpush1.msra.mxu0 %v1476
    %1516 = vmatprep.subr.mxu0 %v1474
    %1517 = vmatpush1.msra.mxu0 %v1473
    %1518 = vmatprep.subr.mxu0 %v1471
    %1519 = vmatpush1.msra.mxu0 %v1470
    %1520 = vmatprep.subr.mxu0 %v1468
    %1521 = vmatpush1.msra.mxu0 %v1467
    %1522 = vmatprep.subr.mxu0 %v1465
    %1523 = vmatpush1.msra.mxu0 %v1464
    %1524 = vmatprep.subr.mxu0 %v1462
    %1525 = vmatpush1.msra.mxu0 %v1461
    %1526 = vmatprep.subr.mxu0 %v1459
    %1527 = vmatpush1.msra.mxu0 %v1458
    %1528 = vmatprep.subr.mxu0 %v1456
    %1529 = vmatpush1.msra.mxu0 %v1455
    %1530 = vmatprep.subr.mxu0 %v1453
    %1531 = vmatpush1.msra.mxu0 %v1452
    %1532 = vmatprep.subr.mxu0 0.0
    %1533 = vmatpush2.msra.mxu0 0.0
    %1534 = vmatprep.subr.mxu0 0.0
    %1535 = vmatpush2.msra.mxu0 0.0
    %1536 = vmatprep.subr.mxu0 0.0
    %1537 = vmatpush2.msra.mxu0 0.0
    %1538 = vmatprep.subr.mxu0 0.0
    %1539 = vmatpush2.msra.mxu0 0.0
    %1540 = vmatprep.subr.mxu0 0.0
    %1541 = vmatpush2.msra.mxu0 0.0
    %1542 = vmatprep.subr.mxu0 0.0
    %1543 = vmatpush2.msra.mxu0 0.0
    %1544 = vmatprep.subr.mxu0 0.0
    %1545 = vmatpush2.msra.mxu0 0.0
    %1546 = vmatprep.subr.mxu0 0.0
    %1547 = vmatpush2.msra.mxu0 0.0
    %1548 = vmatprep.subr.mxu0 0.0
    %1549 = vmatpush2.msra.mxu0 0.0
    %1550 = vmatprep.subr.mxu0 0.0
    %1551 = vmatpush2.msra.mxu0 0.0
    %1552 = vmatprep.subr.mxu0 0.0
    %1553 = vmatpush2.msra.mxu0 0.0
    %1554 = vmatprep.subr.mxu0 0.0
    %1555 = vmatpush2.msra.mxu0 0.0
    %1556 = vmatprep.subr.mxu0 0.0
    %1557 = vmatpush2.msra.mxu0 0.0
    %1558 = vmatprep.subr.mxu0 0.0
    %1559 = vmatpush2.msra.mxu0 0.0
    %1560 = vmatprep.subr.mxu0 0.0
    %1561 = vmatpush2.msra.mxu0 0.0
    %1562 = vmatprep.subr.mxu0 0.0
    %1563 = vmatpush2.msra.mxu0 0.0
    %1564 = vmatprep.mubr.f32.mxu0 0.0
    %1565 = vmatmul.mubr.f32.gmra.mxu0 %v877
    %v1566 = vpop.f32.mrf.mxu0
    %v1567 = vadd.f32 0.0, %v1566
    %v1568 = vpop.f32.mrf.mxu0
    %v1569 = vadd.f32 0.0, %v1568
    %1570 = vdwg.mxu0
    %1571 = vmatprep.subr.mxu0 0.0
    %1572 = vmatpush1.msra.mxu0 %v1499
    %1573 = vmatprep.subr.mxu0 0.0
    %1574 = vmatpush1.msra.mxu0 %v1496
    %1575 = vmatprep.subr.mxu0 0.0
    %1576 = vmatpush1.msra.mxu0 %v1493
    %1577 = vmatprep.subr.mxu0 0.0
    %1578 = vmatpush1.msra.mxu0 %v1490
    %1579 = vmatprep.subr.mxu0 0.0
    %1580 = vmatpush1.msra.mxu0 %v1487
    %1581 = vmatprep.subr.mxu0 0.0
    %1582 = vmatpush1.msra.mxu0 %v1484
    %1583 = vmatprep.subr.mxu0 0.0
    %1584 = vmatpush1.msra.mxu0 %v1481
    %1585 = vmatprep.subr.mxu0 0.0
    %1586 = vmatpush1.msra.mxu0 %v1478
    %1587 = vmatprep.subr.mxu0 0.0
    %1588 = vmatpush1.msra.mxu0 %v1475
    %1589 = vmatprep.subr.mxu0 0.0
    %1590 = vmatpush1.msra.mxu0 %v1472
    %1591 = vmatprep.subr.mxu0 0.0
    %1592 = vmatpush1.msra.mxu0 %v1469
    %1593 = vmatprep.subr.mxu0 0.0
    %1594 = vmatpush1.msra.mxu0 %v1466
    %1595 = vmatprep.subr.mxu0 0.0
    %1596 = vmatpush1.msra.mxu0 %v1463
    %1597 = vmatprep.subr.mxu0 0.0
    %1598 = vmatpush1.msra.mxu0 %v1460
    %1599 = vmatprep.subr.mxu0 0.0
    %1600 = vmatpush1.msra.mxu0 %v1457
    %1601 = vmatprep.subr.mxu0 0.0
    %1602 = vmatpush1.msra.mxu0 %v1454
    %1603 = vmatprep.subr.mxu0 0.0
    %1604 = vmatpush2.msra.mxu0 0.0
    %1605 = vmatprep.subr.mxu0 0.0
    %1606 = vmatpush2.msra.mxu0 0.0
    %1607 = vmatprep.subr.mxu0 0.0
    %1608 = vmatpush2.msra.mxu0 0.0
    %1609 = vmatprep.subr.mxu0 0.0
    %1610 = vmatpush2.msra.mxu0 0.0
    %1611 = vmatprep.subr.mxu0 0.0
    %1612 = vmatpush2.msra.mxu0 0.0
    %1613 = vmatprep.subr.mxu0 0.0
    %1614 = vmatpush2.msra.mxu0 0.0
    %1615 = vmatprep.subr.mxu0 0.0
    %1616 = vmatpush2.msra.mxu0 0.0
    %1617 = vmatprep.subr.mxu0 0.0
    %1618 = vmatpush2.msra.mxu0 0.0
    %1619 = vmatprep.subr.mxu0 0.0
    %1620 = vmatpush2.msra.mxu0 0.0
    %1621 = vmatprep.subr.mxu0 0.0
    %1622 = vmatpush2.msra.mxu0 0.0
    %1623 = vmatprep.subr.mxu0 0.0
    %1624 = vmatpush2.msra.mxu0 0.0
    %1625 = vmatprep.subr.mxu0 0.0
    %1626 = vmatpush2.msra.mxu0 0.0
    %1627 = vmatprep.subr.mxu0 0.0
    %1628 = vmatpush2.msra.mxu0 0.0
    %1629 = vmatprep.subr.mxu0 0.0
    %1630 = vmatpush2.msra.mxu0 0.0
    %1631 = vmatprep.subr.mxu0 0.0
    %1632 = vmatpush2.msra.mxu0 0.0
    %1633 = vmatprep.subr.mxu0 0.0
    %1634 = vmatpush2.msra.mxu0 0.0
    %1635 = vmatprep.mubr.f32.mxu0 0.0
    %1636 = vmatmul.mubr.f32.gmra.mxu0 %v877
    %v1637 = vpop.f32.mrf.mxu0
    %v1638 = vadd.f32 0.0, %v1637
    %v1639 = vpop.f32.mrf.mxu0
    %1640 = vdwg.mxu0
    %v1641 = vadd.f32 %v1449, %v1567
    %v1642 = vxor.u32 %v1641, 2147483648
    %v1643 = vmul.f32 %v1642, 1.442695
    %v1644 = vpow.pop %v1643
    %v1645 = vadd.f32 %v1644, 1.0
    %v1646 = vrcp.pop %v1645
    %v1647 = vmul.f32 1.0, %v1646
    %v1648 = vadd.f32 %v1450, %v1569
    %v1649 = vxor.u32 %v1648, 2147483648
    %v1650 = vmul.f32 %v1649, 1.442695
    %v1651 = vpow.pop %v1650
    %v1652 = vadd.f32 %v1651, 1.0
    %v1653 = vrcp.pop %v1652
    %v1654 = vmul.f32 1.0, %v1653
    %v1655 = vadd.f32 %v1638, %v868
    %v1656 = vmul.f32 %v1647, %v1655
    %v1657 = vadd.f32 %v1451, %v1656
    %v1658 = vtanh.pop %v1657
    %v1659 = vsub.f32 1.0, %v1654
    %v1660 = vmul.f32 %v1659, %v1658
    %v1661 = vmul.f32 %v1654, %v877
    %v1662 = vadd.f32 %v1660, %v1661
    %v1663 = vld [vmem:[#allocation11] sm:$0xff]
    %v1664 = vld [vmem:[#allocation11 + $0x10] sm:$0xff]
    %v1665 = vld [vmem:[#allocation11 + $0x20] sm:$0xff]
    %v1666 = vld [vmem:[#allocation11 + $0x30] sm:$0xff]
    %v1667 = vld [vmem:[#allocation11 + $0x40] sm:$0xff]
    %v1668 = vld [vmem:[#allocation11 + $0x50] sm:$0xff]
    %v1669 = vld [vmem:[#allocation11 + $0x60] sm:$0xff]
    %v1670 = vld [vmem:[#allocation11 + $0x70] sm:$0xff]
    %v1671 = vld [vmem:[#allocation11 + $0x80] sm:$0xff]
    %v1672 = vld [vmem:[#allocation11 + $0x90] sm:$0xff]
    %v1673 = vld [vmem:[#allocation11 + $0xa0] sm:$0xff]
    %v1674 = vld [vmem:[#allocation11 + $0xb0] sm:$0xff]
    %v1675 = vld [vmem:[#allocation11 + $0xc0] sm:$0xff]
    %v1676 = vld [vmem:[#allocation11 + $0xd0] sm:$0xff]
    %v1677 = vld [vmem:[#allocation11 + $0xe0] sm:$0xff]
    %v1678 = vld [vmem:[#allocation11 + $0xf0] sm:$0xff]
    %1679 = vmatprep.subr.mxu0 0.0
    %1680 = vmatpush1.msra.mxu0 %v1678
    %1681 = vmatprep.subr.mxu0 0.0
    %1682 = vmatpush1.msra.mxu0 %v1677
    %1683 = vmatprep.subr.mxu0 0.0
    %1684 = vmatpush1.msra.mxu0 %v1676
    %1685 = vmatprep.subr.mxu0 0.0
    %1686 = vmatpush1.msra.mxu0 %v1675
    %1687 = vmatprep.subr.mxu0 0.0
    %1688 = vmatpush1.msra.mxu0 %v1674
    %1689 = vmatprep.subr.mxu0 0.0
    %1690 = vmatpush1.msra.mxu0 %v1673
    %1691 = vmatprep.subr.mxu0 0.0
    %1692 = vmatpush1.msra.mxu0 %v1672
    %1693 = vmatprep.subr.mxu0 0.0
    %1694 = vmatpush1.msra.mxu0 %v1671
    %1695 = vmatprep.subr.mxu0 0.0
    %1696 = vmatpush1.msra.mxu0 %v1670
    %1697 = vmatprep.subr.mxu0 0.0
    %1698 = vmatpush1.msra.mxu0 %v1669
    %1699 = vmatprep.subr.mxu0 0.0
    %1700 = vmatpush1.msra.mxu0 %v1668
    %1701 = vmatprep.subr.mxu0 0.0
    %1702 = vmatpush1.msra.mxu0 %v1667
    %1703 = vmatprep.subr.mxu0 0.0
    %1704 = vmatpush1.msra.mxu0 %v1666
    %1705 = vmatprep.subr.mxu0 0.0
    %1706 = vmatpush1.msra.mxu0 %v1665
    %1707 = vmatprep.subr.mxu0 0.0
    %1708 = vmatpush1.msra.mxu0 %v1664
    %1709 = vmatprep.subr.mxu0 0.0
    %1710 = vmatpush1.msra.mxu0 %v1663
    %1711 = vmatprep.subr.mxu0 0.0
    %1712 = vmatpush2.msra.mxu0 0.0
    %1713 = vmatprep.subr.mxu0 0.0
    %1714 = vmatpush2.msra.mxu0 0.0
    %1715 = vmatprep.subr.mxu0 0.0
    %1716 = vmatpush2.msra.mxu0 0.0
    %1717 = vmatprep.subr.mxu0 0.0
    %1718 = vmatpush2.msra.mxu0 0.0
    %1719 = vmatprep.subr.mxu0 0.0
    %1720 = vmatpush2.msra.mxu0 0.0
    %1721 = vmatprep.subr.mxu0 0.0
    %1722 = vmatpush2.msra.mxu0 0.0
    %1723 = vmatprep.subr.mxu0 0.0
    %1724 = vmatpush2.msra.mxu0 0.0
    %1725 = vmatprep.subr.mxu0 0.0
    %1726 = vmatpush2.msra.mxu0 0.0
    %1727 = vmatprep.subr.mxu0 0.0
    %1728 = vmatpush2.msra.mxu0 0.0
    %1729 = vmatprep.subr.mxu0 0.0
    %1730 = vmatpush2.msra.mxu0 0.0
    %1731 = vmatprep.subr.mxu0 0.0
    %1732 = vmatpush2.msra.mxu0 0.0
    %1733 = vmatprep.subr.mxu0 0.0
    %1734 = vmatpush2.msra.mxu0 0.0
    %1735 = vmatprep.subr.mxu0 0.0
    %1736 = vmatpush2.msra.mxu0 0.0
    %1737 = vmatprep.subr.mxu0 0.0
    %1738 = vmatpush2.msra.mxu0 0.0
    %1739 = vmatprep.subr.mxu0 0.0
    %1740 = vmatpush2.msra.mxu0 0.0
    %1741 = vmatprep.subr.mxu0 0.0
    %1742 = vmatpush2.msra.mxu0 0.0
    %1743 = vmatprep.mubr.f32.mxu0 0.0
    %1744 = vmatmul.mubr.f32.gmra.mxu0 %v1662
    %v1745 = vpop.f32.mrf.mxu0
    %v1746 = vadd.f32 %v898, %v1745
    %v1747 = vpop.f32.mrf.mxu0
    %1748 = vdwg.mxu0
    %1749 = vrot.lane.b32.xlu0 %v1746, 1
    %v1750 = vpop.permute.xlu0 %1749
    %vm1751 = vcmp.gt.f32.partialorder %v1750, %v1746
    %vm1752 = vcmp.eq.f32.partialorder %v1750, %v1746
    %vm1753 = vmand %vm1752, %vm976
    %vm1754 = vmor %vm1751, %vm1753
    %v1755 = vsel %vm1754, %v1750, %v1746
    %v1756 = vsel %vm1754, %v973, %v99
    %1757 = vrot.lane.b32.xlu0 %v1755, 2
    %v1758 = vpop.permute.xlu0 %1757
    %1759 = vrot.lane.b32.xlu0 %v1756, 2
    %v1760 = vpop.permute.xlu0 %1759
    %vm1761 = vcmp.gt.f32.partialorder %v1758, %v1755
    %vm1762 = vcmp.eq.f32.partialorder %v1758, %v1755
    %vm1763 = vcmp.lt.s32.totalorder %v1760, %v1756
    %vm1764 = vmand %vm1762, %vm1763
    %vm1765 = vmor %vm1761, %vm1764
    %v1766 = vsel %vm1765, %v1758, %v1755
    %v1767 = vsel %vm1765, %v1760, %v1756
    %1768 = vrot.lane.b32.xlu0 %v1766, 4
    %v1769 = vpop.permute.xlu0 %1768
    %1770 = vrot.lane.b32.xlu0 %v1767, 4
    %v1771 = vpop.permute.xlu0 %1770
    %vm1772 = vcmp.gt.f32.partialorder %v1769, %v1766
    %vm1773 = vcmp.eq.f32.partialorder %v1769, %v1766
    %vm1774 = vcmp.lt.s32.totalorder %v1771, %v1767
    %vm1775 = vmand %vm1773, %vm1774
    %vm1776 = vmor %vm1772, %vm1775
    %v1777 = vsel %vm1776, %v1769, %v1766
    %v1778 = vsel %vm1776, %v1771, %v1767
    %1779 = vrot.lane.b32.xlu0 %v1777, 8
    %v1780 = vpop.permute.xlu0 %1779
    %1781 = vrot.lane.b32.xlu0 %v1778, 8
    %v1782 = vpop.permute.xlu0 %1781
    %vm1783 = vcmp.gt.f32.partialorder %v1780, %v1777
    %vm1784 = vcmp.eq.f32.partialorder %v1780, %v1777
    %vm1785 = vcmp.lt.s32.totalorder %v1782, %v1778
    %vm1786 = vmand %vm1784, %vm1785
    %vm1787 = vmor %vm1783, %vm1786
    %v1788 = vsel %vm1787, %v1780, %v1777
    %v1789 = vsel %vm1787, %v1782, %v1778
    %1790 = vrot.lane.b32.xlu0 %v1788, 16
    %v1791 = vpop.permute.xlu0 %1790
    %1792 = vrot.lane.b32.xlu0 %v1789, 16
    %v1793 = vpop.permute.xlu0 %1792
    %vm1794 = vcmp.gt.f32.partialorder %v1791, %v1788
    %vm1795 = vcmp.eq.f32.partialorder %v1791, %v1788
    %vm1796 = vcmp.lt.s32.totalorder %v1793, %v1789
    %vm1797 = vmand %vm1795, %vm1796
    %vm1798 = vmor %vm1794, %vm1797
    %v1799 = vsel %vm1798, %v1791, %v1788
    %v1800 = vsel %vm1798, %v1793, %v1789
    %1801 = vrot.lane.b32.xlu0 %v1799, 32
    %v1802 = vpop.permute.xlu0 %1801
    %1803 = vrot.lane.b32.xlu0 %v1800, 32
    %v1804 = vpop.permute.xlu0 %1803
    %vm1805 = vcmp.gt.f32.partialorder %v1802, %v1799
    %vm1806 = vcmp.eq.f32.partialorder %v1802, %v1799
    %vm1807 = vcmp.lt.s32.totalorder %v1804, %v1800
    %vm1808 = vmand %vm1806, %vm1807
    %vm1809 = vmor %vm1805, %vm1808
    %v1810 = vsel %vm1809, %v1802, %v1799
    %v1811 = vsel %vm1809, %v1804, %v1800
    %1812 = vrot.lane.b32.xlu0 %v1810, 64
    %v1813 = vpop.permute.xlu0 %1812
    %1814 = vrot.lane.b32.xlu0 %v1811, 64
    %v1815 = vpop.permute.xlu0 %1814
    %vm1816 = vcmp.gt.f32.partialorder %v1813, %v1810
    %vm1817 = vcmp.eq.f32.partialorder %v1813, %v1810
    %vm1818 = vcmp.lt.s32.totalorder %v1815, %v1811
    %vm1819 = vmand %vm1817, %vm1818
    %vm1820 = vmor %vm1816, %vm1819
    %v1821 = vsel %vm1820, %v1813, %v1810
    %v1822 = vsel %vm1820, %v1815, %v1811
    %v1823 = vsub.f32 %v1746, %v1821
    %v1824 = vmul.f32 %v1823, 1.442695
    %v1825 = vpow.pop %v1824
    %v1826 = vsel %vm1050, %v1825, 0.0
    %1827 = vadd.xlane.f32.xlu0 %v1826
    %v1828 = vpop.xlane.xlu0 %1827
    %v1829 = vlog2.pop %v1828
    %v1830 = vmul.f32 %v1829, 0.6931472
    %v1831 = vsub.f32 %v1823, %v1830
    %s1832 = scalar_lea.vmem [#allocation12], 2
    %1833 = vst [vmem:[%s1832] sm:$0x3] %v1831
    %vm1834 = vcmp.eq.s32.totalorder %v1822, 0
    %v1835 = vld [vmem:[#allocation6] ss:$8 sm:$0x7]
    %v1837 = vlaneseq
    %v1838 = vshrl.u32 %v1837, 7
    %v1839 = vsub.s32 0, %v1838
    %v1840 = vrot.slane %v1835, %v1839
    %v1841 = vlaneseq
    %v1842 = vshrl.u32 %v1841, 7
    %v1843 = vsub.s32 1, %v1842
    %v1844 = vrot.slane %v1835, %v1843
    %v1845 = vlaneseq
    %v1846 = vshrl.u32 %v1845, 7
    %v1847 = vsub.s32 2, %v1846
    %v1848 = vrot.slane %v1835, %v1847
    %v1852 = vsel %vm1834, %v1840, 0.0
    %v1853 = vsel %vm1834, %v1844, 0.0
    %v1854 = vsel %vm1834, %v1848, 0.0
    %vm1855 = vcmp.eq.s32.totalorder %v1822, 1
    %v1856 = vld [vmem:[%s326] ss:$8 sm:$0x7]
    %v1858 = vlaneseq
    %v1859 = vshrl.u32 %v1858, 7
    %v1860 = vsub.s32 0, %v1859
    %v1861 = vrot.slane %v1856, %v1860
    %v1862 = vlaneseq
    %v1863 = vshrl.u32 %v1862, 7
    %v1864 = vsub.s32 1, %v1863
    %v1865 = vrot.slane %v1856, %v1864
    %v1866 = vlaneseq
    %v1867 = vshrl.u32 %v1866, 7
    %v1868 = vsub.s32 2, %v1867
    %v1869 = vrot.slane %v1856, %v1868
    %v1873 = vsel %vm1855, %v1861, 0.0
    %v1874 = vsel %vm1855, %v1865, 0.0
    %v1875 = vsel %vm1855, %v1869, 0.0
    %vm1876 = vcmp.eq.s32.totalorder %v1822, 2
    %v1877 = vld [vmem:[%s353] ss:$8 sm:$0x7]
    %v1879 = vlaneseq
    %v1880 = vshrl.u32 %v1879, 7
    %v1881 = vsub.s32 0, %v1880
    %v1882 = vrot.slane %v1877, %v1881
    %v1883 = vlaneseq
    %v1884 = vshrl.u32 %v1883, 7
    %v1885 = vsub.s32 1, %v1884
    %v1886 = vrot.slane %v1877, %v1885
    %v1887 = vlaneseq
    %v1888 = vshrl.u32 %v1887, 7
    %v1889 = vsub.s32 2, %v1888
    %v1890 = vrot.slane %v1877, %v1889
    %v1894 = vsel %vm1876, %v1882, 0.0
    %v1895 = vsel %vm1876, %v1886, 0.0
    %v1896 = vsel %vm1876, %v1890, 0.0
    %vm1897 = vcmp.eq.s32.totalorder %v1822, 3
    %v1898 = vld [vmem:[%s380] ss:$8 sm:$0x7]
    %v1900 = vlaneseq
    %v1901 = vshrl.u32 %v1900, 7
    %v1902 = vsub.s32 0, %v1901
    %v1903 = vrot.slane %v1898, %v1902
    %v1904 = vlaneseq
    %v1905 = vshrl.u32 %v1904, 7
    %v1906 = vsub.s32 1, %v1905
    %v1907 = vrot.slane %v1898, %v1906
    %v1908 = vlaneseq
    %v1909 = vshrl.u32 %v1908, 7
    %v1910 = vsub.s32 2, %v1909
    %v1911 = vrot.slane %v1898, %v1910
    %v1915 = vsel %vm1897, %v1903, 0.0
    %v1916 = vsel %vm1897, %v1907, 0.0
    %v1917 = vsel %vm1897, %v1911, 0.0
    %vm1918 = vcmp.eq.s32.totalorder %v1822, 4
    %v1919 = vld [vmem:[%s407] ss:$8 sm:$0x7]
    %v1921 = vlaneseq
    %v1922 = vshrl.u32 %v1921, 7
    %v1923 = vsub.s32 0, %v1922
    %v1924 = vrot.slane %v1919, %v1923
    %v1925 = vlaneseq
    %v1926 = vshrl.u32 %v1925, 7
    %v1927 = vsub.s32 1, %v1926
    %v1928 = vrot.slane %v1919, %v1927
    %v1929 = vlaneseq
    %v1930 = vshrl.u32 %v1929, 7
    %v1931 = vsub.s32 2, %v1930
    %v1932 = vrot.slane %v1919, %v1931
    %v1936 = vsel %vm1918, %v1924, 0.0
    %v1937 = vsel %vm1918, %v1928, 0.0
    %v1938 = vsel %vm1918, %v1932, 0.0
    %vm1939 = vcmp.eq.s32.totalorder %v1822, 5
    %v1940 = vld [vmem:[%s434] ss:$8 sm:$0x7]
    %v1942 = vlaneseq
    %v1943 = vshrl.u32 %v1942, 7
    %v1944 = vsub.s32 0, %v1943
    %v1945 = vrot.slane %v1940, %v1944
    %v1946 = vlaneseq
    %v1947 = vshrl.u32 %v1946, 7
    %v1948 = vsub.s32 1, %v1947
    %v1949 = vrot.slane %v1940, %v1948
    %v1950 = vlaneseq
    %v1951 = vshrl.u32 %v1950, 7
    %v1952 = vsub.s32 2, %v1951
    %v1953 = vrot.slane %v1940, %v1952
    %v1957 = vsel %vm1939, %v1945, 0.0
    %v1958 = vsel %vm1939, %v1949, 0.0
    %v1959 = vsel %vm1939, %v1953, 0.0
    %vm1960 = vcmp.eq.s32.totalorder %v1822, 6
    %v1961 = vld [vmem:[%s461] ss:$8 sm:$0x7]
    %v1963 = vlaneseq
    %v1964 = vshrl.u32 %v1963, 7
    %v1965 = vsub.s32 0, %v1964
    %v1966 = vrot.slane %v1961, %v1965
    %v1967 = vlaneseq
    %v1968 = vshrl.u32 %v1967, 7
    %v1969 = vsub.s32 1, %v1968
    %v1970 = vrot.slane %v1961, %v1969
    %v1971 = vlaneseq
    %v1972 = vshrl.u32 %v1971, 7
    %v1973 = vsub.s32 2, %v1972
    %v1974 = vrot.slane %v1961, %v1973
    %v1978 = vsel %vm1960, %v1966, 0.0
    %v1979 = vsel %vm1960, %v1970, 0.0
    %v1980 = vsel %vm1960, %v1974, 0.0
    %vm1981 = vcmp.eq.s32.totalorder %v1822, 7
    %v1982 = vld [vmem:[%s488] ss:$8 sm:$0x7]
    %v1984 = vlaneseq
    %v1985 = vshrl.u32 %v1984, 7
    %v1986 = vsub.s32 0, %v1985
    %v1987 = vrot.slane %v1982, %v1986
    %v1988 = vlaneseq
    %v1989 = vshrl.u32 %v1988, 7
    %v1990 = vsub.s32 1, %v1989
    %v1991 = vrot.slane %v1982, %v1990
    %v1992 = vlaneseq
    %v1993 = vshrl.u32 %v1992, 7
    %v1994 = vsub.s32 2, %v1993
    %v1995 = vrot.slane %v1982, %v1994
    %v1999 = vsel %vm1981, %v1987, 0.0
    %v2000 = vsel %vm1981, %v1991, 0.0
    %v2001 = vsel %vm1981, %v1995, 0.0
    %vm2002 = vcmp.eq.s32.totalorder %v1822, 8
    %v2003 = vld [vmem:[%s515] ss:$8 sm:$0x7]
    %v2005 = vlaneseq
    %v2006 = vshrl.u32 %v2005, 7
    %v2007 = vsub.s32 0, %v2006
    %v2008 = vrot.slane %v2003, %v2007
    %v2009 = vlaneseq
    %v2010 = vshrl.u32 %v2009, 7
    %v2011 = vsub.s32 1, %v2010
    %v2012 = vrot.slane %v2003, %v2011
    %v2013 = vlaneseq
    %v2014 = vshrl.u32 %v2013, 7
    %v2015 = vsub.s32 2, %v2014
    %v2016 = vrot.slane %v2003, %v2015
    %v2020 = vsel %vm2002, %v2008, 0.0
    %v2021 = vsel %vm2002, %v2012, 0.0
    %v2022 = vsel %vm2002, %v2016, 0.0
    %vm2023 = vcmp.eq.s32.totalorder %v1822, 9
    %v2024 = vld [vmem:[%s542] ss:$8 sm:$0x7]
    %v2026 = vlaneseq
    %v2027 = vshrl.u32 %v2026, 7
    %v2028 = vsub.s32 0, %v2027
    %v2029 = vrot.slane %v2024, %v2028
    %v2030 = vlaneseq
    %v2031 = vshrl.u32 %v2030, 7
    %v2032 = vsub.s32 1, %v2031
    %v2033 = vrot.slane %v2024, %v2032
    %v2034 = vlaneseq
    %v2035 = vshrl.u32 %v2034, 7
    %v2036 = vsub.s32 2, %v2035
    %v2037 = vrot.slane %v2024, %v2036
    %v2041 = vsel %vm2023, %v2029, 0.0
    %v2042 = vsel %vm2023, %v2033, 0.0
    %v2043 = vsel %vm2023, %v2037, 0.0
    %vm2044 = vcmp.eq.s32.totalorder %v1822, 10
    %v2045 = vld [vmem:[%s569] ss:$8 sm:$0x7]
    %v2047 = vlaneseq
    %v2048 = vshrl.u32 %v2047, 7
    %v2049 = vsub.s32 0, %v2048
    %v2050 = vrot.slane %v2045, %v2049
    %v2051 = vlaneseq
    %v2052 = vshrl.u32 %v2051, 7
    %v2053 = vsub.s32 1, %v2052
    %v2054 = vrot.slane %v2045, %v2053
    %v2055 = vlaneseq
    %v2056 = vshrl.u32 %v2055, 7
    %v2057 = vsub.s32 2, %v2056
    %v2058 = vrot.slane %v2045, %v2057
    %v2062 = vsel %vm2044, %v2050, 0.0
    %v2063 = vsel %vm2044, %v2054, 0.0
    %v2064 = vsel %vm2044, %v2058, 0.0
    %vm2065 = vcmp.eq.s32.totalorder %v1822, 11
    %v2066 = vld [vmem:[%s596] ss:$8 sm:$0x7]
    %v2068 = vlaneseq
    %v2069 = vshrl.u32 %v2068, 7
    %v2070 = vsub.s32 0, %v2069
    %v2071 = vrot.slane %v2066, %v2070
    %v2072 = vlaneseq
    %v2073 = vshrl.u32 %v2072, 7
    %v2074 = vsub.s32 1, %v2073
    %v2075 = vrot.slane %v2066, %v2074
    %v2076 = vlaneseq
    %v2077 = vshrl.u32 %v2076, 7
    %v2078 = vsub.s32 2, %v2077
    %v2079 = vrot.slane %v2066, %v2078
    %v2083 = vsel %vm2065, %v2071, 0.0
    %v2084 = vsel %vm2065, %v2075, 0.0
    %v2085 = vsel %vm2065, %v2079, 0.0
    %v2086 = vadd.f32 %v1852, %v1873
    %v2087 = vadd.f32 %v1853, %v1874
    %v2088 = vadd.f32 %v1854, %v1875
    %v2089 = vadd.f32 %v1894, %v1915
    %v2090 = vadd.f32 %v1895, %v1916
    %v2091 = vadd.f32 %v1896, %v1917
    %v2092 = vadd.f32 %v1936, %v1957
    %v2093 = vadd.f32 %v1937, %v1958
    %v2094 = vadd.f32 %v1938, %v1959
    %v2095 = vadd.f32 %v1978, %v1999
    %v2096 = vadd.f32 %v1979, %v2000
    %v2097 = vadd.f32 %v1980, %v2001
    %v2098 = vadd.f32 %v2020, %v2041
    %v2099 = vadd.f32 %v2021, %v2042
    %v2100 = vadd.f32 %v2022, %v2043
    %v2101 = vadd.f32 %v2062, %v2083
    %v2102 = vadd.f32 %v2063, %v2084
    %v2103 = vadd.f32 %v2064, %v2085
    %v2104 = vadd.f32 %v2086, %v2089
    %v2105 = vadd.f32 %v2087, %v2090
    %v2106 = vadd.f32 %v2088, %v2091
    %v2107 = vadd.f32 %v2092, %v2095
    %v2108 = vadd.f32 %v2093, %v2096
    %v2109 = vadd.f32 %v2094, %v2097
    %v2110 = vadd.f32 %v2098, %v2101
    %v2111 = vadd.f32 %v2099, %v2102
    %v2112 = vadd.f32 %v2100, %v2103
    %v2113 = vadd.f32 %v2104, %v2107
    %v2114 = vadd.f32 %v2105, %v2108
    %v2115 = vadd.f32 %v2106, %v2109
    %v2116 = vadd.f32 %v2113, %v2110
    %v2117 = vadd.f32 %v2114, %v2111
    %v2118 = vadd.f32 %v2115, %v2112
    %v2119 = vld [vmem:[#allocation2] sm:$0x30]
    %v2120 = vld [vmem:[#allocation2 + $0x8] sm:$0x30]
    %v2121 = vld [vmem:[#allocation2 + $0x10] sm:$0x30]
    %v2125 = vrot.slane %v2119, 4
    %v2126 = vrot.slane %v2120, 4
    %v2127 = vrot.slane %v2121, 4
    %v2131 = vadd.f32 %v2116, %v2125
    %v2132 = vadd.f32 %v2117, %v2126
    %v2133 = vadd.f32 %v2118, %v2127
    %v2134 = vld [vmem:[#allocation9] sm:$0xff]
    %v2135 = vld [vmem:[#allocation9 + $0x8] sm:$0xff]
    %v2136 = vld [vmem:[#allocation9 + $0x10] sm:$0xff]
    %v2137 = vld [vmem:[#allocation9 + $0x18] sm:$0xff]
    %v2138 = vld [vmem:[#allocation9 + $0x20] sm:$0xff]
    %v2139 = vld [vmem:[#allocation9 + $0x28] sm:$0xff]
    %v2140 = vld [vmem:[#allocation9 + $0x30] sm:$0xff]
    %v2141 = vld [vmem:[#allocation9 + $0x38] sm:$0xff]
    %v2142 = vld [vmem:[#allocation9 + $0x40] sm:$0xff]
    %v2143 = vld [vmem:[#allocation9 + $0x48] sm:$0xff]
    %v2144 = vld [vmem:[#allocation9 + $0x50] sm:$0xff]
    %v2145 = vld [vmem:[#allocation9 + $0x58] sm:$0xff]
    %v2146 = vld [vmem:[#allocation9 + $0x60] sm:$0xff]
    %v2147 = vld [vmem:[#allocation9 + $0x68] sm:$0xff]
    %v2148 = vld [vmem:[#allocation9 + $0x70] sm:$0xff]
    %v2149 = vld [vmem:[#allocation9 + $0x78] sm:$0xff]
    %v2150 = vld [vmem:[#allocation9 + $0x80] sm:$0xff]
    %v2151 = vld [vmem:[#allocation9 + $0x88] sm:$0xff]
    %v2152 = vld [vmem:[#allocation9 + $0x90] sm:$0xff]
    %v2153 = vld [vmem:[#allocation9 + $0x98] sm:$0xff]
    %v2154 = vld [vmem:[#allocation9 + $0xa0] sm:$0xff]
    %v2155 = vld [vmem:[#allocation9 + $0xa8] sm:$0xff]
    %v2156 = vld [vmem:[#allocation9 + $0xb0] sm:$0xff]
    %v2157 = vld [vmem:[#allocation9 + $0xb8] sm:$0xff]
    %v2158 = vld [vmem:[#allocation9 + $0xc0] sm:$0xff]
    %v2159 = vld [vmem:[#allocation9 + $0xc8] sm:$0xff]
    %v2160 = vld [vmem:[#allocation9 + $0xd0] sm:$0xff]
    %v2161 = vld [vmem:[#allocation9 + $0xd8] sm:$0xff]
    %v2162 = vld [vmem:[#allocation9 + $0xe0] sm:$0xff]
    %v2163 = vld [vmem:[#allocation9 + $0xe8] sm:$0xff]
    %v2164 = vld [vmem:[#allocation9 + $0xf0] sm:$0xff]
    %v2165 = vld [vmem:[#allocation9 + $0xf8] sm:$0xff]
    %v2166 = vld [vmem:[#allocation9 + $0x100] sm:$0xff]
    %v2167 = vld [vmem:[#allocation9 + $0x108] sm:$0xff]
    %v2168 = vld [vmem:[#allocation9 + $0x110] sm:$0xff]
    %v2169 = vld [vmem:[#allocation9 + $0x118] sm:$0xff]
    %v2170 = vld [vmem:[#allocation9 + $0x120] sm:$0xff]
    %v2171 = vld [vmem:[#allocation9 + $0x128] sm:$0xff]
    %v2172 = vld [vmem:[#allocation9 + $0x130] sm:$0xff]
    %v2173 = vld [vmem:[#allocation9 + $0x138] sm:$0xff]
    %v2174 = vld [vmem:[#allocation9 + $0x140] sm:$0xff]
    %v2175 = vld [vmem:[#allocation9 + $0x148] sm:$0xff]
    %v2176 = vld [vmem:[#allocation9 + $0x150] sm:$0xff]
    %v2177 = vld [vmem:[#allocation9 + $0x158] sm:$0xff]
    %v2178 = vld [vmem:[#allocation9 + $0x160] sm:$0xff]
    %v2179 = vld [vmem:[#allocation9 + $0x168] sm:$0xff]
    %v2180 = vld [vmem:[#allocation9 + $0x170] sm:$0xff]
    %v2181 = vld [vmem:[#allocation9 + $0x178] sm:$0xff]
    %2182 = vmatprep.subr.mxu0 %v2180
    %2183 = vmatpush1.msra.mxu0 %v2179
    %2184 = vmatprep.subr.mxu0 %v2177
    %2185 = vmatpush1.msra.mxu0 %v2176
    %2186 = vmatprep.subr.mxu0 %v2174
    %2187 = vmatpush1.msra.mxu0 %v2173
    %2188 = vmatprep.subr.mxu0 %v2171
    %2189 = vmatpush1.msra.mxu0 %v2170
    %2190 = vmatprep.subr.mxu0 %v2168
    %2191 = vmatpush1.msra.mxu0 %v2167
    %2192 = vmatprep.subr.mxu0 %v2165
    %2193 = vmatpush1.msra.mxu0 %v2164
    %2194 = vmatprep.subr.mxu0 %v2162
    %2195 = vmatpush1.msra.mxu0 %v2161
    %2196 = vmatprep.subr.mxu0 %v2159
    %2197 = vmatpush1.msra.mxu0 %v2158
    %2198 = vmatprep.subr.mxu0 %v2156
    %2199 = vmatpush1.msra.mxu0 %v2155
    %2200 = vmatprep.subr.mxu0 %v2153
    %2201 = vmatpush1.msra.mxu0 %v2152
    %2202 = vmatprep.subr.mxu0 %v2150
    %2203 = vmatpush1.msra.mxu0 %v2149
    %2204 = vmatprep.subr.mxu0 %v2147
    %2205 = vmatpush1.msra.mxu0 %v2146
    %2206 = vmatprep.subr.mxu0 %v2144
    %2207 = vmatpush1.msra.mxu0 %v2143
    %2208 = vmatprep.subr.mxu0 %v2141
    %2209 = vmatpush1.msra.mxu0 %v2140
    %2210 = vmatprep.subr.mxu0 %v2138
    %2211 = vmatpush1.msra.mxu0 %v2137
    %2212 = vmatprep.subr.mxu0 %v2135
    %2213 = vmatpush1.msra.mxu0 %v2134
    %2214 = vmatprep.subr.mxu0 0.0
    %2215 = vmatpush2.msra.mxu0 0.0
    %2216 = vmatprep.subr.mxu0 0.0
    %2217 = vmatpush2.msra.mxu0 0.0
    %2218 = vmatprep.subr.mxu0 0.0
    %2219 = vmatpush2.msra.mxu0 0.0
    %2220 = vmatprep.subr.mxu0 0.0
    %2221 = vmatpush2.msra.mxu0 0.0
    %2222 = vmatprep.subr.mxu0 0.0
    %2223 = vmatpush2.msra.mxu0 0.0
    %2224 = vmatprep.subr.mxu0 0.0
    %2225 = vmatpush2.msra.mxu0 0.0
    %2226 = vmatprep.subr.mxu0 0.0
    %2227 = vmatpush2.msra.mxu0 0.0
    %2228 = vmatprep.subr.mxu0 0.0
    %2229 = vmatpush2.msra.mxu0 0.0
    %2230 = vmatprep.subr.mxu0 0.0
    %2231 = vmatpush2.msra.mxu0 0.0
    %2232 = vmatprep.subr.mxu0 0.0
    %2233 = vmatpush2.msra.mxu0 0.0
    %2234 = vmatprep.subr.mxu0 0.0
    %2235 = vmatpush2.msra.mxu0 0.0
    %2236 = vmatprep.subr.mxu0 0.0
    %2237 = vmatpush2.msra.mxu0 0.0
    %2238 = vmatprep.subr.mxu0 0.0
    %2239 = vmatpush2.msra.mxu0 0.0
    %2240 = vmatprep.subr.mxu0 0.0
    %2241 = vmatpush2.msra.mxu0 0.0
    %2242 = vmatprep.subr.mxu0 0.0
    %2243 = vmatpush2.msra.mxu0 0.0
    %2244 = vmatprep.subr.mxu0 0.0
    %2245 = vmatpush2.msra.mxu0 0.0
    %2246 = vmatprep.mubr.f32.mxu0 0.0
    %2247 = vmatmul.mubr.f32.gmra.mxu0 %v1662
    %v2248 = vpop.f32.mrf.mxu0
    %v2249 = vadd.f32 0.0, %v2248
    %v2250 = vpop.f32.mrf.mxu0
    %v2251 = vadd.f32 0.0, %v2250
    %2252 = vdwg.mxu0
    %2253 = vmatprep.subr.mxu0 0.0
    %2254 = vmatpush1.msra.mxu0 %v2181
    %2255 = vmatprep.subr.mxu0 0.0
    %2256 = vmatpush1.msra.mxu0 %v2178
    %2257 = vmatprep.subr.mxu0 0.0
    %2258 = vmatpush1.msra.mxu0 %v2175
    %2259 = vmatprep.subr.mxu0 0.0
    %2260 = vmatpush1.msra.mxu0 %v2172
    %2261 = vmatprep.subr.mxu0 0.0
    %2262 = vmatpush1.msra.mxu0 %v2169
    %2263 = vmatprep.subr.mxu0 0.0
    %2264 = vmatpush1.msra.mxu0 %v2166
    %2265 = vmatprep.subr.mxu0 0.0
    %2266 = vmatpush1.msra.mxu0 %v2163
    %2267 = vmatprep.subr.mxu0 0.0
    %2268 = vmatpush1.msra.mxu0 %v2160
    %2269 = vmatprep.subr.mxu0 0.0
    %2270 = vmatpush1.msra.mxu0 %v2157
    %2271 = vmatprep.subr.mxu0 0.0
    %2272 = vmatpush1.msra.mxu0 %v2154
    %2273 = vmatprep.subr.mxu0 0.0
    %2274 = vmatpush1.msra.mxu0 %v2151
    %2275 = vmatprep.subr.mxu0 0.0
    %2276 = vmatpush1.msra.mxu0 %v2148
    %2277 = vmatprep.subr.mxu0 0.0
    %2278 = vmatpush1.msra.mxu0 %v2145
    %2279 = vmatprep.subr.mxu0 0.0
    %2280 = vmatpush1.msra.mxu0 %v2142
    %2281 = vmatprep.subr.mxu0 0.0
    %2282 = vmatpush1.msra.mxu0 %v2139
    %2283 = vmatprep.subr.mxu0 0.0
    %2284 = vmatpush1.msra.mxu0 %v2136
    %2285 = vmatprep.subr.mxu0 0.0
    %2286 = vmatpush2.msra.mxu0 0.0
    %2287 = vmatprep.subr.mxu0 0.0
    %2288 = vmatpush2.msra.mxu0 0.0
    %2289 = vmatprep.subr.mxu0 0.0
    %2290 = vmatpush2.msra.mxu0 0.0
    %2291 = vmatprep.subr.mxu0 0.0
    %2292 = vmatpush2.msra.mxu0 0.0
    %2293 = vmatprep.subr.mxu0 0.0
    %2294 = vmatpush2.msra.mxu0 0.0
    %2295 = vmatprep.subr.mxu0 0.0
    %2296 = vmatpush2.msra.mxu0 0.0
    %2297 = vmatprep.subr.mxu0 0.0
    %2298 = vmatpush2.msra.mxu0 0.0
    %2299 = vmatprep.subr.mxu0 0.0
    %2300 = vmatpush2.msra.mxu0 0.0
    %2301 = vmatprep.subr.mxu0 0.0
    %2302 = vmatpush2.msra.mxu0 0.0
    %2303 = vmatprep.subr.mxu0 0.0
    %2304 = vmatpush2.msra.mxu0 0.0
    %2305 = vmatprep.subr.mxu0 0.0
    %2306 = vmatpush2.msra.mxu0 0.0
    %2307 = vmatprep.subr.mxu0 0.0
    %2308 = vmatpush2.msra.mxu0 0.0
    %2309 = vmatprep.subr.mxu0 0.0
    %2310 = vmatpush2.msra.mxu0 0.0
    %2311 = vmatprep.subr.mxu0 0.0
    %2312 = vmatpush2.msra.mxu0 0.0
    %2313 = vmatprep.subr.mxu0 0.0
    %2314 = vmatpush2.msra.mxu0 0.0
    %2315 = vmatprep.subr.mxu0 0.0
    %2316 = vmatpush2.msra.mxu0 0.0
    %2317 = vmatprep.mubr.f32.mxu0 0.0
    %2318 = vmatmul.mubr.f32.gmra.mxu0 %v1662
    %v2319 = vpop.f32.mrf.mxu0
    %v2320 = vadd.f32 0.0, %v2319
    %v2321 = vpop.f32.mrf.mxu0
    %2322 = vdwg.mxu0
    %v2323 = vadd.f32 %v2131, %v2249
    %v2324 = vxor.u32 %v2323, 2147483648
    %v2325 = vmul.f32 %v2324, 1.442695
    %v2326 = vpow.pop %v2325
    %v2327 = vadd.f32 %v2326, 1.0
    %v2328 = vrcp.pop %v2327
    %v2329 = vmul.f32 1.0, %v2328
    %v2330 = vadd.f32 %v2132, %v2251
    %v2331 = vxor.u32 %v2330, 2147483648
    %v2332 = vmul.f32 %v2331, 1.442695
    %v2333 = vpow.pop %v2332
    %v2334 = vadd.f32 %v2333, 1.0
    %v2335 = vrcp.pop %v2334
    %v2336 = vmul.f32 1.0, %v2335
    %v2337 = vadd.f32 %v2320, %v868
    %v2338 = vmul.f32 %v2329, %v2337
    %v2339 = vadd.f32 %v2133, %v2338
    %v2340 = vtanh.pop %v2339
    %v2341 = vsub.f32 1.0, %v2336
    %v2342 = vmul.f32 %v2341, %v2340
    %v2343 = vmul.f32 %v2336, %v1662
    %v2344 = vadd.f32 %v2342, %v2343
    %v2345 = vld [vmem:[#allocation11] sm:$0xff]
    %v2346 = vld [vmem:[#allocation11 + $0x10] sm:$0xff]
    %v2347 = vld [vmem:[#allocation11 + $0x20] sm:$0xff]
    %v2348 = vld [vmem:[#allocation11 + $0x30] sm:$0xff]
    %v2349 = vld [vmem:[#allocation11 + $0x40] sm:$0xff]
    %v2350 = vld [vmem:[#allocation11 + $0x50] sm:$0xff]
    %v2351 = vld [vmem:[#allocation11 + $0x60] sm:$0xff]
    %v2352 = vld [vmem:[#allocation11 + $0x70] sm:$0xff]
    %v2353 = vld [vmem:[#allocation11 + $0x80] sm:$0xff]
    %v2354 = vld [vmem:[#allocation11 + $0x90] sm:$0xff]
    %v2355 = vld [vmem:[#allocation11 + $0xa0] sm:$0xff]
    %v2356 = vld [vmem:[#allocation11 + $0xb0] sm:$0xff]
    %v2357 = vld [vmem:[#allocation11 + $0xc0] sm:$0xff]
    %v2358 = vld [vmem:[#allocation11 + $0xd0] sm:$0xff]
    %v2359 = vld [vmem:[#allocation11 + $0xe0] sm:$0xff]
    %v2360 = vld [vmem:[#allocation11 + $0xf0] sm:$0xff]
    %2361 = vmatprep.subr.mxu0 0.0
    %2362 = vmatpush1.msra.mxu0 %v2360
    %2363 = vmatprep.subr.mxu0 0.0
    %2364 = vmatpush1.msra.mxu0 %v2359
    %2365 = vmatprep.subr.mxu0 0.0
    %2366 = vmatpush1.msra.mxu0 %v2358
    %2367 = vmatprep.subr.mxu0 0.0
    %2368 = vmatpush1.msra.mxu0 %v2357
    %2369 = vmatprep.subr.mxu0 0.0
    %2370 = vmatpush1.msra.mxu0 %v2356
    %2371 = vmatprep.subr.mxu0 0.0
    %2372 = vmatpush1.msra.mxu0 %v2355
    %2373 = vmatprep.subr.mxu0 0.0
    %2374 = vmatpush1.msra.mxu0 %v2354
    %2375 = vmatprep.subr.mxu0 0.0
    %2376 = vmatpush1.msra.mxu0 %v2353
    %2377 = vmatprep.subr.mxu0 0.0
    %2378 = vmatpush1.msra.mxu0 %v2352
    %2379 = vmatprep.subr.mxu0 0.0
    %2380 = vmatpush1.msra.mxu0 %v2351
    %2381 = vmatprep.subr.mxu0 0.0
    %2382 = vmatpush1.msra.mxu0 %v2350
    %2383 = vmatprep.subr.mxu0 0.0
    %2384 = vmatpush1.msra.mxu0 %v2349
    %2385 = vmatprep.subr.mxu0 0.0
    %2386 = vmatpush1.msra.mxu0 %v2348
    %2387 = vmatprep.subr.mxu0 0.0
    %2388 = vmatpush1.msra.mxu0 %v2347
    %2389 = vmatprep.subr.mxu0 0.0
    %2390 = vmatpush1.msra.mxu0 %v2346
    %2391 = vmatprep.subr.mxu0 0.0
    %2392 = vmatpush1.msra.mxu0 %v2345
    %2393 = vmatprep.subr.mxu0 0.0
    %2394 = vmatpush2.msra.mxu0 0.0
    %2395 = vmatprep.subr.mxu0 0.0
    %2396 = vmatpush2.msra.mxu0 0.0
    %2397 = vmatprep.subr.mxu0 0.0
    %2398 = vmatpush2.msra.mxu0 0.0
    %2399 = vmatprep.subr.mxu0 0.0
    %2400 = vmatpush2.msra.mxu0 0.0
    %2401 = vmatprep.subr.mxu0 0.0
    %2402 = vmatpush2.msra.mxu0 0.0
    %2403 = vmatprep.subr.mxu0 0.0
    %2404 = vmatpush2.msra.mxu0 0.0
    %2405 = vmatprep.subr.mxu0 0.0
    %2406 = vmatpush2.msra.mxu0 0.0
    %2407 = vmatprep.subr.mxu0 0.0
    %2408 = vmatpush2.msra.mxu0 0.0
    %2409 = vmatprep.subr.mxu0 0.0
    %2410 = vmatpush2.msra.mxu0 0.0
    %2411 = vmatprep.subr.mxu0 0.0
    %2412 = vmatpush2.msra.mxu0 0.0
    %2413 = vmatprep.subr.mxu0 0.0
    %2414 = vmatpush2.msra.mxu0 0.0
    %2415 = vmatprep.subr.mxu0 0.0
    %2416 = vmatpush2.msra.mxu0 0.0
    %2417 = vmatprep.subr.mxu0 0.0
    %2418 = vmatpush2.msra.mxu0 0.0
    %2419 = vmatprep.subr.mxu0 0.0
    %2420 = vmatpush2.msra.mxu0 0.0
    %2421 = vmatprep.subr.mxu0 0.0
    %2422 = vmatpush2.msra.mxu0 0.0
    %2423 = vmatprep.subr.mxu0 0.0
    %2424 = vmatpush2.msra.mxu0 0.0
    %2425 = vmatprep.mubr.f32.mxu0 0.0
    %2426 = vmatmul.mubr.f32.gmra.mxu0 %v2344
    %v2427 = vpop.f32.mrf.mxu0
    %v2428 = vadd.f32 %v898, %v2427
    %v2429 = vpop.f32.mrf.mxu0
    %2430 = vdwg.mxu0
    %2431 = vrot.lane.b32.xlu0 %v2428, 1
    %v2432 = vpop.permute.xlu0 %2431
    %vm2433 = vcmp.gt.f32.partialorder %v2432, %v2428
    %vm2434 = vcmp.eq.f32.partialorder %v2432, %v2428
    %vm2435 = vmand %vm2434, %vm976
    %vm2436 = vmor %vm2433, %vm2435
    %v2437 = vsel %vm2436, %v2432, %v2428
    %v2438 = vsel %vm2436, %v973, %v99
    %2439 = vrot.lane.b32.xlu0 %v2437, 2
    %v2440 = vpop.permute.xlu0 %2439
    %2441 = vrot.lane.b32.xlu0 %v2438, 2
    %v2442 = vpop.permute.xlu0 %2441
    %vm2443 = vcmp.gt.f32.partialorder %v2440, %v2437
    %vm2444 = vcmp.eq.f32.partialorder %v2440, %v2437
    %vm2445 = vcmp.lt.s32.totalorder %v2442, %v2438
    %vm2446 = vmand %vm2444, %vm2445
    %vm2447 = vmor %vm2443, %vm2446
    %v2448 = vsel %vm2447, %v2440, %v2437
    %v2449 = vsel %vm2447, %v2442, %v2438
    %2450 = vrot.lane.b32.xlu0 %v2448, 4
    %v2451 = vpop.permute.xlu0 %2450
    %2452 = vrot.lane.b32.xlu0 %v2449, 4
    %v2453 = vpop.permute.xlu0 %2452
    %vm2454 = vcmp.gt.f32.partialorder %v2451, %v2448
    %vm2455 = vcmp.eq.f32.partialorder %v2451, %v2448
    %vm2456 = vcmp.lt.s32.totalorder %v2453, %v2449
    %vm2457 = vmand %vm2455, %vm2456
    %vm2458 = vmor %vm2454, %vm2457
    %v2459 = vsel %vm2458, %v2451, %v2448
    %v2460 = vsel %vm2458, %v2453, %v2449
    %2461 = vrot.lane.b32.xlu0 %v2459, 8
    %v2462 = vpop.permute.xlu0 %2461
    %2463 = vrot.lane.b32.xlu0 %v2460, 8
    %v2464 = vpop.permute.xlu0 %2463
    %vm2465 = vcmp.gt.f32.partialorder %v2462, %v2459
    %vm2466 = vcmp.eq.f32.partialorder %v2462, %v2459
    %vm2467 = vcmp.lt.s32.totalorder %v2464, %v2460
    %vm2468 = vmand %vm2466, %vm2467
    %vm2469 = vmor %vm2465, %vm2468
    %v2470 = vsel %vm2469, %v2462, %v2459
    %v2471 = vsel %vm2469, %v2464, %v2460
    %2472 = vrot.lane.b32.xlu0 %v2470, 16
    %v2473 = vpop.permute.xlu0 %2472
    %2474 = vrot.lane.b32.xlu0 %v2471, 16
    %v2475 = vpop.permute.xlu0 %2474
    %vm2476 = vcmp.gt.f32.partialorder %v2473, %v2470
    %vm2477 = vcmp.eq.f32.partialorder %v2473, %v2470
    %vm2478 = vcmp.lt.s32.totalorder %v2475, %v2471
    %vm2479 = vmand %vm2477, %vm2478
    %vm2480 = vmor %vm2476, %vm2479
    %v2481 = vsel %vm2480, %v2473, %v2470
    %v2482 = vsel %vm2480, %v2475, %v2471
    %2483 = vrot.lane.b32.xlu0 %v2481, 32
    %v2484 = vpop.permute.xlu0 %2483
    %2485 = vrot.lane.b32.xlu0 %v2482, 32
    %v2486 = vpop.permute.xlu0 %2485
    %vm2487 = vcmp.gt.f32.partialorder %v2484, %v2481
    %vm2488 = vcmp.eq.f32.partialorder %v2484, %v2481
    %vm2489 = vcmp.lt.s32.totalorder %v2486, %v2482
    %vm2490 = vmand %vm2488, %vm2489
    %vm2491 = vmor %vm2487, %vm2490
    %v2492 = vsel %vm2491, %v2484, %v2481
    %v2493 = vsel %vm2491, %v2486, %v2482
    %2494 = vrot.lane.b32.xlu0 %v2492, 64
    %v2495 = vpop.permute.xlu0 %2494
    %2496 = vrot.lane.b32.xlu0 %v2493, 64
    %v2497 = vpop.permute.xlu0 %2496
    %vm2498 = vcmp.gt.f32.partialorder %v2495, %v2492
    %vm2499 = vcmp.eq.f32.partialorder %v2495, %v2492
    %vm2500 = vcmp.lt.s32.totalorder %v2497, %v2493
    %vm2501 = vmand %vm2499, %vm2500
    %vm2502 = vmor %vm2498, %vm2501
    %v2503 = vsel %vm2502, %v2495, %v2492
    %v2504 = vsel %vm2502, %v2497, %v2493
    %v2505 = vsub.f32 %v2428, %v2503
    %v2506 = vmul.f32 %v2505, 1.442695
    %v2507 = vpow.pop %v2506
    %v2508 = vsel %vm1050, %v2507, 0.0
    %2509 = vadd.xlane.f32.xlu0 %v2508
    %v2510 = vpop.xlane.xlu0 %2509
    %v2511 = vlog2.pop %v2510
    %v2512 = vmul.f32 %v2511, 0.6931472
    %v2513 = vsub.f32 %v2505, %v2512
    %s2514 = scalar_lea.vmem [#allocation12], 4
    %2515 = vst [vmem:[%s2514] sm:$0x3] %v2513
    %vm2516 = vcmp.eq.s32.totalorder %v2504, 0
    %v2517 = vld [vmem:[#allocation6] ss:$8 sm:$0x7]
    %v2519 = vlaneseq
    %v2520 = vshrl.u32 %v2519, 7
    %v2521 = vsub.s32 0, %v2520
    %v2522 = vrot.slane %v2517, %v2521
    %v2523 = vlaneseq
    %v2524 = vshrl.u32 %v2523, 7
    %v2525 = vsub.s32 1, %v2524
    %v2526 = vrot.slane %v2517, %v2525
    %v2527 = vlaneseq
    %v2528 = vshrl.u32 %v2527, 7
    %v2529 = vsub.s32 2, %v2528
    %v2530 = vrot.slane %v2517, %v2529
    %v2534 = vsel %vm2516, %v2522, 0.0
    %v2535 = vsel %vm2516, %v2526, 0.0
    %v2536 = vsel %vm2516, %v2530, 0.0
    %vm2537 = vcmp.eq.s32.totalorder %v2504, 1
    %v2538 = vld [vmem:[%s326] ss:$8 sm:$0x7]
    %v2540 = vlaneseq
    %v2541 = vshrl.u32 %v2540, 7
    %v2542 = vsub.s32 0, %v2541
    %v2543 = vrot.slane %v2538, %v2542
    %v2544 = vlaneseq
    %v2545 = vshrl.u32 %v2544, 7
    %v2546 = vsub.s32 1, %v2545
    %v2547 = vrot.slane %v2538, %v2546
    %v2548 = vlaneseq
    %v2549 = vshrl.u32 %v2548, 7
    %v2550 = vsub.s32 2, %v2549
    %v2551 = vrot.slane %v2538, %v2550
    %v2555 = vsel %vm2537, %v2543, 0.0
    %v2556 = vsel %vm2537, %v2547, 0.0
    %v2557 = vsel %vm2537, %v2551, 0.0
    %vm2558 = vcmp.eq.s32.totalorder %v2504, 2
    %v2559 = vld [vmem:[%s353] ss:$8 sm:$0x7]
    %v2561 = vlaneseq
    %v2562 = vshrl.u32 %v2561, 7
    %v2563 = vsub.s32 0, %v2562
    %v2564 = vrot.slane %v2559, %v2563
    %v2565 = vlaneseq
    %v2566 = vshrl.u32 %v2565, 7
    %v2567 = vsub.s32 1, %v2566
    %v2568 = vrot.slane %v2559, %v2567
    %v2569 = vlaneseq
    %v2570 = vshrl.u32 %v2569, 7
    %v2571 = vsub.s32 2, %v2570
    %v2572 = vrot.slane %v2559, %v2571
    %v2576 = vsel %vm2558, %v2564, 0.0
    %v2577 = vsel %vm2558, %v2568, 0.0
    %v2578 = vsel %vm2558, %v2572, 0.0
    %vm2579 = vcmp.eq.s32.totalorder %v2504, 3
    %v2580 = vld [vmem:[%s380] ss:$8 sm:$0x7]
    %v2582 = vlaneseq
    %v2583 = vshrl.u32 %v2582, 7
    %v2584 = vsub.s32 0, %v2583
    %v2585 = vrot.slane %v2580, %v2584
    %v2586 = vlaneseq
    %v2587 = vshrl.u32 %v2586, 7
    %v2588 = vsub.s32 1, %v2587
    %v2589 = vrot.slane %v2580, %v2588
    %v2590 = vlaneseq
    %v2591 = vshrl.u32 %v2590, 7
    %v2592 = vsub.s32 2, %v2591
    %v2593 = vrot.slane %v2580, %v2592
    %v2597 = vsel %vm2579, %v2585, 0.0
    %v2598 = vsel %vm2579, %v2589, 0.0
    %v2599 = vsel %vm2579, %v2593, 0.0
    %vm2600 = vcmp.eq.s32.totalorder %v2504, 4
    %v2601 = vld [vmem:[%s407] ss:$8 sm:$0x7]
    %v2603 = vlaneseq
    %v2604 = vshrl.u32 %v2603, 7
    %v2605 = vsub.s32 0, %v2604
    %v2606 = vrot.slane %v2601, %v2605
    %v2607 = vlaneseq
    %v2608 = vshrl.u32 %v2607, 7
    %v2609 = vsub.s32 1, %v2608
    %v2610 = vrot.slane %v2601, %v2609
    %v2611 = vlaneseq
    %v2612 = vshrl.u32 %v2611, 7
    %v2613 = vsub.s32 2, %v2612
    %v2614 = vrot.slane %v2601, %v2613
    %v2618 = vsel %vm2600, %v2606, 0.0
    %v2619 = vsel %vm2600, %v2610, 0.0
    %v2620 = vsel %vm2600, %v2614, 0.0
    %vm2621 = vcmp.eq.s32.totalorder %v2504, 5
    %v2622 = vld [vmem:[%s434] ss:$8 sm:$0x7]
    %v2624 = vlaneseq
    %v2625 = vshrl.u32 %v2624, 7
    %v2626 = vsub.s32 0, %v2625
    %v2627 = vrot.slane %v2622, %v2626
    %v2628 = vlaneseq
    %v2629 = vshrl.u32 %v2628, 7
    %v2630 = vsub.s32 1, %v2629
    %v2631 = vrot.slane %v2622, %v2630
    %v2632 = vlaneseq
    %v2633 = vshrl.u32 %v2632, 7
    %v2634 = vsub.s32 2, %v2633
    %v2635 = vrot.slane %v2622, %v2634
    %v2639 = vsel %vm2621, %v2627, 0.0
    %v2640 = vsel %vm2621, %v2631, 0.0
    %v2641 = vsel %vm2621, %v2635, 0.0
    %vm2642 = vcmp.eq.s32.totalorder %v2504, 6
    %v2643 = vld [vmem:[%s461] ss:$8 sm:$0x7]
    %v2645 = vlaneseq
    %v2646 = vshrl.u32 %v2645, 7
    %v2647 = vsub.s32 0, %v2646
    %v2648 = vrot.slane %v2643, %v2647
    %v2649 = vlaneseq
    %v2650 = vshrl.u32 %v2649, 7
    %v2651 = vsub.s32 1, %v2650
    %v2652 = vrot.slane %v2643, %v2651
    %v2653 = vlaneseq
    %v2654 = vshrl.u32 %v2653, 7
    %v2655 = vsub.s32 2, %v2654
    %v2656 = vrot.slane %v2643, %v2655
    %v2660 = vsel %vm2642, %v2648, 0.0
    %v2661 = vsel %vm2642, %v2652, 0.0
    %v2662 = vsel %vm2642, %v2656, 0.0
    %vm2663 = vcmp.eq.s32.totalorder %v2504, 7
    %v2664 = vld [vmem:[%s488] ss:$8 sm:$0x7]
    %v2666 = vlaneseq
    %v2667 = vshrl.u32 %v2666, 7
    %v2668 = vsub.s32 0, %v2667
    %v2669 = vrot.slane %v2664, %v2668
    %v2670 = vlaneseq
    %v2671 = vshrl.u32 %v2670, 7
    %v2672 = vsub.s32 1, %v2671
    %v2673 = vrot.slane %v2664, %v2672
    %v2674 = vlaneseq
    %v2675 = vshrl.u32 %v2674, 7
    %v2676 = vsub.s32 2, %v2675
    %v2677 = vrot.slane %v2664, %v2676
    %v2681 = vsel %vm2663, %v2669, 0.0
    %v2682 = vsel %vm2663, %v2673, 0.0
    %v2683 = vsel %vm2663, %v2677, 0.0
    %vm2684 = vcmp.eq.s32.totalorder %v2504, 8
    %v2685 = vld [vmem:[%s515] ss:$8 sm:$0x7]
    %v2687 = vlaneseq
    %v2688 = vshrl.u32 %v2687, 7
    %v2689 = vsub.s32 0, %v2688
    %v2690 = vrot.slane %v2685, %v2689
    %v2691 = vlaneseq
    %v2692 = vshrl.u32 %v2691, 7
    %v2693 = vsub.s32 1, %v2692
    %v2694 = vrot.slane %v2685, %v2693
    %v2695 = vlaneseq
    %v2696 = vshrl.u32 %v2695, 7
    %v2697 = vsub.s32 2, %v2696
    %v2698 = vrot.slane %v2685, %v2697
    %v2702 = vsel %vm2684, %v2690, 0.0
    %v2703 = vsel %vm2684, %v2694, 0.0
    %v2704 = vsel %vm2684, %v2698, 0.0
    %vm2705 = vcmp.eq.s32.totalorder %v2504, 9
    %v2706 = vld [vmem:[%s542] ss:$8 sm:$0x7]
    %v2708 = vlaneseq
    %v2709 = vshrl.u32 %v2708, 7
    %v2710 = vsub.s32 0, %v2709
    %v2711 = vrot.slane %v2706, %v2710
    %v2712 = vlaneseq
    %v2713 = vshrl.u32 %v2712, 7
    %v2714 = vsub.s32 1, %v2713
    %v2715 = vrot.slane %v2706, %v2714
    %v2716 = vlaneseq
    %v2717 = vshrl.u32 %v2716, 7
    %v2718 = vsub.s32 2, %v2717
    %v2719 = vrot.slane %v2706, %v2718
    %v2723 = vsel %vm2705, %v2711, 0.0
    %v2724 = vsel %vm2705, %v2715, 0.0
    %v2725 = vsel %vm2705, %v2719, 0.0
    %vm2726 = vcmp.eq.s32.totalorder %v2504, 10
    %v2727 = vld [vmem:[%s569] ss:$8 sm:$0x7]
    %v2729 = vlaneseq
    %v2730 = vshrl.u32 %v2729, 7
    %v2731 = vsub.s32 0, %v2730
    %v2732 = vrot.slane %v2727, %v2731
    %v2733 = vlaneseq
    %v2734 = vshrl.u32 %v2733, 7
    %v2735 = vsub.s32 1, %v2734
    %v2736 = vrot.slane %v2727, %v2735
    %v2737 = vlaneseq
    %v2738 = vshrl.u32 %v2737, 7
    %v2739 = vsub.s32 2, %v2738
    %v2740 = vrot.slane %v2727, %v2739
    %v2744 = vsel %vm2726, %v2732, 0.0
    %v2745 = vsel %vm2726, %v2736, 0.0
    %v2746 = vsel %vm2726, %v2740, 0.0
    %vm2747 = vcmp.eq.s32.totalorder %v2504, 11
    %v2748 = vld [vmem:[%s596] ss:$8 sm:$0x7]
    %v2750 = vlaneseq
    %v2751 = vshrl.u32 %v2750, 7
    %v2752 = vsub.s32 0, %v2751
    %v2753 = vrot.slane %v2748, %v2752
    %v2754 = vlaneseq
    %v2755 = vshrl.u32 %v2754, 7
    %v2756 = vsub.s32 1, %v2755
    %v2757 = vrot.slane %v2748, %v2756
    %v2758 = vlaneseq
    %v2759 = vshrl.u32 %v2758, 7
    %v2760 = vsub.s32 2, %v2759
    %v2761 = vrot.slane %v2748, %v2760
    %v2765 = vsel %vm2747, %v2753, 0.0
    %v2766 = vsel %vm2747, %v2757, 0.0
    %v2767 = vsel %vm2747, %v2761, 0.0
    %v2768 = vadd.f32 %v2534, %v2555
    %v2769 = vadd.f32 %v2535, %v2556
    %v2770 = vadd.f32 %v2536, %v2557
    %v2771 = vadd.f32 %v2576, %v2597
    %v2772 = vadd.f32 %v2577, %v2598
    %v2773 = vadd.f32 %v2578, %v2599
    %v2774 = vadd.f32 %v2618, %v2639
    %v2775 = vadd.f32 %v2619, %v2640
    %v2776 = vadd.f32 %v2620, %v2641
    %v2777 = vadd.f32 %v2660, %v2681
    %v2778 = vadd.f32 %v2661, %v2682
    %v2779 = vadd.f32 %v2662, %v2683
    %v2780 = vadd.f32 %v2702, %v2723
    %v2781 = vadd.f32 %v2703, %v2724
    %v2782 = vadd.f32 %v2704, %v2725
    %v2783 = vadd.f32 %v2744, %v2765
    %v2784 = vadd.f32 %v2745, %v2766
    %v2785 = vadd.f32 %v2746, %v2767
    %v2786 = vadd.f32 %v2768, %v2771
    %v2787 = vadd.f32 %v2769, %v2772
    %v2788 = vadd.f32 %v2770, %v2773
    %v2789 = vadd.f32 %v2774, %v2777
    %v2790 = vadd.f32 %v2775, %v2778
    %v2791 = vadd.f32 %v2776, %v2779
    %v2792 = vadd.f32 %v2780, %v2783
    %v2793 = vadd.f32 %v2781, %v2784
    %v2794 = vadd.f32 %v2782, %v2785
    %v2795 = vadd.f32 %v2786, %v2789
    %v2796 = vadd.f32 %v2787, %v2790
    %v2797 = vadd.f32 %v2788, %v2791
    %v2798 = vadd.f32 %v2795, %v2792
    %v2799 = vadd.f32 %v2796, %v2793
    %v2800 = vadd.f32 %v2797, %v2794
    %v2801 = vld [vmem:[#allocation2] sm:$0xc0]
    %v2802 = vld [vmem:[#allocation2 + $0x8] sm:$0xc0]
    %v2803 = vld [vmem:[#allocation2 + $0x10] sm:$0xc0]
    %v2807 = vrot.slane %v2801, 6
    %v2808 = vrot.slane %v2802, 6
    %v2809 = vrot.slane %v2803, 6
    %v2813 = vadd.f32 %v2798, %v2807
    %v2814 = vadd.f32 %v2799, %v2808
    %v2815 = vadd.f32 %v2800, %v2809
    %v2816 = vld [vmem:[#allocation9] sm:$0xff]
    %v2817 = vld [vmem:[#allocation9 + $0x8] sm:$0xff]
    %v2818 = vld [vmem:[#allocation9 + $0x10] sm:$0xff]
    %v2819 = vld [vmem:[#allocation9 + $0x18] sm:$0xff]
    %v2820 = vld [vmem:[#allocation9 + $0x20] sm:$0xff]
    %v2821 = vld [vmem:[#allocation9 + $0x28] sm:$0xff]
    %v2822 = vld [vmem:[#allocation9 + $0x30] sm:$0xff]
    %v2823 = vld [vmem:[#allocation9 + $0x38] sm:$0xff]
    %v2824 = vld [vmem:[#allocation9 + $0x40] sm:$0xff]
    %v2825 = vld [vmem:[#allocation9 + $0x48] sm:$0xff]
    %v2826 = vld [vmem:[#allocation9 + $0x50] sm:$0xff]
    %v2827 = vld [vmem:[#allocation9 + $0x58] sm:$0xff]
    %v2828 = vld [vmem:[#allocation9 + $0x60] sm:$0xff]
    %v2829 = vld [vmem:[#allocation9 + $0x68] sm:$0xff]
    %v2830 = vld [vmem:[#allocation9 + $0x70] sm:$0xff]
    %v2831 = vld [vmem:[#allocation9 + $0x78] sm:$0xff]
    %v2832 = vld [vmem:[#allocation9 + $0x80] sm:$0xff]
    %v2833 = vld [vmem:[#allocation9 + $0x88] sm:$0xff]
    %v2834 = vld [vmem:[#allocation9 + $0x90] sm:$0xff]
    %v2835 = vld [vmem:[#allocation9 + $0x98] sm:$0xff]
    %v2836 = vld [vmem:[#allocation9 + $0xa0] sm:$0xff]
    %v2837 = vld [vmem:[#allocation9 + $0xa8] sm:$0xff]
    %v2838 = vld [vmem:[#allocation9 + $0xb0] sm:$0xff]
    %v2839 = vld [vmem:[#allocation9 + $0xb8] sm:$0xff]
    %v2840 = vld [vmem:[#allocation9 + $0xc0] sm:$0xff]
    %v2841 = vld [vmem:[#allocation9 + $0xc8] sm:$0xff]
    %v2842 = vld [vmem:[#allocation9 + $0xd0] sm:$0xff]
    %v2843 = vld [vmem:[#allocation9 + $0xd8] sm:$0xff]
    %v2844 = vld [vmem:[#allocation9 + $0xe0] sm:$0xff]
    %v2845 = vld [vmem:[#allocation9 + $0xe8] sm:$0xff]
    %v2846 = vld [vmem:[#allocation9 + $0xf0] sm:$0xff]
    %v2847 = vld [vmem:[#allocation9 + $0xf8] sm:$0xff]
    %v2848 = vld [vmem:[#allocation9 + $0x100] sm:$0xff]
    %v2849 = vld [vmem:[#allocation9 + $0x108] sm:$0xff]
    %v2850 = vld [vmem:[#allocation9 + $0x110] sm:$0xff]
    %v2851 = vld [vmem:[#allocation9 + $0x118] sm:$0xff]
    %v2852 = vld [vmem:[#allocation9 + $0x120] sm:$0xff]
    %v2853 = vld [vmem:[#allocation9 + $0x128] sm:$0xff]
    %v2854 = vld [vmem:[#allocation9 + $0x130] sm:$0xff]
    %v2855 = vld [vmem:[#allocation9 + $0x138] sm:$0xff]
    %v2856 = vld [vmem:[#allocation9 + $0x140] sm:$0xff]
    %v2857 = vld [vmem:[#allocation9 + $0x148] sm:$0xff]
    %v2858 = vld [vmem:[#allocation9 + $0x150] sm:$0xff]
    %v2859 = vld [vmem:[#allocation9 + $0x158] sm:$0xff]
    %v2860 = vld [vmem:[#allocation9 + $0x160] sm:$0xff]
    %v2861 = vld [vmem:[#allocation9 + $0x168] sm:$0xff]
    %v2862 = vld [vmem:[#allocation9 + $0x170] sm:$0xff]
    %v2863 = vld [vmem:[#allocation9 + $0x178] sm:$0xff]
    %2864 = vmatprep.subr.mxu0 %v2862
    %2865 = vmatpush1.msra.mxu0 %v2861
    %2866 = vmatprep.subr.mxu0 %v2859
    %2867 = vmatpush1.msra.mxu0 %v2858
    %2868 = vmatprep.subr.mxu0 %v2856
    %2869 = vmatpush1.msra.mxu0 %v2855
    %2870 = vmatprep.subr.mxu0 %v2853
    %2871 = vmatpush1.msra.mxu0 %v2852
    %2872 = vmatprep.subr.mxu0 %v2850
    %2873 = vmatpush1.msra.mxu0 %v2849
    %2874 = vmatprep.subr.mxu0 %v2847
    %2875 = vmatpush1.msra.mxu0 %v2846
    %2876 = vmatprep.subr.mxu0 %v2844
    %2877 = vmatpush1.msra.mxu0 %v2843
    %2878 = vmatprep.subr.mxu0 %v2841
    %2879 = vmatpush1.msra.mxu0 %v2840
    %2880 = vmatprep.subr.mxu0 %v2838
    %2881 = vmatpush1.msra.mxu0 %v2837
    %2882 = vmatprep.subr.mxu0 %v2835
    %2883 = vmatpush1.msra.mxu0 %v2834
    %2884 = vmatprep.subr.mxu0 %v2832
    %2885 = vmatpush1.msra.mxu0 %v2831
    %2886 = vmatprep.subr.mxu0 %v2829
    %2887 = vmatpush1.msra.mxu0 %v2828
    %2888 = vmatprep.subr.mxu0 %v2826
    %2889 = vmatpush1.msra.mxu0 %v2825
    %2890 = vmatprep.subr.mxu0 %v2823
    %2891 = vmatpush1.msra.mxu0 %v2822
    %2892 = vmatprep.subr.mxu0 %v2820
    %2893 = vmatpush1.msra.mxu0 %v2819
    %2894 = vmatprep.subr.mxu0 %v2817
    %2895 = vmatpush1.msra.mxu0 %v2816
    %2896 = vmatprep.subr.mxu0 0.0
    %2897 = vmatpush2.msra.mxu0 0.0
    %2898 = vmatprep.subr.mxu0 0.0
    %2899 = vmatpush2.msra.mxu0 0.0
    %2900 = vmatprep.subr.mxu0 0.0
    %2901 = vmatpush2.msra.mxu0 0.0
    %2902 = vmatprep.subr.mxu0 0.0
    %2903 = vmatpush2.msra.mxu0 0.0
    %2904 = vmatprep.subr.mxu0 0.0
    %2905 = vmatpush2.msra.mxu0 0.0
    %2906 = vmatprep.subr.mxu0 0.0
    %2907 = vmatpush2.msra.mxu0 0.0
    %2908 = vmatprep.subr.mxu0 0.0
    %2909 = vmatpush2.msra.mxu0 0.0
    %2910 = vmatprep.subr.mxu0 0.0
    %2911 = vmatpush2.msra.mxu0 0.0
    %2912 = vmatprep.subr.mxu0 0.0
    %2913 = vmatpush2.msra.mxu0 0.0
    %2914 = vmatprep.subr.mxu0 0.0
    %2915 = vmatpush2.msra.mxu0 0.0
    %2916 = vmatprep.subr.mxu0 0.0
    %2917 = vmatpush2.msra.mxu0 0.0
    %2918 = vmatprep.subr.mxu0 0.0
    %2919 = vmatpush2.msra.mxu0 0.0
    %2920 = vmatprep.subr.mxu0 0.0
    %2921 = vmatpush2.msra.mxu0 0.0
    %2922 = vmatprep.subr.mxu0 0.0
    %2923 = vmatpush2.msra.mxu0 0.0
    %2924 = vmatprep.subr.mxu0 0.0
    %2925 = vmatpush2.msra.mxu0 0.0
    %2926 = vmatprep.subr.mxu0 0.0
    %2927 = vmatpush2.msra.mxu0 0.0
    %2928 = vmatprep.mubr.f32.mxu0 0.0
    %2929 = vmatmul.mubr.f32.gmra.mxu0 %v2344
    %v2930 = vpop.f32.mrf.mxu0
    %v2931 = vadd.f32 0.0, %v2930
    %v2932 = vpop.f32.mrf.mxu0
    %v2933 = vadd.f32 0.0, %v2932
    %2934 = vdwg.mxu0
    %2935 = vmatprep.subr.mxu0 0.0
    %2936 = vmatpush1.msra.mxu0 %v2863
    %2937 = vmatprep.subr.mxu0 0.0
    %2938 = vmatpush1.msra.mxu0 %v2860
    %2939 = vmatprep.subr.mxu0 0.0
    %2940 = vmatpush1.msra.mxu0 %v2857
    %2941 = vmatprep.subr.mxu0 0.0
    %2942 = vmatpush1.msra.mxu0 %v2854
    %2943 = vmatprep.subr.mxu0 0.0
    %2944 = vmatpush1.msra.mxu0 %v2851
    %2945 = vmatprep.subr.mxu0 0.0
    %2946 = vmatpush1.msra.mxu0 %v2848
    %2947 = vmatprep.subr.mxu0 0.0
    %2948 = vmatpush1.msra.mxu0 %v2845
    %2949 = vmatprep.subr.mxu0 0.0
    %2950 = vmatpush1.msra.mxu0 %v2842
    %2951 = vmatprep.subr.mxu0 0.0
    %2952 = vmatpush1.msra.mxu0 %v2839
    %2953 = vmatprep.subr.mxu0 0.0
    %2954 = vmatpush1.msra.mxu0 %v2836
    %2955 = vmatprep.subr.mxu0 0.0
    %2956 = vmatpush1.msra.mxu0 %v2833
    %2957 = vmatprep.subr.mxu0 0.0
    %2958 = vmatpush1.msra.mxu0 %v2830
    %2959 = vmatprep.subr.mxu0 0.0
    %2960 = vmatpush1.msra.mxu0 %v2827
    %2961 = vmatprep.subr.mxu0 0.0
    %2962 = vmatpush1.msra.mxu0 %v2824
    %2963 = vmatprep.subr.mxu0 0.0
    %2964 = vmatpush1.msra.mxu0 %v2821
    %2965 = vmatprep.subr.mxu0 0.0
    %2966 = vmatpush1.msra.mxu0 %v2818
    %2967 = vmatprep.subr.mxu0 0.0
    %2968 = vmatpush2.msra.mxu0 0.0
    %2969 = vmatprep.subr.mxu0 0.0
    %2970 = vmatpush2.msra.mxu0 0.0
    %2971 = vmatprep.subr.mxu0 0.0
    %2972 = vmatpush2.msra.mxu0 0.0
    %2973 = vmatprep.subr.mxu0 0.0
    %2974 = vmatpush2.msra.mxu0 0.0
    %2975 = vmatprep.subr.mxu0 0.0
    %2976 = vmatpush2.msra.mxu0 0.0
    %2977 = vmatprep.subr.mxu0 0.0
    %2978 = vmatpush2.msra.mxu0 0.0
    %2979 = vmatprep.subr.mxu0 0.0
    %2980 = vmatpush2.msra.mxu0 0.0
    %2981 = vmatprep.subr.mxu0 0.0
    %2982 = vmatpush2.msra.mxu0 0.0
    %2983 = vmatprep.subr.mxu0 0.0
    %2984 = vmatpush2.msra.mxu0 0.0
    %2985 = vmatprep.subr.mxu0 0.0
    %2986 = vmatpush2.msra.mxu0 0.0
    %2987 = vmatprep.subr.mxu0 0.0
    %2988 = vmatpush2.msra.mxu0 0.0
    %2989 = vmatprep.subr.mxu0 0.0
    %2990 = vmatpush2.msra.mxu0 0.0
    %2991 = vmatprep.subr.mxu0 0.0
    %2992 = vmatpush2.msra.mxu0 0.0
    %2993 = vmatprep.subr.mxu0 0.0
    %2994 = vmatpush2.msra.mxu0 0.0
    %2995 = vmatprep.subr.mxu0 0.0
    %2996 = vmatpush2.msra.mxu0 0.0
    %2997 = vmatprep.subr.mxu0 0.0
    %2998 = vmatpush2.msra.mxu0 0.0
    %2999 = vmatprep.mubr.f32.mxu0 0.0
    %3000 = vmatmul.mubr.f32.gmra.mxu0 %v2344
    %v3001 = vpop.f32.mrf.mxu0
    %v3002 = vadd.f32 0.0, %v3001
    %v3003 = vpop.f32.mrf.mxu0
    %3004 = vdwg.mxu0
    %v3005 = vadd.f32 %v2813, %v2931
    %v3006 = vxor.u32 %v3005, 2147483648
    %v3007 = vmul.f32 %v3006, 1.442695
    %v3008 = vpow.pop %v3007
    %v3009 = vadd.f32 %v3008, 1.0
    %v3010 = vrcp.pop %v3009
    %v3011 = vmul.f32 1.0, %v3010
    %v3012 = vadd.f32 %v2814, %v2933
    %v3013 = vxor.u32 %v3012, 2147483648
    %v3014 = vmul.f32 %v3013, 1.442695
    %v3015 = vpow.pop %v3014
    %v3016 = vadd.f32 %v3015, 1.0
    %v3017 = vrcp.pop %v3016
    %v3018 = vmul.f32 1.0, %v3017
    %v3019 = vadd.f32 %v3002, %v868
    %v3020 = vmul.f32 %v3011, %v3019
    %v3021 = vadd.f32 %v2815, %v3020
    %v3022 = vtanh.pop %v3021
    %v3023 = vsub.f32 1.0, %v3018
    %v3024 = vmul.f32 %v3023, %v3022
    %v3025 = vmul.f32 %v3018, %v2344
    %v3026 = vadd.f32 %v3024, %v3025
    %v3027 = vld [vmem:[#allocation11] sm:$0xff]
    %v3028 = vld [vmem:[#allocation11 + $0x10] sm:$0xff]
    %v3029 = vld [vmem:[#allocation11 + $0x20] sm:$0xff]
    %v3030 = vld [vmem:[#allocation11 + $0x30] sm:$0xff]
    %v3031 = vld [vmem:[#allocation11 + $0x40] sm:$0xff]
    %v3032 = vld [vmem:[#allocation11 + $0x50] sm:$0xff]
    %v3033 = vld [vmem:[#allocation11 + $0x60] sm:$0xff]
    %v3034 = vld [vmem:[#allocation11 + $0x70] sm:$0xff]
    %v3035 = vld [vmem:[#allocation11 + $0x80] sm:$0xff]
    %v3036 = vld [vmem:[#allocation11 + $0x90] sm:$0xff]
    %v3037 = vld [vmem:[#allocation11 + $0xa0] sm:$0xff]
    %v3038 = vld [vmem:[#allocation11 + $0xb0] sm:$0xff]
    %v3039 = vld [vmem:[#allocation11 + $0xc0] sm:$0xff]
    %v3040 = vld [vmem:[#allocation11 + $0xd0] sm:$0xff]
    %v3041 = vld [vmem:[#allocation11 + $0xe0] sm:$0xff]
    %v3042 = vld [vmem:[#allocation11 + $0xf0] sm:$0xff]
    %3043 = vmatprep.subr.mxu0 0.0
    %3044 = vmatpush1.msra.mxu0 %v3042
    %3045 = vmatprep.subr.mxu0 0.0
    %3046 = vmatpush1.msra.mxu0 %v3041
    %3047 = vmatprep.subr.mxu0 0.0
    %3048 = vmatpush1.msra.mxu0 %v3040
    %3049 = vmatprep.subr.mxu0 0.0
    %3050 = vmatpush1.msra.mxu0 %v3039
    %3051 = vmatprep.subr.mxu0 0.0
    %3052 = vmatpush1.msra.mxu0 %v3038
    %3053 = vmatprep.subr.mxu0 0.0
    %3054 = vmatpush1.msra.mxu0 %v3037
    %3055 = vmatprep.subr.mxu0 0.0
    %3056 = vmatpush1.msra.mxu0 %v3036
    %3057 = vmatprep.subr.mxu0 0.0
    %3058 = vmatpush1.msra.mxu0 %v3035
    %3059 = vmatprep.subr.mxu0 0.0
    %3060 = vmatpush1.msra.mxu0 %v3034
    %3061 = vmatprep.subr.mxu0 0.0
    %3062 = vmatpush1.msra.mxu0 %v3033
    %3063 = vmatprep.subr.mxu0 0.0
    %3064 = vmatpush1.msra.mxu0 %v3032
    %3065 = vmatprep.subr.mxu0 0.0
    %3066 = vmatpush1.msra.mxu0 %v3031
    %3067 = vmatprep.subr.mxu0 0.0
    %3068 = vmatpush1.msra.mxu0 %v3030
    %3069 = vmatprep.subr.mxu0 0.0
    %3070 = vmatpush1.msra.mxu0 %v3029
    %3071 = vmatprep.subr.mxu0 0.0
    %3072 = vmatpush1.msra.mxu0 %v3028
    %3073 = vmatprep.subr.mxu0 0.0
    %3074 = vmatpush1.msra.mxu0 %v3027
    %3075 = vmatprep.subr.mxu0 0.0
    %3076 = vmatpush2.msra.mxu0 0.0
    %3077 = vmatprep.subr.mxu0 0.0
    %3078 = vmatpush2.msra.mxu0 0.0
    %3079 = vmatprep.subr.mxu0 0.0
    %3080 = vmatpush2.msra.mxu0 0.0
    %3081 = vmatprep.subr.mxu0 0.0
    %3082 = vmatpush2.msra.mxu0 0.0
    %3083 = vmatprep.subr.mxu0 0.0
    %3084 = vmatpush2.msra.mxu0 0.0
    %3085 = vmatprep.subr.mxu0 0.0
    %3086 = vmatpush2.msra.mxu0 0.0
    %3087 = vmatprep.subr.mxu0 0.0
    %3088 = vmatpush2.msra.mxu0 0.0
    %3089 = vmatprep.subr.mxu0 0.0
    %3090 = vmatpush2.msra.mxu0 0.0
    %3091 = vmatprep.subr.mxu0 0.0
    %3092 = vmatpush2.msra.mxu0 0.0
    %3093 = vmatprep.subr.mxu0 0.0
    %3094 = vmatpush2.msra.mxu0 0.0
    %3095 = vmatprep.subr.mxu0 0.0
    %3096 = vmatpush2.msra.mxu0 0.0
    %3097 = vmatprep.subr.mxu0 0.0
    %3098 = vmatpush2.msra.mxu0 0.0
    %3099 = vmatprep.subr.mxu0 0.0
    %3100 = vmatpush2.msra.mxu0 0.0
    %3101 = vmatprep.subr.mxu0 0.0
    %3102 = vmatpush2.msra.mxu0 0.0
    %3103 = vmatprep.subr.mxu0 0.0
    %3104 = vmatpush2.msra.mxu0 0.0
    %3105 = vmatprep.subr.mxu0 0.0
    %3106 = vmatpush2.msra.mxu0 0.0
    %3107 = vmatprep.mubr.f32.mxu0 0.0
    %3108 = vmatmul.mubr.f32.gmra.mxu0 %v3026
    %v3109 = vpop.f32.mrf.mxu0
    %v3110 = vadd.f32 %v898, %v3109
    %v3111 = vpop.f32.mrf.mxu0
    %3112 = vdwg.mxu0
    %3113 = vrot.lane.b32.xlu0 %v3110, 1
    %v3114 = vpop.permute.xlu0 %3113
    %vm3115 = vcmp.gt.f32.partialorder %v3114, %v3110
    %vm3116 = vcmp.eq.f32.partialorder %v3114, %v3110
    %vm3117 = vmand %vm3116, %vm976
    %vm3118 = vmor %vm3115, %vm3117
    %v3119 = vsel %vm3118, %v3114, %v3110
    %v3120 = vsel %vm3118, %v973, %v99
    %3121 = vrot.lane.b32.xlu0 %v3119, 2
    %v3122 = vpop.permute.xlu0 %3121
    %3123 = vrot.lane.b32.xlu0 %v3120, 2
    %v3124 = vpop.permute.xlu0 %3123
    %vm3125 = vcmp.gt.f32.partialorder %v3122, %v3119
    %vm3126 = vcmp.eq.f32.partialorder %v3122, %v3119
    %vm3127 = vcmp.lt.s32.totalorder %v3124, %v3120
    %vm3128 = vmand %vm3126, %vm3127
    %vm3129 = vmor %vm3125, %vm3128
    %v3130 = vsel %vm3129, %v3122, %v3119
    %v3131 = vsel %vm3129, %v3124, %v3120
    %3132 = vrot.lane.b32.xlu0 %v3130, 4
    %v3133 = vpop.permute.xlu0 %3132
    %3134 = vrot.lane.b32.xlu0 %v3131, 4
    %v3135 = vpop.permute.xlu0 %3134
    %vm3136 = vcmp.gt.f32.partialorder %v3133, %v3130
    %vm3137 = vcmp.eq.f32.partialorder %v3133, %v3130
    %vm3138 = vcmp.lt.s32.totalorder %v3135, %v3131
    %vm3139 = vmand %vm3137, %vm3138
    %vm3140 = vmor %vm3136, %vm3139
    %v3141 = vsel %vm3140, %v3133, %v3130
    %v3142 = vsel %vm3140, %v3135, %v3131
    %3143 = vrot.lane.b32.xlu0 %v3141, 8
    %v3144 = vpop.permute.xlu0 %3143
    %3145 = vrot.lane.b32.xlu0 %v3142, 8
    %v3146 = vpop.permute.xlu0 %3145
    %vm3147 = vcmp.gt.f32.partialorder %v3144, %v3141
    %vm3148 = vcmp.eq.f32.partialorder %v3144, %v3141
    %vm3149 = vcmp.lt.s32.totalorder %v3146, %v3142
    %vm3150 = vmand %vm3148, %vm3149
    %vm3151 = vmor %vm3147, %vm3150
    %v3152 = vsel %vm3151, %v3144, %v3141
    %v3153 = vsel %vm3151, %v3146, %v3142
    %3154 = vrot.lane.b32.xlu0 %v3152, 16
    %v3155 = vpop.permute.xlu0 %3154
    %3156 = vrot.lane.b32.xlu0 %v3153, 16
    %v3157 = vpop.permute.xlu0 %3156
    %vm3158 = vcmp.gt.f32.partialorder %v3155, %v3152
    %vm3159 = vcmp.eq.f32.partialorder %v3155, %v3152
    %vm3160 = vcmp.lt.s32.totalorder %v3157, %v3153
    %vm3161 = vmand %vm3159, %vm3160
    %vm3162 = vmor %vm3158, %vm3161
    %v3163 = vsel %vm3162, %v3155, %v3152
    %v3164 = vsel %vm3162, %v3157, %v3153
    %3165 = vrot.lane.b32.xlu0 %v3163, 32
    %v3166 = vpop.permute.xlu0 %3165
    %3167 = vrot.lane.b32.xlu0 %v3164, 32
    %v3168 = vpop.permute.xlu0 %3167
    %vm3169 = vcmp.gt.f32.partialorder %v3166, %v3163
    %vm3170 = vcmp.eq.f32.partialorder %v3166, %v3163
    %vm3171 = vcmp.lt.s32.totalorder %v3168, %v3164
    %vm3172 = vmand %vm3170, %vm3171
    %vm3173 = vmor %vm3169, %vm3172
    %v3174 = vsel %vm3173, %v3166, %v3163
    %v3175 = vsel %vm3173, %v3168, %v3164
    %3176 = vrot.lane.b32.xlu0 %v3174, 64
    %v3177 = vpop.permute.xlu0 %3176
    %3178 = vrot.lane.b32.xlu0 %v3175, 64
    %v3179 = vpop.permute.xlu0 %3178
    %vm3180 = vcmp.gt.f32.partialorder %v3177, %v3174
    %vm3181 = vcmp.eq.f32.partialorder %v3177, %v3174
    %vm3182 = vcmp.lt.s32.totalorder %v3179, %v3175
    %vm3183 = vmand %vm3181, %vm3182
    %vm3184 = vmor %vm3180, %vm3183
    %v3185 = vsel %vm3184, %v3177, %v3174
    %v3186 = vsel %vm3184, %v3179, %v3175
    %v3187 = vsub.f32 %v3110, %v3185
    %v3188 = vmul.f32 %v3187, 1.442695
    %v3189 = vpow.pop %v3188
    %v3190 = vsel %vm1050, %v3189, 0.0
    %3191 = vadd.xlane.f32.xlu0 %v3190
    %v3192 = vpop.xlane.xlu0 %3191
    %v3193 = vlog2.pop %v3192
    %v3194 = vmul.f32 %v3193, 0.6931472
    %v3195 = vsub.f32 %v3187, %v3194
    %s3196 = scalar_lea.vmem [#allocation12], 6
    %3197 = vst [vmem:[%s3196] sm:$0x3] %v3195
    %vm3198 = vcmp.eq.s32.totalorder %v3186, 0
    %v3199 = vld [vmem:[#allocation6] ss:$8 sm:$0x7]
    %v3201 = vlaneseq
    %v3202 = vshrl.u32 %v3201, 7
    %v3203 = vsub.s32 0, %v3202
    %v3204 = vrot.slane %v3199, %v3203
    %v3205 = vlaneseq
    %v3206 = vshrl.u32 %v3205, 7
    %v3207 = vsub.s32 1, %v3206
    %v3208 = vrot.slane %v3199, %v3207
    %v3209 = vlaneseq
    %v3210 = vshrl.u32 %v3209, 7
    %v3211 = vsub.s32 2, %v3210
    %v3212 = vrot.slane %v3199, %v3211
    %v3216 = vsel %vm3198, %v3204, 0.0
    %v3217 = vsel %vm3198, %v3208, 0.0
    %v3218 = vsel %vm3198, %v3212, 0.0
    %vm3219 = vcmp.eq.s32.totalorder %v3186, 1
    %v3220 = vld [vmem:[%s326] ss:$8 sm:$0x7]
    %v3222 = vlaneseq
    %v3223 = vshrl.u32 %v3222, 7
    %v3224 = vsub.s32 0, %v3223
    %v3225 = vrot.slane %v3220, %v3224
    %v3226 = vlaneseq
    %v3227 = vshrl.u32 %v3226, 7
    %v3228 = vsub.s32 1, %v3227
    %v3229 = vrot.slane %v3220, %v3228
    %v3230 = vlaneseq
    %v3231 = vshrl.u32 %v3230, 7
    %v3232 = vsub.s32 2, %v3231
    %v3233 = vrot.slane %v3220, %v3232
    %v3237 = vsel %vm3219, %v3225, 0.0
    %v3238 = vsel %vm3219, %v3229, 0.0
    %v3239 = vsel %vm3219, %v3233, 0.0
    %vm3240 = vcmp.eq.s32.totalorder %v3186, 2
    %v3241 = vld [vmem:[%s353] ss:$8 sm:$0x7]
    %v3243 = vlaneseq
    %v3244 = vshrl.u32 %v3243, 7
    %v3245 = vsub.s32 0, %v3244
    %v3246 = vrot.slane %v3241, %v3245
    %v3247 = vlaneseq
    %v3248 = vshrl.u32 %v3247, 7
    %v3249 = vsub.s32 1, %v3248
    %v3250 = vrot.slane %v3241, %v3249
    %v3251 = vlaneseq
    %v3252 = vshrl.u32 %v3251, 7
    %v3253 = vsub.s32 2, %v3252
    %v3254 = vrot.slane %v3241, %v3253
    %v3258 = vsel %vm3240, %v3246, 0.0
    %v3259 = vsel %vm3240, %v3250, 0.0
    %v3260 = vsel %vm3240, %v3254, 0.0
    %vm3261 = vcmp.eq.s32.totalorder %v3186, 3
    %v3262 = vld [vmem:[%s380] ss:$8 sm:$0x7]
    %v3264 = vlaneseq
    %v3265 = vshrl.u32 %v3264, 7
    %v3266 = vsub.s32 0, %v3265
    %v3267 = vrot.slane %v3262, %v3266
    %v3268 = vlaneseq
    %v3269 = vshrl.u32 %v3268, 7
    %v3270 = vsub.s32 1, %v3269
    %v3271 = vrot.slane %v3262, %v3270
    %v3272 = vlaneseq
    %v3273 = vshrl.u32 %v3272, 7
    %v3274 = vsub.s32 2, %v3273
    %v3275 = vrot.slane %v3262, %v3274
    %v3279 = vsel %vm3261, %v3267, 0.0
    %v3280 = vsel %vm3261, %v3271, 0.0
    %v3281 = vsel %vm3261, %v3275, 0.0
    %vm3282 = vcmp.eq.s32.totalorder %v3186, 4
    %v3283 = vld [vmem:[%s407] ss:$8 sm:$0x7]
    %v3285 = vlaneseq
    %v3286 = vshrl.u32 %v3285, 7
    %v3287 = vsub.s32 0, %v3286
    %v3288 = vrot.slane %v3283, %v3287
    %v3289 = vlaneseq
    %v3290 = vshrl.u32 %v3289, 7
    %v3291 = vsub.s32 1, %v3290
    %v3292 = vrot.slane %v3283, %v3291
    %v3293 = vlaneseq
    %v3294 = vshrl.u32 %v3293, 7
    %v3295 = vsub.s32 2, %v3294
    %v3296 = vrot.slane %v3283, %v3295
    %v3300 = vsel %vm3282, %v3288, 0.0
    %v3301 = vsel %vm3282, %v3292, 0.0
    %v3302 = vsel %vm3282, %v3296, 0.0
    %vm3303 = vcmp.eq.s32.totalorder %v3186, 5
    %v3304 = vld [vmem:[%s434] ss:$8 sm:$0x7]
    %v3306 = vlaneseq
    %v3307 = vshrl.u32 %v3306, 7
    %v3308 = vsub.s32 0, %v3307
    %v3309 = vrot.slane %v3304, %v3308
    %v3310 = vlaneseq
    %v3311 = vshrl.u32 %v3310, 7
    %v3312 = vsub.s32 1, %v3311
    %v3313 = vrot.slane %v3304, %v3312
    %v3314 = vlaneseq
    %v3315 = vshrl.u32 %v3314, 7
    %v3316 = vsub.s32 2, %v3315
    %v3317 = vrot.slane %v3304, %v3316
    %v3321 = vsel %vm3303, %v3309, 0.0
    %v3322 = vsel %vm3303, %v3313, 0.0
    %v3323 = vsel %vm3303, %v3317, 0.0
    %vm3324 = vcmp.eq.s32.totalorder %v3186, 6
    %v3325 = vld [vmem:[%s461] ss:$8 sm:$0x7]
    %v3327 = vlaneseq
    %v3328 = vshrl.u32 %v3327, 7
    %v3329 = vsub.s32 0, %v3328
    %v3330 = vrot.slane %v3325, %v3329
    %v3331 = vlaneseq
    %v3332 = vshrl.u32 %v3331, 7
    %v3333 = vsub.s32 1, %v3332
    %v3334 = vrot.slane %v3325, %v3333
    %v3335 = vlaneseq
    %v3336 = vshrl.u32 %v3335, 7
    %v3337 = vsub.s32 2, %v3336
    %v3338 = vrot.slane %v3325, %v3337
    %v3342 = vsel %vm3324, %v3330, 0.0
    %v3343 = vsel %vm3324, %v3334, 0.0
    %v3344 = vsel %vm3324, %v3338, 0.0
    %vm3345 = vcmp.eq.s32.totalorder %v3186, 7
    %v3346 = vld [vmem:[%s488] ss:$8 sm:$0x7]
    %v3348 = vlaneseq
    %v3349 = vshrl.u32 %v3348, 7
    %v3350 = vsub.s32 0, %v3349
    %v3351 = vrot.slane %v3346, %v3350
    %v3352 = vlaneseq
    %v3353 = vshrl.u32 %v3352, 7
    %v3354 = vsub.s32 1, %v3353
    %v3355 = vrot.slane %v3346, %v3354
    %v3356 = vlaneseq
    %v3357 = vshrl.u32 %v3356, 7
    %v3358 = vsub.s32 2, %v3357
    %v3359 = vrot.slane %v3346, %v3358
    %v3363 = vsel %vm3345, %v3351, 0.0
    %v3364 = vsel %vm3345, %v3355, 0.0
    %v3365 = vsel %vm3345, %v3359, 0.0
    %vm3366 = vcmp.eq.s32.totalorder %v3186, 8
    %v3367 = vld [vmem:[%s515] ss:$8 sm:$0x7]
    %v3369 = vlaneseq
    %v3370 = vshrl.u32 %v3369, 7
    %v3371 = vsub.s32 0, %v3370
    %v3372 = vrot.slane %v3367, %v3371
    %v3373 = vlaneseq
    %v3374 = vshrl.u32 %v3373, 7
    %v3375 = vsub.s32 1, %v3374
    %v3376 = vrot.slane %v3367, %v3375
    %v3377 = vlaneseq
    %v3378 = vshrl.u32 %v3377, 7
    %v3379 = vsub.s32 2, %v3378
    %v3380 = vrot.slane %v3367, %v3379
    %v3384 = vsel %vm3366, %v3372, 0.0
    %v3385 = vsel %vm3366, %v3376, 0.0
    %v3386 = vsel %vm3366, %v3380, 0.0
    %vm3387 = vcmp.eq.s32.totalorder %v3186, 9
    %v3388 = vld [vmem:[%s542] ss:$8 sm:$0x7]
    %v3390 = vlaneseq
    %v3391 = vshrl.u32 %v3390, 7
    %v3392 = vsub.s32 0, %v3391
    %v3393 = vrot.slane %v3388, %v3392
    %v3394 = vlaneseq
    %v3395 = vshrl.u32 %v3394, 7
    %v3396 = vsub.s32 1, %v3395
    %v3397 = vrot.slane %v3388, %v3396
    %v3398 = vlaneseq
    %v3399 = vshrl.u32 %v3398, 7
    %v3400 = vsub.s32 2, %v3399
    %v3401 = vrot.slane %v3388, %v3400
    %v3405 = vsel %vm3387, %v3393, 0.0
    %v3406 = vsel %vm3387, %v3397, 0.0
    %v3407 = vsel %vm3387, %v3401, 0.0
    %vm3408 = vcmp.eq.s32.totalorder %v3186, 10
    %v3409 = vld [vmem:[%s569] ss:$8 sm:$0x7]
    %v3411 = vlaneseq
    %v3412 = vshrl.u32 %v3411, 7
    %v3413 = vsub.s32 0, %v3412
    %v3414 = vrot.slane %v3409, %v3413
    %v3415 = vlaneseq
    %v3416 = vshrl.u32 %v3415, 7
    %v3417 = vsub.s32 1, %v3416
    %v3418 = vrot.slane %v3409, %v3417
    %v3419 = vlaneseq
    %v3420 = vshrl.u32 %v3419, 7
    %v3421 = vsub.s32 2, %v3420
    %v3422 = vrot.slane %v3409, %v3421
    %v3426 = vsel %vm3408, %v3414, 0.0
    %v3427 = vsel %vm3408, %v3418, 0.0
    %v3428 = vsel %vm3408, %v3422, 0.0
    %vm3429 = vcmp.eq.s32.totalorder %v3186, 11
    %v3430 = vld [vmem:[%s596] ss:$8 sm:$0x7]
    %v3432 = vlaneseq
    %v3433 = vshrl.u32 %v3432, 7
    %v3434 = vsub.s32 0, %v3433
    %v3435 = vrot.slane %v3430, %v3434
    %v3436 = vlaneseq
    %v3437 = vshrl.u32 %v3436, 7
    %v3438 = vsub.s32 1, %v3437
    %v3439 = vrot.slane %v3430, %v3438
    %v3440 = vlaneseq
    %v3441 = vshrl.u32 %v3440, 7
    %v3442 = vsub.s32 2, %v3441
    %v3443 = vrot.slane %v3430, %v3442
    %v3447 = vsel %vm3429, %v3435, 0.0
    %v3448 = vsel %vm3429, %v3439, 0.0
    %v3449 = vsel %vm3429, %v3443, 0.0
    %v3450 = vadd.f32 %v3216, %v3237
    %v3451 = vadd.f32 %v3217, %v3238
    %v3452 = vadd.f32 %v3218, %v3239
    %v3453 = vadd.f32 %v3258, %v3279
    %v3454 = vadd.f32 %v3259, %v3280
    %v3455 = vadd.f32 %v3260, %v3281
    %v3456 = vadd.f32 %v3300, %v3321
    %v3457 = vadd.f32 %v3301, %v3322
    %v3458 = vadd.f32 %v3302, %v3323
    %v3459 = vadd.f32 %v3342, %v3363
    %v3460 = vadd.f32 %v3343, %v3364
    %v3461 = vadd.f32 %v3344, %v3365
    %v3462 = vadd.f32 %v3384, %v3405
    %v3463 = vadd.f32 %v3385, %v3406
    %v3464 = vadd.f32 %v3386, %v3407
    %v3465 = vadd.f32 %v3426, %v3447
    %v3466 = vadd.f32 %v3427, %v3448
    %v3467 = vadd.f32 %v3428, %v3449
    %v3468 = vadd.f32 %v3450, %v3453
    %v3469 = vadd.f32 %v3451, %v3454
    %v3470 = vadd.f32 %v3452, %v3455
    %v3471 = vadd.f32 %v3456, %v3459
    %v3472 = vadd.f32 %v3457, %v3460
    %v3473 = vadd.f32 %v3458, %v3461
    %v3474 = vadd.f32 %v3462, %v3465
    %v3475 = vadd.f32 %v3463, %v3466
    %v3476 = vadd.f32 %v3464, %v3467
    %v3477 = vadd.f32 %v3468, %v3471
    %v3478 = vadd.f32 %v3469, %v3472
    %v3479 = vadd.f32 %v3470, %v3473
    %v3480 = vadd.f32 %v3477, %v3474
    %v3481 = vadd.f32 %v3478, %v3475
    %v3482 = vadd.f32 %v3479, %v3476
    %v3483 = vld [vmem:[#allocation2 + $0x18] sm:$0x3]
    %v3484 = vld [vmem:[#allocation2 + $0x20] sm:$0x3]
    %v3485 = vld [vmem:[#allocation2 + $0x28] sm:$0x3]
    %v3486 = vadd.f32 %v3480, %v3483
    %v3487 = vadd.f32 %v3481, %v3484
    %v3488 = vadd.f32 %v3482, %v3485
    %v3489 = vld [vmem:[#allocation9] sm:$0xff]
    %v3490 = vld [vmem:[#allocation9 + $0x8] sm:$0xff]
    %v3491 = vld [vmem:[#allocation9 + $0x10] sm:$0xff]
    %v3492 = vld [vmem:[#allocation9 + $0x18] sm:$0xff]
    %v3493 = vld [vmem:[#allocation9 + $0x20] sm:$0xff]
    %v3494 = vld [vmem:[#allocation9 + $0x28] sm:$0xff]
    %v3495 = vld [vmem:[#allocation9 + $0x30] sm:$0xff]
    %v3496 = vld [vmem:[#allocation9 + $0x38] sm:$0xff]
    %v3497 = vld [vmem:[#allocation9 + $0x40] sm:$0xff]
    %v3498 = vld [vmem:[#allocation9 + $0x48] sm:$0xff]
    %v3499 = vld [vmem:[#allocation9 + $0x50] sm:$0xff]
    %v3500 = vld [vmem:[#allocation9 + $0x58] sm:$0xff]
    %v3501 = vld [vmem:[#allocation9 + $0x60] sm:$0xff]
    %v3502 = vld [vmem:[#allocation9 + $0x68] sm:$0xff]
    %v3503 = vld [vmem:[#allocation9 + $0x70] sm:$0xff]
    %v3504 = vld [vmem:[#allocation9 + $0x78] sm:$0xff]
    %v3505 = vld [vmem:[#allocation9 + $0x80] sm:$0xff]
    %v3506 = vld [vmem:[#allocation9 + $0x88] sm:$0xff]
    %v3507 = vld [vmem:[#allocation9 + $0x90] sm:$0xff]
    %v3508 = vld [vmem:[#allocation9 + $0x98] sm:$0xff]
    %v3509 = vld [vmem:[#allocation9 + $0xa0] sm:$0xff]
    %v3510 = vld [vmem:[#allocation9 + $0xa8] sm:$0xff]
    %v3511 = vld [vmem:[#allocation9 + $0xb0] sm:$0xff]
    %v3512 = vld [vmem:[#allocation9 + $0xb8] sm:$0xff]
    %v3513 = vld [vmem:[#allocation9 + $0xc0] sm:$0xff]
    %v3514 = vld [vmem:[#allocation9 + $0xc8] sm:$0xff]
    %v3515 = vld [vmem:[#allocation9 + $0xd0] sm:$0xff]
    %v3516 = vld [vmem:[#allocation9 + $0xd8] sm:$0xff]
    %v3517 = vld [vmem:[#allocation9 + $0xe0] sm:$0xff]
    %v3518 = vld [vmem:[#allocation9 + $0xe8] sm:$0xff]
    %v3519 = vld [vmem:[#allocation9 + $0xf0] sm:$0xff]
    %v3520 = vld [vmem:[#allocation9 + $0xf8] sm:$0xff]
    %v3521 = vld [vmem:[#allocation9 + $0x100] sm:$0xff]
    %v3522 = vld [vmem:[#allocation9 + $0x108] sm:$0xff]
    %v3523 = vld [vmem:[#allocation9 + $0x110] sm:$0xff]
    %v3524 = vld [vmem:[#allocation9 + $0x118] sm:$0xff]
    %v3525 = vld [vmem:[#allocation9 + $0x120] sm:$0xff]
    %v3526 = vld [vmem:[#allocation9 + $0x128] sm:$0xff]
    %v3527 = vld [vmem:[#allocation9 + $0x130] sm:$0xff]
    %v3528 = vld [vmem:[#allocation9 + $0x138] sm:$0xff]
    %v3529 = vld [vmem:[#allocation9 + $0x140] sm:$0xff]
    %v3530 = vld [vmem:[#allocation9 + $0x148] sm:$0xff]
    %v3531 = vld [vmem:[#allocation9 + $0x150] sm:$0xff]
    %v3532 = vld [vmem:[#allocation9 + $0x158] sm:$0xff]
    %v3533 = vld [vmem:[#allocation9 + $0x160] sm:$0xff]
    %v3534 = vld [vmem:[#allocation9 + $0x168] sm:$0xff]
    %v3535 = vld [vmem:[#allocation9 + $0x170] sm:$0xff]
    %v3536 = vld [vmem:[#allocation9 + $0x178] sm:$0xff]
    %3537 = vmatprep.subr.mxu0 %v3535
    %3538 = vmatpush1.msra.mxu0 %v3534
    %3539 = vmatprep.subr.mxu0 %v3532
    %3540 = vmatpush1.msra.mxu0 %v3531
    %3541 = vmatprep.subr.mxu0 %v3529
    %3542 = vmatpush1.msra.mxu0 %v3528
    %3543 = vmatprep.subr.mxu0 %v3526
    %3544 = vmatpush1.msra.mxu0 %v3525
    %3545 = vmatprep.subr.mxu0 %v3523
    %3546 = vmatpush1.msra.mxu0 %v3522
    %3547 = vmatprep.subr.mxu0 %v3520
    %3548 = vmatpush1.msra.mxu0 %v3519
    %3549 = vmatprep.subr.mxu0 %v3517
    %3550 = vmatpush1.msra.mxu0 %v3516
    %3551 = vmatprep.subr.mxu0 %v3514
    %3552 = vmatpush1.msra.mxu0 %v3513
    %3553 = vmatprep.subr.mxu0 %v3511
    %3554 = vmatpush1.msra.mxu0 %v3510
    %3555 = vmatprep.subr.mxu0 %v3508
    %3556 = vmatpush1.msra.mxu0 %v3507
    %3557 = vmatprep.subr.mxu0 %v3505
    %3558 = vmatpush1.msra.mxu0 %v3504
    %3559 = vmatprep.subr.mxu0 %v3502
    %3560 = vmatpush1.msra.mxu0 %v3501
    %3561 = vmatprep.subr.mxu0 %v3499
    %3562 = vmatpush1.msra.mxu0 %v3498
    %3563 = vmatprep.subr.mxu0 %v3496
    %3564 = vmatpush1.msra.mxu0 %v3495
    %3565 = vmatprep.subr.mxu0 %v3493
    %3566 = vmatpush1.msra.mxu0 %v3492
    %3567 = vmatprep.subr.mxu0 %v3490
    %3568 = vmatpush1.msra.mxu0 %v3489
    %3569 = vmatprep.subr.mxu0 0.0
    %3570 = vmatpush2.msra.mxu0 0.0
    %3571 = vmatprep.subr.mxu0 0.0
    %3572 = vmatpush2.msra.mxu0 0.0
    %3573 = vmatprep.subr.mxu0 0.0
    %3574 = vmatpush2.msra.mxu0 0.0
    %3575 = vmatprep.subr.mxu0 0.0
    %3576 = vmatpush2.msra.mxu0 0.0
    %3577 = vmatprep.subr.mxu0 0.0
    %3578 = vmatpush2.msra.mxu0 0.0
    %3579 = vmatprep.subr.mxu0 0.0
    %3580 = vmatpush2.msra.mxu0 0.0
    %3581 = vmatprep.subr.mxu0 0.0
    %3582 = vmatpush2.msra.mxu0 0.0
    %3583 = vmatprep.subr.mxu0 0.0
    %3584 = vmatpush2.msra.mxu0 0.0
    %3585 = vmatprep.subr.mxu0 0.0
    %3586 = vmatpush2.msra.mxu0 0.0
    %3587 = vmatprep.subr.mxu0 0.0
    %3588 = vmatpush2.msra.mxu0 0.0
    %3589 = vmatprep.subr.mxu0 0.0
    %3590 = vmatpush2.msra.mxu0 0.0
    %3591 = vmatprep.subr.mxu0 0.0
    %3592 = vmatpush2.msra.mxu0 0.0
    %3593 = vmatprep.subr.mxu0 0.0
    %3594 = vmatpush2.msra.mxu0 0.0
    %3595 = vmatprep.subr.mxu0 0.0
    %3596 = vmatpush2.msra.mxu0 0.0
    %3597 = vmatprep.subr.mxu0 0.0
    %3598 = vmatpush2.msra.mxu0 0.0
    %3599 = vmatprep.subr.mxu0 0.0
    %3600 = vmatpush2.msra.mxu0 0.0
    %3601 = vmatprep.mubr.f32.mxu0 0.0
    %3602 = vmatmul.mubr.f32.gmra.mxu0 %v3026
    %v3603 = vpop.f32.mrf.mxu0
    %v3604 = vadd.f32 0.0, %v3603
    %v3605 = vpop.f32.mrf.mxu0
    %v3606 = vadd.f32 0.0, %v3605
    %3607 = vdwg.mxu0
    %3608 = vmatprep.subr.mxu0 0.0
    %3609 = vmatpush1.msra.mxu0 %v3536
    %3610 = vmatprep.subr.mxu0 0.0
    %3611 = vmatpush1.msra.mxu0 %v3533
    %3612 = vmatprep.subr.mxu0 0.0
    %3613 = vmatpush1.msra.mxu0 %v3530
    %3614 = vmatprep.subr.mxu0 0.0
    %3615 = vmatpush1.msra.mxu0 %v3527
    %3616 = vmatprep.subr.mxu0 0.0
    %3617 = vmatpush1.msra.mxu0 %v3524
    %3618 = vmatprep.subr.mxu0 0.0
    %3619 = vmatpush1.msra.mxu0 %v3521
    %3620 = vmatprep.subr.mxu0 0.0
    %3621 = vmatpush1.msra.mxu0 %v3518
    %3622 = vmatprep.subr.mxu0 0.0
    %3623 = vmatpush1.msra.mxu0 %v3515
    %3624 = vmatprep.subr.mxu0 0.0
    %3625 = vmatpush1.msra.mxu0 %v3512
    %3626 = vmatprep.subr.mxu0 0.0
    %3627 = vmatpush1.msra.mxu0 %v3509
    %3628 = vmatprep.subr.mxu0 0.0
    %3629 = vmatpush1.msra.mxu0 %v3506
    %3630 = vmatprep.subr.mxu0 0.0
    %3631 = vmatpush1.msra.mxu0 %v3503
    %3632 = vmatprep.subr.mxu0 0.0
    %3633 = vmatpush1.msra.mxu0 %v3500
    %3634 = vmatprep.subr.mxu0 0.0
    %3635 = vmatpush1.msra.mxu0 %v3497
    %3636 = vmatprep.subr.mxu0 0.0
    %3637 = vmatpush1.msra.mxu0 %v3494
    %3638 = vmatprep.subr.mxu0 0.0
    %3639 = vmatpush1.msra.mxu0 %v3491
    %3640 = vmatprep.subr.mxu0 0.0
    %3641 = vmatpush2.msra.mxu0 0.0
    %3642 = vmatprep.subr.mxu0 0.0
    %3643 = vmatpush2.msra.mxu0 0.0
    %3644 = vmatprep.subr.mxu0 0.0
    %3645 = vmatpush2.msra.mxu0 0.0
    %3646 = vmatprep.subr.mxu0 0.0
    %3647 = vmatpush2.msra.mxu0 0.0
    %3648 = vmatprep.subr.mxu0 0.0
    %3649 = vmatpush2.msra.mxu0 0.0
    %3650 = vmatprep.subr.mxu0 0.0
    %3651 = vmatpush2.msra.mxu0 0.0
    %3652 = vmatprep.subr.mxu0 0.0
    %3653 = vmatpush2.msra.mxu0 0.0
    %3654 = vmatprep.subr.mxu0 0.0
    %3655 = vmatpush2.msra.mxu0 0.0
    %3656 = vmatprep.subr.mxu0 0.0
    %3657 = vmatpush2.msra.mxu0 0.0
    %3658 = vmatprep.subr.mxu0 0.0
    %3659 = vmatpush2.msra.mxu0 0.0
    %3660 = vmatprep.subr.mxu0 0.0
    %3661 = vmatpush2.msra.mxu0 0.0
    %3662 = vmatprep.subr.mxu0 0.0
    %3663 = vmatpush2.msra.mxu0 0.0
    %3664 = vmatprep.subr.mxu0 0.0
    %3665 = vmatpush2.msra.mxu0 0.0
    %3666 = vmatprep.subr.mxu0 0.0
    %3667 = vmatpush2.msra.mxu0 0.0
    %3668 = vmatprep.subr.mxu0 0.0
    %3669 = vmatpush2.msra.mxu0 0.0
    %3670 = vmatprep.subr.mxu0 0.0
    %3671 = vmatpush2.msra.mxu0 0.0
    %3672 = vmatprep.mubr.f32.mxu0 0.0
    %3673 = vmatmul.mubr.f32.gmra.mxu0 %v3026
    %v3674 = vpop.f32.mrf.mxu0
    %v3675 = vadd.f32 0.0, %v3674
    %v3676 = vpop.f32.mrf.mxu0
    %3677 = vdwg.mxu0
    %v3678 = vadd.f32 %v3486, %v3604
    %v3679 = vxor.u32 %v3678, 2147483648
    %v3680 = vmul.f32 %v3679, 1.442695
    %v3681 = vpow.pop %v3680
    %v3682 = vadd.f32 %v3681, 1.0
    %v3683 = vrcp.pop %v3682
    %v3684 = vmul.f32 1.0, %v3683
    %v3685 = vadd.f32 %v3487, %v3606
    %v3686 = vxor.u32 %v3685, 2147483648
    %v3687 = vmul.f32 %v3686, 1.442695
    %v3688 = vpow.pop %v3687
    %v3689 = vadd.f32 %v3688, 1.0
    %v3690 = vrcp.pop %v3689
    %v3691 = vmul.f32 1.0, %v3690
    %v3692 = vadd.f32 %v3675, %v868
    %v3693 = vmul.f32 %v3684, %v3692
    %v3694 = vadd.f32 %v3488, %v3693
    %v3695 = vtanh.pop %v3694
    %v3696 = vsub.f32 1.0, %v3691
    %v3697 = vmul.f32 %v3696, %v3695
    %v3698 = vmul.f32 %v3691, %v3026
    %v3699 = vadd.f32 %v3697, %v3698
    %v3700 = vld [vmem:[#allocation11] sm:$0xff]
    %v3701 = vld [vmem:[#allocation11 + $0x10] sm:$0xff]
    %v3702 = vld [vmem:[#allocation11 + $0x20] sm:$0xff]
    %v3703 = vld [vmem:[#allocation11 + $0x30] sm:$0xff]
    %v3704 = vld [vmem:[#allocation11 + $0x40] sm:$0xff]
    %v3705 = vld [vmem:[#allocation11 + $0x50] sm:$0xff]
    %v3706 = vld [vmem:[#allocation11 + $0x60] sm:$0xff]
    %v3707 = vld [vmem:[#allocation11 + $0x70] sm:$0xff]
    %v3708 = vld [vmem:[#allocation11 + $0x80] sm:$0xff]
    %v3709 = vld [vmem:[#allocation11 + $0x90] sm:$0xff]
    %v3710 = vld [vmem:[#allocation11 + $0xa0] sm:$0xff]
    %v3711 = vld [vmem:[#allocation11 + $0xb0] sm:$0xff]
    %v3712 = vld [vmem:[#allocation11 + $0xc0] sm:$0xff]
    %v3713 = vld [vmem:[#allocation11 + $0xd0] sm:$0xff]
    %v3714 = vld [vmem:[#allocation11 + $0xe0] sm:$0xff]
    %v3715 = vld [vmem:[#allocation11 + $0xf0] sm:$0xff]
    %3716 = vmatprep.subr.mxu0 0.0
    %3717 = vmatpush1.msra.mxu0 %v3715
    %3718 = vmatprep.subr.mxu0 0.0
    %3719 = vmatpush1.msra.mxu0 %v3714
    %3720 = vmatprep.subr.mxu0 0.0
    %3721 = vmatpush1.msra.mxu0 %v3713
    %3722 = vmatprep.subr.mxu0 0.0
    %3723 = vmatpush1.msra.mxu0 %v3712
    %3724 = vmatprep.subr.mxu0 0.0
    %3725 = vmatpush1.msra.mxu0 %v3711
    %3726 = vmatprep.subr.mxu0 0.0
    %3727 = vmatpush1.msra.mxu0 %v3710
    %3728 = vmatprep.subr.mxu0 0.0
    %3729 = vmatpush1.msra.mxu0 %v3709
    %3730 = vmatprep.subr.mxu0 0.0
    %3731 = vmatpush1.msra.mxu0 %v3708
    %3732 = vmatprep.subr.mxu0 0.0
    %3733 = vmatpush1.msra.mxu0 %v3707
    %3734 = vmatprep.subr.mxu0 0.0
    %3735 = vmatpush1.msra.mxu0 %v3706
    %3736 = vmatprep.subr.mxu0 0.0
    %3737 = vmatpush1.msra.mxu0 %v3705
    %3738 = vmatprep.subr.mxu0 0.0
    %3739 = vmatpush1.msra.mxu0 %v3704
    %3740 = vmatprep.subr.mxu0 0.0
    %3741 = vmatpush1.msra.mxu0 %v3703
    %3742 = vmatprep.subr.mxu0 0.0
    %3743 = vmatpush1.msra.mxu0 %v3702
    %3744 = vmatprep.subr.mxu0 0.0
    %3745 = vmatpush1.msra.mxu0 %v3701
    %3746 = vmatprep.subr.mxu0 0.0
    %3747 = vmatpush1.msra.mxu0 %v3700
    %3748 = vmatprep.subr.mxu0 0.0
    %3749 = vmatpush2.msra.mxu0 0.0
    %3750 = vmatprep.subr.mxu0 0.0
    %3751 = vmatpush2.msra.mxu0 0.0
    %3752 = vmatprep.subr.mxu0 0.0
    %3753 = vmatpush2.msra.mxu0 0.0
    %3754 = vmatprep.subr.mxu0 0.0
    %3755 = vmatpush2.msra.mxu0 0.0
    %3756 = vmatprep.subr.mxu0 0.0
    %3757 = vmatpush2.msra.mxu0 0.0
    %3758 = vmatprep.subr.mxu0 0.0
    %3759 = vmatpush2.msra.mxu0 0.0
    %3760 = vmatprep.subr.mxu0 0.0
    %3761 = vmatpush2.msra.mxu0 0.0
    %3762 = vmatprep.subr.mxu0 0.0
    %3763 = vmatpush2.msra.mxu0 0.0
    %3764 = vmatprep.subr.mxu0 0.0
    %3765 = vmatpush2.msra.mxu0 0.0
    %3766 = vmatprep.subr.mxu0 0.0
    %3767 = vmatpush2.msra.mxu0 0.0
    %3768 = vmatprep.subr.mxu0 0.0
    %3769 = vmatpush2.msra.mxu0 0.0
    %3770 = vmatprep.subr.mxu0 0.0
    %3771 = vmatpush2.msra.mxu0 0.0
    %3772 = vmatprep.subr.mxu0 0.0
    %3773 = vmatpush2.msra.mxu0 0.0
    %3774 = vmatprep.subr.mxu0 0.0
    %3775 = vmatpush2.msra.mxu0 0.0
    %3776 = vmatprep.subr.mxu0 0.0
    %3777 = vmatpush2.msra.mxu0 0.0
    %3778 = vmatprep.subr.mxu0 0.0
    %3779 = vmatpush2.msra.mxu0 0.0
    %3780 = vmatprep.mubr.f32.mxu0 0.0
    %3781 = vmatmul.mubr.f32.gmra.mxu0 %v3699
    %v3782 = vpop.f32.mrf.mxu0
    %v3783 = vadd.f32 %v898, %v3782
    %v3784 = vpop.f32.mrf.mxu0
    %3785 = vdwg.mxu0
    %3786 = vrot.lane.b32.xlu0 %v3783, 1
    %v3787 = vpop.permute.xlu0 %3786
    %vm3788 = vcmp.gt.f32.partialorder %v3787, %v3783
    %vm3789 = vcmp.eq.f32.partialorder %v3787, %v3783
    %vm3790 = vmand %vm3789, %vm976
    %vm3791 = vmor %vm3788, %vm3790
    %v3792 = vsel %vm3791, %v3787, %v3783
    %v3793 = vsel %vm3791, %v973, %v99
    %3794 = vrot.lane.b32.xlu0 %v3792, 2
    %v3795 = vpop.permute.xlu0 %3794
    %3796 = vrot.lane.b32.xlu0 %v3793, 2
    %v3797 = vpop.permute.xlu0 %3796
    %vm3798 = vcmp.gt.f32.partialorder %v3795, %v3792
    %vm3799 = vcmp.eq.f32.partialorder %v3795, %v3792
    %vm3800 = vcmp.lt.s32.totalorder %v3797, %v3793
    %vm3801 = vmand %vm3799, %vm3800
    %vm3802 = vmor %vm3798, %vm3801
    %v3803 = vsel %vm3802, %v3795, %v3792
    %v3804 = vsel %vm3802, %v3797, %v3793
    %3805 = vrot.lane.b32.xlu0 %v3803, 4
    %v3806 = vpop.permute.xlu0 %3805
    %3807 = vrot.lane.b32.xlu0 %v3804, 4
    %v3808 = vpop.permute.xlu0 %3807
    %vm3809 = vcmp.gt.f32.partialorder %v3806, %v3803
    %vm3810 = vcmp.eq.f32.partialorder %v3806, %v3803
    %vm3811 = vcmp.lt.s32.totalorder %v3808, %v3804
    %vm3812 = vmand %vm3810, %vm3811
    %vm3813 = vmor %vm3809, %vm3812
    %v3814 = vsel %vm3813, %v3806, %v3803
    %v3815 = vsel %vm3813, %v3808, %v3804
    %3816 = vrot.lane.b32.xlu0 %v3814, 8
    %v3817 = vpop.permute.xlu0 %3816
    %3818 = vrot.lane.b32.xlu0 %v3815, 8
    %v3819 = vpop.permute.xlu0 %3818
    %vm3820 = vcmp.gt.f32.partialorder %v3817, %v3814
    %vm3821 = vcmp.eq.f32.partialorder %v3817, %v3814
    %vm3822 = vcmp.lt.s32.totalorder %v3819, %v3815
    %vm3823 = vmand %vm3821, %vm3822
    %vm3824 = vmor %vm3820, %vm3823
    %v3825 = vsel %vm3824, %v3817, %v3814
    %v3826 = vsel %vm3824, %v3819, %v3815
    %3827 = vrot.lane.b32.xlu0 %v3825, 16
    %v3828 = vpop.permute.xlu0 %3827
    %3829 = vrot.lane.b32.xlu0 %v3826, 16
    %v3830 = vpop.permute.xlu0 %3829
    %vm3831 = vcmp.gt.f32.partialorder %v3828, %v3825
    %vm3832 = vcmp.eq.f32.partialorder %v3828, %v3825
    %vm3833 = vcmp.lt.s32.totalorder %v3830, %v3826
    %vm3834 = vmand %vm3832, %vm3833
    %vm3835 = vmor %vm3831, %vm3834
    %v3836 = vsel %vm3835, %v3828, %v3825
    %v3837 = vsel %vm3835, %v3830, %v3826
    %3838 = vrot.lane.b32.xlu0 %v3836, 32
    %v3839 = vpop.permute.xlu0 %3838
    %3840 = vrot.lane.b32.xlu0 %v3837, 32
    %v3841 = vpop.permute.xlu0 %3840
    %vm3842 = vcmp.gt.f32.partialorder %v3839, %v3836
    %vm3843 = vcmp.eq.f32.partialorder %v3839, %v3836
    %vm3844 = vcmp.lt.s32.totalorder %v3841, %v3837
    %vm3845 = vmand %vm3843, %vm3844
    %vm3846 = vmor %vm3842, %vm3845
    %v3847 = vsel %vm3846, %v3839, %v3836
    %v3848 = vsel %vm3846, %v3841, %v3837
    %3849 = vrot.lane.b32.xlu0 %v3847, 64
    %v3850 = vpop.permute.xlu0 %3849
    %3851 = vrot.lane.b32.xlu0 %v3848, 64
    %v3852 = vpop.permute.xlu0 %3851
    %vm3853 = vcmp.gt.f32.partialorder %v3850, %v3847
    %vm3854 = vcmp.eq.f32.partialorder %v3850, %v3847
    %vm3855 = vcmp.lt.s32.totalorder %v3852, %v3848
    %vm3856 = vmand %vm3854, %vm3855
    %vm3857 = vmor %vm3853, %vm3856
    %v3858 = vsel %vm3857, %v3850, %v3847
    %v3859 = vsel %vm3857, %v3852, %v3848
    %v3860 = vsub.f32 %v3783, %v3858
    %v3861 = vmul.f32 %v3860, 1.442695
    %v3862 = vpow.pop %v3861
    %v3863 = vsel %vm1050, %v3862, 0.0
    %3864 = vadd.xlane.f32.xlu0 %v3863
    %v3865 = vpop.xlane.xlu0 %3864
    %v3866 = vlog2.pop %v3865
    %v3867 = vmul.f32 %v3866, 0.6931472
    %v3868 = vsub.f32 %v3860, %v3867
    %s3869 = scalar_lea.vmem [#allocation12], 8
    %3870 = vst [vmem:[%s3869] sm:$0x3] %v3868
    %vm3871 = vcmp.eq.s32.totalorder %v3859, 0
    %v3872 = vld [vmem:[#allocation6] ss:$8 sm:$0x7]
    %v3874 = vlaneseq
    %v3875 = vshrl.u32 %v3874, 7
    %v3876 = vsub.s32 0, %v3875
    %v3877 = vrot.slane %v3872, %v3876
    %v3878 = vlaneseq
    %v3879 = vshrl.u32 %v3878, 7
    %v3880 = vsub.s32 1, %v3879
    %v3881 = vrot.slane %v3872, %v3880
    %v3882 = vlaneseq
    %v3883 = vshrl.u32 %v3882, 7
    %v3884 = vsub.s32 2, %v3883
    %v3885 = vrot.slane %v3872, %v3884
    %v3889 = vsel %vm3871, %v3877, 0.0
    %v3890 = vsel %vm3871, %v3881, 0.0
    %v3891 = vsel %vm3871, %v3885, 0.0
    %vm3892 = vcmp.eq.s32.totalorder %v3859, 1
    %v3893 = vld [vmem:[%s326] ss:$8 sm:$0x7]
    %v3895 = vlaneseq
    %v3896 = vshrl.u32 %v3895, 7
    %v3897 = vsub.s32 0, %v3896
    %v3898 = vrot.slane %v3893, %v3897
    %v3899 = vlaneseq
    %v3900 = vshrl.u32 %v3899, 7
    %v3901 = vsub.s32 1, %v3900
    %v3902 = vrot.slane %v3893, %v3901
    %v3903 = vlaneseq
    %v3904 = vshrl.u32 %v3903, 7
    %v3905 = vsub.s32 2, %v3904
    %v3906 = vrot.slane %v3893, %v3905
    %v3910 = vsel %vm3892, %v3898, 0.0
    %v3911 = vsel %vm3892, %v3902, 0.0
    %v3912 = vsel %vm3892, %v3906, 0.0
    %vm3913 = vcmp.eq.s32.totalorder %v3859, 2
    %v3914 = vld [vmem:[%s353] ss:$8 sm:$0x7]
    %v3916 = vlaneseq
    %v3917 = vshrl.u32 %v3916, 7
    %v3918 = vsub.s32 0, %v3917
    %v3919 = vrot.slane %v3914, %v3918
    %v3920 = vlaneseq
    %v3921 = vshrl.u32 %v3920, 7
    %v3922 = vsub.s32 1, %v3921
    %v3923 = vrot.slane %v3914, %v3922
    %v3924 = vlaneseq
    %v3925 = vshrl.u32 %v3924, 7
    %v3926 = vsub.s32 2, %v3925
    %v3927 = vrot.slane %v3914, %v3926
    %v3931 = vsel %vm3913, %v3919, 0.0
    %v3932 = vsel %vm3913, %v3923, 0.0
    %v3933 = vsel %vm3913, %v3927, 0.0
    %vm3934 = vcmp.eq.s32.totalorder %v3859, 3
    %v3935 = vld [vmem:[%s380] ss:$8 sm:$0x7]
    %v3937 = vlaneseq
    %v3938 = vshrl.u32 %v3937, 7
    %v3939 = vsub.s32 0, %v3938
    %v3940 = vrot.slane %v3935, %v3939
    %v3941 = vlaneseq
    %v3942 = vshrl.u32 %v3941, 7
    %v3943 = vsub.s32 1, %v3942
    %v3944 = vrot.slane %v3935, %v3943
    %v3945 = vlaneseq
    %v3946 = vshrl.u32 %v3945, 7
    %v3947 = vsub.s32 2, %v3946
    %v3948 = vrot.slane %v3935, %v3947
    %v3952 = vsel %vm3934, %v3940, 0.0
    %v3953 = vsel %vm3934, %v3944, 0.0
    %v3954 = vsel %vm3934, %v3948, 0.0
    %vm3955 = vcmp.eq.s32.totalorder %v3859, 4
    %v3956 = vld [vmem:[%s407] ss:$8 sm:$0x7]
    %v3958 = vlaneseq
    %v3959 = vshrl.u32 %v3958, 7
    %v3960 = vsub.s32 0, %v3959
    %v3961 = vrot.slane %v3956, %v3960
    %v3962 = vlaneseq
    %v3963 = vshrl.u32 %v3962, 7
    %v3964 = vsub.s32 1, %v3963
    %v3965 = vrot.slane %v3956, %v3964
    %v3966 = vlaneseq
    %v3967 = vshrl.u32 %v3966, 7
    %v3968 = vsub.s32 2, %v3967
    %v3969 = vrot.slane %v3956, %v3968
    %v3973 = vsel %vm3955, %v3961, 0.0
    %v3974 = vsel %vm3955, %v3965, 0.0
    %v3975 = vsel %vm3955, %v3969, 0.0
    %vm3976 = vcmp.eq.s32.totalorder %v3859, 5
    %v3977 = vld [vmem:[%s434] ss:$8 sm:$0x7]
    %v3979 = vlaneseq
    %v3980 = vshrl.u32 %v3979, 7
    %v3981 = vsub.s32 0, %v3980
    %v3982 = vrot.slane %v3977, %v3981
    %v3983 = vlaneseq
    %v3984 = vshrl.u32 %v3983, 7
    %v3985 = vsub.s32 1, %v3984
    %v3986 = vrot.slane %v3977, %v3985
    %v3987 = vlaneseq
    %v3988 = vshrl.u32 %v3987, 7
    %v3989 = vsub.s32 2, %v3988
    %v3990 = vrot.slane %v3977, %v3989
    %v3994 = vsel %vm3976, %v3982, 0.0
    %v3995 = vsel %vm3976, %v3986, 0.0
    %v3996 = vsel %vm3976, %v3990, 0.0
    %vm3997 = vcmp.eq.s32.totalorder %v3859, 6
    %v3998 = vld [vmem:[%s461] ss:$8 sm:$0x7]
    %v4000 = vlaneseq
    %v4001 = vshrl.u32 %v4000, 7
    %v4002 = vsub.s32 0, %v4001
    %v4003 = vrot.slane %v3998, %v4002
    %v4004 = vlaneseq
    %v4005 = vshrl.u32 %v4004, 7
    %v4006 = vsub.s32 1, %v4005
    %v4007 = vrot.slane %v3998, %v4006
    %v4008 = vlaneseq
    %v4009 = vshrl.u32 %v4008, 7
    %v4010 = vsub.s32 2, %v4009
    %v4011 = vrot.slane %v3998, %v4010
    %v4015 = vsel %vm3997, %v4003, 0.0
    %v4016 = vsel %vm3997, %v4007, 0.0
    %v4017 = vsel %vm3997, %v4011, 0.0
    %vm4018 = vcmp.eq.s32.totalorder %v3859, 7
    %v4019 = vld [vmem:[%s488] ss:$8 sm:$0x7]
    %v4021 = vlaneseq
    %v4022 = vshrl.u32 %v4021, 7
    %v4023 = vsub.s32 0, %v4022
    %v4024 = vrot.slane %v4019, %v4023
    %v4025 = vlaneseq
    %v4026 = vshrl.u32 %v4025, 7
    %v4027 = vsub.s32 1, %v4026
    %v4028 = vrot.slane %v4019, %v4027
    %v4029 = vlaneseq
    %v4030 = vshrl.u32 %v4029, 7
    %v4031 = vsub.s32 2, %v4030
    %v4032 = vrot.slane %v4019, %v4031
    %v4036 = vsel %vm4018, %v4024, 0.0
    %v4037 = vsel %vm4018, %v4028, 0.0
    %v4038 = vsel %vm4018, %v4032, 0.0
    %vm4039 = vcmp.eq.s32.totalorder %v3859, 8
    %v4040 = vld [vmem:[%s515] ss:$8 sm:$0x7]
    %v4042 = vlaneseq
    %v4043 = vshrl.u32 %v4042, 7
    %v4044 = vsub.s32 0, %v4043
    %v4045 = vrot.slane %v4040, %v4044
    %v4046 = vlaneseq
    %v4047 = vshrl.u32 %v4046, 7
    %v4048 = vsub.s32 1, %v4047
    %v4049 = vrot.slane %v4040, %v4048
    %v4050 = vlaneseq
    %v4051 = vshrl.u32 %v4050, 7
    %v4052 = vsub.s32 2, %v4051
    %v4053 = vrot.slane %v4040, %v4052
    %v4057 = vsel %vm4039, %v4045, 0.0
    %v4058 = vsel %vm4039, %v4049, 0.0
    %v4059 = vsel %vm4039, %v4053, 0.0
    %vm4060 = vcmp.eq.s32.totalorder %v3859, 9
    %v4061 = vld [vmem:[%s542] ss:$8 sm:$0x7]
    %v4063 = vlaneseq
    %v4064 = vshrl.u32 %v4063, 7
    %v4065 = vsub.s32 0, %v4064
    %v4066 = vrot.slane %v4061, %v4065
    %v4067 = vlaneseq
    %v4068 = vshrl.u32 %v4067, 7
    %v4069 = vsub.s32 1, %v4068
    %v4070 = vrot.slane %v4061, %v4069
    %v4071 = vlaneseq
    %v4072 = vshrl.u32 %v4071, 7
    %v4073 = vsub.s32 2, %v4072
    %v4074 = vrot.slane %v4061, %v4073
    %v4078 = vsel %vm4060, %v4066, 0.0
    %v4079 = vsel %vm4060, %v4070, 0.0
    %v4080 = vsel %vm4060, %v4074, 0.0
    %vm4081 = vcmp.eq.s32.totalorder %v3859, 10
    %v4082 = vld [vmem:[%s569] ss:$8 sm:$0x7]
    %v4084 = vlaneseq
    %v4085 = vshrl.u32 %v4084, 7
    %v4086 = vsub.s32 0, %v4085
    %v4087 = vrot.slane %v4082, %v4086
    %v4088 = vlaneseq
    %v4089 = vshrl.u32 %v4088, 7
    %v4090 = vsub.s32 1, %v4089
    %v4091 = vrot.slane %v4082, %v4090
    %v4092 = vlaneseq
    %v4093 = vshrl.u32 %v4092, 7
    %v4094 = vsub.s32 2, %v4093
    %v4095 = vrot.slane %v4082, %v4094
    %v4099 = vsel %vm4081, %v4087, 0.0
    %v4100 = vsel %vm4081, %v4091, 0.0
    %v4101 = vsel %vm4081, %v4095, 0.0
    %vm4102 = vcmp.eq.s32.totalorder %v3859, 11
    %v4103 = vld [vmem:[%s596] ss:$8 sm:$0x7]
    %v4105 = vlaneseq
    %v4106 = vshrl.u32 %v4105, 7
    %v4107 = vsub.s32 0, %v4106
    %v4108 = vrot.slane %v4103, %v4107
    %v4109 = vlaneseq
    %v4110 = vshrl.u32 %v4109, 7
    %v4111 = vsub.s32 1, %v4110
    %v4112 = vrot.slane %v4103, %v4111
    %v4113 = vlaneseq
    %v4114 = vshrl.u32 %v4113, 7
    %v4115 = vsub.s32 2, %v4114
    %v4116 = vrot.slane %v4103, %v4115
    %v4120 = vsel %vm4102, %v4108, 0.0
    %v4121 = vsel %vm4102, %v4112, 0.0
    %v4122 = vsel %vm4102, %v4116, 0.0
    %v4123 = vadd.f32 %v3889, %v3910
    %v4124 = vadd.f32 %v3890, %v3911
    %v4125 = vadd.f32 %v3891, %v3912
    %v4126 = vadd.f32 %v3931, %v3952
    %v4127 = vadd.f32 %v3932, %v3953
    %v4128 = vadd.f32 %v3933, %v3954
    %v4129 = vadd.f32 %v3973, %v3994
    %v4130 = vadd.f32 %v3974, %v3995
    %v4131 = vadd.f32 %v3975, %v3996
    %v4132 = vadd.f32 %v4015, %v4036
    %v4133 = vadd.f32 %v4016, %v4037
    %v4134 = vadd.f32 %v4017, %v4038
    %v4135 = vadd.f32 %v4057, %v4078
    %v4136 = vadd.f32 %v4058, %v4079
    %v4137 = vadd.f32 %v4059, %v4080
    %v4138 = vadd.f32 %v4099, %v4120
    %v4139 = vadd.f32 %v4100, %v4121
    %v4140 = vadd.f32 %v4101, %v4122
    %v4141 = vadd.f32 %v4123, %v4126
    %v4142 = vadd.f32 %v4124, %v4127
    %v4143 = vadd.f32 %v4125, %v4128
    %v4144 = vadd.f32 %v4129, %v4132
    %v4145 = vadd.f32 %v4130, %v4133
    %v4146 = vadd.f32 %v4131, %v4134
    %v4147 = vadd.f32 %v4135, %v4138
    %v4148 = vadd.f32 %v4136, %v4139
    %v4149 = vadd.f32 %v4137, %v4140
    %v4150 = vadd.f32 %v4141, %v4144
    %v4151 = vadd.f32 %v4142, %v4145
    %v4152 = vadd.f32 %v4143, %v4146
    %v4153 = vadd.f32 %v4150, %v4147
    %v4154 = vadd.f32 %v4151, %v4148
    %v4155 = vadd.f32 %v4152, %v4149
    %v4156 = vld [vmem:[#allocation2 + $0x18] sm:$0xc]
    %v4157 = vld [vmem:[#allocation2 + $0x20] sm:$0xc]
    %v4158 = vld [vmem:[#allocation2 + $0x28] sm:$0xc]
    %v4162 = vrot.slane %v4156, 2
    %v4163 = vrot.slane %v4157, 2
    %v4164 = vrot.slane %v4158, 2
    %v4168 = vadd.f32 %v4153, %v4162
    %v4169 = vadd.f32 %v4154, %v4163
    %v4170 = vadd.f32 %v4155, %v4164
    %v4171 = vld [vmem:[#allocation9] sm:$0xff]
    %v4172 = vld [vmem:[#allocation9 + $0x8] sm:$0xff]
    %v4173 = vld [vmem:[#allocation9 + $0x10] sm:$0xff]
    %v4174 = vld [vmem:[#allocation9 + $0x18] sm:$0xff]
    %v4175 = vld [vmem:[#allocation9 + $0x20] sm:$0xff]
    %v4176 = vld [vmem:[#allocation9 + $0x28] sm:$0xff]
    %v4177 = vld [vmem:[#allocation9 + $0x30] sm:$0xff]
    %v4178 = vld [vmem:[#allocation9 + $0x38] sm:$0xff]
    %v4179 = vld [vmem:[#allocation9 + $0x40] sm:$0xff]
    %v4180 = vld [vmem:[#allocation9 + $0x48] sm:$0xff]
    %v4181 = vld [vmem:[#allocation9 + $0x50] sm:$0xff]
    %v4182 = vld [vmem:[#allocation9 + $0x58] sm:$0xff]
    %v4183 = vld [vmem:[#allocation9 + $0x60] sm:$0xff]
    %v4184 = vld [vmem:[#allocation9 + $0x68] sm:$0xff]
    %v4185 = vld [vmem:[#allocation9 + $0x70] sm:$0xff]
    %v4186 = vld [vmem:[#allocation9 + $0x78] sm:$0xff]
    %v4187 = vld [vmem:[#allocation9 + $0x80] sm:$0xff]
    %v4188 = vld [vmem:[#allocation9 + $0x88] sm:$0xff]
    %v4189 = vld [vmem:[#allocation9 + $0x90] sm:$0xff]
    %v4190 = vld [vmem:[#allocation9 + $0x98] sm:$0xff]
    %v4191 = vld [vmem:[#allocation9 + $0xa0] sm:$0xff]
    %v4192 = vld [vmem:[#allocation9 + $0xa8] sm:$0xff]
    %v4193 = vld [vmem:[#allocation9 + $0xb0] sm:$0xff]
    %v4194 = vld [vmem:[#allocation9 + $0xb8] sm:$0xff]
    %v4195 = vld [vmem:[#allocation9 + $0xc0] sm:$0xff]
    %v4196 = vld [vmem:[#allocation9 + $0xc8] sm:$0xff]
    %v4197 = vld [vmem:[#allocation9 + $0xd0] sm:$0xff]
    %v4198 = vld [vmem:[#allocation9 + $0xd8] sm:$0xff]
    %v4199 = vld [vmem:[#allocation9 + $0xe0] sm:$0xff]
    %v4200 = vld [vmem:[#allocation9 + $0xe8] sm:$0xff]
    %v4201 = vld [vmem:[#allocation9 + $0xf0] sm:$0xff]
    %v4202 = vld [vmem:[#allocation9 + $0xf8] sm:$0xff]
    %v4203 = vld [vmem:[#allocation9 + $0x100] sm:$0xff]
    %v4204 = vld [vmem:[#allocation9 + $0x108] sm:$0xff]
    %v4205 = vld [vmem:[#allocation9 + $0x110] sm:$0xff]
    %v4206 = vld [vmem:[#allocation9 + $0x118] sm:$0xff]
    %v4207 = vld [vmem:[#allocation9 + $0x120] sm:$0xff]
    %v4208 = vld [vmem:[#allocation9 + $0x128] sm:$0xff]
    %v4209 = vld [vmem:[#allocation9 + $0x130] sm:$0xff]
    %v4210 = vld [vmem:[#allocation9 + $0x138] sm:$0xff]
    %v4211 = vld [vmem:[#allocation9 + $0x140] sm:$0xff]
    %v4212 = vld [vmem:[#allocation9 + $0x148] sm:$0xff]
    %v4213 = vld [vmem:[#allocation9 + $0x150] sm:$0xff]
    %v4214 = vld [vmem:[#allocation9 + $0x158] sm:$0xff]
    %v4215 = vld [vmem:[#allocation9 + $0x160] sm:$0xff]
    %v4216 = vld [vmem:[#allocation9 + $0x168] sm:$0xff]
    %v4217 = vld [vmem:[#allocation9 + $0x170] sm:$0xff]
    %v4218 = vld [vmem:[#allocation9 + $0x178] sm:$0xff]
    %4219 = vmatprep.subr.mxu0 %v4217
    %4220 = vmatpush1.msra.mxu0 %v4216
    %4221 = vmatprep.subr.mxu0 %v4214
    %4222 = vmatpush1.msra.mxu0 %v4213
    %4223 = vmatprep.subr.mxu0 %v4211
    %4224 = vmatpush1.msra.mxu0 %v4210
    %4225 = vmatprep.subr.mxu0 %v4208
    %4226 = vmatpush1.msra.mxu0 %v4207
    %4227 = vmatprep.subr.mxu0 %v4205
    %4228 = vmatpush1.msra.mxu0 %v4204
    %4229 = vmatprep.subr.mxu0 %v4202
    %4230 = vmatpush1.msra.mxu0 %v4201
    %4231 = vmatprep.subr.mxu0 %v4199
    %4232 = vmatpush1.msra.mxu0 %v4198
    %4233 = vmatprep.subr.mxu0 %v4196
    %4234 = vmatpush1.msra.mxu0 %v4195
    %4235 = vmatprep.subr.mxu0 %v4193
    %4236 = vmatpush1.msra.mxu0 %v4192
    %4237 = vmatprep.subr.mxu0 %v4190
    %4238 = vmatpush1.msra.mxu0 %v4189
    %4239 = vmatprep.subr.mxu0 %v4187
    %4240 = vmatpush1.msra.mxu0 %v4186
    %4241 = vmatprep.subr.mxu0 %v4184
    %4242 = vmatpush1.msra.mxu0 %v4183
    %4243 = vmatprep.subr.mxu0 %v4181
    %4244 = vmatpush1.msra.mxu0 %v4180
    %4245 = vmatprep.subr.mxu0 %v4178
    %4246 = vmatpush1.msra.mxu0 %v4177
    %4247 = vmatprep.subr.mxu0 %v4175
    %4248 = vmatpush1.msra.mxu0 %v4174
    %4249 = vmatprep.subr.mxu0 %v4172
    %4250 = vmatpush1.msra.mxu0 %v4171
    %4251 = vmatprep.subr.mxu0 0.0
    %4252 = vmatpush2.msra.mxu0 0.0
    %4253 = vmatprep.subr.mxu0 0.0
    %4254 = vmatpush2.msra.mxu0 0.0
    %4255 = vmatprep.subr.mxu0 0.0
    %4256 = vmatpush2.msra.mxu0 0.0
    %4257 = vmatprep.subr.mxu0 0.0
    %4258 = vmatpush2.msra.mxu0 0.0
    %4259 = vmatprep.subr.mxu0 0.0
    %4260 = vmatpush2.msra.mxu0 0.0
    %4261 = vmatprep.subr.mxu0 0.0
    %4262 = vmatpush2.msra.mxu0 0.0
    %4263 = vmatprep.subr.mxu0 0.0
    %4264 = vmatpush2.msra.mxu0 0.0
    %4265 = vmatprep.subr.mxu0 0.0
    %4266 = vmatpush2.msra.mxu0 0.0
    %4267 = vmatprep.subr.mxu0 0.0
    %4268 = vmatpush2.msra.mxu0 0.0
    %4269 = vmatprep.subr.mxu0 0.0
    %4270 = vmatpush2.msra.mxu0 0.0
    %4271 = vmatprep.subr.mxu0 0.0
    %4272 = vmatpush2.msra.mxu0 0.0
    %4273 = vmatprep.subr.mxu0 0.0
    %4274 = vmatpush2.msra.mxu0 0.0
    %4275 = vmatprep.subr.mxu0 0.0
    %4276 = vmatpush2.msra.mxu0 0.0
    %4277 = vmatprep.subr.mxu0 0.0
    %4278 = vmatpush2.msra.mxu0 0.0
    %4279 = vmatprep.subr.mxu0 0.0
    %4280 = vmatpush2.msra.mxu0 0.0
    %4281 = vmatprep.subr.mxu0 0.0
    %4282 = vmatpush2.msra.mxu0 0.0
    %4283 = vmatprep.mubr.f32.mxu0 0.0
    %4284 = vmatmul.mubr.f32.gmra.mxu0 %v3699
    %v4285 = vpop.f32.mrf.mxu0
    %v4286 = vadd.f32 0.0, %v4285
    %v4287 = vpop.f32.mrf.mxu0
    %v4288 = vadd.f32 0.0, %v4287
    %4289 = vdwg.mxu0
    %4290 = vmatprep.subr.mxu0 0.0
    %4291 = vmatpush1.msra.mxu0 %v4218
    %4292 = vmatprep.subr.mxu0 0.0
    %4293 = vmatpush1.msra.mxu0 %v4215
    %4294 = vmatprep.subr.mxu0 0.0
    %4295 = vmatpush1.msra.mxu0 %v4212
    %4296 = vmatprep.subr.mxu0 0.0
    %4297 = vmatpush1.msra.mxu0 %v4209
    %4298 = vmatprep.subr.mxu0 0.0
    %4299 = vmatpush1.msra.mxu0 %v4206
    %4300 = vmatprep.subr.mxu0 0.0
    %4301 = vmatpush1.msra.mxu0 %v4203
    %4302 = vmatprep.subr.mxu0 0.0
    %4303 = vmatpush1.msra.mxu0 %v4200
    %4304 = vmatprep.subr.mxu0 0.0
    %4305 = vmatpush1.msra.mxu0 %v4197
    %4306 = vmatprep.subr.mxu0 0.0
    %4307 = vmatpush1.msra.mxu0 %v4194
    %4308 = vmatprep.subr.mxu0 0.0
    %4309 = vmatpush1.msra.mxu0 %v4191
    %4310 = vmatprep.subr.mxu0 0.0
    %4311 = vmatpush1.msra.mxu0 %v4188
    %4312 = vmatprep.subr.mxu0 0.0
    %4313 = vmatpush1.msra.mxu0 %v4185
    %4314 = vmatprep.subr.mxu0 0.0
    %4315 = vmatpush1.msra.mxu0 %v4182
    %4316 = vmatprep.subr.mxu0 0.0
    %4317 = vmatpush1.msra.mxu0 %v4179
    %4318 = vmatprep.subr.mxu0 0.0
    %4319 = vmatpush1.msra.mxu0 %v4176
    %4320 = vmatprep.subr.mxu0 0.0
    %4321 = vmatpush1.msra.mxu0 %v4173
    %4322 = vmatprep.subr.mxu0 0.0
    %4323 = vmatpush2.msra.mxu0 0.0
    %4324 = vmatprep.subr.mxu0 0.0
    %4325 = vmatpush2.msra.mxu0 0.0
    %4326 = vmatprep.subr.mxu0 0.0
    %4327 = vmatpush2.msra.mxu0 0.0
    %4328 = vmatprep.subr.mxu0 0.0
    %4329 = vmatpush2.msra.mxu0 0.0
    %4330 = vmatprep.subr.mxu0 0.0
    %4331 = vmatpush2.msra.mxu0 0.0
    %4332 = vmatprep.subr.mxu0 0.0
    %4333 = vmatpush2.msra.mxu0 0.0
    %4334 = vmatprep.subr.mxu0 0.0
    %4335 = vmatpush2.msra.mxu0 0.0
    %4336 = vmatprep.subr.mxu0 0.0
    %4337 = vmatpush2.msra.mxu0 0.0
    %4338 = vmatprep.subr.mxu0 0.0
    %4339 = vmatpush2.msra.mxu0 0.0
    %4340 = vmatprep.subr.mxu0 0.0
    %4341 = vmatpush2.msra.mxu0 0.0
    %4342 = vmatprep.subr.mxu0 0.0
    %4343 = vmatpush2.msra.mxu0 0.0
    %4344 = vmatprep.subr.mxu0 0.0
    %4345 = vmatpush2.msra.mxu0 0.0
    %4346 = vmatprep.subr.mxu0 0.0
    %4347 = vmatpush2.msra.mxu0 0.0
    %4348 = vmatprep.subr.mxu0 0.0
    %4349 = vmatpush2.msra.mxu0 0.0
    %4350 = vmatprep.subr.mxu0 0.0
    %4351 = vmatpush2.msra.mxu0 0.0
    %4352 = vmatprep.subr.mxu0 0.0
    %4353 = vmatpush2.msra.mxu0 0.0
    %4354 = vmatprep.mubr.f32.mxu0 0.0
    %4355 = vmatmul.mubr.f32.gmra.mxu0 %v3699
    %v4356 = vpop.f32.mrf.mxu0
    %v4357 = vadd.f32 0.0, %v4356
    %v4358 = vpop.f32.mrf.mxu0
    %4359 = vdwg.mxu0
    %v4360 = vadd.f32 %v4168, %v4286
    %v4361 = vxor.u32 %v4360, 2147483648
    %v4362 = vmul.f32 %v4361, 1.442695
    %v4363 = vpow.pop %v4362
    %v4364 = vadd.f32 %v4363, 1.0
    %v4365 = vrcp.pop %v4364
    %v4366 = vmul.f32 1.0, %v4365
    %v4367 = vadd.f32 %v4169, %v4288
    %v4368 = vxor.u32 %v4367, 2147483648
    %v4369 = vmul.f32 %v4368, 1.442695
    %v4370 = vpow.pop %v4369
    %v4371 = vadd.f32 %v4370, 1.0
    %v4372 = vrcp.pop %v4371
    %v4373 = vmul.f32 1.0, %v4372
    %v4374 = vadd.f32 %v4357, %v868
    %v4375 = vmul.f32 %v4366, %v4374
    %v4376 = vadd.f32 %v4170, %v4375
    %v4377 = vtanh.pop %v4376
    %v4378 = vsub.f32 1.0, %v4373
    %v4379 = vmul.f32 %v4378, %v4377
    %v4380 = vmul.f32 %v4373, %v3699
    %v4381 = vadd.f32 %v4379, %v4380
    %v4382 = vld [vmem:[#allocation11] sm:$0xff]
    %v4383 = vld [vmem:[#allocation11 + $0x10] sm:$0xff]
    %v4384 = vld [vmem:[#allocation11 + $0x20] sm:$0xff]
    %v4385 = vld [vmem:[#allocation11 + $0x30] sm:$0xff]
    %v4386 = vld [vmem:[#allocation11 + $0x40] sm:$0xff]
    %v4387 = vld [vmem:[#allocation11 + $0x50] sm:$0xff]
    %v4388 = vld [vmem:[#allocation11 + $0x60] sm:$0xff]
    %v4389 = vld [vmem:[#allocation11 + $0x70] sm:$0xff]
    %v4390 = vld [vmem:[#allocation11 + $0x80] sm:$0xff]
    %v4391 = vld [vmem:[#allocation11 + $0x90] sm:$0xff]
    %v4392 = vld [vmem:[#allocation11 + $0xa0] sm:$0xff]
    %v4393 = vld [vmem:[#allocation11 + $0xb0] sm:$0xff]
    %v4394 = vld [vmem:[#allocation11 + $0xc0] sm:$0xff]
    %v4395 = vld [vmem:[#allocation11 + $0xd0] sm:$0xff]
    %v4396 = vld [vmem:[#allocation11 + $0xe0] sm:$0xff]
    %v4397 = vld [vmem:[#allocation11 + $0xf0] sm:$0xff]
    %4398 = vmatprep.subr.mxu0 0.0
    %4399 = vmatpush1.msra.mxu0 %v4397
    %4400 = vmatprep.subr.mxu0 0.0
    %4401 = vmatpush1.msra.mxu0 %v4396
    %4402 = vmatprep.subr.mxu0 0.0
    %4403 = vmatpush1.msra.mxu0 %v4395
    %4404 = vmatprep.subr.mxu0 0.0
    %4405 = vmatpush1.msra.mxu0 %v4394
    %4406 = vmatprep.subr.mxu0 0.0
    %4407 = vmatpush1.msra.mxu0 %v4393
    %4408 = vmatprep.subr.mxu0 0.0
    %4409 = vmatpush1.msra.mxu0 %v4392
    %4410 = vmatprep.subr.mxu0 0.0
    %4411 = vmatpush1.msra.mxu0 %v4391
    %4412 = vmatprep.subr.mxu0 0.0
    %4413 = vmatpush1.msra.mxu0 %v4390
    %4414 = vmatprep.subr.mxu0 0.0
    %4415 = vmatpush1.msra.mxu0 %v4389
    %4416 = vmatprep.subr.mxu0 0.0
    %4417 = vmatpush1.msra.mxu0 %v4388
    %4418 = vmatprep.subr.mxu0 0.0
    %4419 = vmatpush1.msra.mxu0 %v4387
    %4420 = vmatprep.subr.mxu0 0.0
    %4421 = vmatpush1.msra.mxu0 %v4386
    %4422 = vmatprep.subr.mxu0 0.0
    %4423 = vmatpush1.msra.mxu0 %v4385
    %4424 = vmatprep.subr.mxu0 0.0
    %4425 = vmatpush1.msra.mxu0 %v4384
    %4426 = vmatprep.subr.mxu0 0.0
    %4427 = vmatpush1.msra.mxu0 %v4383
    %4428 = vmatprep.subr.mxu0 0.0
    %4429 = vmatpush1.msra.mxu0 %v4382
    %4430 = vmatprep.subr.mxu0 0.0
    %4431 = vmatpush2.msra.mxu0 0.0
    %4432 = vmatprep.subr.mxu0 0.0
    %4433 = vmatpush2.msra.mxu0 0.0
    %4434 = vmatprep.subr.mxu0 0.0
    %4435 = vmatpush2.msra.mxu0 0.0
    %4436 = vmatprep.subr.mxu0 0.0
    %4437 = vmatpush2.msra.mxu0 0.0
    %4438 = vmatprep.subr.mxu0 0.0
    %4439 = vmatpush2.msra.mxu0 0.0
    %4440 = vmatprep.subr.mxu0 0.0
    %4441 = vmatpush2.msra.mxu0 0.0
    %4442 = vmatprep.subr.mxu0 0.0
    %4443 = vmatpush2.msra.mxu0 0.0
    %4444 = vmatprep.subr.mxu0 0.0
    %4445 = vmatpush2.msra.mxu0 0.0
    %4446 = vmatprep.subr.mxu0 0.0
    %4447 = vmatpush2.msra.mxu0 0.0
    %4448 = vmatprep.subr.mxu0 0.0
    %4449 = vmatpush2.msra.mxu0 0.0
    %4450 = vmatprep.subr.mxu0 0.0
    %4451 = vmatpush2.msra.mxu0 0.0
    %4452 = vmatprep.subr.mxu0 0.0
    %4453 = vmatpush2.msra.mxu0 0.0
    %4454 = vmatprep.subr.mxu0 0.0
    %4455 = vmatpush2.msra.mxu0 0.0
    %4456 = vmatprep.subr.mxu0 0.0
    %4457 = vmatpush2.msra.mxu0 0.0
    %4458 = vmatprep.subr.mxu0 0.0
    %4459 = vmatpush2.msra.mxu0 0.0
    %4460 = vmatprep.subr.mxu0 0.0
    %4461 = vmatpush2.msra.mxu0 0.0
    %4462 = vmatprep.mubr.f32.mxu0 0.0
    %4463 = vmatmul.mubr.f32.gmra.mxu0 %v4381
    %v4464 = vpop.f32.mrf.mxu0
    %v4465 = vadd.f32 %v898, %v4464
    %v4466 = vpop.f32.mrf.mxu0
    %4467 = vdwg.mxu0
    %4468 = vrot.lane.b32.xlu0 %v4465, 1
    %v4469 = vpop.permute.xlu0 %4468
    %vm4470 = vcmp.gt.f32.partialorder %v4469, %v4465
    %vm4471 = vcmp.eq.f32.partialorder %v4469, %v4465
    %vm4472 = vmand %vm4471, %vm976
    %vm4473 = vmor %vm4470, %vm4472
    %v4474 = vsel %vm4473, %v4469, %v4465
    %v4475 = vsel %vm4473, %v973, %v99
    %4476 = vrot.lane.b32.xlu0 %v4474, 2
    %v4477 = vpop.permute.xlu0 %4476
    %4478 = vrot.lane.b32.xlu0 %v4475, 2
    %v4479 = vpop.permute.xlu0 %4478
    %vm4480 = vcmp.gt.f32.partialorder %v4477, %v4474
    %vm4481 = vcmp.eq.f32.partialorder %v4477, %v4474
    %vm4482 = vcmp.lt.s32.totalorder %v4479, %v4475
    %vm4483 = vmand %vm4481, %vm4482
    %vm4484 = vmor %vm4480, %vm4483
    %v4485 = vsel %vm4484, %v4477, %v4474
    %v4486 = vsel %vm4484, %v4479, %v4475
    %4487 = vrot.lane.b32.xlu0 %v4485, 4
    %v4488 = vpop.permute.xlu0 %4487
    %4489 = vrot.lane.b32.xlu0 %v4486, 4
    %v4490 = vpop.permute.xlu0 %4489
    %vm4491 = vcmp.gt.f32.partialorder %v4488, %v4485
    %vm4492 = vcmp.eq.f32.partialorder %v4488, %v4485
    %vm4493 = vcmp.lt.s32.totalorder %v4490, %v4486
    %vm4494 = vmand %vm4492, %vm4493
    %vm4495 = vmor %vm4491, %vm4494
    %v4496 = vsel %vm4495, %v4488, %v4485
    %v4497 = vsel %vm4495, %v4490, %v4486
    %4498 = vrot.lane.b32.xlu0 %v4496, 8
    %v4499 = vpop.permute.xlu0 %4498
    %4500 = vrot.lane.b32.xlu0 %v4497, 8
    %v4501 = vpop.permute.xlu0 %4500
    %vm4502 = vcmp.gt.f32.partialorder %v4499, %v4496
    %vm4503 = vcmp.eq.f32.partialorder %v4499, %v4496
    %vm4504 = vcmp.lt.s32.totalorder %v4501, %v4497
    %vm4505 = vmand %vm4503, %vm4504
    %vm4506 = vmor %vm4502, %vm4505
    %v4507 = vsel %vm4506, %v4499, %v4496
    %v4508 = vsel %vm4506, %v4501, %v4497
    %4509 = vrot.lane.b32.xlu0 %v4507, 16
    %v4510 = vpop.permute.xlu0 %4509
    %4511 = vrot.lane.b32.xlu0 %v4508, 16
    %v4512 = vpop.permute.xlu0 %4511
    %vm4513 = vcmp.gt.f32.partialorder %v4510, %v4507
    %vm4514 = vcmp.eq.f32.partialorder %v4510, %v4507
    %vm4515 = vcmp.lt.s32.totalorder %v4512, %v4508
    %vm4516 = vmand %vm4514, %vm4515
    %vm4517 = vmor %vm4513, %vm4516
    %v4518 = vsel %vm4517, %v4510, %v4507
    %v4519 = vsel %vm4517, %v4512, %v4508
    %4520 = vrot.lane.b32.xlu0 %v4518, 32
    %v4521 = vpop.permute.xlu0 %4520
    %4522 = vrot.lane.b32.xlu0 %v4519, 32
    %v4523 = vpop.permute.xlu0 %4522
    %vm4524 = vcmp.gt.f32.partialorder %v4521, %v4518
    %vm4525 = vcmp.eq.f32.partialorder %v4521, %v4518
    %vm4526 = vcmp.lt.s32.totalorder %v4523, %v4519
    %vm4527 = vmand %vm4525, %vm4526
    %vm4528 = vmor %vm4524, %vm4527
    %v4529 = vsel %vm4528, %v4521, %v4518
    %v4530 = vsel %vm4528, %v4523, %v4519
    %4531 = vrot.lane.b32.xlu0 %v4529, 64
    %v4532 = vpop.permute.xlu0 %4531
    %4533 = vrot.lane.b32.xlu0 %v4530, 64
    %v4534 = vpop.permute.xlu0 %4533
    %vm4535 = vcmp.gt.f32.partialorder %v4532, %v4529
    %vm4536 = vcmp.eq.f32.partialorder %v4532, %v4529
    %vm4537 = vcmp.lt.s32.totalorder %v4534, %v4530
    %vm4538 = vmand %vm4536, %vm4537
    %vm4539 = vmor %vm4535, %vm4538
    %v4540 = vsel %vm4539, %v4532, %v4529
    %v4541 = vsel %vm4539, %v4534, %v4530
    %v4542 = vsub.f32 %v4465, %v4540
    %v4543 = vmul.f32 %v4542, 1.442695
    %v4544 = vpow.pop %v4543
    %v4545 = vsel %vm1050, %v4544, 0.0
    %4546 = vadd.xlane.f32.xlu0 %v4545
    %v4547 = vpop.xlane.xlu0 %4546
    %v4548 = vlog2.pop %v4547
    %v4549 = vmul.f32 %v4548, 0.6931472
    %v4550 = vsub.f32 %v4542, %v4549
    %s4551 = scalar_lea.vmem [#allocation12], 10
    %4552 = vst [vmem:[%s4551] sm:$0x3] %v4550
    %vm4553 = vcmp.eq.s32.totalorder %v4541, 0
    %v4554 = vld [vmem:[#allocation6] ss:$8 sm:$0x7]
    %v4556 = vlaneseq
    %v4557 = vshrl.u32 %v4556, 7
    %v4558 = vsub.s32 0, %v4557
    %v4559 = vrot.slane %v4554, %v4558
    %v4560 = vlaneseq
    %v4561 = vshrl.u32 %v4560, 7
    %v4562 = vsub.s32 1, %v4561
    %v4563 = vrot.slane %v4554, %v4562
    %v4564 = vlaneseq
    %v4565 = vshrl.u32 %v4564, 7
    %v4566 = vsub.s32 2, %v4565
    %v4567 = vrot.slane %v4554, %v4566
    %v4571 = vsel %vm4553, %v4559, 0.0
    %v4572 = vsel %vm4553, %v4563, 0.0
    %v4573 = vsel %vm4553, %v4567, 0.0
    %vm4574 = vcmp.eq.s32.totalorder %v4541, 1
    %v4575 = vld [vmem:[%s326] ss:$8 sm:$0x7]
    %v4577 = vlaneseq
    %v4578 = vshrl.u32 %v4577, 7
    %v4579 = vsub.s32 0, %v4578
    %v4580 = vrot.slane %v4575, %v4579
    %v4581 = vlaneseq
    %v4582 = vshrl.u32 %v4581, 7
    %v4583 = vsub.s32 1, %v4582
    %v4584 = vrot.slane %v4575, %v4583
    %v4585 = vlaneseq
    %v4586 = vshrl.u32 %v4585, 7
    %v4587 = vsub.s32 2, %v4586
    %v4588 = vrot.slane %v4575, %v4587
    %v4592 = vsel %vm4574, %v4580, 0.0
    %v4593 = vsel %vm4574, %v4584, 0.0
    %v4594 = vsel %vm4574, %v4588, 0.0
    %vm4595 = vcmp.eq.s32.totalorder %v4541, 2
    %v4596 = vld [vmem:[%s353] ss:$8 sm:$0x7]
    %v4598 = vlaneseq
    %v4599 = vshrl.u32 %v4598, 7
    %v4600 = vsub.s32 0, %v4599
    %v4601 = vrot.slane %v4596, %v4600
    %v4602 = vlaneseq
    %v4603 = vshrl.u32 %v4602, 7
    %v4604 = vsub.s32 1, %v4603
    %v4605 = vrot.slane %v4596, %v4604
    %v4606 = vlaneseq
    %v4607 = vshrl.u32 %v4606, 7
    %v4608 = vsub.s32 2, %v4607
    %v4609 = vrot.slane %v4596, %v4608
    %v4613 = vsel %vm4595, %v4601, 0.0
    %v4614 = vsel %vm4595, %v4605, 0.0
    %v4615 = vsel %vm4595, %v4609, 0.0
    %vm4616 = vcmp.eq.s32.totalorder %v4541, 3
    %v4617 = vld [vmem:[%s380] ss:$8 sm:$0x7]
    %v4619 = vlaneseq
    %v4620 = vshrl.u32 %v4619, 7
    %v4621 = vsub.s32 0, %v4620
    %v4622 = vrot.slane %v4617, %v4621
    %v4623 = vlaneseq
    %v4624 = vshrl.u32 %v4623, 7
    %v4625 = vsub.s32 1, %v4624
    %v4626 = vrot.slane %v4617, %v4625
    %v4627 = vlaneseq
    %v4628 = vshrl.u32 %v4627, 7
    %v4629 = vsub.s32 2, %v4628
    %v4630 = vrot.slane %v4617, %v4629
    %v4634 = vsel %vm4616, %v4622, 0.0
    %v4635 = vsel %vm4616, %v4626, 0.0
    %v4636 = vsel %vm4616, %v4630, 0.0
    %vm4637 = vcmp.eq.s32.totalorder %v4541, 4
    %v4638 = vld [vmem:[%s407] ss:$8 sm:$0x7]
    %v4640 = vlaneseq
    %v4641 = vshrl.u32 %v4640, 7
    %v4642 = vsub.s32 0, %v4641
    %v4643 = vrot.slane %v4638, %v4642
    %v4644 = vlaneseq
    %v4645 = vshrl.u32 %v4644, 7
    %v4646 = vsub.s32 1, %v4645
    %v4647 = vrot.slane %v4638, %v4646
    %v4648 = vlaneseq
    %v4649 = vshrl.u32 %v4648, 7
    %v4650 = vsub.s32 2, %v4649
    %v4651 = vrot.slane %v4638, %v4650
    %v4655 = vsel %vm4637, %v4643, 0.0
    %v4656 = vsel %vm4637, %v4647, 0.0
    %v4657 = vsel %vm4637, %v4651, 0.0
    %vm4658 = vcmp.eq.s32.totalorder %v4541, 5
    %v4659 = vld [vmem:[%s434] ss:$8 sm:$0x7]
    %v4661 = vlaneseq
    %v4662 = vshrl.u32 %v4661, 7
    %v4663 = vsub.s32 0, %v4662
    %v4664 = vrot.slane %v4659, %v4663
    %v4665 = vlaneseq
    %v4666 = vshrl.u32 %v4665, 7
    %v4667 = vsub.s32 1, %v4666
    %v4668 = vrot.slane %v4659, %v4667
    %v4669 = vlaneseq
    %v4670 = vshrl.u32 %v4669, 7
    %v4671 = vsub.s32 2, %v4670
    %v4672 = vrot.slane %v4659, %v4671
    %v4676 = vsel %vm4658, %v4664, 0.0
    %v4677 = vsel %vm4658, %v4668, 0.0
    %v4678 = vsel %vm4658, %v4672, 0.0
    %vm4679 = vcmp.eq.s32.totalorder %v4541, 6
    %v4680 = vld [vmem:[%s461] ss:$8 sm:$0x7]
    %v4682 = vlaneseq
    %v4683 = vshrl.u32 %v4682, 7
    %v4684 = vsub.s32 0, %v4683
    %v4685 = vrot.slane %v4680, %v4684
    %v4686 = vlaneseq
    %v4687 = vshrl.u32 %v4686, 7
    %v4688 = vsub.s32 1, %v4687
    %v4689 = vrot.slane %v4680, %v4688
    %v4690 = vlaneseq
    %v4691 = vshrl.u32 %v4690, 7
    %v4692 = vsub.s32 2, %v4691
    %v4693 = vrot.slane %v4680, %v4692
    %v4697 = vsel %vm4679, %v4685, 0.0
    %v4698 = vsel %vm4679, %v4689, 0.0
    %v4699 = vsel %vm4679, %v4693, 0.0
    %vm4700 = vcmp.eq.s32.totalorder %v4541, 7
    %v4701 = vld [vmem:[%s488] ss:$8 sm:$0x7]
    %v4703 = vlaneseq
    %v4704 = vshrl.u32 %v4703, 7
    %v4705 = vsub.s32 0, %v4704
    %v4706 = vrot.slane %v4701, %v4705
    %v4707 = vlaneseq
    %v4708 = vshrl.u32 %v4707, 7
    %v4709 = vsub.s32 1, %v4708
    %v4710 = vrot.slane %v4701, %v4709
    %v4711 = vlaneseq
    %v4712 = vshrl.u32 %v4711, 7
    %v4713 = vsub.s32 2, %v4712
    %v4714 = vrot.slane %v4701, %v4713
    %v4718 = vsel %vm4700, %v4706, 0.0
    %v4719 = vsel %vm4700, %v4710, 0.0
    %v4720 = vsel %vm4700, %v4714, 0.0
    %vm4721 = vcmp.eq.s32.totalorder %v4541, 8
    %v4722 = vld [vmem:[%s515] ss:$8 sm:$0x7]
    %v4724 = vlaneseq
    %v4725 = vshrl.u32 %v4724, 7
    %v4726 = vsub.s32 0, %v4725
    %v4727 = vrot.slane %v4722, %v4726
    %v4728 = vlaneseq
    %v4729 = vshrl.u32 %v4728, 7
    %v4730 = vsub.s32 1, %v4729
    %v4731 = vrot.slane %v4722, %v4730
    %v4732 = vlaneseq
    %v4733 = vshrl.u32 %v4732, 7
    %v4734 = vsub.s32 2, %v4733
    %v4735 = vrot.slane %v4722, %v4734
    %v4739 = vsel %vm4721, %v4727, 0.0
    %v4740 = vsel %vm4721, %v4731, 0.0
    %v4741 = vsel %vm4721, %v4735, 0.0
    %vm4742 = vcmp.eq.s32.totalorder %v4541, 9
    %v4743 = vld [vmem:[%s542] ss:$8 sm:$0x7]
    %v4745 = vlaneseq
    %v4746 = vshrl.u32 %v4745, 7
    %v4747 = vsub.s32 0, %v4746
    %v4748 = vrot.slane %v4743, %v4747
    %v4749 = vlaneseq
    %v4750 = vshrl.u32 %v4749, 7
    %v4751 = vsub.s32 1, %v4750
    %v4752 = vrot.slane %v4743, %v4751
    %v4753 = vlaneseq
    %v4754 = vshrl.u32 %v4753, 7
    %v4755 = vsub.s32 2, %v4754
    %v4756 = vrot.slane %v4743, %v4755
    %v4760 = vsel %vm4742, %v4748, 0.0
    %v4761 = vsel %vm4742, %v4752, 0.0
    %v4762 = vsel %vm4742, %v4756, 0.0
    %vm4763 = vcmp.eq.s32.totalorder %v4541, 10
    %v4764 = vld [vmem:[%s569] ss:$8 sm:$0x7]
    %v4766 = vlaneseq
    %v4767 = vshrl.u32 %v4766, 7
    %v4768 = vsub.s32 0, %v4767
    %v4769 = vrot.slane %v4764, %v4768
    %v4770 = vlaneseq
    %v4771 = vshrl.u32 %v4770, 7
    %v4772 = vsub.s32 1, %v4771
    %v4773 = vrot.slane %v4764, %v4772
    %v4774 = vlaneseq
    %v4775 = vshrl.u32 %v4774, 7
    %v4776 = vsub.s32 2, %v4775
    %v4777 = vrot.slane %v4764, %v4776
    %v4781 = vsel %vm4763, %v4769, 0.0
    %v4782 = vsel %vm4763, %v4773, 0.0
    %v4783 = vsel %vm4763, %v4777, 0.0
    %vm4784 = vcmp.eq.s32.totalorder %v4541, 11
    %v4785 = vld [vmem:[%s596] ss:$8 sm:$0x7]
    %v4787 = vlaneseq
    %v4788 = vshrl.u32 %v4787, 7
    %v4789 = vsub.s32 0, %v4788
    %v4790 = vrot.slane %v4785, %v4789
    %v4791 = vlaneseq
    %v4792 = vshrl.u32 %v4791, 7
    %v4793 = vsub.s32 1, %v4792
    %v4794 = vrot.slane %v4785, %v4793
    %v4795 = vlaneseq
    %v4796 = vshrl.u32 %v4795, 7
    %v4797 = vsub.s32 2, %v4796
    %v4798 = vrot.slane %v4785, %v4797
    %v4802 = vsel %vm4784, %v4790, 0.0
    %v4803 = vsel %vm4784, %v4794, 0.0
    %v4804 = vsel %vm4784, %v4798, 0.0
    %v4805 = vadd.f32 %v4571, %v4592
    %v4806 = vadd.f32 %v4572, %v4593
    %v4807 = vadd.f32 %v4573, %v4594
    %v4808 = vadd.f32 %v4613, %v4634
    %v4809 = vadd.f32 %v4614, %v4635
    %v4810 = vadd.f32 %v4615, %v4636
    %v4811 = vadd.f32 %v4655, %v4676
    %v4812 = vadd.f32 %v4656, %v4677
    %v4813 = vadd.f32 %v4657, %v4678
    %v4814 = vadd.f32 %v4697, %v4718
    %v4815 = vadd.f32 %v4698, %v4719
    %v4816 = vadd.f32 %v4699, %v4720
    %v4817 = vadd.f32 %v4739, %v4760
    %v4818 = vadd.f32 %v4740, %v4761
    %v4819 = vadd.f32 %v4741, %v4762
    %v4820 = vadd.f32 %v4781, %v4802
    %v4821 = vadd.f32 %v4782, %v4803
    %v4822 = vadd.f32 %v4783, %v4804
    %v4823 = vadd.f32 %v4805, %v4808
    %v4824 = vadd.f32 %v4806, %v4809
    %v4825 = vadd.f32 %v4807, %v4810
    %v4826 = vadd.f32 %v4811, %v4814
    %v4827 = vadd.f32 %v4812, %v4815
    %v4828 = vadd.f32 %v4813, %v4816
    %v4829 = vadd.f32 %v4817, %v4820
    %v4830 = vadd.f32 %v4818, %v4821
    %v4831 = vadd.f32 %v4819, %v4822
    %v4832 = vadd.f32 %v4823, %v4826
    %v4833 = vadd.f32 %v4824, %v4827
    %v4834 = vadd.f32 %v4825, %v4828
    %v4835 = vadd.f32 %v4832, %v4829
    %v4836 = vadd.f32 %v4833, %v4830
    %v4837 = vadd.f32 %v4834, %v4831
    %v4838 = vld [vmem:[#allocation2 + $0x18] sm:$0x30]
    %v4839 = vld [vmem:[#allocation2 + $0x20] sm:$0x30]
    %v4840 = vld [vmem:[#allocation2 + $0x28] sm:$0x30]
    %v4844 = vrot.slane %v4838, 4
    %v4845 = vrot.slane %v4839, 4
    %v4846 = vrot.slane %v4840, 4
    %v4850 = vadd.f32 %v4835, %v4844
    %v4851 = vadd.f32 %v4836, %v4845
    %v4852 = vadd.f32 %v4837, %v4846
    %v4853 = vld [vmem:[#allocation9] sm:$0xff]
    %v4854 = vld [vmem:[#allocation9 + $0x8] sm:$0xff]
    %v4855 = vld [vmem:[#allocation9 + $0x10] sm:$0xff]
    %v4856 = vld [vmem:[#allocation9 + $0x18] sm:$0xff]
    %v4857 = vld [vmem:[#allocation9 + $0x20] sm:$0xff]
    %v4858 = vld [vmem:[#allocation9 + $0x28] sm:$0xff]
    %v4859 = vld [vmem:[#allocation9 + $0x30] sm:$0xff]
    %v4860 = vld [vmem:[#allocation9 + $0x38] sm:$0xff]
    %v4861 = vld [vmem:[#allocation9 + $0x40] sm:$0xff]
    %v4862 = vld [vmem:[#allocation9 + $0x48] sm:$0xff]
    %v4863 = vld [vmem:[#allocation9 + $0x50] sm:$0xff]
    %v4864 = vld [vmem:[#allocation9 + $0x58] sm:$0xff]
    %v4865 = vld [vmem:[#allocation9 + $0x60] sm:$0xff]
    %v4866 = vld [vmem:[#allocation9 + $0x68] sm:$0xff]
    %v4867 = vld [vmem:[#allocation9 + $0x70] sm:$0xff]
    %v4868 = vld [vmem:[#allocation9 + $0x78] sm:$0xff]
    %v4869 = vld [vmem:[#allocation9 + $0x80] sm:$0xff]
    %v4870 = vld [vmem:[#allocation9 + $0x88] sm:$0xff]
    %v4871 = vld [vmem:[#allocation9 + $0x90] sm:$0xff]
    %v4872 = vld [vmem:[#allocation9 + $0x98] sm:$0xff]
    %v4873 = vld [vmem:[#allocation9 + $0xa0] sm:$0xff]
    %v4874 = vld [vmem:[#allocation9 + $0xa8] sm:$0xff]
    %v4875 = vld [vmem:[#allocation9 + $0xb0] sm:$0xff]
    %v4876 = vld [vmem:[#allocation9 + $0xb8] sm:$0xff]
    %v4877 = vld [vmem:[#allocation9 + $0xc0] sm:$0xff]
    %v4878 = vld [vmem:[#allocation9 + $0xc8] sm:$0xff]
    %v4879 = vld [vmem:[#allocation9 + $0xd0] sm:$0xff]
    %v4880 = vld [vmem:[#allocation9 + $0xd8] sm:$0xff]
    %v4881 = vld [vmem:[#allocation9 + $0xe0] sm:$0xff]
    %v4882 = vld [vmem:[#allocation9 + $0xe8] sm:$0xff]
    %v4883 = vld [vmem:[#allocation9 + $0xf0] sm:$0xff]
    %v4884 = vld [vmem:[#allocation9 + $0xf8] sm:$0xff]
    %v4885 = vld [vmem:[#allocation9 + $0x100] sm:$0xff]
    %v4886 = vld [vmem:[#allocation9 + $0x108] sm:$0xff]
    %v4887 = vld [vmem:[#allocation9 + $0x110] sm:$0xff]
    %v4888 = vld [vmem:[#allocation9 + $0x118] sm:$0xff]
    %v4889 = vld [vmem:[#allocation9 + $0x120] sm:$0xff]
    %v4890 = vld [vmem:[#allocation9 + $0x128] sm:$0xff]
    %v4891 = vld [vmem:[#allocation9 + $0x130] sm:$0xff]
    %v4892 = vld [vmem:[#allocation9 + $0x138] sm:$0xff]
    %v4893 = vld [vmem:[#allocation9 + $0x140] sm:$0xff]
    %v4894 = vld [vmem:[#allocation9 + $0x148] sm:$0xff]
    %v4895 = vld [vmem:[#allocation9 + $0x150] sm:$0xff]
    %v4896 = vld [vmem:[#allocation9 + $0x158] sm:$0xff]
    %v4897 = vld [vmem:[#allocation9 + $0x160] sm:$0xff]
    %v4898 = vld [vmem:[#allocation9 + $0x168] sm:$0xff]
    %v4899 = vld [vmem:[#allocation9 + $0x170] sm:$0xff]
    %v4900 = vld [vmem:[#allocation9 + $0x178] sm:$0xff]
    %4901 = vmatprep.subr.mxu0 %v4899
    %4902 = vmatpush1.msra.mxu0 %v4898
    %4903 = vmatprep.subr.mxu0 %v4896
    %4904 = vmatpush1.msra.mxu0 %v4895
    %4905 = vmatprep.subr.mxu0 %v4893
    %4906 = vmatpush1.msra.mxu0 %v4892
    %4907 = vmatprep.subr.mxu0 %v4890
    %4908 = vmatpush1.msra.mxu0 %v4889
    %4909 = vmatprep.subr.mxu0 %v4887
    %4910 = vmatpush1.msra.mxu0 %v4886
    %4911 = vmatprep.subr.mxu0 %v4884
    %4912 = vmatpush1.msra.mxu0 %v4883
    %4913 = vmatprep.subr.mxu0 %v4881
    %4914 = vmatpush1.msra.mxu0 %v4880
    %4915 = vmatprep.subr.mxu0 %v4878
    %4916 = vmatpush1.msra.mxu0 %v4877
    %4917 = vmatprep.subr.mxu0 %v4875
    %4918 = vmatpush1.msra.mxu0 %v4874
    %4919 = vmatprep.subr.mxu0 %v4872
    %4920 = vmatpush1.msra.mxu0 %v4871
    %4921 = vmatprep.subr.mxu0 %v4869
    %4922 = vmatpush1.msra.mxu0 %v4868
    %4923 = vmatprep.subr.mxu0 %v4866
    %4924 = vmatpush1.msra.mxu0 %v4865
    %4925 = vmatprep.subr.mxu0 %v4863
    %4926 = vmatpush1.msra.mxu0 %v4862
    %4927 = vmatprep.subr.mxu0 %v4860
    %4928 = vmatpush1.msra.mxu0 %v4859
    %4929 = vmatprep.subr.mxu0 %v4857
    %4930 = vmatpush1.msra.mxu0 %v4856
    %4931 = vmatprep.subr.mxu0 %v4854
    %4932 = vmatpush1.msra.mxu0 %v4853
    %4933 = vmatprep.subr.mxu0 0.0
    %4934 = vmatpush2.msra.mxu0 0.0
    %4935 = vmatprep.subr.mxu0 0.0
    %4936 = vmatpush2.msra.mxu0 0.0
    %4937 = vmatprep.subr.mxu0 0.0
    %4938 = vmatpush2.msra.mxu0 0.0
    %4939 = vmatprep.subr.mxu0 0.0
    %4940 = vmatpush2.msra.mxu0 0.0
    %4941 = vmatprep.subr.mxu0 0.0
    %4942 = vmatpush2.msra.mxu0 0.0
    %4943 = vmatprep.subr.mxu0 0.0
    %4944 = vmatpush2.msra.mxu0 0.0
    %4945 = vmatprep.subr.mxu0 0.0
    %4946 = vmatpush2.msra.mxu0 0.0
    %4947 = vmatprep.subr.mxu0 0.0
    %4948 = vmatpush2.msra.mxu0 0.0
    %4949 = vmatprep.subr.mxu0 0.0
    %4950 = vmatpush2.msra.mxu0 0.0
    %4951 = vmatprep.subr.mxu0 0.0
    %4952 = vmatpush2.msra.mxu0 0.0
    %4953 = vmatprep.subr.mxu0 0.0
    %4954 = vmatpush2.msra.mxu0 0.0
    %4955 = vmatprep.subr.mxu0 0.0
    %4956 = vmatpush2.msra.mxu0 0.0
    %4957 = vmatprep.subr.mxu0 0.0
    %4958 = vmatpush2.msra.mxu0 0.0
    %4959 = vmatprep.subr.mxu0 0.0
    %4960 = vmatpush2.msra.mxu0 0.0
    %4961 = vmatprep.subr.mxu0 0.0
    %4962 = vmatpush2.msra.mxu0 0.0
    %4963 = vmatprep.subr.mxu0 0.0
    %4964 = vmatpush2.msra.mxu0 0.0
    %4965 = vmatprep.mubr.f32.mxu0 0.0
    %4966 = vmatmul.mubr.f32.gmra.mxu0 %v4381
    %v4967 = vpop.f32.mrf.mxu0
    %v4968 = vadd.f32 0.0, %v4967
    %v4969 = vpop.f32.mrf.mxu0
    %v4970 = vadd.f32 0.0, %v4969
    %4971 = vdwg.mxu0
    %4972 = vmatprep.subr.mxu0 0.0
    %4973 = vmatpush1.msra.mxu0 %v4900
    %4974 = vmatprep.subr.mxu0 0.0
    %4975 = vmatpush1.msra.mxu0 %v4897
    %4976 = vmatprep.subr.mxu0 0.0
    %4977 = vmatpush1.msra.mxu0 %v4894
    %4978 = vmatprep.subr.mxu0 0.0
    %4979 = vmatpush1.msra.mxu0 %v4891
    %4980 = vmatprep.subr.mxu0 0.0
    %4981 = vmatpush1.msra.mxu0 %v4888
    %4982 = vmatprep.subr.mxu0 0.0
    %4983 = vmatpush1.msra.mxu0 %v4885
    %4984 = vmatprep.subr.mxu0 0.0
    %4985 = vmatpush1.msra.mxu0 %v4882
    %4986 = vmatprep.subr.mxu0 0.0
    %4987 = vmatpush1.msra.mxu0 %v4879
    %4988 = vmatprep.subr.mxu0 0.0
    %4989 = vmatpush1.msra.mxu0 %v4876
    %4990 = vmatprep.subr.mxu0 0.0
    %4991 = vmatpush1.msra.mxu0 %v4873
    %4992 = vmatprep.subr.mxu0 0.0
    %4993 = vmatpush1.msra.mxu0 %v4870
    %4994 = vmatprep.subr.mxu0 0.0
    %4995 = vmatpush1.msra.mxu0 %v4867
    %4996 = vmatprep.subr.mxu0 0.0
    %4997 = vmatpush1.msra.mxu0 %v4864
    %4998 = vmatprep.subr.mxu0 0.0
    %4999 = vmatpush1.msra.mxu0 %v4861
    %5000 = vmatprep.subr.mxu0 0.0
    %5001 = vmatpush1.msra.mxu0 %v4858
    %5002 = vmatprep.subr.mxu0 0.0
    %5003 = vmatpush1.msra.mxu0 %v4855
    %5004 = vmatprep.subr.mxu0 0.0
    %5005 = vmatpush2.msra.mxu0 0.0
    %5006 = vmatprep.subr.mxu0 0.0
    %5007 = vmatpush2.msra.mxu0 0.0
    %5008 = vmatprep.subr.mxu0 0.0
    %5009 = vmatpush2.msra.mxu0 0.0
    %5010 = vmatprep.subr.mxu0 0.0
    %5011 = vmatpush2.msra.mxu0 0.0
    %5012 = vmatprep.subr.mxu0 0.0
    %5013 = vmatpush2.msra.mxu0 0.0
    %5014 = vmatprep.subr.mxu0 0.0
    %5015 = vmatpush2.msra.mxu0 0.0
    %5016 = vmatprep.subr.mxu0 0.0
    %5017 = vmatpush2.msra.mxu0 0.0
    %5018 = vmatprep.subr.mxu0 0.0
    %5019 = vmatpush2.msra.mxu0 0.0
    %5020 = vmatprep.subr.mxu0 0.0
    %5021 = vmatpush2.msra.mxu0 0.0
    %5022 = vmatprep.subr.mxu0 0.0
    %5023 = vmatpush2.msra.mxu0 0.0
    %5024 = vmatprep.subr.mxu0 0.0
    %5025 = vmatpush2.msra.mxu0 0.0
    %5026 = vmatprep.subr.mxu0 0.0
    %5027 = vmatpush2.msra.mxu0 0.0
    %5028 = vmatprep.subr.mxu0 0.0
    %5029 = vmatpush2.msra.mxu0 0.0
    %5030 = vmatprep.subr.mxu0 0.0
    %5031 = vmatpush2.msra.mxu0 0.0
    %5032 = vmatprep.subr.mxu0 0.0
    %5033 = vmatpush2.msra.mxu0 0.0
    %5034 = vmatprep.subr.mxu0 0.0
    %5035 = vmatpush2.msra.mxu0 0.0
    %5036 = vmatprep.mubr.f32.mxu0 0.0
    %5037 = vmatmul.mubr.f32.gmra.mxu0 %v4381
    %v5038 = vpop.f32.mrf.mxu0
    %v5039 = vadd.f32 0.0, %v5038
    %v5040 = vpop.f32.mrf.mxu0
    %5041 = vdwg.mxu0
    %v5042 = vadd.f32 %v4850, %v4968
    %v5043 = vxor.u32 %v5042, 2147483648
    %v5044 = vmul.f32 %v5043, 1.442695
    %v5045 = vpow.pop %v5044
    %v5046 = vadd.f32 %v5045, 1.0
    %v5047 = vrcp.pop %v5046
    %v5048 = vmul.f32 1.0, %v5047
    %v5049 = vadd.f32 %v4851, %v4970
    %v5050 = vxor.u32 %v5049, 2147483648
    %v5051 = vmul.f32 %v5050, 1.442695
    %v5052 = vpow.pop %v5051
    %v5053 = vadd.f32 %v5052, 1.0
    %v5054 = vrcp.pop %v5053
    %v5055 = vmul.f32 1.0, %v5054
    %v5056 = vadd.f32 %v5039, %v868
    %v5057 = vmul.f32 %v5048, %v5056
    %v5058 = vadd.f32 %v4852, %v5057
    %v5059 = vtanh.pop %v5058
    %v5060 = vsub.f32 1.0, %v5055
    %v5061 = vmul.f32 %v5060, %v5059
    %v5062 = vmul.f32 %v5055, %v4381
    %v5063 = vadd.f32 %v5061, %v5062
    %v5064 = vld [vmem:[#allocation11] sm:$0xff]
    %v5065 = vld [vmem:[#allocation11 + $0x10] sm:$0xff]
    %v5066 = vld [vmem:[#allocation11 + $0x20] sm:$0xff]
    %v5067 = vld [vmem:[#allocation11 + $0x30] sm:$0xff]
    %v5068 = vld [vmem:[#allocation11 + $0x40] sm:$0xff]
    %v5069 = vld [vmem:[#allocation11 + $0x50] sm:$0xff]
    %v5070 = vld [vmem:[#allocation11 + $0x60] sm:$0xff]
    %v5071 = vld [vmem:[#allocation11 + $0x70] sm:$0xff]
    %v5072 = vld [vmem:[#allocation11 + $0x80] sm:$0xff]
    %v5073 = vld [vmem:[#allocation11 + $0x90] sm:$0xff]
    %v5074 = vld [vmem:[#allocation11 + $0xa0] sm:$0xff]
    %v5075 = vld [vmem:[#allocation11 + $0xb0] sm:$0xff]
    %v5076 = vld [vmem:[#allocation11 + $0xc0] sm:$0xff]
    %v5077 = vld [vmem:[#allocation11 + $0xd0] sm:$0xff]
    %v5078 = vld [vmem:[#allocation11 + $0xe0] sm:$0xff]
    %v5079 = vld [vmem:[#allocation11 + $0xf0] sm:$0xff]
    %5080 = vmatprep.subr.mxu0 0.0
    %5081 = vmatpush1.msra.mxu0 %v5079
    %5082 = vmatprep.subr.mxu0 0.0
    %5083 = vmatpush1.msra.mxu0 %v5078
    %5084 = vmatprep.subr.mxu0 0.0
    %5085 = vmatpush1.msra.mxu0 %v5077
    %5086 = vmatprep.subr.mxu0 0.0
    %5087 = vmatpush1.msra.mxu0 %v5076
    %5088 = vmatprep.subr.mxu0 0.0
    %5089 = vmatpush1.msra.mxu0 %v5075
    %5090 = vmatprep.subr.mxu0 0.0
    %5091 = vmatpush1.msra.mxu0 %v5074
    %5092 = vmatprep.subr.mxu0 0.0
    %5093 = vmatpush1.msra.mxu0 %v5073
    %5094 = vmatprep.subr.mxu0 0.0
    %5095 = vmatpush1.msra.mxu0 %v5072
    %5096 = vmatprep.subr.mxu0 0.0
    %5097 = vmatpush1.msra.mxu0 %v5071
    %5098 = vmatprep.subr.mxu0 0.0
    %5099 = vmatpush1.msra.mxu0 %v5070
    %5100 = vmatprep.subr.mxu0 0.0
    %5101 = vmatpush1.msra.mxu0 %v5069
    %5102 = vmatprep.subr.mxu0 0.0
    %5103 = vmatpush1.msra.mxu0 %v5068
    %5104 = vmatprep.subr.mxu0 0.0
    %5105 = vmatpush1.msra.mxu0 %v5067
    %5106 = vmatprep.subr.mxu0 0.0
    %5107 = vmatpush1.msra.mxu0 %v5066
    %5108 = vmatprep.subr.mxu0 0.0
    %5109 = vmatpush1.msra.mxu0 %v5065
    %5110 = vmatprep.subr.mxu0 0.0
    %5111 = vmatpush1.msra.mxu0 %v5064
    %5112 = vmatprep.subr.mxu0 0.0
    %5113 = vmatpush2.msra.mxu0 0.0
    %5114 = vmatprep.subr.mxu0 0.0
    %5115 = vmatpush2.msra.mxu0 0.0
    %5116 = vmatprep.subr.mxu0 0.0
    %5117 = vmatpush2.msra.mxu0 0.0
    %5118 = vmatprep.subr.mxu0 0.0
    %5119 = vmatpush2.msra.mxu0 0.0
    %5120 = vmatprep.subr.mxu0 0.0
    %5121 = vmatpush2.msra.mxu0 0.0
    %5122 = vmatprep.subr.mxu0 0.0
    %5123 = vmatpush2.msra.mxu0 0.0
    %5124 = vmatprep.subr.mxu0 0.0
    %5125 = vmatpush2.msra.mxu0 0.0
    %5126 = vmatprep.subr.mxu0 0.0
    %5127 = vmatpush2.msra.mxu0 0.0
    %5128 = vmatprep.subr.mxu0 0.0
    %5129 = vmatpush2.msra.mxu0 0.0
    %5130 = vmatprep.subr.mxu0 0.0
    %5131 = vmatpush2.msra.mxu0 0.0
    %5132 = vmatprep.subr.mxu0 0.0
    %5133 = vmatpush2.msra.mxu0 0.0
    %5134 = vmatprep.subr.mxu0 0.0
    %5135 = vmatpush2.msra.mxu0 0.0
    %5136 = vmatprep.subr.mxu0 0.0
    %5137 = vmatpush2.msra.mxu0 0.0
    %5138 = vmatprep.subr.mxu0 0.0
    %5139 = vmatpush2.msra.mxu0 0.0
    %5140 = vmatprep.subr.mxu0 0.0
    %5141 = vmatpush2.msra.mxu0 0.0
    %5142 = vmatprep.subr.mxu0 0.0
    %5143 = vmatpush2.msra.mxu0 0.0
    %5144 = vmatprep.mubr.f32.mxu0 0.0
    %5145 = vmatmul.mubr.f32.gmra.mxu0 %v5063
    %v5146 = vpop.f32.mrf.mxu0
    %v5147 = vadd.f32 %v898, %v5146
    %v5148 = vpop.f32.mrf.mxu0
    %5149 = vdwg.mxu0
    %5150 = vrot.lane.b32.xlu0 %v5147, 1
    %v5151 = vpop.permute.xlu0 %5150
    %vm5152 = vcmp.gt.f32.partialorder %v5151, %v5147
    %vm5153 = vcmp.eq.f32.partialorder %v5151, %v5147
    %vm5154 = vmand %vm5153, %vm976
    %vm5155 = vmor %vm5152, %vm5154
    %v5156 = vsel %vm5155, %v5151, %v5147
    %v5157 = vsel %vm5155, %v973, %v99
    %5158 = vrot.lane.b32.xlu0 %v5156, 2
    %v5159 = vpop.permute.xlu0 %5158
    %5160 = vrot.lane.b32.xlu0 %v5157, 2
    %v5161 = vpop.permute.xlu0 %5160
    %vm5162 = vcmp.gt.f32.partialorder %v5159, %v5156
    %vm5163 = vcmp.eq.f32.partialorder %v5159, %v5156
    %vm5164 = vcmp.lt.s32.totalorder %v5161, %v5157
    %vm5165 = vmand %vm5163, %vm5164
    %vm5166 = vmor %vm5162, %vm5165
    %v5167 = vsel %vm5166, %v5159, %v5156
    %v5168 = vsel %vm5166, %v5161, %v5157
    %5169 = vrot.lane.b32.xlu0 %v5167, 4
    %v5170 = vpop.permute.xlu0 %5169
    %5171 = vrot.lane.b32.xlu0 %v5168, 4
    %v5172 = vpop.permute.xlu0 %5171
    %vm5173 = vcmp.gt.f32.partialorder %v5170, %v5167
    %vm5174 = vcmp.eq.f32.partialorder %v5170, %v5167
    %vm5175 = vcmp.lt.s32.totalorder %v5172, %v5168
    %vm5176 = vmand %vm5174, %vm5175
    %vm5177 = vmor %vm5173, %vm5176
    %v5178 = vsel %vm5177, %v5170, %v5167
    %v5179 = vsel %vm5177, %v5172, %v5168
    %5180 = vrot.lane.b32.xlu0 %v5178, 8
    %v5181 = vpop.permute.xlu0 %5180
    %5182 = vrot.lane.b32.xlu0 %v5179, 8
    %v5183 = vpop.permute.xlu0 %5182
    %vm5184 = vcmp.gt.f32.partialorder %v5181, %v5178
    %vm5185 = vcmp.eq.f32.partialorder %v5181, %v5178
    %vm5186 = vcmp.lt.s32.totalorder %v5183, %v5179
    %vm5187 = vmand %vm5185, %vm5186
    %vm5188 = vmor %vm5184, %vm5187
    %v5189 = vsel %vm5188, %v5181, %v5178
    %v5190 = vsel %vm5188, %v5183, %v5179
    %5191 = vrot.lane.b32.xlu0 %v5189, 16
    %v5192 = vpop.permute.xlu0 %5191
    %5193 = vrot.lane.b32.xlu0 %v5190, 16
    %v5194 = vpop.permute.xlu0 %5193
    %vm5195 = vcmp.gt.f32.partialorder %v5192, %v5189
    %vm5196 = vcmp.eq.f32.partialorder %v5192, %v5189
    %vm5197 = vcmp.lt.s32.totalorder %v5194, %v5190
    %vm5198 = vmand %vm5196, %vm5197
    %vm5199 = vmor %vm5195, %vm5198
    %v5200 = vsel %vm5199, %v5192, %v5189
    %v5201 = vsel %vm5199, %v5194, %v5190
    %5202 = vrot.lane.b32.xlu0 %v5200, 32
    %v5203 = vpop.permute.xlu0 %5202
    %5204 = vrot.lane.b32.xlu0 %v5201, 32
    %v5205 = vpop.permute.xlu0 %5204
    %vm5206 = vcmp.gt.f32.partialorder %v5203, %v5200
    %vm5207 = vcmp.eq.f32.partialorder %v5203, %v5200
    %vm5208 = vcmp.lt.s32.totalorder %v5205, %v5201
    %vm5209 = vmand %vm5207, %vm5208
    %vm5210 = vmor %vm5206, %vm5209
    %v5211 = vsel %vm5210, %v5203, %v5200
    %v5212 = vsel %vm5210, %v5205, %v5201
    %5213 = vrot.lane.b32.xlu0 %v5211, 64
    %v5214 = vpop.permute.xlu0 %5213
    %5215 = vrot.lane.b32.xlu0 %v5212, 64
    %v5216 = vpop.permute.xlu0 %5215
    %vm5217 = vcmp.gt.f32.partialorder %v5214, %v5211
    %vm5218 = vcmp.eq.f32.partialorder %v5214, %v5211
    %vm5219 = vcmp.lt.s32.totalorder %v5216, %v5212
    %vm5220 = vmand %vm5218, %vm5219
    %vm5221 = vmor %vm5217, %vm5220
    %v5222 = vsel %vm5221, %v5214, %v5211
    %v5223 = vsel %vm5221, %v5216, %v5212
    %v5224 = vsub.f32 %v5147, %v5222
    %v5225 = vmul.f32 %v5224, 1.442695
    %v5226 = vpow.pop %v5225
    %v5227 = vsel %vm1050, %v5226, 0.0
    %5228 = vadd.xlane.f32.xlu0 %v5227
    %v5229 = vpop.xlane.xlu0 %5228
    %v5230 = vlog2.pop %v5229
    %v5231 = vmul.f32 %v5230, 0.6931472
    %v5232 = vsub.f32 %v5224, %v5231
    %s5233 = scalar_lea.vmem [#allocation12], 12
    %5234 = vst [vmem:[%s5233] sm:$0x3] %v5232
    %vm5235 = vcmp.eq.s32.totalorder %v5223, 0
    %v5236 = vld [vmem:[#allocation6] ss:$8 sm:$0x7]
    %v5238 = vlaneseq
    %v5239 = vshrl.u32 %v5238, 7
    %v5240 = vsub.s32 0, %v5239
    %v5241 = vrot.slane %v5236, %v5240
    %v5242 = vlaneseq
    %v5243 = vshrl.u32 %v5242, 7
    %v5244 = vsub.s32 1, %v5243
    %v5245 = vrot.slane %v5236, %v5244
    %v5246 = vlaneseq
    %v5247 = vshrl.u32 %v5246, 7
    %v5248 = vsub.s32 2, %v5247
    %v5249 = vrot.slane %v5236, %v5248
    %v5253 = vsel %vm5235, %v5241, 0.0
    %v5254 = vsel %vm5235, %v5245, 0.0
    %v5255 = vsel %vm5235, %v5249, 0.0
    %vm5256 = vcmp.eq.s32.totalorder %v5223, 1
    %v5257 = vld [vmem:[%s326] ss:$8 sm:$0x7]
    %v5259 = vlaneseq
    %v5260 = vshrl.u32 %v5259, 7
    %v5261 = vsub.s32 0, %v5260
    %v5262 = vrot.slane %v5257, %v5261
    %v5263 = vlaneseq
    %v5264 = vshrl.u32 %v5263, 7
    %v5265 = vsub.s32 1, %v5264
    %v5266 = vrot.slane %v5257, %v5265
    %v5267 = vlaneseq
    %v5268 = vshrl.u32 %v5267, 7
    %v5269 = vsub.s32 2, %v5268
    %v5270 = vrot.slane %v5257, %v5269
    %v5274 = vsel %vm5256, %v5262, 0.0
    %v5275 = vsel %vm5256, %v5266, 0.0
    %v5276 = vsel %vm5256, %v5270, 0.0
    %vm5277 = vcmp.eq.s32.totalorder %v5223, 2
    %v5278 = vld [vmem:[%s353] ss:$8 sm:$0x7]
    %v5280 = vlaneseq
    %v5281 = vshrl.u32 %v5280, 7
    %v5282 = vsub.s32 0, %v5281
    %v5283 = vrot.slane %v5278, %v5282
    %v5284 = vlaneseq
    %v5285 = vshrl.u32 %v5284, 7
    %v5286 = vsub.s32 1, %v5285
    %v5287 = vrot.slane %v5278, %v5286
    %v5288 = vlaneseq
    %v5289 = vshrl.u32 %v5288, 7
    %v5290 = vsub.s32 2, %v5289
    %v5291 = vrot.slane %v5278, %v5290
    %v5295 = vsel %vm5277, %v5283, 0.0
    %v5296 = vsel %vm5277, %v5287, 0.0
    %v5297 = vsel %vm5277, %v5291, 0.0
    %vm5298 = vcmp.eq.s32.totalorder %v5223, 3
    %v5299 = vld [vmem:[%s380] ss:$8 sm:$0x7]
    %v5301 = vlaneseq
    %v5302 = vshrl.u32 %v5301, 7
    %v5303 = vsub.s32 0, %v5302
    %v5304 = vrot.slane %v5299, %v5303
    %v5305 = vlaneseq
    %v5306 = vshrl.u32 %v5305, 7
    %v5307 = vsub.s32 1, %v5306
    %v5308 = vrot.slane %v5299, %v5307
    %v5309 = vlaneseq
    %v5310 = vshrl.u32 %v5309, 7
    %v5311 = vsub.s32 2, %v5310
    %v5312 = vrot.slane %v5299, %v5311
    %v5316 = vsel %vm5298, %v5304, 0.0
    %v5317 = vsel %vm5298, %v5308, 0.0
    %v5318 = vsel %vm5298, %v5312, 0.0
    %vm5319 = vcmp.eq.s32.totalorder %v5223, 4
    %v5320 = vld [vmem:[%s407] ss:$8 sm:$0x7]
    %v5322 = vlaneseq
    %v5323 = vshrl.u32 %v5322, 7
    %v5324 = vsub.s32 0, %v5323
    %v5325 = vrot.slane %v5320, %v5324
    %v5326 = vlaneseq
    %v5327 = vshrl.u32 %v5326, 7
    %v5328 = vsub.s32 1, %v5327
    %v5329 = vrot.slane %v5320, %v5328
    %v5330 = vlaneseq
    %v5331 = vshrl.u32 %v5330, 7
    %v5332 = vsub.s32 2, %v5331
    %v5333 = vrot.slane %v5320, %v5332
    %v5337 = vsel %vm5319, %v5325, 0.0
    %v5338 = vsel %vm5319, %v5329, 0.0
    %v5339 = vsel %vm5319, %v5333, 0.0
    %vm5340 = vcmp.eq.s32.totalorder %v5223, 5
    %v5341 = vld [vmem:[%s434] ss:$8 sm:$0x7]
    %v5343 = vlaneseq
    %v5344 = vshrl.u32 %v5343, 7
    %v5345 = vsub.s32 0, %v5344
    %v5346 = vrot.slane %v5341, %v5345
    %v5347 = vlaneseq
    %v5348 = vshrl.u32 %v5347, 7
    %v5349 = vsub.s32 1, %v5348
    %v5350 = vrot.slane %v5341, %v5349
    %v5351 = vlaneseq
    %v5352 = vshrl.u32 %v5351, 7
    %v5353 = vsub.s32 2, %v5352
    %v5354 = vrot.slane %v5341, %v5353
    %v5358 = vsel %vm5340, %v5346, 0.0
    %v5359 = vsel %vm5340, %v5350, 0.0
    %v5360 = vsel %vm5340, %v5354, 0.0
    %vm5361 = vcmp.eq.s32.totalorder %v5223, 6
    %v5362 = vld [vmem:[%s461] ss:$8 sm:$0x7]
    %v5364 = vlaneseq
    %v5365 = vshrl.u32 %v5364, 7
    %v5366 = vsub.s32 0, %v5365
    %v5367 = vrot.slane %v5362, %v5366
    %v5368 = vlaneseq
    %v5369 = vshrl.u32 %v5368, 7
    %v5370 = vsub.s32 1, %v5369
    %v5371 = vrot.slane %v5362, %v5370
    %v5372 = vlaneseq
    %v5373 = vshrl.u32 %v5372, 7
    %v5374 = vsub.s32 2, %v5373
    %v5375 = vrot.slane %v5362, %v5374
    %v5379 = vsel %vm5361, %v5367, 0.0
    %v5380 = vsel %vm5361, %v5371, 0.0
    %v5381 = vsel %vm5361, %v5375, 0.0
    %vm5382 = vcmp.eq.s32.totalorder %v5223, 7
    %v5383 = vld [vmem:[%s488] ss:$8 sm:$0x7]
    %v5385 = vlaneseq
    %v5386 = vshrl.u32 %v5385, 7
    %v5387 = vsub.s32 0, %v5386
    %v5388 = vrot.slane %v5383, %v5387
    %v5389 = vlaneseq
    %v5390 = vshrl.u32 %v5389, 7
    %v5391 = vsub.s32 1, %v5390
    %v5392 = vrot.slane %v5383, %v5391
    %v5393 = vlaneseq
    %v5394 = vshrl.u32 %v5393, 7
    %v5395 = vsub.s32 2, %v5394
    %v5396 = vrot.slane %v5383, %v5395
    %v5400 = vsel %vm5382, %v5388, 0.0
    %v5401 = vsel %vm5382, %v5392, 0.0
    %v5402 = vsel %vm5382, %v5396, 0.0
    %vm5403 = vcmp.eq.s32.totalorder %v5223, 8
    %v5404 = vld [vmem:[%s515] ss:$8 sm:$0x7]
    %v5406 = vlaneseq
    %v5407 = vshrl.u32 %v5406, 7
    %v5408 = vsub.s32 0, %v5407
    %v5409 = vrot.slane %v5404, %v5408
    %v5410 = vlaneseq
    %v5411 = vshrl.u32 %v5410, 7
    %v5412 = vsub.s32 1, %v5411
    %v5413 = vrot.slane %v5404, %v5412
    %v5414 = vlaneseq
    %v5415 = vshrl.u32 %v5414, 7
    %v5416 = vsub.s32 2, %v5415
    %v5417 = vrot.slane %v5404, %v5416
    %v5421 = vsel %vm5403, %v5409, 0.0
    %v5422 = vsel %vm5403, %v5413, 0.0
    %v5423 = vsel %vm5403, %v5417, 0.0
    %vm5424 = vcmp.eq.s32.totalorder %v5223, 9
    %v5425 = vld [vmem:[%s542] ss:$8 sm:$0x7]
    %v5427 = vlaneseq
    %v5428 = vshrl.u32 %v5427, 7
    %v5429 = vsub.s32 0, %v5428
    %v5430 = vrot.slane %v5425, %v5429
    %v5431 = vlaneseq
    %v5432 = vshrl.u32 %v5431, 7
    %v5433 = vsub.s32 1, %v5432
    %v5434 = vrot.slane %v5425, %v5433
    %v5435 = vlaneseq
    %v5436 = vshrl.u32 %v5435, 7
    %v5437 = vsub.s32 2, %v5436
    %v5438 = vrot.slane %v5425, %v5437
    %v5442 = vsel %vm5424, %v5430, 0.0
    %v5443 = vsel %vm5424, %v5434, 0.0
    %v5444 = vsel %vm5424, %v5438, 0.0
    %vm5445 = vcmp.eq.s32.totalorder %v5223, 10
    %v5446 = vld [vmem:[%s569] ss:$8 sm:$0x7]
    %v5448 = vlaneseq
    %v5449 = vshrl.u32 %v5448, 7
    %v5450 = vsub.s32 0, %v5449
    %v5451 = vrot.slane %v5446, %v5450
    %v5452 = vlaneseq
    %v5453 = vshrl.u32 %v5452, 7
    %v5454 = vsub.s32 1, %v5453
    %v5455 = vrot.slane %v5446, %v5454
    %v5456 = vlaneseq
    %v5457 = vshrl.u32 %v5456, 7
    %v5458 = vsub.s32 2, %v5457
    %v5459 = vrot.slane %v5446, %v5458
    %v5463 = vsel %vm5445, %v5451, 0.0
    %v5464 = vsel %vm5445, %v5455, 0.0
    %v5465 = vsel %vm5445, %v5459, 0.0
    %vm5466 = vcmp.eq.s32.totalorder %v5223, 11
    %v5467 = vld [vmem:[%s596] ss:$8 sm:$0x7]
    %v5469 = vlaneseq
    %v5470 = vshrl.u32 %v5469, 7
    %v5471 = vsub.s32 0, %v5470
    %v5472 = vrot.slane %v5467, %v5471
    %v5473 = vlaneseq
    %v5474 = vshrl.u32 %v5473, 7
    %v5475 = vsub.s32 1, %v5474
    %v5476 = vrot.slane %v5467, %v5475
    %v5477 = vlaneseq
    %v5478 = vshrl.u32 %v5477, 7
    %v5479 = vsub.s32 2, %v5478
    %v5480 = vrot.slane %v5467, %v5479
    %v5484 = vsel %vm5466, %v5472, 0.0
    %v5485 = vsel %vm5466, %v5476, 0.0
    %v5486 = vsel %vm5466, %v5480, 0.0
    %v5487 = vadd.f32 %v5253, %v5274
    %v5488 = vadd.f32 %v5254, %v5275
    %v5489 = vadd.f32 %v5255, %v5276
    %v5490 = vadd.f32 %v5295, %v5316
    %v5491 = vadd.f32 %v5296, %v5317
    %v5492 = vadd.f32 %v5297, %v5318
    %v5493 = vadd.f32 %v5337, %v5358
    %v5494 = vadd.f32 %v5338, %v5359
    %v5495 = vadd.f32 %v5339, %v5360
    %v5496 = vadd.f32 %v5379, %v5400
    %v5497 = vadd.f32 %v5380, %v5401
    %v5498 = vadd.f32 %v5381, %v5402
    %v5499 = vadd.f32 %v5421, %v5442
    %v5500 = vadd.f32 %v5422, %v5443
    %v5501 = vadd.f32 %v5423, %v5444
    %v5502 = vadd.f32 %v5463, %v5484
    %v5503 = vadd.f32 %v5464, %v5485
    %v5504 = vadd.f32 %v5465, %v5486
    %v5505 = vadd.f32 %v5487, %v5490
    %v5506 = vadd.f32 %v5488, %v5491
    %v5507 = vadd.f32 %v5489, %v5492
    %v5508 = vadd.f32 %v5493, %v5496
    %v5509 = vadd.f32 %v5494, %v5497
    %v5510 = vadd.f32 %v5495, %v5498
    %v5511 = vadd.f32 %v5499, %v5502
    %v5512 = vadd.f32 %v5500, %v5503
    %v5513 = vadd.f32 %v5501, %v5504
    %v5514 = vadd.f32 %v5505, %v5508
    %v5515 = vadd.f32 %v5506, %v5509
    %v5516 = vadd.f32 %v5507, %v5510
    %v5517 = vadd.f32 %v5514, %v5511
    %v5518 = vadd.f32 %v5515, %v5512
    %v5519 = vadd.f32 %v5516, %v5513
    %v5520 = vld [vmem:[#allocation2 + $0x18] sm:$0xc0]
    %v5521 = vld [vmem:[#allocation2 + $0x20] sm:$0xc0]
    %v5522 = vld [vmem:[#allocation2 + $0x28] sm:$0xc0]
    %v5526 = vrot.slane %v5520, 6
    %v5527 = vrot.slane %v5521, 6
    %v5528 = vrot.slane %v5522, 6
    %v5532 = vadd.f32 %v5517, %v5526
    %v5533 = vadd.f32 %v5518, %v5527
    %v5534 = vadd.f32 %v5519, %v5528
    %v5535 = vld [vmem:[#allocation9] sm:$0xff]
    %v5536 = vld [vmem:[#allocation9 + $0x8] sm:$0xff]
    %v5537 = vld [vmem:[#allocation9 + $0x10] sm:$0xff]
    %v5538 = vld [vmem:[#allocation9 + $0x18] sm:$0xff]
    %v5539 = vld [vmem:[#allocation9 + $0x20] sm:$0xff]
    %v5540 = vld [vmem:[#allocation9 + $0x28] sm:$0xff]
    %v5541 = vld [vmem:[#allocation9 + $0x30] sm:$0xff]
    %v5542 = vld [vmem:[#allocation9 + $0x38] sm:$0xff]
    %v5543 = vld [vmem:[#allocation9 + $0x40] sm:$0xff]
    %v5544 = vld [vmem:[#allocation9 + $0x48] sm:$0xff]
    %v5545 = vld [vmem:[#allocation9 + $0x50] sm:$0xff]
    %v5546 = vld [vmem:[#allocation9 + $0x58] sm:$0xff]
    %v5547 = vld [vmem:[#allocation9 + $0x60] sm:$0xff]
    %v5548 = vld [vmem:[#allocation9 + $0x68] sm:$0xff]
    %v5549 = vld [vmem:[#allocation9 + $0x70] sm:$0xff]
    %v5550 = vld [vmem:[#allocation9 + $0x78] sm:$0xff]
    %v5551 = vld [vmem:[#allocation9 + $0x80] sm:$0xff]
    %v5552 = vld [vmem:[#allocation9 + $0x88] sm:$0xff]
    %v5553 = vld [vmem:[#allocation9 + $0x90] sm:$0xff]
    %v5554 = vld [vmem:[#allocation9 + $0x98] sm:$0xff]
    %v5555 = vld [vmem:[#allocation9 + $0xa0] sm:$0xff]
    %v5556 = vld [vmem:[#allocation9 + $0xa8] sm:$0xff]
    %v5557 = vld [vmem:[#allocation9 + $0xb0] sm:$0xff]
    %v5558 = vld [vmem:[#allocation9 + $0xb8] sm:$0xff]
    %v5559 = vld [vmem:[#allocation9 + $0xc0] sm:$0xff]
    %v5560 = vld [vmem:[#allocation9 + $0xc8] sm:$0xff]
    %v5561 = vld [vmem:[#allocation9 + $0xd0] sm:$0xff]
    %v5562 = vld [vmem:[#allocation9 + $0xd8] sm:$0xff]
    %v5563 = vld [vmem:[#allocation9 + $0xe0] sm:$0xff]
    %v5564 = vld [vmem:[#allocation9 + $0xe8] sm:$0xff]
    %v5565 = vld [vmem:[#allocation9 + $0xf0] sm:$0xff]
    %v5566 = vld [vmem:[#allocation9 + $0xf8] sm:$0xff]
    %v5567 = vld [vmem:[#allocation9 + $0x100] sm:$0xff]
    %v5568 = vld [vmem:[#allocation9 + $0x108] sm:$0xff]
    %v5569 = vld [vmem:[#allocation9 + $0x110] sm:$0xff]
    %v5570 = vld [vmem:[#allocation9 + $0x118] sm:$0xff]
    %v5571 = vld [vmem:[#allocation9 + $0x120] sm:$0xff]
    %v5572 = vld [vmem:[#allocation9 + $0x128] sm:$0xff]
    %v5573 = vld [vmem:[#allocation9 + $0x130] sm:$0xff]
    %v5574 = vld [vmem:[#allocation9 + $0x138] sm:$0xff]
    %v5575 = vld [vmem:[#allocation9 + $0x140] sm:$0xff]
    %v5576 = vld [vmem:[#allocation9 + $0x148] sm:$0xff]
    %v5577 = vld [vmem:[#allocation9 + $0x150] sm:$0xff]
    %v5578 = vld [vmem:[#allocation9 + $0x158] sm:$0xff]
    %v5579 = vld [vmem:[#allocation9 + $0x160] sm:$0xff]
    %v5580 = vld [vmem:[#allocation9 + $0x168] sm:$0xff]
    %v5581 = vld [vmem:[#allocation9 + $0x170] sm:$0xff]
    %v5582 = vld [vmem:[#allocation9 + $0x178] sm:$0xff]
    %5583 = vmatprep.subr.mxu0 %v5581
    %5584 = vmatpush1.msra.mxu0 %v5580
    %5585 = vmatprep.subr.mxu0 %v5578
    %5586 = vmatpush1.msra.mxu0 %v5577
    %5587 = vmatprep.subr.mxu0 %v5575
    %5588 = vmatpush1.msra.mxu0 %v5574
    %5589 = vmatprep.subr.mxu0 %v5572
    %5590 = vmatpush1.msra.mxu0 %v5571
    %5591 = vmatprep.subr.mxu0 %v5569
    %5592 = vmatpush1.msra.mxu0 %v5568
    %5593 = vmatprep.subr.mxu0 %v5566
    %5594 = vmatpush1.msra.mxu0 %v5565
    %5595 = vmatprep.subr.mxu0 %v5563
    %5596 = vmatpush1.msra.mxu0 %v5562
    %5597 = vmatprep.subr.mxu0 %v5560
    %5598 = vmatpush1.msra.mxu0 %v5559
    %5599 = vmatprep.subr.mxu0 %v5557
    %5600 = vmatpush1.msra.mxu0 %v5556
    %5601 = vmatprep.subr.mxu0 %v5554
    %5602 = vmatpush1.msra.mxu0 %v5553
    %5603 = vmatprep.subr.mxu0 %v5551
    %5604 = vmatpush1.msra.mxu0 %v5550
    %5605 = vmatprep.subr.mxu0 %v5548
    %5606 = vmatpush1.msra.mxu0 %v5547
    %5607 = vmatprep.subr.mxu0 %v5545
    %5608 = vmatpush1.msra.mxu0 %v5544
    %5609 = vmatprep.subr.mxu0 %v5542
    %5610 = vmatpush1.msra.mxu0 %v5541
    %5611 = vmatprep.subr.mxu0 %v5539
    %5612 = vmatpush1.msra.mxu0 %v5538
    %5613 = vmatprep.subr.mxu0 %v5536
    %5614 = vmatpush1.msra.mxu0 %v5535
    %5615 = vmatprep.subr.mxu0 0.0
    %5616 = vmatpush2.msra.mxu0 0.0
    %5617 = vmatprep.subr.mxu0 0.0
    %5618 = vmatpush2.msra.mxu0 0.0
    %5619 = vmatprep.subr.mxu0 0.0
    %5620 = vmatpush2.msra.mxu0 0.0
    %5621 = vmatprep.subr.mxu0 0.0
    %5622 = vmatpush2.msra.mxu0 0.0
    %5623 = vmatprep.subr.mxu0 0.0
    %5624 = vmatpush2.msra.mxu0 0.0
    %5625 = vmatprep.subr.mxu0 0.0
    %5626 = vmatpush2.msra.mxu0 0.0
    %5627 = vmatprep.subr.mxu0 0.0
    %5628 = vmatpush2.msra.mxu0 0.0
    %5629 = vmatprep.subr.mxu0 0.0
    %5630 = vmatpush2.msra.mxu0 0.0
    %5631 = vmatprep.subr.mxu0 0.0
    %5632 = vmatpush2.msra.mxu0 0.0
    %5633 = vmatprep.subr.mxu0 0.0
    %5634 = vmatpush2.msra.mxu0 0.0
    %5635 = vmatprep.subr.mxu0 0.0
    %5636 = vmatpush2.msra.mxu0 0.0
    %5637 = vmatprep.subr.mxu0 0.0
    %5638 = vmatpush2.msra.mxu0 0.0
    %5639 = vmatprep.subr.mxu0 0.0
    %5640 = vmatpush2.msra.mxu0 0.0
    %5641 = vmatprep.subr.mxu0 0.0
    %5642 = vmatpush2.msra.mxu0 0.0
    %5643 = vmatprep.subr.mxu0 0.0
    %5644 = vmatpush2.msra.mxu0 0.0
    %5645 = vmatprep.subr.mxu0 0.0
    %5646 = vmatpush2.msra.mxu0 0.0
    %5647 = vmatprep.mubr.f32.mxu0 0.0
    %5648 = vmatmul.mubr.f32.gmra.mxu0 %v5063
    %v5649 = vpop.f32.mrf.mxu0
    %v5650 = vadd.f32 0.0, %v5649
    %v5651 = vpop.f32.mrf.mxu0
    %v5652 = vadd.f32 0.0, %v5651
    %5653 = vdwg.mxu0
    %5654 = vmatprep.subr.mxu0 0.0
    %5655 = vmatpush1.msra.mxu0 %v5582
    %5656 = vmatprep.subr.mxu0 0.0
    %5657 = vmatpush1.msra.mxu0 %v5579
    %5658 = vmatprep.subr.mxu0 0.0
    %5659 = vmatpush1.msra.mxu0 %v5576
    %5660 = vmatprep.subr.mxu0 0.0
    %5661 = vmatpush1.msra.mxu0 %v5573
    %5662 = vmatprep.subr.mxu0 0.0
    %5663 = vmatpush1.msra.mxu0 %v5570
    %5664 = vmatprep.subr.mxu0 0.0
    %5665 = vmatpush1.msra.mxu0 %v5567
    %5666 = vmatprep.subr.mxu0 0.0
    %5667 = vmatpush1.msra.mxu0 %v5564
    %5668 = vmatprep.subr.mxu0 0.0
    %5669 = vmatpush1.msra.mxu0 %v5561
    %5670 = vmatprep.subr.mxu0 0.0
    %5671 = vmatpush1.msra.mxu0 %v5558
    %5672 = vmatprep.subr.mxu0 0.0
    %5673 = vmatpush1.msra.mxu0 %v5555
    %5674 = vmatprep.subr.mxu0 0.0
    %5675 = vmatpush1.msra.mxu0 %v5552
    %5676 = vmatprep.subr.mxu0 0.0
    %5677 = vmatpush1.msra.mxu0 %v5549
    %5678 = vmatprep.subr.mxu0 0.0
    %5679 = vmatpush1.msra.mxu0 %v5546
    %5680 = vmatprep.subr.mxu0 0.0
    %5681 = vmatpush1.msra.mxu0 %v5543
    %5682 = vmatprep.subr.mxu0 0.0
    %5683 = vmatpush1.msra.mxu0 %v5540
    %5684 = vmatprep.subr.mxu0 0.0
    %5685 = vmatpush1.msra.mxu0 %v5537
    %5686 = vmatprep.subr.mxu0 0.0
    %5687 = vmatpush2.msra.mxu0 0.0
    %5688 = vmatprep.subr.mxu0 0.0
    %5689 = vmatpush2.msra.mxu0 0.0
    %5690 = vmatprep.subr.mxu0 0.0
    %5691 = vmatpush2.msra.mxu0 0.0
    %5692 = vmatprep.subr.mxu0 0.0
    %5693 = vmatpush2.msra.mxu0 0.0
    %5694 = vmatprep.subr.mxu0 0.0
    %5695 = vmatpush2.msra.mxu0 0.0
    %5696 = vmatprep.subr.mxu0 0.0
    %5697 = vmatpush2.msra.mxu0 0.0
    %5698 = vmatprep.subr.mxu0 0.0
    %5699 = vmatpush2.msra.mxu0 0.0
    %5700 = vmatprep.subr.mxu0 0.0
    %5701 = vmatpush2.msra.mxu0 0.0
    %5702 = vmatprep.subr.mxu0 0.0
    %5703 = vmatpush2.msra.mxu0 0.0
    %5704 = vmatprep.subr.mxu0 0.0
    %5705 = vmatpush2.msra.mxu0 0.0
    %5706 = vmatprep.subr.mxu0 0.0
    %5707 = vmatpush2.msra.mxu0 0.0
    %5708 = vmatprep.subr.mxu0 0.0
    %5709 = vmatpush2.msra.mxu0 0.0
    %5710 = vmatprep.subr.mxu0 0.0
    %5711 = vmatpush2.msra.mxu0 0.0
    %5712 = vmatprep.subr.mxu0 0.0
    %5713 = vmatpush2.msra.mxu0 0.0
    %5714 = vmatprep.subr.mxu0 0.0
    %5715 = vmatpush2.msra.mxu0 0.0
    %5716 = vmatprep.subr.mxu0 0.0
    %5717 = vmatpush2.msra.mxu0 0.0
    %5718 = vmatprep.mubr.f32.mxu0 0.0
    %5719 = vmatmul.mubr.f32.gmra.mxu0 %v5063
    %v5720 = vpop.f32.mrf.mxu0
    %v5721 = vadd.f32 0.0, %v5720
    %v5722 = vpop.f32.mrf.mxu0
    %5723 = vdwg.mxu0
    %v5724 = vadd.f32 %v5532, %v5650
    %v5725 = vxor.u32 %v5724, 2147483648
    %v5726 = vmul.f32 %v5725, 1.442695
    %v5727 = vpow.pop %v5726
    %v5728 = vadd.f32 %v5727, 1.0
    %v5729 = vrcp.pop %v5728
    %v5730 = vmul.f32 1.0, %v5729
    %v5731 = vadd.f32 %v5533, %v5652
    %v5732 = vxor.u32 %v5731, 2147483648
    %v5733 = vmul.f32 %v5732, 1.442695
    %v5734 = vpow.pop %v5733
    %v5735 = vadd.f32 %v5734, 1.0
    %v5736 = vrcp.pop %v5735
    %v5737 = vmul.f32 1.0, %v5736
    %v5738 = vadd.f32 %v5721, %v868
    %v5739 = vmul.f32 %v5730, %v5738
    %v5740 = vadd.f32 %v5534, %v5739
    %v5741 = vtanh.pop %v5740
    %v5742 = vsub.f32 1.0, %v5737
    %v5743 = vmul.f32 %v5742, %v5741
    %v5744 = vmul.f32 %v5737, %v5063
    %v5745 = vadd.f32 %v5743, %v5744
    %v5746 = vld [vmem:[#allocation11] sm:$0xff]
    %v5747 = vld [vmem:[#allocation11 + $0x10] sm:$0xff]
    %v5748 = vld [vmem:[#allocation11 + $0x20] sm:$0xff]
    %v5749 = vld [vmem:[#allocation11 + $0x30] sm:$0xff]
    %v5750 = vld [vmem:[#allocation11 + $0x40] sm:$0xff]
    %v5751 = vld [vmem:[#allocation11 + $0x50] sm:$0xff]
    %v5752 = vld [vmem:[#allocation11 + $0x60] sm:$0xff]
    %v5753 = vld [vmem:[#allocation11 + $0x70] sm:$0xff]
    %v5754 = vld [vmem:[#allocation11 + $0x80] sm:$0xff]
    %v5755 = vld [vmem:[#allocation11 + $0x90] sm:$0xff]
    %v5756 = vld [vmem:[#allocation11 + $0xa0] sm:$0xff]
    %v5757 = vld [vmem:[#allocation11 + $0xb0] sm:$0xff]
    %v5758 = vld [vmem:[#allocation11 + $0xc0] sm:$0xff]
    %v5759 = vld [vmem:[#allocation11 + $0xd0] sm:$0xff]
    %v5760 = vld [vmem:[#allocation11 + $0xe0] sm:$0xff]
    %v5761 = vld [vmem:[#allocation11 + $0xf0] sm:$0xff]
    %5762 = vmatprep.subr.mxu0 0.0
    %5763 = vmatpush1.msra.mxu0 %v5761
    %5764 = vmatprep.subr.mxu0 0.0
    %5765 = vmatpush1.msra.mxu0 %v5760
    %5766 = vmatprep.subr.mxu0 0.0
    %5767 = vmatpush1.msra.mxu0 %v5759
    %5768 = vmatprep.subr.mxu0 0.0
    %5769 = vmatpush1.msra.mxu0 %v5758
    %5770 = vmatprep.subr.mxu0 0.0
    %5771 = vmatpush1.msra.mxu0 %v5757
    %5772 = vmatprep.subr.mxu0 0.0
    %5773 = vmatpush1.msra.mxu0 %v5756
    %5774 = vmatprep.subr.mxu0 0.0
    %5775 = vmatpush1.msra.mxu0 %v5755
    %5776 = vmatprep.subr.mxu0 0.0
    %5777 = vmatpush1.msra.mxu0 %v5754
    %5778 = vmatprep.subr.mxu0 0.0
    %5779 = vmatpush1.msra.mxu0 %v5753
    %5780 = vmatprep.subr.mxu0 0.0
    %5781 = vmatpush1.msra.mxu0 %v5752
    %5782 = vmatprep.subr.mxu0 0.0
    %5783 = vmatpush1.msra.mxu0 %v5751
    %5784 = vmatprep.subr.mxu0 0.0
    %5785 = vmatpush1.msra.mxu0 %v5750
    %5786 = vmatprep.subr.mxu0 0.0
    %5787 = vmatpush1.msra.mxu0 %v5749
    %5788 = vmatprep.subr.mxu0 0.0
    %5789 = vmatpush1.msra.mxu0 %v5748
    %5790 = vmatprep.subr.mxu0 0.0
    %5791 = vmatpush1.msra.mxu0 %v5747
    %5792 = vmatprep.subr.mxu0 0.0
    %5793 = vmatpush1.msra.mxu0 %v5746
    %5794 = vmatprep.subr.mxu0 0.0
    %5795 = vmatpush2.msra.mxu0 0.0
    %5796 = vmatprep.subr.mxu0 0.0
    %5797 = vmatpush2.msra.mxu0 0.0
    %5798 = vmatprep.subr.mxu0 0.0
    %5799 = vmatpush2.msra.mxu0 0.0
    %5800 = vmatprep.subr.mxu0 0.0
    %5801 = vmatpush2.msra.mxu0 0.0
    %5802 = vmatprep.subr.mxu0 0.0
    %5803 = vmatpush2.msra.mxu0 0.0
    %5804 = vmatprep.subr.mxu0 0.0
    %5805 = vmatpush2.msra.mxu0 0.0
    %5806 = vmatprep.subr.mxu0 0.0
    %5807 = vmatpush2.msra.mxu0 0.0
    %5808 = vmatprep.subr.mxu0 0.0
    %5809 = vmatpush2.msra.mxu0 0.0
    %5810 = vmatprep.subr.mxu0 0.0
    %5811 = vmatpush2.msra.mxu0 0.0
    %5812 = vmatprep.subr.mxu0 0.0
    %5813 = vmatpush2.msra.mxu0 0.0
    %5814 = vmatprep.subr.mxu0 0.0
    %5815 = vmatpush2.msra.mxu0 0.0
    %5816 = vmatprep.subr.mxu0 0.0
    %5817 = vmatpush2.msra.mxu0 0.0
    %5818 = vmatprep.subr.mxu0 0.0
    %5819 = vmatpush2.msra.mxu0 0.0
    %5820 = vmatprep.subr.mxu0 0.0
    %5821 = vmatpush2.msra.mxu0 0.0
    %5822 = vmatprep.subr.mxu0 0.0
    %5823 = vmatpush2.msra.mxu0 0.0
    %5824 = vmatprep.subr.mxu0 0.0
    %5825 = vmatpush2.msra.mxu0 0.0
    %5826 = vmatprep.mubr.f32.mxu0 0.0
    %5827 = vmatmul.mubr.f32.gmra.mxu0 %v5745
    %v5828 = vpop.f32.mrf.mxu0
    %v5829 = vadd.f32 %v898, %v5828
    %v5830 = vpop.f32.mrf.mxu0
    %5831 = vdwg.mxu0
    %5832 = vrot.lane.b32.xlu0 %v5829, 1
    %v5833 = vpop.permute.xlu0 %5832
    %vm5834 = vcmp.gt.f32.partialorder %v5833, %v5829
    %vm5835 = vcmp.eq.f32.partialorder %v5833, %v5829
    %vm5836 = vmand %vm5835, %vm976
    %vm5837 = vmor %vm5834, %vm5836
    %v5838 = vsel %vm5837, %v5833, %v5829
    %v5839 = vsel %vm5837, %v973, %v99
    %5840 = vrot.lane.b32.xlu0 %v5838, 2
    %v5841 = vpop.permute.xlu0 %5840
    %5842 = vrot.lane.b32.xlu0 %v5839, 2
    %v5843 = vpop.permute.xlu0 %5842
    %vm5844 = vcmp.gt.f32.partialorder %v5841, %v5838
    %vm5845 = vcmp.eq.f32.partialorder %v5841, %v5838
    %vm5846 = vcmp.lt.s32.totalorder %v5843, %v5839
    %vm5847 = vmand %vm5845, %vm5846
    %vm5848 = vmor %vm5844, %vm5847
    %v5849 = vsel %vm5848, %v5841, %v5838
    %v5850 = vsel %vm5848, %v5843, %v5839
    %5851 = vrot.lane.b32.xlu0 %v5849, 4
    %v5852 = vpop.permute.xlu0 %5851
    %5853 = vrot.lane.b32.xlu0 %v5850, 4
    %v5854 = vpop.permute.xlu0 %5853
    %vm5855 = vcmp.gt.f32.partialorder %v5852, %v5849
    %vm5856 = vcmp.eq.f32.partialorder %v5852, %v5849
    %vm5857 = vcmp.lt.s32.totalorder %v5854, %v5850
    %vm5858 = vmand %vm5856, %vm5857
    %vm5859 = vmor %vm5855, %vm5858
    %v5860 = vsel %vm5859, %v5852, %v5849
    %v5861 = vsel %vm5859, %v5854, %v5850
    %5862 = vrot.lane.b32.xlu0 %v5860, 8
    %v5863 = vpop.permute.xlu0 %5862
    %5864 = vrot.lane.b32.xlu0 %v5861, 8
    %v5865 = vpop.permute.xlu0 %5864
    %vm5866 = vcmp.gt.f32.partialorder %v5863, %v5860
    %vm5867 = vcmp.eq.f32.partialorder %v5863, %v5860
    %vm5868 = vcmp.lt.s32.totalorder %v5865, %v5861
    %vm5869 = vmand %vm5867, %vm5868
    %vm5870 = vmor %vm5866, %vm5869
    %v5871 = vsel %vm5870, %v5863, %v5860
    %v5872 = vsel %vm5870, %v5865, %v5861
    %5873 = vrot.lane.b32.xlu0 %v5871, 16
    %v5874 = vpop.permute.xlu0 %5873
    %5875 = vrot.lane.b32.xlu0 %v5872, 16
    %v5876 = vpop.permute.xlu0 %5875
    %vm5877 = vcmp.gt.f32.partialorder %v5874, %v5871
    %vm5878 = vcmp.eq.f32.partialorder %v5874, %v5871
    %vm5879 = vcmp.lt.s32.totalorder %v5876, %v5872
    %vm5880 = vmand %vm5878, %vm5879
    %vm5881 = vmor %vm5877, %vm5880
    %v5882 = vsel %vm5881, %v5874, %v5871
    %v5883 = vsel %vm5881, %v5876, %v5872
    %5884 = vrot.lane.b32.xlu0 %v5882, 32
    %v5885 = vpop.permute.xlu0 %5884
    %5886 = vrot.lane.b32.xlu0 %v5883, 32
    %v5887 = vpop.permute.xlu0 %5886
    %vm5888 = vcmp.gt.f32.partialorder %v5885, %v5882
    %vm5889 = vcmp.eq.f32.partialorder %v5885, %v5882
    %vm5890 = vcmp.lt.s32.totalorder %v5887, %v5883
    %vm5891 = vmand %vm5889, %vm5890
    %vm5892 = vmor %vm5888, %vm5891
    %v5893 = vsel %vm5892, %v5885, %v5882
    %v5894 = vsel %vm5892, %v5887, %v5883
    %5895 = vrot.lane.b32.xlu0 %v5893, 64
    %v5896 = vpop.permute.xlu0 %5895
    %5897 = vrot.lane.b32.xlu0 %v5894, 64
    %v5898 = vpop.permute.xlu0 %5897
    %vm5899 = vcmp.gt.f32.partialorder %v5896, %v5893
    %vm5900 = vcmp.eq.f32.partialorder %v5896, %v5893
    %vm5901 = vcmp.lt.s32.totalorder %v5898, %v5894
    %vm5902 = vmand %vm5900, %vm5901
    %vm5903 = vmor %vm5899, %vm5902
    %v5904 = vsel %vm5903, %v5896, %v5893
    %v5905 = vsub.f32 %v5829, %v5904
    %v5906 = vmul.f32 %v5905, 1.442695
    %v5907 = vpow.pop %v5906
    %v5908 = vsel %vm1050, %v5907, 0.0
    %5909 = vadd.xlane.f32.xlu0 %v5908
    %v5910 = vpop.xlane.xlu0 %5909
    %v5911 = vlog2.pop %v5910
    %v5912 = vmul.f32 %v5911, 0.6931472
    %v5913 = vsub.f32 %v5905, %v5912
    %s5914 = scalar_lea.vmem [#allocation12], 14
    %5915 = vst [vmem:[%s5914] sm:$0x3] %v5913
    // Predicated region
    $region50: #{tpu_custom_call.1} parent=1 // pred_check
      _
    $region51: #{tpu_custom_call.1} parent=1 // pred_check_branch
      %5917 = sbr.rel (0) target = $region53
    $region52: #{tpu_custom_call.1} parent=1 // pred_region
      %s5919 = ssub.s32 256, 256
      %5920 = vsyncadd [#allocation5], %s5919
      %s5921 = sshll.u32 [#allocation12], 4
      %s5922 = int_to_ptr.vmem [resolvable:$true] %s5921
      %5927 = dma.vmem_to_hbm [thread:$0]  %s5922, 256, %s7, [#allocation5], 32, 32, 2
    $region53: #{tpu_custom_call.1} parent=1 // pred_fallthru
      _
    // Predicated region
    $region54: #{tpu_custom_call.1} parent=1 // pred_check
      _
    $region55: #{tpu_custom_call.1} parent=1 // pred_check_branch
      %5929 = sbr.rel (0) target = $region57
    $region56: #{tpu_custom_call.1} parent=1 // pred_region
      %s5931 = ssub.s32 32, 32
      %5932 = vsyncadd [#allocation14], %s5931
      %s5934 = sshll.u32 [#allocation13], 4
      %s5935 = int_to_ptr.vmem [resolvable:$true] %s5934
      %5937 = dma.vmem_to_hbm [thread:$0]  %s5935, 32, %s8, [#allocation14]
    $region57: #{tpu_custom_call.1} parent=1 // pred_fallthru
      _
    // Predicated region
    $region58: #{tpu_custom_call.1} parent=1 // pred_check
      _
    $region59: #{tpu_custom_call.1} parent=1 // pred_check_branch
      %5939 = sbr.rel (0) target = $region61
    $region60: #{tpu_custom_call.1} parent=1 // pred_region
      %5940 = dma.done [#allocation5], 256
    $region61: #{tpu_custom_call.1} parent=1 // pred_fallthru
      _
    // Predicated region
    $region62: #{tpu_custom_call.1} parent=1 // pred_check
      _
    $region63: #{tpu_custom_call.1} parent=1 // pred_check_branch
      %5942 = sbr.rel (0) target = $region65
    $region64: #{tpu_custom_call.1} parent=1 // pred_region
      %5943 = dma.done [#allocation14], 32
    $region65: #{tpu_custom_call.1} parent=1 // pred_fallthru
      _
    %5944 = vsyncpa [#allocation4], 1
    %5945 = vsyncpa [#allocation7], 1
    %5946 = vsyncpa [#allocation10], 1
    %5947 = vsyncpa [#allocation5], 1
    %5948 = vsyncpa [#allocation14], 1

</llo_original>
